<compile_context>
chip_gen: v7x
topology: tpu7x:2x2x1
jax: 0.10.0
libtpu: 0.0.40
codegen_flags: <defaults>
</compile_context>

<pallas_src>
import functools

import jax
import jax.numpy as jnp
from jax.experimental import pallas as pl
from jax.experimental.pallas import tpu as pltpu


C = 32     # per-branch channels (z1 / z2)
HID = 64   # InvertedResidualBlock hidden dim (expand_ratio = 2)


def _make_bands(H, W):
    """Static list of (row_start, band_rows); band*W bounds the live accumulator."""
    band = max(1, min(8, 1024 // max(W, 1)))
    bands, r = [], 0
    while r < H:
        b = min(band, H - r)
        bands.append((r, b))
        r += b
    return bands


def _dw_band(pad_ref, wd, r0, bb, W):
    """3x3 depthwise conv + ReLU6 over `bb` rows (padded rows r0..r0+bb+1).

    Loads each dh row-slab once (3 VMEM loads / band instead of 9) and derives
    the three dw taps from static slices of the in-register slab."""
    hid = wd.shape[-1]
    acc = None
    for dh in range(3):
        slab = pad_ref[r0 + dh:r0 + dh + bb, :, :]            # (bb, W+2, hid)
        for dw in range(3):
            t = slab[:, dw:dw + W, :] * wd[dh * 3 + dw]
            acc = t if acc is None else acc + t
    return jnp.clip(acc, 0.0, 6.0).reshape(bb * W, hid)


# ----------------------------------------------------------------------------
# Fused DetailNode kernel (one grid step == one image of the batch)
# ----------------------------------------------------------------------------
def _detail_node_kernel(x_ref,
                        wp1_ref, bp1_ref,              # fused shuffle | phi-expand
                        wdp_ref, w2p_ref,              # phi depthwise / padded project
                        w1re_ref, wdre_ref, wproj_ref, # fused rho|eta block
                        out_ref,
                        pad_p, pad_re,
                        *, H, W):
    f32 = jnp.float32
    bands = _make_bands(H, W)

    # ---- phase 1: fused shuffle 1x1 (64->64) + phi expand (->64), K=64 GEMM ----
    wp1 = wp1_ref[...]                                         # (64, 128)
    bp1 = bp1_ref[...]                                         # (1, 128)
    for r0, bb in bands:
        rows = slice(r0 * W, (r0 + bb) * W)
        g = jnp.dot(x_ref[0, rows, :], wp1, preferred_element_type=f32) + bp1
        out_ref[0, rows, :] = g[:, :2 * C].astype(out_ref.dtype)   # [z1n | z2n]
        h = jnp.clip(g[:, 2 * C:], 0.0, 6.0).reshape(bb, W, HID)
        # reflection-pad along W in registers -> aligned full-row store
        pad_p[r0 + 1:r0 + 1 + bb, :, :] = jnp.concatenate(
            [h[:, 1:2], h, h[:, W - 2:W - 1]], axis=1)
    pad_p[0:1, :, :] = pad_p[2:3, :, :]                        # reflect H (top)
    pad_p[H + 1:H + 2, :, :] = pad_p[H - 1:H, :, :]            # reflect H (bottom)

    # ---- phase 2: phi depthwise + padded project, z2 <- z2 + phi(z1n) ----------
    wdp = wdp_ref[...]                                         # (9, 64)
    w2p = w2p_ref[...]                                         # (64, 64), cols 0:32 = 0
    for r0, bb in bands:
        rows = slice(r0 * W, (r0 + bb) * W)
        a = _dw_band(pad_p, wdp, r0, bb, W)                    # (bb*W, 64)
        phi_pad = jnp.dot(a, w2p, preferred_element_type=f32)  # [0 | phi]
        out_ref[0, rows, :] = out_ref[0, rows, :] + phi_pad    # full 64-wide RMW

    # ---- phase 3a: fused rho|eta expand from the 64-wide [z1n | z2] slab -------
    w1re = w1re_ref[...]                                       # (64, 128), z1n rows = 0
    for r0, bb in bands:
        rows = slice(r0 * W, (r0 + bb) * W)
        h = jnp.clip(jnp.dot(out_ref[0, rows, :], w1re,
                             preferred_element_type=f32), 0.0, 6.0)
        h = h.reshape(bb, W, 2 * HID)
        pad_re[r0 + 1:r0 + 1 + bb, :, :] = jnp.concatenate(
            [h[:, 1:2], h, h[:, W - 2:W - 1]], axis=1)
    pad_re[0:1, :, :] = pad_re[2:3, :, :]
    pad_re[H + 1:H + 2, :, :] = pad_re[H - 1:H, :, :]

    # ---- phase 3b: 128-ch depthwise + block-diag project -> [rho | eta] --------
    wdre = wdre_ref[...]                                       # (9, 128)
    wproj = wproj_ref[...]                                     # (128, 64) block-diag
    for r0, bb in bands:
        rows = slice(r0 * W, (r0 + bb) * W)
        a = _dw_band(pad_re, wdre, r0, bb, W)                  # (bb*W, 128)
        re = jnp.dot(a, wproj, preferred_element_type=f32)     # (bb*W, 64) = [rho|eta]
        y = out_ref[0, rows, :]                                # [z1n | z2_out]
        z1o = y[:, :C] * jnp.exp(re[:, :C]) + re[:, C:]
        out_ref[0, rows, :C] = z1o.astype(out_ref.dtype)       # z2 lanes already final


# ----------------------------------------------------------------------------
# Wrapper
# ----------------------------------------------------------------------------
def _fuse_params(p):
    f32 = jnp.float32
    wsh, bsh = p["shffle_w"], p["shffle_b"]                     # (64,64), (1,64)
    w1p, wdp, w2p = p["phi"]["w1"], p["phi"]["wd"], p["phi"]["w2"]
    # phase-1 fused: [Wsh | Wsh[:, :32] @ W1_phi] and matching bias -> (64,128)
    wp1 = jnp.concatenate([wsh, wsh[:, :C] @ w1p], axis=1)
    bp1 = jnp.concatenate([bsh, bsh[:, :C] @ w1p], axis=1)      # (1, 128)
    # phi project zero-padded so it only touches the z2 lanes    -> (64, 64)
    w2p_pad = jnp.concatenate([jnp.zeros((HID, C), f32), w2p], axis=1)
    # rho|eta expand consumed directly from the [z1n | z2] slab   -> (64, 128)
    w1re = jnp.concatenate([p["rho"]["w1"], p["eta"]["w1"]], axis=1)
    w1re_pad = jnp.concatenate([jnp.zeros((C, 2 * HID), f32), w1re], axis=0)
    wdre = jnp.concatenate([p["rho"]["wd"], p["eta"]["wd"]], axis=1)     # (9, 128)
    zeros = jnp.zeros((HID, C), f32)
    wproj = jnp.concatenate(
        [jnp.concatenate([p["rho"]["w2"], zeros], axis=1),
         jnp.concatenate([zeros, p["eta"]["w2"]], axis=1)], axis=0)      # (128, 64)
    return (wp1, bp1, wdp, w2p_pad, w1re_pad, wdre, wproj)


def detail_node_forward(z1, z2, params):
    """z1, z2: (B, H, W, 32) NHWC.  Returns (z1_out, z2_out) NHWC."""
    B, H, W, Cc = z1.shape
    assert Cc == C and H >= 3 and W >= 3
    HW = H * W
    # Packed [z1 | z2] input: one 64-wide lane-dense block per image.
    x = jnp.concatenate([z1.reshape(B, HW, C), z2.reshape(B, HW, C)], axis=-1)
    weights = _fuse_params(params)

    # Explicit VMEM budget: two padded hidden maps (the 64-ch one lane-pads to
    # 128) + double-buffered packed input/output blocks + small weights.
    pad_bytes = 2 * (H + 2) * (W + 2) * 128 * 4
    io_bytes = 2 * 2 * HW * 2 * C * 4
    vmem_limit = min(max(int(1.4 * (pad_bytes + io_bytes)) + (2 << 20), 16 << 20),
                     64 << 20)

    out = pl.pallas_call(
        functools.partial(_detail_node_kernel, H=H, W=W),
        out_shape=jax.ShapeDtypeStruct((B, HW, 2 * C), z1.dtype),
        grid_spec=pltpu.PrefetchScalarGridSpec(
            num_scalar_prefetch=0,
            grid=(B,),
            in_specs=[
                pl.BlockSpec((1, HW, 2 * C), lambda b: (b, 0, 0)),     # packed [z1|z2]
                pl.BlockSpec((2 * C, 2 * HID), lambda b: (0, 0)),      # fused shuffle|expand
                pl.BlockSpec((1, 2 * HID), lambda b: (0, 0)),          # fused bias
                pl.BlockSpec((9, HID), lambda b: (0, 0)),              # phi depthwise
                pl.BlockSpec((HID, 2 * C), lambda b: (0, 0)),          # phi project (padded)
                pl.BlockSpec((2 * C, 2 * HID), lambda b: (0, 0)),      # rho|eta expand (padded)
                pl.BlockSpec((9, 2 * HID), lambda b: (0, 0)),          # rho|eta depthwise
                pl.BlockSpec((2 * HID, 2 * C), lambda b: (0, 0)),      # rho|eta project
            ],
            out_specs=pl.BlockSpec((1, HW, 2 * C), lambda b: (b, 0, 0)),
            scratch_shapes=[
                pltpu.VMEM((H + 2, W + 2, HID), jnp.float32),          # padded phi hidden
                pltpu.VMEM((H + 2, W + 2, 2 * HID), jnp.float32),      # padded rho|eta hidden
            ],
        ),
        compiler_params=pltpu.CompilerParams(
            dimension_semantics=("parallel",),
            vmem_limit_bytes=vmem_limit),
    )(x, *weights)

    z1o = out[:, :, :C].reshape(B, H, W, C)
    z2o = out[:, :, C:].reshape(B, H, W, C)
    return z1o, z2o


# ----------------------------------------------------------------------------
# Deterministic parameter init (small scale keeps exp() tame)
# ----------------------------------------------------------------------------
def init_params(key, inp=32, expand=2):
    hid = inp * expand
    scale = 0.1

    def blk(k):
        k1, k2, k3 = jax.random.split(k, 3)
        return {
            "w1": jax.random.normal(k1, (inp, hid), jnp.float32) * scale,
            "wd": jax.random.normal(k2, (9, hid), jnp.float32) * scale,
            "w2": jax.random.normal(k3, (hid, inp), jnp.float32) * scale,
        }

    ks = jax.random.split(key, 5)
    return {
        "shffle_w": jax.random.normal(ks[0], (2 * inp, 2 * inp), jnp.float32) * scale,
        "shffle_b": jax.random.normal(ks[1], (1, 2 * inp), jnp.float32) * scale,
        "phi": blk(ks[2]),
        "rho": blk(ks[3]),
        "eta": blk(ks[4]),
    }


# ----------------------------------------------------------------------------
# Pure-JAX reference (correctness check of the Pallas path)
# ----------------------------------------------------------------------------
def _ref_block(x, p):
    h = jnp.clip(jnp.einsum("bhwc,cd->bhwd", x, p["w1"]), 0.0, 6.0)
    hp = jnp.pad(h, ((0, 0), (1, 1), (1, 1), (0, 0)), mode="reflect")
    H, W = x.shape[1], x.shape[2]
    acc = 0.0
    for dh in range(3):
        for dw in range(3):
            acc = acc + hp[:, dh:dh + H, dw:dw + W, :] * p["wd"][dh * 3 + dw]
    acc = jnp.clip(acc, 0.0, 6.0)
    return jnp.einsum("bhwc,cd->bhwd", acc, p["w2"])


def _ref_forward(z1, z2, params):
    Cc = z1.shape[-1]
    x = jnp.concatenate([z1, z2], axis=-1)
    y = jnp.einsum("bhwc,cd->bhwd", x, params["shffle_w"]) + params["shffle_b"][0]
    z1n, z2n = y[..., :Cc], y[..., Cc:]
    z2o = z2n + _ref_block(z1n, params["phi"])
    z1o = z1n * jnp.exp(_ref_block(z2o, params["rho"])) + _ref_block(z2o, params["eta"])
    return z1o, z2o


# ----------------------------------------------------------------------------
if __name__ == "__main__":
    key = jax.random.PRNGKey(0)
    kp, k1, k2 = jax.random.split(key, 3)
    params = init_params(kp)

    B, H, W, Cc = 2, 16, 16, 32          # NHWC (== NCHW (2, 32, 16, 16))
    z1 = jax.random.normal(k1, (B, H, W, Cc), jnp.float32)
    z2 = jax.random.normal(k2, (B, H, W, Cc), jnp.float32)

    fwd = jax.jit(detail_node_forward)
    z1_out, z2_out = fwd(z1, z2, params)
    jax.block_until_ready((z1_out, z2_out))

    z1_ref, z2_ref = _ref_forward(z1, z2, params)
    assert jnp.allclose(z1_out, z1_ref, atol=1e-3, rtol=1e-3), "z1 mismatch"
    assert jnp.allclose(z2_out, z2_ref, atol=1e-3, rtol=1e-3), "z2 mismatch"

    print("KERNEL_OK")
</pallas_src>

<mosaic_0001>
module attributes {stable_mosaic.version = 11 : i64} {
  func.func @_detail_node_kernel(%arg0: i32, %arg1: memref<1x256x64xf32, #tpu.memory_space<vmem>>, %arg2: memref<64x128xf32, #tpu.memory_space<vmem>>, %arg3: memref<1x128xf32, #tpu.memory_space<vmem>>, %arg4: memref<9x64xf32, #tpu.memory_space<vmem>>, %arg5: memref<64x64xf32, #tpu.memory_space<vmem>>, %arg6: memref<64x128xf32, #tpu.memory_space<vmem>>, %arg7: memref<9x128xf32, #tpu.memory_space<vmem>>, %arg8: memref<128x64xf32, #tpu.memory_space<vmem>>, %arg9: memref<1x256x64xf32, #tpu.memory_space<vmem>>, %arg10: memref<18x18x64xf32, #tpu.memory_space<vmem>>, %arg11: memref<18x18x128xf32, #tpu.memory_space<vmem>>) attributes {dimension_semantics = [#tpu.dimension_semantics<parallel>], iteration_bounds = array<i64: 2>, scalar_prefetch = 0 : i64, scratch_operands = 2 : i64, tpu.core_type = #tpu.core_type<tc>, window_params = [{transform_indices = @transform_0, window_bounds = array<i64: 1, 256, 64>}, {pipeline_mode = #tpu.pipeline_mode<synchronous>, transform_indices = @transform_1, window_bounds = array<i64: 64, 128>}, {pipeline_mode = #tpu.pipeline_mode<synchronous>, transform_indices = @transform_2, window_bounds = array<i64: 1, 128>}, {pipeline_mode = #tpu.pipeline_mode<synchronous>, transform_indices = @transform_3, window_bounds = array<i64: 9, 64>}, {pipeline_mode = #tpu.pipeline_mode<synchronous>, transform_indices = @transform_4, window_bounds = array<i64: 64, 64>}, {pipeline_mode = #tpu.pipeline_mode<synchronous>, transform_indices = @transform_5, window_bounds = array<i64: 64, 128>}, {pipeline_mode = #tpu.pipeline_mode<synchronous>, transform_indices = @transform_6, window_bounds = array<i64: 9, 128>}, {pipeline_mode = #tpu.pipeline_mode<synchronous>, transform_indices = @transform_7, window_bounds = array<i64: 128, 64>}, {transform_indices = @transform_8, window_bounds = array<i64: 1, 256, 64>}]} {
    %c0 = arith.constant 0 : index
    %c0_0 = arith.constant 0 : index
    %0 = vector.load %arg2[%c0, %c0_0] : memref<64x128xf32, #tpu.memory_space<vmem>>, vector<64x128xf32>
    %c0_1 = arith.constant 0 : index
    %c0_2 = arith.constant 0 : index
    %1 = vector.load %arg3[%c0_1, %c0_2] : memref<1x128xf32, #tpu.memory_space<vmem>>, vector<1x128xf32>
    %c0_3 = arith.constant 0 : index
    %c0_4 = arith.constant 0 : index
    %c0_5 = arith.constant 0 : index
    %2 = vector.load %arg1[%c0_3, %c0_4, %c0_5] : memref<1x256x64xf32, #tpu.memory_space<vmem>>, vector<1x128x64xf32>
    %3 = vector.shape_cast %2 : vector<1x128x64xf32> to vector<128x64xf32>
    %cst = arith.constant dense<0.000000e+00> : vector<128x128xf32>
    %4 = tpu.matmul %3, %0, %cst {dimension_numbers = #tpu.dot_dimension_numbers<[1], [0], [0], [1], [0, 0, 1, 1], [], []>} : vector<128x64xf32>, vector<64x128xf32>, vector<128x128xf32> -> vector<128x128xf32>
    %5 = vector.broadcast %1 : vector<1x128xf32> to vector<128x128xf32>
    %6 = arith.addf %4, %5 : vector<128x128xf32>
    %7 = vector.extract_strided_slice %6 {offsets = [0, 0], sizes = [128, 64], strides = [1, 1]} : vector<128x128xf32> to vector<128x64xf32>
    %c0_6 = arith.constant 0 : index
    %c0_7 = arith.constant 0 : index
    %c0_8 = arith.constant 0 : index
    %8 = vector.load %arg9[%c0_6, %c0_7, %c0_8] : memref<1x256x64xf32, #tpu.memory_space<vmem>>, vector<1x128x64xf32>
    %9 = vector.shape_cast %8 : vector<1x128x64xf32> to vector<128x64xf32>
    %10 = vector.shape_cast %7 : vector<128x64xf32> to vector<1x128x64xf32>
    tpu.vector_store %arg9[%c0_6, %c0_7, %c0_8], %10 {strides = array<i32>} : memref<1x256x64xf32, #tpu.memory_space<vmem>>, vector<1x128x64xf32>,
    %11 = vector.extract_strided_slice %6 {offsets = [0, 64], sizes = [128, 64], strides = [1, 1]} : vector<128x128xf32> to vector<128x64xf32>
    %cst_9 = arith.constant 0.000000e+00 : f32
    %cst_10 = arith.constant 6.000000e+00 : f32
    %12 = vector.broadcast %cst_9 : f32 to vector<128x64xf32>
    %13 = arith.maximumf %12, %11 : vector<128x64xf32>
    %14 = vector.broadcast %cst_10 : f32 to vector<128x64xf32>
    %15 = arith.minimumf %14, %13 : vector<128x64xf32>
    %16 = vector.shape_cast %15 : vector<128x64xf32> to vector<8x16x64xf32>
    %17 = vector.extract_strided_slice %16 {offsets = [0, 1, 0], sizes = [8, 1, 64], strides = [1, 1, 1]} : vector<8x16x64xf32> to vector<8x1x64xf32>
    %18 = vector.extract_strided_slice %16 {offsets = [0, 14, 0], sizes = [8, 1, 64], strides = [1, 1, 1]} : vector<8x16x64xf32> to vector<8x1x64xf32>
    %19 = tpu.concatenate %17, %16, %18 in 1 : vector<8x1x64xf32>, vector<8x16x64xf32>, vector<8x1x64xf32> -> vector<8x18x64xf32>
    %c1 = arith.constant 1 : index
    %c0_11 = arith.constant 0 : index
    %c0_12 = arith.constant 0 : index
    %20 = vector.load %arg10[%c1, %c0_11, %c0_12] : memref<18x18x64xf32, #tpu.memory_space<vmem>>, vector<8x18x64xf32>
    tpu.vector_store %arg10[%c1, %c0_11, %c0_12], %19 {strides = array<i32>} : memref<18x18x64xf32, #tpu.memory_space<vmem>>, vector<8x18x64xf32>,
    %c0_13 = arith.constant 0 : index
    %c128 = arith.constant 128 : index
    %c0_14 = arith.constant 0 : index
    %21 = vector.load %arg1[%c0_13, %c128, %c0_14] : memref<1x256x64xf32, #tpu.memory_space<vmem>>, vector<1x128x64xf32>
    %22 = vector.shape_cast %21 : vector<1x128x64xf32> to vector<128x64xf32>
    %cst_15 = arith.constant dense<0.000000e+00> : vector<128x128xf32>
    %23 = tpu.matmul %22, %0, %cst_15 {dimension_numbers = #tpu.dot_dimension_numbers<[1], [0], [0], [1], [0, 0, 1, 1], [], []>} : vector<128x64xf32>, vector<64x128xf32>, vector<128x128xf32> -> vector<128x128xf32>
    %24 = vector.broadcast %1 : vector<1x128xf32> to vector<128x128xf32>
    %25 = arith.addf %23, %24 : vector<128x128xf32>
    %26 = vector.extract_strided_slice %25 {offsets = [0, 0], sizes = [128, 64], strides = [1, 1]} : vector<128x128xf32> to vector<128x64xf32>
    %c0_16 = arith.constant 0 : index
    %c128_17 = arith.constant 128 : index
    %c0_18 = arith.constant 0 : index
    %27 = vector.load %arg9[%c0_16, %c128_17, %c0_18] : memref<1x256x64xf32, #tpu.memory_space<vmem>>, vector<1x128x64xf32>
    %28 = vector.shape_cast %27 : vector<1x128x64xf32> to vector<128x64xf32>
    %29 = vector.shape_cast %26 : vector<128x64xf32> to vector<1x128x64xf32>
    tpu.vector_store %arg9[%c0_16, %c128_17, %c0_18], %29 {strides = array<i32>} : memref<1x256x64xf32, #tpu.memory_space<vmem>>, vector<1x128x64xf32>,
    %30 = vector.extract_strided_slice %25 {offsets = [0, 64], sizes = [128, 64], strides = [1, 1]} : vector<128x128xf32> to vector<128x64xf32>
    %cst_19 = arith.constant 0.000000e+00 : f32
    %cst_20 = arith.constant 6.000000e+00 : f32
    %31 = vector.broadcast %cst_19 : f32 to vector<128x64xf32>
    %32 = arith.maximumf %31, %30 : vector<128x64xf32>
    %33 = vector.broadcast %cst_20 : f32 to vector<128x64xf32>
    %34 = arith.minimumf %33, %32 : vector<128x64xf32>
    %35 = vector.shape_cast %34 : vector<128x64xf32> to vector<8x16x64xf32>
    %36 = vector.extract_strided_slice %35 {offsets = [0, 1, 0], sizes = [8, 1, 64], strides = [1, 1, 1]} : vector<8x16x64xf32> to vector<8x1x64xf32>
    %37 = vector.extract_strided_slice %35 {offsets = [0, 14, 0], sizes = [8, 1, 64], strides = [1, 1, 1]} : vector<8x16x64xf32> to vector<8x1x64xf32>
    %38 = tpu.concatenate %36, %35, %37 in 1 : vector<8x1x64xf32>, vector<8x16x64xf32>, vector<8x1x64xf32> -> vector<8x18x64xf32>
    %c9 = arith.constant 9 : index
    %c0_21 = arith.constant 0 : index
    %c0_22 = arith.constant 0 : index
    %39 = vector.load %arg10[%c9, %c0_21, %c0_22] : memref<18x18x64xf32, #tpu.memory_space<vmem>>, vector<8x18x64xf32>
    tpu.vector_store %arg10[%c9, %c0_21, %c0_22], %38 {strides = array<i32>} : memref<18x18x64xf32, #tpu.memory_space<vmem>>, vector<8x18x64xf32>,
    %c2 = arith.constant 2 : index
    %c0_23 = arith.constant 0 : index
    %c0_24 = arith.constant 0 : index
    %40 = vector.load %arg10[%c2, %c0_23, %c0_24] : memref<18x18x64xf32, #tpu.memory_space<vmem>>, vector<1x18x64xf32>
    %c0_25 = arith.constant 0 : index
    %c0_26 = arith.constant 0 : index
    %c0_27 = arith.constant 0 : index
    %41 = vector.load %arg10[%c0_25, %c0_26, %c0_27] : memref<18x18x64xf32, #tpu.memory_space<vmem>>, vector<1x18x64xf32>
    tpu.vector_store %arg10[%c0_25, %c0_26, %c0_27], %40 {strides = array<i32>} : memref<18x18x64xf32, #tpu.memory_space<vmem>>, vector<1x18x64xf32>,
    %c15 = arith.constant 15 : index
    %c0_28 = arith.constant 0 : index
    %c0_29 = arith.constant 0 : index
    %42 = vector.load %arg10[%c15, %c0_28, %c0_29] : memref<18x18x64xf32, #tpu.memory_space<vmem>>, vector<1x18x64xf32>
    %c17 = arith.constant 17 : index
    %c0_30 = arith.constant 0 : index
    %c0_31 = arith.constant 0 : index
    %43 = vector.load %arg10[%c17, %c0_30, %c0_31] : memref<18x18x64xf32, #tpu.memory_space<vmem>>, vector<1x18x64xf32>
    tpu.vector_store %arg10[%c17, %c0_30, %c0_31], %42 {strides = array<i32>} : memref<18x18x64xf32, #tpu.memory_space<vmem>>, vector<1x18x64xf32>,
    %c0_32 = arith.constant 0 : index
    %c0_33 = arith.constant 0 : index
    %44 = vector.load %arg4[%c0_32, %c0_33] : memref<9x64xf32, #tpu.memory_space<vmem>>, vector<9x64xf32>
    %c0_34 = arith.constant 0 : index
    %c0_35 = arith.constant 0 : index
    %45 = vector.load %arg5[%c0_34, %c0_35] : memref<64x64xf32, #tpu.memory_space<vmem>>, vector<64x64xf32>
    %c0_36 = arith.constant 0 : index
    %c0_37 = arith.constant 0 : index
    %c0_38 = arith.constant 0 : index
    %46 = vector.load %arg10[%c0_36, %c0_37, %c0_38] : memref<18x18x64xf32, #tpu.memory_space<vmem>>, vector<8x18x64xf32>
    %47 = vector.extract_strided_slice %46 {offsets = [0, 0, 0], sizes = [8, 16, 64], strides = [1, 1, 1]} : vector<8x18x64xf32> to vector<8x16x64xf32>
    %48 = vector.extract_strided_slice %44 {offsets = [0, 0], sizes = [1, 64], strides = [1, 1]} : vector<9x64xf32> to vector<1x64xf32>
    %49 = vector.shape_cast %48 : vector<1x64xf32> to vector<64xf32>
    %50 = vector.shape_cast %49 : vector<64xf32> to vector<1x1x64xf32>
    %51 = vector.broadcast %50 : vector<1x1x64xf32> to vector<8x16x64xf32>
    %52 = arith.mulf %47, %51 : vector<8x16x64xf32>
    %53 = vector.extract_strided_slice %46 {offsets = [0, 1, 0], sizes = [8, 16, 64], strides = [1, 1, 1]} : vector<8x18x64xf32> to vector<8x16x64xf32>
    %54 = vector.extract_strided_slice %44 {offsets = [1, 0], sizes = [1, 64], strides = [1, 1]} : vector<9x64xf32> to vector<1x64xf32>
    %55 = vector.shape_cast %54 : vector<1x64xf32> to vector<64xf32>
    %56 = vector.shape_cast %55 : vector<64xf32> to vector<1x1x64xf32>
    %57 = vector.broadcast %56 : vector<1x1x64xf32> to vector<8x16x64xf32>
    %58 = arith.mulf %53, %57 : vector<8x16x64xf32>
    %59 = arith.addf %52, %58 : vector<8x16x64xf32>
    %60 = vector.extract_strided_slice %46 {offsets = [0, 2, 0], sizes = [8, 16, 64], strides = [1, 1, 1]} : vector<8x18x64xf32> to vector<8x16x64xf32>
    %61 = vector.extract_strided_slice %44 {offsets = [2, 0], sizes = [1, 64], strides = [1, 1]} : vector<9x64xf32> to vector<1x64xf32>
    %62 = vector.shape_cast %61 : vector<1x64xf32> to vector<64xf32>
    %63 = vector.shape_cast %62 : vector<64xf32> to vector<1x1x64xf32>
    %64 = vector.broadcast %63 : vector<1x1x64xf32> to vector<8x16x64xf32>
    %65 = arith.mulf %60, %64 : vector<8x16x64xf32>
    %66 = arith.addf %59, %65 : vector<8x16x64xf32>
    %c1_39 = arith.constant 1 : index
    %c0_40 = arith.constant 0 : index
    %c0_41 = arith.constant 0 : index
    %67 = vector.load %arg10[%c1_39, %c0_40, %c0_41] : memref<18x18x64xf32, #tpu.memory_space<vmem>>, vector<8x18x64xf32>
    %68 = vector.extract_strided_slice %67 {offsets = [0, 0, 0], sizes = [8, 16, 64], strides = [1, 1, 1]} : vector<8x18x64xf32> to vector<8x16x64xf32>
    %69 = vector.extract_strided_slice %44 {offsets = [3, 0], sizes = [1, 64], strides = [1, 1]} : vector<9x64xf32> to vector<1x64xf32>
    %70 = vector.shape_cast %69 : vector<1x64xf32> to vector<64xf32>
    %71 = vector.shape_cast %70 : vector<64xf32> to vector<1x1x64xf32>
    %72 = vector.broadcast %71 : vector<1x1x64xf32> to vector<8x16x64xf32>
    %73 = arith.mulf %68, %72 : vector<8x16x64xf32>
    %74 = arith.addf %66, %73 : vector<8x16x64xf32>
    %75 = vector.extract_strided_slice %67 {offsets = [0, 1, 0], sizes = [8, 16, 64], strides = [1, 1, 1]} : vector<8x18x64xf32> to vector<8x16x64xf32>
    %76 = vector.extract_strided_slice %44 {offsets = [4, 0], sizes = [1, 64], strides = [1, 1]} : vector<9x64xf32> to vector<1x64xf32>
    %77 = vector.shape_cast %76 : vector<1x64xf32> to vector<64xf32>
    %78 = vector.shape_cast %77 : vector<64xf32> to vector<1x1x64xf32>
    %79 = vector.broadcast %78 : vector<1x1x64xf32> to vector<8x16x64xf32>
    %80 = arith.mulf %75, %79 : vector<8x16x64xf32>
    %81 = arith.addf %74, %80 : vector<8x16x64xf32>
    %82 = vector.extract_strided_slice %67 {offsets = [0, 2, 0], sizes = [8, 16, 64], strides = [1, 1, 1]} : vector<8x18x64xf32> to vector<8x16x64xf32>
    %83 = vector.extract_strided_slice %44 {offsets = [5, 0], sizes = [1, 64], strides = [1, 1]} : vector<9x64xf32> to vector<1x64xf32>
    %84 = vector.shape_cast %83 : vector<1x64xf32> to vector<64xf32>
    %85 = vector.shape_cast %84 : vector<64xf32> to vector<1x1x64xf32>
    %86 = vector.broadcast %85 : vector<1x1x64xf32> to vector<8x16x64xf32>
    %87 = arith.mulf %82, %86 : vector<8x16x64xf32>
    %88 = arith.addf %81, %87 : vector<8x16x64xf32>
    %c2_42 = arith.constant 2 : index
    %c0_43 = arith.constant 0 : index
    %c0_44 = arith.constant 0 : index
    %89 = vector.load %arg10[%c2_42, %c0_43, %c0_44] : memref<18x18x64xf32, #tpu.memory_space<vmem>>, vector<8x18x64xf32>
    %90 = vector.extract_strided_slice %89 {offsets = [0, 0, 0], sizes = [8, 16, 64], strides = [1, 1, 1]} : vector<8x18x64xf32> to vector<8x16x64xf32>
    %91 = vector.extract_strided_slice %44 {offsets = [6, 0], sizes = [1, 64], strides = [1, 1]} : vector<9x64xf32> to vector<1x64xf32>
    %92 = vector.shape_cast %91 : vector<1x64xf32> to vector<64xf32>
    %93 = vector.shape_cast %92 : vector<64xf32> to vector<1x1x64xf32>
    %94 = vector.broadcast %93 : vector<1x1x64xf32> to vector<8x16x64xf32>
    %95 = arith.mulf %90, %94 : vector<8x16x64xf32>
    %96 = arith.addf %88, %95 : vector<8x16x64xf32>
    %97 = vector.extract_strided_slice %89 {offsets = [0, 1, 0], sizes = [8, 16, 64], strides = [1, 1, 1]} : vector<8x18x64xf32> to vector<8x16x64xf32>
    %98 = vector.extract_strided_slice %44 {offsets = [7, 0], sizes = [1, 64], strides = [1, 1]} : vector<9x64xf32> to vector<1x64xf32>
    %99 = vector.shape_cast %98 : vector<1x64xf32> to vector<64xf32>
    %100 = vector.shape_cast %99 : vector<64xf32> to vector<1x1x64xf32>
    %101 = vector.broadcast %100 : vector<1x1x64xf32> to vector<8x16x64xf32>
    %102 = arith.mulf %97, %101 : vector<8x16x64xf32>
    %103 = arith.addf %96, %102 : vector<8x16x64xf32>
    %104 = vector.extract_strided_slice %89 {offsets = [0, 2, 0], sizes = [8, 16, 64], strides = [1, 1, 1]} : vector<8x18x64xf32> to vector<8x16x64xf32>
    %105 = vector.extract_strided_slice %44 {offsets = [8, 0], sizes = [1, 64], strides = [1, 1]} : vector<9x64xf32> to vector<1x64xf32>
    %106 = vector.shape_cast %105 : vector<1x64xf32> to vector<64xf32>
    %107 = vector.shape_cast %106 : vector<64xf32> to vector<1x1x64xf32>
    %108 = vector.broadcast %107 : vector<1x1x64xf32> to vector<8x16x64xf32>
    %109 = arith.mulf %104, %108 : vector<8x16x64xf32>
    %110 = arith.addf %103, %109 : vector<8x16x64xf32>
    %cst_45 = arith.constant 0.000000e+00 : f32
    %cst_46 = arith.constant 6.000000e+00 : f32
    %111 = vector.broadcast %cst_45 : f32 to vector<8x16x64xf32>
    %112 = arith.maximumf %111, %110 : vector<8x16x64xf32>
    %113 = vector.broadcast %cst_46 : f32 to vector<8x16x64xf32>
    %114 = arith.minimumf %113, %112 : vector<8x16x64xf32>
    %115 = vector.shape_cast %114 : vector<8x16x64xf32> to vector<128x64xf32>
    %cst_47 = arith.constant dense<0.000000e+00> : vector<128x64xf32>
    %116 = tpu.matmul %115, %45, %cst_47 {dimension_numbers = #tpu.dot_dimension_numbers<[1], [0], [0], [1], [0, 0, 1, 1], [], []>} : vector<128x64xf32>, vector<64x64xf32>, vector<128x64xf32> -> vector<128x64xf32>
    %c0_48 = arith.constant 0 : index
    %c0_49 = arith.constant 0 : index
    %c0_50 = arith.constant 0 : index
    %117 = vector.load %arg9[%c0_48, %c0_49, %c0_50] : memref<1x256x64xf32, #tpu.memory_space<vmem>>, vector<1x128x64xf32>
    %118 = vector.shape_cast %117 : vector<1x128x64xf32> to vector<128x64xf32>
    %119 = arith.addf %118, %116 : vector<128x64xf32>
    %c0_51 = arith.constant 0 : index
    %c0_52 = arith.constant 0 : index
    %c0_53 = arith.constant 0 : index
    %120 = vector.load %arg9[%c0_51, %c0_52, %c0_53] : memref<1x256x64xf32, #tpu.memory_space<vmem>>, vector<1x128x64xf32>
    %121 = vector.shape_cast %120 : vector<1x128x64xf32> to vector<128x64xf32>
    %122 = vector.shape_cast %119 : vector<128x64xf32> to vector<1x128x64xf32>
    tpu.vector_store %arg9[%c0_51, %c0_52, %c0_53], %122 {strides = array<i32>} : memref<1x256x64xf32, #tpu.memory_space<vmem>>, vector<1x128x64xf32>,
    %c8 = arith.constant 8 : index
    %c0_54 = arith.constant 0 : index
    %c0_55 = arith.constant 0 : index
    %123 = vector.load %arg10[%c8, %c0_54, %c0_55] : memref<18x18x64xf32, #tpu.memory_space<vmem>>, vector<8x18x64xf32>
    %124 = vector.extract_strided_slice %123 {offsets = [0, 0, 0], sizes = [8, 16, 64], strides = [1, 1, 1]} : vector<8x18x64xf32> to vector<8x16x64xf32>
    %125 = vector.extract_strided_slice %44 {offsets = [0, 0], sizes = [1, 64], strides = [1, 1]} : vector<9x64xf32> to vector<1x64xf32>
    %126 = vector.shape_cast %125 : vector<1x64xf32> to vector<64xf32>
    %127 = vector.shape_cast %126 : vector<64xf32> to vector<1x1x64xf32>
    %128 = vector.broadcast %127 : vector<1x1x64xf32> to vector<8x16x64xf32>
    %129 = arith.mulf %124, %128 : vector<8x16x64xf32>
    %130 = vector.extract_strided_slice %123 {offsets = [0, 1, 0], sizes = [8, 16, 64], strides = [1, 1, 1]} : vector<8x18x64xf32> to vector<8x16x64xf32>
    %131 = vector.extract_strided_slice %44 {offsets = [1, 0], sizes = [1, 64], strides = [1, 1]} : vector<9x64xf32> to vector<1x64xf32>
    %132 = vector.shape_cast %131 : vector<1x64xf32> to vector<64xf32>
    %133 = vector.shape_cast %132 : vector<64xf32> to vector<1x1x64xf32>
    %134 = vector.broadcast %133 : vector<1x1x64xf32> to vector<8x16x64xf32>
    %135 = arith.mulf %130, %134 : vector<8x16x64xf32>
    %136 = arith.addf %129, %135 : vector<8x16x64xf32>
    %137 = vector.extract_strided_slice %123 {offsets = [0, 2, 0], sizes = [8, 16, 64], strides = [1, 1, 1]} : vector<8x18x64xf32> to vector<8x16x64xf32>
    %138 = vector.extract_strided_slice %44 {offsets = [2, 0], sizes = [1, 64], strides = [1, 1]} : vector<9x64xf32> to vector<1x64xf32>
    %139 = vector.shape_cast %138 : vector<1x64xf32> to vector<64xf32>
    %140 = vector.shape_cast %139 : vector<64xf32> to vector<1x1x64xf32>
    %141 = vector.broadcast %140 : vector<1x1x64xf32> to vector<8x16x64xf32>
    %142 = arith.mulf %137, %141 : vector<8x16x64xf32>
    %143 = arith.addf %136, %142 : vector<8x16x64xf32>
    %c9_56 = arith.constant 9 : index
    %c0_57 = arith.constant 0 : index
    %c0_58 = arith.constant 0 : index
    %144 = vector.load %arg10[%c9_56, %c0_57, %c0_58] : memref<18x18x64xf32, #tpu.memory_space<vmem>>, vector<8x18x64xf32>
    %145 = vector.extract_strided_slice %144 {offsets = [0, 0, 0], sizes = [8, 16, 64], strides = [1, 1, 1]} : vector<8x18x64xf32> to vector<8x16x64xf32>
    %146 = vector.extract_strided_slice %44 {offsets = [3, 0], sizes = [1, 64], strides = [1, 1]} : vector<9x64xf32> to vector<1x64xf32>
    %147 = vector.shape_cast %146 : vector<1x64xf32> to vector<64xf32>
    %148 = vector.shape_cast %147 : vector<64xf32> to vector<1x1x64xf32>
    %149 = vector.broadcast %148 : vector<1x1x64xf32> to vector<8x16x64xf32>
    %150 = arith.mulf %145, %149 : vector<8x16x64xf32>
    %151 = arith.addf %143, %150 : vector<8x16x64xf32>
    %152 = vector.extract_strided_slice %144 {offsets = [0, 1, 0], sizes = [8, 16, 64], strides = [1, 1, 1]} : vector<8x18x64xf32> to vector<8x16x64xf32>
    %153 = vector.extract_strided_slice %44 {offsets = [4, 0], sizes = [1, 64], strides = [1, 1]} : vector<9x64xf32> to vector<1x64xf32>
    %154 = vector.shape_cast %153 : vector<1x64xf32> to vector<64xf32>
    %155 = vector.shape_cast %154 : vector<64xf32> to vector<1x1x64xf32>
    %156 = vector.broadcast %155 : vector<1x1x64xf32> to vector<8x16x64xf32>
    %157 = arith.mulf %152, %156 : vector<8x16x64xf32>
    %158 = arith.addf %151, %157 : vector<8x16x64xf32>
    %159 = vector.extract_strided_slice %144 {offsets = [0, 2, 0], sizes = [8, 16, 64], strides = [1, 1, 1]} : vector<8x18x64xf32> to vector<8x16x64xf32>
    %160 = vector.extract_strided_slice %44 {offsets = [5, 0], sizes = [1, 64], strides = [1, 1]} : vector<9x64xf32> to vector<1x64xf32>
    %161 = vector.shape_cast %160 : vector<1x64xf32> to vector<64xf32>
    %162 = vector.shape_cast %161 : vector<64xf32> to vector<1x1x64xf32>
    %163 = vector.broadcast %162 : vector<1x1x64xf32> to vector<8x16x64xf32>
    %164 = arith.mulf %159, %163 : vector<8x16x64xf32>
    %165 = arith.addf %158, %164 : vector<8x16x64xf32>
    %c10 = arith.constant 10 : index
    %c0_59 = arith.constant 0 : index
    %c0_60 = arith.constant 0 : index
    %166 = vector.load %arg10[%c10, %c0_59, %c0_60] : memref<18x18x64xf32, #tpu.memory_space<vmem>>, vector<8x18x64xf32>
    %167 = vector.extract_strided_slice %166 {offsets = [0, 0, 0], sizes = [8, 16, 64], strides = [1, 1, 1]} : vector<8x18x64xf32> to vector<8x16x64xf32>
    %168 = vector.extract_strided_slice %44 {offsets = [6, 0], sizes = [1, 64], strides = [1, 1]} : vector<9x64xf32> to vector<1x64xf32>
    %169 = vector.shape_cast %168 : vector<1x64xf32> to vector<64xf32>
    %170 = vector.shape_cast %169 : vector<64xf32> to vector<1x1x64xf32>
    %171 = vector.broadcast %170 : vector<1x1x64xf32> to vector<8x16x64xf32>
    %172 = arith.mulf %167, %171 : vector<8x16x64xf32>
    %173 = arith.addf %165, %172 : vector<8x16x64xf32>
    %174 = vector.extract_strided_slice %166 {offsets = [0, 1, 0], sizes = [8, 16, 64], strides = [1, 1, 1]} : vector<8x18x64xf32> to vector<8x16x64xf32>
    %175 = vector.extract_strided_slice %44 {offsets = [7, 0], sizes = [1, 64], strides = [1, 1]} : vector<9x64xf32> to vector<1x64xf32>
    %176 = vector.shape_cast %175 : vector<1x64xf32> to vector<64xf32>
    %177 = vector.shape_cast %176 : vector<64xf32> to vector<1x1x64xf32>
    %178 = vector.broadcast %177 : vector<1x1x64xf32> to vector<8x16x64xf32>
    %179 = arith.mulf %174, %178 : vector<8x16x64xf32>
    %180 = arith.addf %173, %179 : vector<8x16x64xf32>
    %181 = vector.extract_strided_slice %166 {offsets = [0, 2, 0], sizes = [8, 16, 64], strides = [1, 1, 1]} : vector<8x18x64xf32> to vector<8x16x64xf32>
    %182 = vector.extract_strided_slice %44 {offsets = [8, 0], sizes = [1, 64], strides = [1, 1]} : vector<9x64xf32> to vector<1x64xf32>
    %183 = vector.shape_cast %182 : vector<1x64xf32> to vector<64xf32>
    %184 = vector.shape_cast %183 : vector<64xf32> to vector<1x1x64xf32>
    %185 = vector.broadcast %184 : vector<1x1x64xf32> to vector<8x16x64xf32>
    %186 = arith.mulf %181, %185 : vector<8x16x64xf32>
    %187 = arith.addf %180, %186 : vector<8x16x64xf32>
    %cst_61 = arith.constant 0.000000e+00 : f32
    %cst_62 = arith.constant 6.000000e+00 : f32
    %188 = vector.broadcast %cst_61 : f32 to vector<8x16x64xf32>
    %189 = arith.maximumf %188, %187 : vector<8x16x64xf32>
    %190 = vector.broadcast %cst_62 : f32 to vector<8x16x64xf32>
    %191 = arith.minimumf %190, %189 : vector<8x16x64xf32>
    %192 = vector.shape_cast %191 : vector<8x16x64xf32> to vector<128x64xf32>
    %cst_63 = arith.constant dense<0.000000e+00> : vector<128x64xf32>
    %193 = tpu.matmul %192, %45, %cst_63 {dimension_numbers = #tpu.dot_dimension_numbers<[1], [0], [0], [1], [0, 0, 1, 1], [], []>} : vector<128x64xf32>, vector<64x64xf32>, vector<128x64xf32> -> vector<128x64xf32>
    %c0_64 = arith.constant 0 : index
    %c128_65 = arith.constant 128 : index
    %c0_66 = arith.constant 0 : index
    %194 = vector.load %arg9[%c0_64, %c128_65, %c0_66] : memref<1x256x64xf32, #tpu.memory_space<vmem>>, vector<1x128x64xf32>
    %195 = vector.shape_cast %194 : vector<1x128x64xf32> to vector<128x64xf32>
    %196 = arith.addf %195, %193 : vector<128x64xf32>
    %c0_67 = arith.constant 0 : index
    %c128_68 = arith.constant 128 : index
    %c0_69 = arith.constant 0 : index
    %197 = vector.load %arg9[%c0_67, %c128_68, %c0_69] : memref<1x256x64xf32, #tpu.memory_space<vmem>>, vector<1x128x64xf32>
    %198 = vector.shape_cast %197 : vector<1x128x64xf32> to vector<128x64xf32>
    %199 = vector.shape_cast %196 : vector<128x64xf32> to vector<1x128x64xf32>
    tpu.vector_store %arg9[%c0_67, %c128_68, %c0_69], %199 {strides = array<i32>} : memref<1x256x64xf32, #tpu.memory_space<vmem>>, vector<1x128x64xf32>,
    %c0_70 = arith.constant 0 : index
    %c0_71 = arith.constant 0 : index
    %200 = vector.load %arg6[%c0_70, %c0_71] : memref<64x128xf32, #tpu.memory_space<vmem>>, vector<64x128xf32>
    %c0_72 = arith.constant 0 : index
    %c0_73 = arith.constant 0 : index
    %c0_74 = arith.constant 0 : index
    %201 = vector.load %arg9[%c0_72, %c0_73, %c0_74] : memref<1x256x64xf32, #tpu.memory_space<vmem>>, vector<1x128x64xf32>
    %202 = vector.shape_cast %201 : vector<1x128x64xf32> to vector<128x64xf32>
    %cst_75 = arith.constant dense<0.000000e+00> : vector<128x128xf32>
    %203 = tpu.matmul %202, %200, %cst_75 {dimension_numbers = #tpu.dot_dimension_numbers<[1], [0], [0], [1], [0, 0, 1, 1], [], []>} : vector<128x64xf32>, vector<64x128xf32>, vector<128x128xf32> -> vector<128x128xf32>
    %cst_76 = arith.constant 0.000000e+00 : f32
    %cst_77 = arith.constant 6.000000e+00 : f32
    %204 = vector.broadcast %cst_76 : f32 to vector<128x128xf32>
    %205 = arith.maximumf %204, %203 : vector<128x128xf32>
    %206 = vector.broadcast %cst_77 : f32 to vector<128x128xf32>
    %207 = arith.minimumf %206, %205 : vector<128x128xf32>
    %208 = vector.shape_cast %207 : vector<128x128xf32> to vector<8x16x128xf32>
    %209 = vector.extract_strided_slice %208 {offsets = [0, 1, 0], sizes = [8, 1, 128], strides = [1, 1, 1]} : vector<8x16x128xf32> to vector<8x1x128xf32>
    %210 = vector.extract_strided_slice %208 {offsets = [0, 14, 0], sizes = [8, 1, 128], strides = [1, 1, 1]} : vector<8x16x128xf32> to vector<8x1x128xf32>
    %211 = tpu.concatenate %209, %208, %210 in 1 : vector<8x1x128xf32>, vector<8x16x128xf32>, vector<8x1x128xf32> -> vector<8x18x128xf32>
    %c1_78 = arith.constant 1 : index
    %c0_79 = arith.constant 0 : index
    %c0_80 = arith.constant 0 : index
    %212 = vector.load %arg11[%c1_78, %c0_79, %c0_80] : memref<18x18x128xf32, #tpu.memory_space<vmem>>, vector<8x18x128xf32>
    tpu.vector_store %arg11[%c1_78, %c0_79, %c0_80], %211 {strides = array<i32>} : memref<18x18x128xf32, #tpu.memory_space<vmem>>, vector<8x18x128xf32>,
    %c0_81 = arith.constant 0 : index
    %c128_82 = arith.constant 128 : index
    %c0_83 = arith.constant 0 : index
    %213 = vector.load %arg9[%c0_81, %c128_82, %c0_83] : memref<1x256x64xf32, #tpu.memory_space<vmem>>, vector<1x128x64xf32>
    %214 = vector.shape_cast %213 : vector<1x128x64xf32> to vector<128x64xf32>
    %cst_84 = arith.constant dense<0.000000e+00> : vector<128x128xf32>
    %215 = tpu.matmul %214, %200, %cst_84 {dimension_numbers = #tpu.dot_dimension_numbers<[1], [0], [0], [1], [0, 0, 1, 1], [], []>} : vector<128x64xf32>, vector<64x128xf32>, vector<128x128xf32> -> vector<128x128xf32>
    %cst_85 = arith.constant 0.000000e+00 : f32
    %cst_86 = arith.constant 6.000000e+00 : f32
    %216 = vector.broadcast %cst_85 : f32 to vector<128x128xf32>
    %217 = arith.maximumf %216, %215 : vector<128x128xf32>
    %218 = vector.broadcast %cst_86 : f32 to vector<128x128xf32>
    %219 = arith.minimumf %218, %217 : vector<128x128xf32>
    %220 = vector.shape_cast %219 : vector<128x128xf32> to vector<8x16x128xf32>
    %221 = vector.extract_strided_slice %220 {offsets = [0, 1, 0], sizes = [8, 1, 128], strides = [1, 1, 1]} : vector<8x16x128xf32> to vector<8x1x128xf32>
    %222 = vector.extract_strided_slice %220 {offsets = [0, 14, 0], sizes = [8, 1, 128], strides = [1, 1, 1]} : vector<8x16x128xf32> to vector<8x1x128xf32>
    %223 = tpu.concatenate %221, %220, %222 in 1 : vector<8x1x128xf32>, vector<8x16x128xf32>, vector<8x1x128xf32> -> vector<8x18x128xf32>
    %c9_87 = arith.constant 9 : index
    %c0_88 = arith.constant 0 : index
    %c0_89 = arith.constant 0 : index
    %224 = vector.load %arg11[%c9_87, %c0_88, %c0_89] : memref<18x18x128xf32, #tpu.memory_space<vmem>>, vector<8x18x128xf32>
    tpu.vector_store %arg11[%c9_87, %c0_88, %c0_89], %223 {strides = array<i32>} : memref<18x18x128xf32, #tpu.memory_space<vmem>>, vector<8x18x128xf32>,
    %c2_90 = arith.constant 2 : index
    %c0_91 = arith.constant 0 : index
    %c0_92 = arith.constant 0 : index
    %225 = vector.load %arg11[%c2_90, %c0_91, %c0_92] : memref<18x18x128xf32, #tpu.memory_space<vmem>>, vector<1x18x128xf32>
    %c0_93 = arith.constant 0 : index
    %c0_94 = arith.constant 0 : index
    %c0_95 = arith.constant 0 : index
    %226 = vector.load %arg11[%c0_93, %c0_94, %c0_95] : memref<18x18x128xf32, #tpu.memory_space<vmem>>, vector<1x18x128xf32>
    tpu.vector_store %arg11[%c0_93, %c0_94, %c0_95], %225 {strides = array<i32>} : memref<18x18x128xf32, #tpu.memory_space<vmem>>, vector<1x18x128xf32>,
    %c15_96 = arith.constant 15 : index
    %c0_97 = arith.constant 0 : index
    %c0_98 = arith.constant 0 : index
    %227 = vector.load %arg11[%c15_96, %c0_97, %c0_98] : memref<18x18x128xf32, #tpu.memory_space<vmem>>, vector<1x18x128xf32>
    %c17_99 = arith.constant 17 : index
    %c0_100 = arith.constant 0 : index
    %c0_101 = arith.constant 0 : index
    %228 = vector.load %arg11[%c17_99, %c0_100, %c0_101] : memref<18x18x128xf32, #tpu.memory_space<vmem>>, vector<1x18x128xf32>
    tpu.vector_store %arg11[%c17_99, %c0_100, %c0_101], %227 {strides = array<i32>} : memref<18x18x128xf32, #tpu.memory_space<vmem>>, vector<1x18x128xf32>,
    %c0_102 = arith.constant 0 : index
    %c0_103 = arith.constant 0 : index
    %229 = vector.load %arg7[%c0_102, %c0_103] : memref<9x128xf32, #tpu.memory_space<vmem>>, vector<9x128xf32>
    %c0_104 = arith.constant 0 : index
    %c0_105 = arith.constant 0 : index
    %230 = vector.load %arg8[%c0_104, %c0_105] : memref<128x64xf32, #tpu.memory_space<vmem>>, vector<128x64xf32>
    %c0_106 = arith.constant 0 : index
    %c0_107 = arith.constant 0 : index
    %c0_108 = arith.constant 0 : index
    %231 = vector.load %arg11[%c0_106, %c0_107, %c0_108] : memref<18x18x128xf32, #tpu.memory_space<vmem>>, vector<8x18x128xf32>
    %232 = vector.extract_strided_slice %231 {offsets = [0, 0, 0], sizes = [8, 16, 128], strides = [1, 1, 1]} : vector<8x18x128xf32> to vector<8x16x128xf32>
    %233 = vector.extract_strided_slice %229 {offsets = [0, 0], sizes = [1, 128], strides = [1, 1]} : vector<9x128xf32> to vector<1x128xf32>
    %234 = vector.shape_cast %233 : vector<1x128xf32> to vector<128xf32>
    %235 = vector.shape_cast %234 : vector<128xf32> to vector<1x1x128xf32>
    %236 = vector.broadcast %235 : vector<1x1x128xf32> to vector<8x16x128xf32>
    %237 = arith.mulf %232, %236 : vector<8x16x128xf32>
    %238 = vector.extract_strided_slice %231 {offsets = [0, 1, 0], sizes = [8, 16, 128], strides = [1, 1, 1]} : vector<8x18x128xf32> to vector<8x16x128xf32>
    %239 = vector.extract_strided_slice %229 {offsets = [1, 0], sizes = [1, 128], strides = [1, 1]} : vector<9x128xf32> to vector<1x128xf32>
    %240 = vector.shape_cast %239 : vector<1x128xf32> to vector<128xf32>
    %241 = vector.shape_cast %240 : vector<128xf32> to vector<1x1x128xf32>
    %242 = vector.broadcast %241 : vector<1x1x128xf32> to vector<8x16x128xf32>
    %243 = arith.mulf %238, %242 : vector<8x16x128xf32>
    %244 = arith.addf %237, %243 : vector<8x16x128xf32>
    %245 = vector.extract_strided_slice %231 {offsets = [0, 2, 0], sizes = [8, 16, 128], strides = [1, 1, 1]} : vector<8x18x128xf32> to vector<8x16x128xf32>
    %246 = vector.extract_strided_slice %229 {offsets = [2, 0], sizes = [1, 128], strides = [1, 1]} : vector<9x128xf32> to vector<1x128xf32>
    %247 = vector.shape_cast %246 : vector<1x128xf32> to vector<128xf32>
    %248 = vector.shape_cast %247 : vector<128xf32> to vector<1x1x128xf32>
    %249 = vector.broadcast %248 : vector<1x1x128xf32> to vector<8x16x128xf32>
    %250 = arith.mulf %245, %249 : vector<8x16x128xf32>
    %251 = arith.addf %244, %250 : vector<8x16x128xf32>
    %c1_109 = arith.constant 1 : index
    %c0_110 = arith.constant 0 : index
    %c0_111 = arith.constant 0 : index
    %252 = vector.load %arg11[%c1_109, %c0_110, %c0_111] : memref<18x18x128xf32, #tpu.memory_space<vmem>>, vector<8x18x128xf32>
    %253 = vector.extract_strided_slice %252 {offsets = [0, 0, 0], sizes = [8, 16, 128], strides = [1, 1, 1]} : vector<8x18x128xf32> to vector<8x16x128xf32>
    %254 = vector.extract_strided_slice %229 {offsets = [3, 0], sizes = [1, 128], strides = [1, 1]} : vector<9x128xf32> to vector<1x128xf32>
    %255 = vector.shape_cast %254 : vector<1x128xf32> to vector<128xf32>
    %256 = vector.shape_cast %255 : vector<128xf32> to vector<1x1x128xf32>
    %257 = vector.broadcast %256 : vector<1x1x128xf32> to vector<8x16x128xf32>
    %258 = arith.mulf %253, %257 : vector<8x16x128xf32>
    %259 = arith.addf %251, %258 : vector<8x16x128xf32>
    %260 = vector.extract_strided_slice %252 {offsets = [0, 1, 0], sizes = [8, 16, 128], strides = [1, 1, 1]} : vector<8x18x128xf32> to vector<8x16x128xf32>
    %261 = vector.extract_strided_slice %229 {offsets = [4, 0], sizes = [1, 128], strides = [1, 1]} : vector<9x128xf32> to vector<1x128xf32>
    %262 = vector.shape_cast %261 : vector<1x128xf32> to vector<128xf32>
    %263 = vector.shape_cast %262 : vector<128xf32> to vector<1x1x128xf32>
    %264 = vector.broadcast %263 : vector<1x1x128xf32> to vector<8x16x128xf32>
    %265 = arith.mulf %260, %264 : vector<8x16x128xf32>
    %266 = arith.addf %259, %265 : vector<8x16x128xf32>
    %267 = vector.extract_strided_slice %252 {offsets = [0, 2, 0], sizes = [8, 16, 128], strides = [1, 1, 1]} : vector<8x18x128xf32> to vector<8x16x128xf32>
    %268 = vector.extract_strided_slice %229 {offsets = [5, 0], sizes = [1, 128], strides = [1, 1]} : vector<9x128xf32> to vector<1x128xf32>
    %269 = vector.shape_cast %268 : vector<1x128xf32> to vector<128xf32>
    %270 = vector.shape_cast %269 : vector<128xf32> to vector<1x1x128xf32>
    %271 = vector.broadcast %270 : vector<1x1x128xf32> to vector<8x16x128xf32>
    %272 = arith.mulf %267, %271 : vector<8x16x128xf32>
    %273 = arith.addf %266, %272 : vector<8x16x128xf32>
    %c2_112 = arith.constant 2 : index
    %c0_113 = arith.constant 0 : index
    %c0_114 = arith.constant 0 : index
    %274 = vector.load %arg11[%c2_112, %c0_113, %c0_114] : memref<18x18x128xf32, #tpu.memory_space<vmem>>, vector<8x18x128xf32>
    %275 = vector.extract_strided_slice %274 {offsets = [0, 0, 0], sizes = [8, 16, 128], strides = [1, 1, 1]} : vector<8x18x128xf32> to vector<8x16x128xf32>
    %276 = vector.extract_strided_slice %229 {offsets = [6, 0], sizes = [1, 128], strides = [1, 1]} : vector<9x128xf32> to vector<1x128xf32>
    %277 = vector.shape_cast %276 : vector<1x128xf32> to vector<128xf32>
    %278 = vector.shape_cast %277 : vector<128xf32> to vector<1x1x128xf32>
    %279 = vector.broadcast %278 : vector<1x1x128xf32> to vector<8x16x128xf32>
    %280 = arith.mulf %275, %279 : vector<8x16x128xf32>
    %281 = arith.addf %273, %280 : vector<8x16x128xf32>
    %282 = vector.extract_strided_slice %274 {offsets = [0, 1, 0], sizes = [8, 16, 128], strides = [1, 1, 1]} : vector<8x18x128xf32> to vector<8x16x128xf32>
    %283 = vector.extract_strided_slice %229 {offsets = [7, 0], sizes = [1, 128], strides = [1, 1]} : vector<9x128xf32> to vector<1x128xf32>
    %284 = vector.shape_cast %283 : vector<1x128xf32> to vector<128xf32>
    %285 = vector.shape_cast %284 : vector<128xf32> to vector<1x1x128xf32>
    %286 = vector.broadcast %285 : vector<1x1x128xf32> to vector<8x16x128xf32>
    %287 = arith.mulf %282, %286 : vector<8x16x128xf32>
    %288 = arith.addf %281, %287 : vector<8x16x128xf32>
    %289 = vector.extract_strided_slice %274 {offsets = [0, 2, 0], sizes = [8, 16, 128], strides = [1, 1, 1]} : vector<8x18x128xf32> to vector<8x16x128xf32>
    %290 = vector.extract_strided_slice %229 {offsets = [8, 0], sizes = [1, 128], strides = [1, 1]} : vector<9x128xf32> to vector<1x128xf32>
    %291 = vector.shape_cast %290 : vector<1x128xf32> to vector<128xf32>
    %292 = vector.shape_cast %291 : vector<128xf32> to vector<1x1x128xf32>
    %293 = vector.broadcast %292 : vector<1x1x128xf32> to vector<8x16x128xf32>
    %294 = arith.mulf %289, %293 : vector<8x16x128xf32>
    %295 = arith.addf %288, %294 : vector<8x16x128xf32>
    %cst_115 = arith.constant 0.000000e+00 : f32
    %cst_116 = arith.constant 6.000000e+00 : f32
    %296 = vector.broadcast %cst_115 : f32 to vector<8x16x128xf32>
    %297 = arith.maximumf %296, %295 : vector<8x16x128xf32>
    %298 = vector.broadcast %cst_116 : f32 to vector<8x16x128xf32>
    %299 = arith.minimumf %298, %297 : vector<8x16x128xf32>
    %300 = vector.shape_cast %299 : vector<8x16x128xf32> to vector<128x128xf32>
    %cst_117 = arith.constant dense<0.000000e+00> : vector<128x64xf32>
    %301 = tpu.matmul %300, %230, %cst_117 {dimension_numbers = #tpu.dot_dimension_numbers<[1], [0], [0], [1], [0, 0, 1, 1], [], []>} : vector<128x128xf32>, vector<128x64xf32>, vector<128x64xf32> -> vector<128x64xf32>
    %c0_118 = arith.constant 0 : index
    %c0_119 = arith.constant 0 : index
    %c0_120 = arith.constant 0 : index
    %302 = vector.load %arg9[%c0_118, %c0_119, %c0_120] : memref<1x256x64xf32, #tpu.memory_space<vmem>>, vector<1x128x64xf32>
    %303 = vector.shape_cast %302 : vector<1x128x64xf32> to vector<128x64xf32>
    %304 = vector.extract_strided_slice %303 {offsets = [0, 0], sizes = [128, 32], strides = [1, 1]} : vector<128x64xf32> to vector<128x32xf32>
    %305 = vector.extract_strided_slice %301 {offsets = [0, 0], sizes = [128, 32], strides = [1, 1]} : vector<128x64xf32> to vector<128x32xf32>
    %306 = math.exp %305 : vector<128x32xf32>
    %307 = arith.mulf %304, %306 : vector<128x32xf32>
    %308 = vector.extract_strided_slice %301 {offsets = [0, 32], sizes = [128, 32], strides = [1, 1]} : vector<128x64xf32> to vector<128x32xf32>
    %309 = arith.addf %307, %308 : vector<128x32xf32>
    %c0_121 = arith.constant 0 : index
    %c0_122 = arith.constant 0 : index
    %c0_123 = arith.constant 0 : index
    %310 = vector.load %arg9[%c0_121, %c0_122, %c0_123] : memref<1x256x64xf32, #tpu.memory_space<vmem>>, vector<1x128x32xf32>
    %311 = vector.shape_cast %310 : vector<1x128x32xf32> to vector<128x32xf32>
    %312 = vector.shape_cast %309 : vector<128x32xf32> to vector<1x128x32xf32>
    tpu.vector_store %arg9[%c0_121, %c0_122, %c0_123], %312 {strides = array<i32>} : memref<1x256x64xf32, #tpu.memory_space<vmem>>, vector<1x128x32xf32>,
    %c8_124 = arith.constant 8 : index
    %c0_125 = arith.constant 0 : index
    %c0_126 = arith.constant 0 : index
    %313 = vector.load %arg11[%c8_124, %c0_125, %c0_126] : memref<18x18x128xf32, #tpu.memory_space<vmem>>, vector<8x18x128xf32>
    %314 = vector.extract_strided_slice %313 {offsets = [0, 0, 0], sizes = [8, 16, 128], strides = [1, 1, 1]} : vector<8x18x128xf32> to vector<8x16x128xf32>
    %315 = vector.extract_strided_slice %229 {offsets = [0, 0], sizes = [1, 128], strides = [1, 1]} : vector<9x128xf32> to vector<1x128xf32>
    %316 = vector.shape_cast %315 : vector<1x128xf32> to vector<128xf32>
    %317 = vector.shape_cast %316 : vector<128xf32> to vector<1x1x128xf32>
    %318 = vector.broadcast %317 : vector<1x1x128xf32> to vector<8x16x128xf32>
    %319 = arith.mulf %314, %318 : vector<8x16x128xf32>
    %320 = vector.extract_strided_slice %313 {offsets = [0, 1, 0], sizes = [8, 16, 128], strides = [1, 1, 1]} : vector<8x18x128xf32> to vector<8x16x128xf32>
    %321 = vector.extract_strided_slice %229 {offsets = [1, 0], sizes = [1, 128], strides = [1, 1]} : vector<9x128xf32> to vector<1x128xf32>
    %322 = vector.shape_cast %321 : vector<1x128xf32> to vector<128xf32>
    %323 = vector.shape_cast %322 : vector<128xf32> to vector<1x1x128xf32>
    %324 = vector.broadcast %323 : vector<1x1x128xf32> to vector<8x16x128xf32>
    %325 = arith.mulf %320, %324 : vector<8x16x128xf32>
    %326 = arith.addf %319, %325 : vector<8x16x128xf32>
    %327 = vector.extract_strided_slice %313 {offsets = [0, 2, 0], sizes = [8, 16, 128], strides = [1, 1, 1]} : vector<8x18x128xf32> to vector<8x16x128xf32>
    %328 = vector.extract_strided_slice %229 {offsets = [2, 0], sizes = [1, 128], strides = [1, 1]} : vector<9x128xf32> to vector<1x128xf32>
    %329 = vector.shape_cast %328 : vector<1x128xf32> to vector<128xf32>
    %330 = vector.shape_cast %329 : vector<128xf32> to vector<1x1x128xf32>
    %331 = vector.broadcast %330 : vector<1x1x128xf32> to vector<8x16x128xf32>
    %332 = arith.mulf %327, %331 : vector<8x16x128xf32>
    %333 = arith.addf %326, %332 : vector<8x16x128xf32>
    %c9_127 = arith.constant 9 : index
    %c0_128 = arith.constant 0 : index
    %c0_129 = arith.constant 0 : index
    %334 = vector.load %arg11[%c9_127, %c0_128, %c0_129] : memref<18x18x128xf32, #tpu.memory_space<vmem>>, vector<8x18x128xf32>
    %335 = vector.extract_strided_slice %334 {offsets = [0, 0, 0], sizes = [8, 16, 128], strides = [1, 1, 1]} : vector<8x18x128xf32> to vector<8x16x128xf32>
    %336 = vector.extract_strided_slice %229 {offsets = [3, 0], sizes = [1, 128], strides = [1, 1]} : vector<9x128xf32> to vector<1x128xf32>
    %337 = vector.shape_cast %336 : vector<1x128xf32> to vector<128xf32>
    %338 = vector.shape_cast %337 : vector<128xf32> to vector<1x1x128xf32>
    %339 = vector.broadcast %338 : vector<1x1x128xf32> to vector<8x16x128xf32>
    %340 = arith.mulf %335, %339 : vector<8x16x128xf32>
    %341 = arith.addf %333, %340 : vector<8x16x128xf32>
    %342 = vector.extract_strided_slice %334 {offsets = [0, 1, 0], sizes = [8, 16, 128], strides = [1, 1, 1]} : vector<8x18x128xf32> to vector<8x16x128xf32>
    %343 = vector.extract_strided_slice %229 {offsets = [4, 0], sizes = [1, 128], strides = [1, 1]} : vector<9x128xf32> to vector<1x128xf32>
    %344 = vector.shape_cast %343 : vector<1x128xf32> to vector<128xf32>
    %345 = vector.shape_cast %344 : vector<128xf32> to vector<1x1x128xf32>
    %346 = vector.broadcast %345 : vector<1x1x128xf32> to vector<8x16x128xf32>
    %347 = arith.mulf %342, %346 : vector<8x16x128xf32>
    %348 = arith.addf %341, %347 : vector<8x16x128xf32>
    %349 = vector.extract_strided_slice %334 {offsets = [0, 2, 0], sizes = [8, 16, 128], strides = [1, 1, 1]} : vector<8x18x128xf32> to vector<8x16x128xf32>
    %350 = vector.extract_strided_slice %229 {offsets = [5, 0], sizes = [1, 128], strides = [1, 1]} : vector<9x128xf32> to vector<1x128xf32>
    %351 = vector.shape_cast %350 : vector<1x128xf32> to vector<128xf32>
    %352 = vector.shape_cast %351 : vector<128xf32> to vector<1x1x128xf32>
    %353 = vector.broadcast %352 : vector<1x1x128xf32> to vector<8x16x128xf32>
    %354 = arith.mulf %349, %353 : vector<8x16x128xf32>
    %355 = arith.addf %348, %354 : vector<8x16x128xf32>
    %c10_130 = arith.constant 10 : index
    %c0_131 = arith.constant 0 : index
    %c0_132 = arith.constant 0 : index
    %356 = vector.load %arg11[%c10_130, %c0_131, %c0_132] : memref<18x18x128xf32, #tpu.memory_space<vmem>>, vector<8x18x128xf32>
    %357 = vector.extract_strided_slice %356 {offsets = [0, 0, 0], sizes = [8, 16, 128], strides = [1, 1, 1]} : vector<8x18x128xf32> to vector<8x16x128xf32>
    %358 = vector.extract_strided_slice %229 {offsets = [6, 0], sizes = [1, 128], strides = [1, 1]} : vector<9x128xf32> to vector<1x128xf32>
    %359 = vector.shape_cast %358 : vector<1x128xf32> to vector<128xf32>
    %360 = vector.shape_cast %359 : vector<128xf32> to vector<1x1x128xf32>
    %361 = vector.broadcast %360 : vector<1x1x128xf32> to vector<8x16x128xf32>
    %362 = arith.mulf %357, %361 : vector<8x16x128xf32>
    %363 = arith.addf %355, %362 : vector<8x16x128xf32>
    %364 = vector.extract_strided_slice %356 {offsets = [0, 1, 0], sizes = [8, 16, 128], strides = [1, 1, 1]} : vector<8x18x128xf32> to vector<8x16x128xf32>
    %365 = vector.extract_strided_slice %229 {offsets = [7, 0], sizes = [1, 128], strides = [1, 1]} : vector<9x128xf32> to vector<1x128xf32>
    %366 = vector.shape_cast %365 : vector<1x128xf32> to vector<128xf32>
    %367 = vector.shape_cast %366 : vector<128xf32> to vector<1x1x128xf32>
    %368 = vector.broadcast %367 : vector<1x1x128xf32> to vector<8x16x128xf32>
    %369 = arith.mulf %364, %368 : vector<8x16x128xf32>
    %370 = arith.addf %363, %369 : vector<8x16x128xf32>
    %371 = vector.extract_strided_slice %356 {offsets = [0, 2, 0], sizes = [8, 16, 128], strides = [1, 1, 1]} : vector<8x18x128xf32> to vector<8x16x128xf32>
    %372 = vector.extract_strided_slice %229 {offsets = [8, 0], sizes = [1, 128], strides = [1, 1]} : vector<9x128xf32> to vector<1x128xf32>
    %373 = vector.shape_cast %372 : vector<1x128xf32> to vector<128xf32>
    %374 = vector.shape_cast %373 : vector<128xf32> to vector<1x1x128xf32>
    %375 = vector.broadcast %374 : vector<1x1x128xf32> to vector<8x16x128xf32>
    %376 = arith.mulf %371, %375 : vector<8x16x128xf32>
    %377 = arith.addf %370, %376 : vector<8x16x128xf32>
    %cst_133 = arith.constant 0.000000e+00 : f32
    %cst_134 = arith.constant 6.000000e+00 : f32
    %378 = vector.broadcast %cst_133 : f32 to vector<8x16x128xf32>
    %379 = arith.maximumf %378, %377 : vector<8x16x128xf32>
    %380 = vector.broadcast %cst_134 : f32 to vector<8x16x128xf32>
    %381 = arith.minimumf %380, %379 : vector<8x16x128xf32>
    %382 = vector.shape_cast %381 : vector<8x16x128xf32> to vector<128x128xf32>
    %cst_135 = arith.constant dense<0.000000e+00> : vector<128x64xf32>
    %383 = tpu.matmul %382, %230, %cst_135 {dimension_numbers = #tpu.dot_dimension_numbers<[1], [0], [0], [1], [0, 0, 1, 1], [], []>} : vector<128x128xf32>, vector<128x64xf32>, vector<128x64xf32> -> vector<128x64xf32>
    %c0_136 = arith.constant 0 : index
    %c128_137 = arith.constant 128 : index
    %c0_138 = arith.constant 0 : index
    %384 = vector.load %arg9[%c0_136, %c128_137, %c0_138] : memref<1x256x64xf32, #tpu.memory_space<vmem>>, vector<1x128x64xf32>
    %385 = vector.shape_cast %384 : vector<1x128x64xf32> to vector<128x64xf32>
    %386 = vector.extract_strided_slice %385 {offsets = [0, 0], sizes = [128, 32], strides = [1, 1]} : vector<128x64xf32> to vector<128x32xf32>
    %387 = vector.extract_strided_slice %383 {offsets = [0, 0], sizes = [128, 32], strides = [1, 1]} : vector<128x64xf32> to vector<128x32xf32>
    %388 = math.exp %387 : vector<128x32xf32>
    %389 = arith.mulf %386, %388 : vector<128x32xf32>
    %390 = vector.extract_strided_slice %383 {offsets = [0, 32], sizes = [128, 32], strides = [1, 1]} : vector<128x64xf32> to vector<128x32xf32>
    %391 = arith.addf %389, %390 : vector<128x32xf32>
    %c0_139 = arith.constant 0 : index
    %c128_140 = arith.constant 128 : index
    %c0_141 = arith.constant 0 : index
    %392 = vector.load %arg9[%c0_139, %c128_140, %c0_141] : memref<1x256x64xf32, #tpu.memory_space<vmem>>, vector<1x128x32xf32>
    %393 = vector.shape_cast %392 : vector<1x128x32xf32> to vector<128x32xf32>
    %394 = vector.shape_cast %391 : vector<128x32xf32> to vector<1x128x32xf32>
    tpu.vector_store %arg9[%c0_139, %c128_140, %c0_141], %394 {strides = array<i32>} : memref<1x256x64xf32, #tpu.memory_space<vmem>>, vector<1x128x32xf32>,
    return
  }
  func.func @transform_0(%arg0: i32) -> (i32, i32, i32) {
    %c0_i32 = arith.constant 0 : i32
    %c0_i32_0 = arith.constant 0 : i32
    %c0_i32_1 = arith.constant 0 : i32
    return %arg0, %c0_i32, %c0_i32_0 : i32, i32, i32
  }
  func.func @transform_1(%arg0: i32) -> (i32, i32) {
    %c0_i32 = arith.constant 0 : i32
    %c0_i32_0 = arith.constant 0 : i32
    %c0_i32_1 = arith.constant 0 : i32
    return %c0_i32, %c0_i32_0 : i32, i32
  }
  func.func @transform_2(%arg0: i32) -> (i32, i32) {
    %c0_i32 = arith.constant 0 : i32
    %c0_i32_0 = arith.constant 0 : i32
    %c0_i32_1 = arith.constant 0 : i32
    return %c0_i32, %c0_i32_0 : i32, i32
  }
  func.func @transform_3(%arg0: i32) -> (i32, i32) {
    %c0_i32 = arith.constant 0 : i32
    %c0_i32_0 = arith.constant 0 : i32
    %c0_i32_1 = arith.constant 0 : i32
    return %c0_i32, %c0_i32_0 : i32, i32
  }
  func.func @transform_4(%arg0: i32) -> (i32, i32) {
    %c0_i32 = arith.constant 0 : i32
    %c0_i32_0 = arith.constant 0 : i32
    %c0_i32_1 = arith.constant 0 : i32
    return %c0_i32, %c0_i32_0 : i32, i32
  }
  func.func @transform_5(%arg0: i32) -> (i32, i32) {
    %c0_i32 = arith.constant 0 : i32
    %c0_i32_0 = arith.constant 0 : i32
    %c0_i32_1 = arith.constant 0 : i32
    return %c0_i32, %c0_i32_0 : i32, i32
  }
  func.func @transform_6(%arg0: i32) -> (i32, i32) {
    %c0_i32 = arith.constant 0 : i32
    %c0_i32_0 = arith.constant 0 : i32
    %c0_i32_1 = arith.constant 0 : i32
    return %c0_i32, %c0_i32_0 : i32, i32
  }
  func.func @transform_7(%arg0: i32) -> (i32, i32) {
    %c0_i32 = arith.constant 0 : i32
    %c0_i32_0 = arith.constant 0 : i32
    %c0_i32_1 = arith.constant 0 : i32
    return %c0_i32, %c0_i32_0 : i32, i32
  }
  func.func @transform_8(%arg0: i32) -> (i32, i32, i32) {
    %c0_i32 = arith.constant 0 : i32
    %c0_i32_0 = arith.constant 0 : i32
    %c0_i32_1 = arith.constant 0 : i32
    return %arg0, %c0_i32, %c0_i32_0 : i32, i32, i32
  }
}

</mosaic_0001>

<llo_original>
// kernel: detail_node_forward.1
$region0: #{detail_node_forward.1}
  #allocation0 [shape = 'u32[]', space=smem, size = 0x4, offset = 0x4, fixed_abs, tag = 'smem constant byte address 0x4 - core index']
  #allocation1 [shape = 'u32[144,128]{1,0:T(1,128)}', space=vmem, size = 0x12000, scoped, tag = 'internal scratch']
  #allocation2 [shape = 'f32[18,18,64]{2,1,0:T(8,128)}', space=vmem, size = 0x36000, scoped, tag = 'scratch operand']
  #allocation3 [shape = 'f32[18,18,128]{2,1,0:T(8,128)}', space=vmem, size = 0x36000, scoped, tag = 'scratch operand']
  %s0 = inlined_call_operand.vmem [shape: f32[2,256,64], index: 0, kind: input, shape index: {}]
  %s1 = inlined_call_operand.vmem [shape: f32[64,128], index: 1, kind: input, shape index: {}]
  %s2 = inlined_call_operand.vmem [shape: f32[1,128], index: 2, kind: input, shape index: {}]
  %s3 = inlined_call_operand.vmem [shape: f32[9,64], index: 3, kind: input, shape index: {}]
  %s4 = inlined_call_operand.vmem [shape: f32[64,64], index: 4, kind: input, shape index: {}]
  %s5 = inlined_call_operand.vmem [shape: f32[64,128], index: 5, kind: input, shape index: {}]
  %s6 = inlined_call_operand.vmem [shape: f32[9,128], index: 6, kind: input, shape index: {}]
  %s7 = inlined_call_operand.vmem [shape: f32[128,64], index: 7, kind: input, shape index: {}]
  %s8 = inlined_call_operand.vmem [shape: f32[2,256,64], index: 8, kind: output, shape index: {}]
  %s9 = sld [smem:[#allocation0]]
  $region65: #{detail_node_forward.1} parent=0
    _
  %s11 = ssub.s32 1, %s9
  %s12 = scalar_select 0, %s11, %s9
  loop: start=0, step=1, limit=4
  $region2: #{detail_node_forward.1} parent=0 // loop_pre_header
    _
  $region3: #{detail_node_forward.1} parent=0 // loop_header
    %s14 = sphi 0, %s18
    %p15 = scmp.ge.s32.totalorder %s14, 4
    %s24 = sphi 0, %s26
    %s27 = sphi 0, %s24
    %s28 = sphi 0, %s27
    %s44 = sphi 0, %s28
    %s48 = sphi 0, %s48
    %s50 = sphi 0, %s48
    %s51 = sphi 0, %s50
    %s65 = sphi 0, %s51
    %s69 = sphi 0, %s69
    %s71 = sphi 0, %s69
    %s72 = sphi 0, %s71
    %s86 = sphi 0, %s72
    %s90 = sphi 0, %s90
    %s92 = sphi 0, %s90
    %s93 = sphi 0, %s92
    %s107 = sphi 0, %s93
    %s111 = sphi 0, %s111
    %s113 = sphi 0, %s111
    %s114 = sphi 0, %s113
    %s128 = sphi 0, %s114
    %s132 = sphi 0, %s132
    %s134 = sphi 0, %s132
    %s135 = sphi 0, %s134
    %s149 = sphi 0, %s135
    %s153 = sphi 0, %s153
    %s155 = sphi 0, %s153
    %s156 = sphi 0, %s155
    %s170 = sphi 0, %s156
    %s174 = sphi 0, %s174
    %s176 = sphi 0, %s174
    %s177 = sphi 0, %s176
    %s191 = sphi 0, %s177
    %s197 = sphi 0, %s199
    %s200 = sphi 0, %s197
    %s201 = sphi 0, %s200
    %s217 = sphi 0, %s201
  $region4: #{detail_node_forward.1} parent=0 // loop_header_branch
    %17 = sbr.rel (%p15) target = $region8
  $region5: #{detail_node_forward.1} parent=0 // loop_body
    %s19 = ssub.s32 %s14, 1
    %s20 = ssub.s32 %s14, 2
    %s21 = sadd.s32 %s14, 1
    %s22 = ssub.s32 %s14, %s21
    %p23 = scmp.eq.s32.totalorder %s22, 0
    %s25 = sadd.s32 %s24, 1
    %s26 = scalar_select %p23, %s24, %s25
    %p29 = pneg %p23
    %p30 = scmp.eq.s32.totalorder %s14, 1
    %p31 = por %p29, %p30
    %p32 = scmp.ne.s32.totalorder %s24, %s27
    %p33 = scmp.eq.s32.totalorder %s14, 0
    %p34 = por %p32, %p33
    %p35 = scmp.ne.s32.totalorder %s24, %s27
    %p36 = scmp.eq.s32.totalorder %s19, 1
    %p37 = por %p35, %p36
    %p38 = scmp.ne.s32.totalorder %s27, %s28
    %p39 = scmp.eq.s32.totalorder %s19, 0
    %p40 = por %p38, %p39
    %p41 = scmp.ne.s32.totalorder %s27, %s28
    %p42 = scmp.eq.s32.totalorder %s20, 1
    %p43 = por %p41, %p42
    %p45 = scmp.ne.s32.totalorder %s28, %s44
    %p46 = scmp.eq.s32.totalorder %s20, 0
    %p47 = por %p45, %p46
    %s49 = sadd.s32 %s48, 1
    %p52 = scmp.eq.s32.totalorder %s14, 1
    %p53 = scmp.ne.s32.totalorder %s48, %s50
    %p54 = scmp.eq.s32.totalorder %s14, 0
    %p55 = por %p53, %p54
    %p56 = scmp.ne.s32.totalorder %s48, %s50
    %p57 = scmp.eq.s32.totalorder %s19, 1
    %p58 = por %p56, %p57
    %p59 = scmp.ne.s32.totalorder %s50, %s51
    %p60 = scmp.eq.s32.totalorder %s19, 0
    %p61 = por %p59, %p60
    %p62 = scmp.ne.s32.totalorder %s50, %s51
    %p63 = scmp.eq.s32.totalorder %s20, 1
    %p64 = por %p62, %p63
    %p66 = scmp.ne.s32.totalorder %s51, %s65
    %p67 = scmp.eq.s32.totalorder %s20, 0
    %p68 = por %p66, %p67
    %s70 = sadd.s32 %s69, 1
    %p73 = scmp.eq.s32.totalorder %s14, 1
    %p74 = scmp.ne.s32.totalorder %s69, %s71
    %p75 = scmp.eq.s32.totalorder %s14, 0
    %p76 = por %p74, %p75
    %p77 = scmp.ne.s32.totalorder %s69, %s71
    %p78 = scmp.eq.s32.totalorder %s19, 1
    %p79 = por %p77, %p78
    %p80 = scmp.ne.s32.totalorder %s71, %s72
    %p81 = scmp.eq.s32.totalorder %s19, 0
    %p82 = por %p80, %p81
    %p83 = scmp.ne.s32.totalorder %s71, %s72
    %p84 = scmp.eq.s32.totalorder %s20, 1
    %p85 = por %p83, %p84
    %p87 = scmp.ne.s32.totalorder %s72, %s86
    %p88 = scmp.eq.s32.totalorder %s20, 0
    %p89 = por %p87, %p88
    %s91 = sadd.s32 %s90, 1
    %p94 = scmp.eq.s32.totalorder %s14, 1
    %p95 = scmp.ne.s32.totalorder %s90, %s92
    %p96 = scmp.eq.s32.totalorder %s14, 0
    %p97 = por %p95, %p96
    %p98 = scmp.ne.s32.totalorder %s90, %s92
    %p99 = scmp.eq.s32.totalorder %s19, 1
    %p100 = por %p98, %p99
    %p101 = scmp.ne.s32.totalorder %s92, %s93
    %p102 = scmp.eq.s32.totalorder %s19, 0
    %p103 = por %p101, %p102
    %p104 = scmp.ne.s32.totalorder %s92, %s93
    %p105 = scmp.eq.s32.totalorder %s20, 1
    %p106 = por %p104, %p105
    %p108 = scmp.ne.s32.totalorder %s93, %s107
    %p109 = scmp.eq.s32.totalorder %s20, 0
    %p110 = por %p108, %p109
    %s112 = sadd.s32 %s111, 1
    %p115 = scmp.eq.s32.totalorder %s14, 1
    %p116 = scmp.ne.s32.totalorder %s111, %s113
    %p117 = scmp.eq.s32.totalorder %s14, 0
    %p118 = por %p116, %p117
    %p119 = scmp.ne.s32.totalorder %s111, %s113
    %p120 = scmp.eq.s32.totalorder %s19, 1
    %p121 = por %p119, %p120
    %p122 = scmp.ne.s32.totalorder %s113, %s114
    %p123 = scmp.eq.s32.totalorder %s19, 0
    %p124 = por %p122, %p123
    %p125 = scmp.ne.s32.totalorder %s113, %s114
    %p126 = scmp.eq.s32.totalorder %s20, 1
    %p127 = por %p125, %p126
    %p129 = scmp.ne.s32.totalorder %s114, %s128
    %p130 = scmp.eq.s32.totalorder %s20, 0
    %p131 = por %p129, %p130
    %s133 = sadd.s32 %s132, 1
    %p136 = scmp.eq.s32.totalorder %s14, 1
    %p137 = scmp.ne.s32.totalorder %s132, %s134
    %p138 = scmp.eq.s32.totalorder %s14, 0
    %p139 = por %p137, %p138
    %p140 = scmp.ne.s32.totalorder %s132, %s134
    %p141 = scmp.eq.s32.totalorder %s19, 1
    %p142 = por %p140, %p141
    %p143 = scmp.ne.s32.totalorder %s134, %s135
    %p144 = scmp.eq.s32.totalorder %s19, 0
    %p145 = por %p143, %p144
    %p146 = scmp.ne.s32.totalorder %s134, %s135
    %p147 = scmp.eq.s32.totalorder %s20, 1
    %p148 = por %p146, %p147
    %p150 = scmp.ne.s32.totalorder %s135, %s149
    %p151 = scmp.eq.s32.totalorder %s20, 0
    %p152 = por %p150, %p151
    %s154 = sadd.s32 %s153, 1
    %p157 = scmp.eq.s32.totalorder %s14, 1
    %p158 = scmp.ne.s32.totalorder %s153, %s155
    %p159 = scmp.eq.s32.totalorder %s14, 0
    %p160 = por %p158, %p159
    %p161 = scmp.ne.s32.totalorder %s153, %s155
    %p162 = scmp.eq.s32.totalorder %s19, 1
    %p163 = por %p161, %p162
    %p164 = scmp.ne.s32.totalorder %s155, %s156
    %p165 = scmp.eq.s32.totalorder %s19, 0
    %p166 = por %p164, %p165
    %p167 = scmp.ne.s32.totalorder %s155, %s156
    %p168 = scmp.eq.s32.totalorder %s20, 1
    %p169 = por %p167, %p168
    %p171 = scmp.ne.s32.totalorder %s156, %s170
    %p172 = scmp.eq.s32.totalorder %s20, 0
    %p173 = por %p171, %p172
    %s175 = sadd.s32 %s174, 1
    %p178 = scmp.eq.s32.totalorder %s14, 1
    %p179 = scmp.ne.s32.totalorder %s174, %s176
    %p180 = scmp.eq.s32.totalorder %s14, 0
    %p181 = por %p179, %p180
    %p182 = scmp.ne.s32.totalorder %s174, %s176
    %p183 = scmp.eq.s32.totalorder %s19, 1
    %p184 = por %p182, %p183
    %p185 = scmp.ne.s32.totalorder %s176, %s177
    %p186 = scmp.eq.s32.totalorder %s19, 0
    %p187 = por %p185, %p186
    %p188 = scmp.ne.s32.totalorder %s176, %s177
    %p189 = scmp.eq.s32.totalorder %s20, 1
    %p190 = por %p188, %p189
    %p192 = scmp.ne.s32.totalorder %s177, %s191
    %p193 = scmp.eq.s32.totalorder %s20, 0
    %p194 = por %p192, %p193
    %s195 = ssub.s32 %s14, %s21
    %p196 = scmp.eq.s32.totalorder %s195, 0
    %s198 = sadd.s32 %s197, 1
    %s199 = scalar_select %p196, %s197, %s198
    %p202 = pneg %p196
    %p203 = scmp.eq.s32.totalorder %s14, 1
    %p204 = por %p202, %p203
    %p205 = scmp.ne.s32.totalorder %s197, %s200
    %p206 = scmp.eq.s32.totalorder %s14, 0
    %p207 = por %p205, %p206
    %p208 = scmp.ne.s32.totalorder %s197, %s200
    %p209 = scmp.eq.s32.totalorder %s19, 1
    %p210 = por %p208, %p209
    %p211 = scmp.ne.s32.totalorder %s200, %s201
    %p212 = scmp.eq.s32.totalorder %s19, 0
    %p213 = por %p211, %p212
    %p214 = scmp.ne.s32.totalorder %s200, %s201
    %p215 = scmp.eq.s32.totalorder %s20, 1
    %p216 = por %p214, %p215
    %p218 = scmp.ne.s32.totalorder %s201, %s217
    %p219 = scmp.eq.s32.totalorder %s20, 0
    %p220 = por %p218, %p219
    %p221 = scmp.le.s32.totalorder 1, %s14
    %p222 = scmp.lt.s32.totalorder %s14, 3
    %p223 = pnand %p221, %p222
    %p224 = pneg %p223
    // Predicated region
    $region9: #{detail_node_forward.1} parent=5 // pred_check
      _
    $region10: #{detail_node_forward.1} parent=5 // pred_check_branch
      %226 = sbr.rel (%p223) target = $region12
    $region11: #{detail_node_forward.1} parent=5 // pred_region
      %s227 = ssub.s32 %s14, 1
      // Predicated region
      $region13: #{detail_node_forward.1} parent=11 // pred_check
        %p228 = pneg %p61
      $region14: #{detail_node_forward.1} parent=11 // pred_check_branch
        %230 = sbr.rel (%p228) target = $region16
      $region15: #{detail_node_forward.1} parent=11 // pred_region
        _
      $region16: #{detail_node_forward.1} parent=11 // pred_fallthru
        _
      // Predicated region
      $region17: #{detail_node_forward.1} parent=11 // pred_check
        %p231 = pneg %p82
      $region18: #{detail_node_forward.1} parent=11 // pred_check_branch
        %233 = sbr.rel (%p231) target = $region20
      $region19: #{detail_node_forward.1} parent=11 // pred_region
        _
      $region20: #{detail_node_forward.1} parent=11 // pred_fallthru
        _
      // Predicated region
      $region21: #{detail_node_forward.1} parent=11 // pred_check
        %p234 = pneg %p103
      $region22: #{detail_node_forward.1} parent=11 // pred_check_branch
        %236 = sbr.rel (%p234) target = $region24
      $region23: #{detail_node_forward.1} parent=11 // pred_region
        _
      $region24: #{detail_node_forward.1} parent=11 // pred_fallthru
        _
      // Predicated region
      $region25: #{detail_node_forward.1} parent=11 // pred_check
        %p237 = pneg %p124
      $region26: #{detail_node_forward.1} parent=11 // pred_check_branch
        %239 = sbr.rel (%p237) target = $region28
      $region27: #{detail_node_forward.1} parent=11 // pred_region
        _
      $region28: #{detail_node_forward.1} parent=11 // pred_fallthru
        _
      // Predicated region
      $region29: #{detail_node_forward.1} parent=11 // pred_check
        %p240 = pneg %p145
      $region30: #{detail_node_forward.1} parent=11 // pred_check_branch
        %242 = sbr.rel (%p240) target = $region32
      $region31: #{detail_node_forward.1} parent=11 // pred_region
        _
      $region32: #{detail_node_forward.1} parent=11 // pred_fallthru
        _
      // Predicated region
      $region33: #{detail_node_forward.1} parent=11 // pred_check
        %p243 = pneg %p166
      $region34: #{detail_node_forward.1} parent=11 // pred_check_branch
        %245 = sbr.rel (%p243) target = $region36
      $region35: #{detail_node_forward.1} parent=11 // pred_region
        _
      $region36: #{detail_node_forward.1} parent=11 // pred_fallthru
        _
      // Predicated region
      $region37: #{detail_node_forward.1} parent=11 // pred_check
        %p246 = pneg %p187
      $region38: #{detail_node_forward.1} parent=11 // pred_check_branch
        %248 = sbr.rel (%p246) target = $region40
      $region39: #{detail_node_forward.1} parent=11 // pred_region
        _
      $region40: #{detail_node_forward.1} parent=11 // pred_fallthru
        _
    $region12: #{detail_node_forward.1} parent=5 // pred_fallthru
      _
    %p249 = scmp.lt.s32.totalorder %s14, 2
    // Predicated region
    $region41: #{detail_node_forward.1} parent=5 // pred_check
      %p250 = pneg %p249
    $region42: #{detail_node_forward.1} parent=5 // pred_check_branch
      %252 = sbr.rel (%p250) target = $region44
    $region43: #{detail_node_forward.1} parent=5 // pred_region
      // Predicated region
      $region45: #{detail_node_forward.1} parent=43 // pred_check
        %p253 = pneg %p34
      $region46: #{detail_node_forward.1} parent=43 // pred_check_branch
        %255 = sbr.rel (%p253) target = $region48
      $region47: #{detail_node_forward.1} parent=43 // pred_region
        %p256 = scmp.lt.s32.totalorder %s14, 1
        %s257 = scalar_select %p256, %s14, 1
        %s258 = smul.addr %s257, 32
        %s259 = smul.addr %s258, 8
        %s260 = scalar_lea.vmem %s0, %s259
      $region48: #{detail_node_forward.1} parent=43 // pred_fallthru
        _
    $region44: #{detail_node_forward.1} parent=5 // pred_fallthru
      _
    %p261 = scmp.le.s32.totalorder 1, %s14
    %p262 = scmp.lt.s32.totalorder %s14, 3
    %p263 = pnand %p261, %p262
    %p264 = pneg %p263
    // Predicated region
    $region49: #{detail_node_forward.1} parent=5 // pred_check
      _
    $region50: #{detail_node_forward.1} parent=5 // pred_check_branch
      %266 = sbr.rel (%p263) target = $region52
    $region51: #{detail_node_forward.1} parent=5 // pred_region
      %s267 = ssub.s32 %s14, 1
      %p268 = scmp.lt.s32.totalorder %s19, 1
      %s269 = scalar_select %p268, %s19, 1
      %s270 = smul.addr %s269, 32
      %s271 = smul.addr %s270, 8
      %s272 = scalar_lea.vmem %s0, %s271
      %p273 = pneg %p40
      %p274 = pneg %p37
      %p275 = pneg %p61
      %p276 = pneg %p58
      %p277 = pneg %p82
      %p278 = pneg %p79
      %p279 = pneg %p103
      %p280 = pneg %p100
      %p281 = pneg %p124
      %p282 = pneg %p121
      %p283 = pneg %p145
      %p284 = pneg %p142
      %p285 = pneg %p166
      %p286 = pneg %p163
      %p287 = pneg %p187
      %p288 = pneg %p184
      %p289 = pneg %p213
      %p290 = pneg %p210
      %p291 = scmp.lt.s32.totalorder %s19, 1
      %s292 = scalar_select %p291, %s19, 1
      %s293 = smul.addr %s292, 32
      %s294 = smul.addr %s293, 8
      %s295 = scalar_lea.vmem %s8, %s294
      %p296 = scmp.lt.s32.totalorder %s19, 1
      %s297 = scalar_select %p296, %s19, 1
      %s298 = smul.addr %s297, 32
      %s299 = smul.addr %s298, 8
      %s300 = scalar_lea.vmem %s0, %s299
      %p301 = scmp.lt.s32.totalorder %s19, 1
      %s302 = scalar_select %p301, %s19, 1
      %s303 = smul.addr %s302, 32
      %s304 = smul.addr %s303, 8
      %s305 = scalar_lea.vmem %s8, %s304
      %v306 = vld [vmem:[%s1] sm:$0xff]
      %v307 = vld [vmem:[%s1 + $0x8] sm:$0xff]
      %v308 = vld [vmem:[%s1 + $0x10] sm:$0xff]
      %v309 = vld [vmem:[%s1 + $0x18] sm:$0xff]
      %v310 = vld [vmem:[%s1 + $0x20] sm:$0xff]
      %v311 = vld [vmem:[%s1 + $0x28] sm:$0xff]
      %v312 = vld [vmem:[%s1 + $0x30] sm:$0xff]
      %v313 = vld [vmem:[%s1 + $0x38] sm:$0xff]
      %v314 = vld [vmem:[%s2] sm:$0x1]
      %v315 = vld [vmem:[%s300] sm:$0xff]
      %v316 = vld [vmem:[%s300 + $0x8] sm:$0xff]
      %v317 = vld [vmem:[%s300 + $0x10] sm:$0xff]
      %v318 = vld [vmem:[%s300 + $0x18] sm:$0xff]
      %v319 = vld [vmem:[%s300 + $0x20] sm:$0xff]
      %v320 = vld [vmem:[%s300 + $0x28] sm:$0xff]
      %v321 = vld [vmem:[%s300 + $0x30] sm:$0xff]
      %v322 = vld [vmem:[%s300 + $0x38] sm:$0xff]
      %v323 = vld [vmem:[%s300 + $0x40] sm:$0xff]
      %v324 = vld [vmem:[%s300 + $0x48] sm:$0xff]
      %v325 = vld [vmem:[%s300 + $0x50] sm:$0xff]
      %v326 = vld [vmem:[%s300 + $0x58] sm:$0xff]
      %v327 = vld [vmem:[%s300 + $0x60] sm:$0xff]
      %v328 = vld [vmem:[%s300 + $0x68] sm:$0xff]
      %v329 = vld [vmem:[%s300 + $0x70] sm:$0xff]
      %v330 = vld [vmem:[%s300 + $0x78] sm:$0xff]
      %v332 = vlaneseq
      %v333 = vshrl.u32 %v332, 7
      %v334 = vsub.s32 0, %v333
      %v335 = vrot.slane %v314, %v334
      %vm337 = vcmask 523264
      %v339 = vsel %vm337, %v315, 0
      %v342 = vsel %vm337, %v316, 0
      %v345 = vsel %vm337, %v317, 0
      %v348 = vsel %vm337, %v318, 0
      %v351 = vsel %vm337, %v319, 0
      %v354 = vsel %vm337, %v320, 0
      %v357 = vsel %vm337, %v321, 0
      %v360 = vsel %vm337, %v322, 0
      %v363 = vsel %vm337, %v323, 0
      %v366 = vsel %vm337, %v324, 0
      %v369 = vsel %vm337, %v325, 0
      %v372 = vsel %vm337, %v326, 0
      %v375 = vsel %vm337, %v327, 0
      %v378 = vsel %vm337, %v328, 0
      %v381 = vsel %vm337, %v329, 0
      %v384 = vsel %vm337, %v330, 0
      %386 = vmatprep.subr.mxu0 0.0
      %387 = vmatpush1.msra.mxu0 %v306
      %388 = vmatprep.subr.mxu0 0.0
      %389 = vmatpush1.msra.mxu0 %v307
      %390 = vmatprep.subr.mxu0 0.0
      %391 = vmatpush1.msra.mxu0 %v308
      %392 = vmatprep.subr.mxu0 0.0
      %393 = vmatpush1.msra.mxu0 %v309
      %394 = vmatprep.subr.mxu0 0.0
      %395 = vmatpush1.msra.mxu0 %v310
      %396 = vmatprep.subr.mxu0 0.0
      %397 = vmatpush1.msra.mxu0 %v311
      %398 = vmatprep.subr.mxu0 0.0
      %399 = vmatpush1.msra.mxu0 %v312
      %400 = vmatprep.subr.mxu0 0.0
      %401 = vmatpush1.msra.mxu0 %v313
      %402 = vmatprep.subr.mxu0 0.0
      %403 = vmatpush1.msra.mxu0 0.0
      %404 = vmatprep.subr.mxu0 0.0
      %405 = vmatpush1.msra.mxu0 0.0
      %406 = vmatprep.subr.mxu0 0.0
      %407 = vmatpush1.msra.mxu0 0.0
      %408 = vmatprep.subr.mxu0 0.0
      %409 = vmatpush1.msra.mxu0 0.0
      %410 = vmatprep.subr.mxu0 0.0
      %411 = vmatpush1.msra.mxu0 0.0
      %412 = vmatprep.subr.mxu0 0.0
      %413 = vmatpush1.msra.mxu0 0.0
      %414 = vmatprep.subr.mxu0 0.0
      %415 = vmatpush1.msra.mxu0 0.0
      %416 = vmatprep.subr.mxu0 0.0
      %417 = vmatpush1.msra.mxu0 0.0
      %418 = vmatprep.subr.mxu0 0.0
      %419 = vmatpush1.msra.mxu0 0.0
      %420 = vmatprep.subr.mxu0 0.0
      %421 = vmatpush1.msra.mxu0 0.0
      %422 = vmatprep.subr.mxu0 0.0
      %423 = vmatpush1.msra.mxu0 0.0
      %424 = vmatprep.subr.mxu0 0.0
      %425 = vmatpush1.msra.mxu0 0.0
      %426 = vmatprep.subr.mxu0 0.0
      %427 = vmatpush1.msra.mxu0 0.0
      %428 = vmatprep.subr.mxu0 0.0
      %429 = vmatpush1.msra.mxu0 0.0
      %430 = vmatprep.subr.mxu0 0.0
      %431 = vmatpush1.msra.mxu0 0.0
      %432 = vmatprep.subr.mxu0 0.0
      %433 = vmatpush1.msra.mxu0 0.0
      %434 = vmatprep.subr.mxu0 0.0
      %435 = vmatpush1.msra.mxu0 0.0
      %436 = vmatprep.subr.mxu0 0.0
      %437 = vmatpush1.msra.mxu0 0.0
      %438 = vmatprep.subr.mxu0 0.0
      %439 = vmatpush1.msra.mxu0 0.0
      %440 = vmatprep.subr.mxu0 0.0
      %441 = vmatpush1.msra.mxu0 0.0
      %442 = vmatprep.subr.mxu0 0.0
      %443 = vmatpush1.msra.mxu0 0.0
      %444 = vmatprep.subr.mxu0 0.0
      %445 = vmatpush1.msra.mxu0 0.0
      %446 = vmatprep.subr.mxu0 0.0
      %447 = vmatpush1.msra.mxu0 0.0
      %448 = vmatprep.subr.mxu0 0.0
      %449 = vmatpush1.msra.mxu0 0.0
      %450 = vmatprep.mubr.f32.mxu0 0.0
      %451 = vmatmul.mubr.f32.gmra.mrb[0].mxu0 %v339
      %v452 = vpop.f32.mrb[0].mxu0
      %v453 = vadd.f32 %v335, %v452
      %v454 = vpop.f32.mrb[0].mxu0
      %455 = vmatprep.mubr.f32.mxu0 0.0
      %456 = vmatmul.mubr.f32.gmra.mrb[0].mxu0 %v342
      %v457 = vpop.f32.mrb[0].mxu0
      %v458 = vadd.f32 %v335, %v457
      %v459 = vpop.f32.mrb[0].mxu0
      %460 = vmatprep.mubr.f32.mxu0 0.0
      %461 = vmatmul.mubr.f32.gmra.mrb[0].mxu0 %v345
      %v462 = vpop.f32.mrb[0].mxu0
      %v463 = vadd.f32 %v335, %v462
      %v464 = vpop.f32.mrb[0].mxu0
      %465 = vmatprep.mubr.f32.mxu0 0.0
      %466 = vmatmul.mubr.f32.gmra.mrb[0].mxu0 %v348
      %v467 = vpop.f32.mrb[0].mxu0
      %v468 = vadd.f32 %v335, %v467
      %v469 = vpop.f32.mrb[0].mxu0
      %470 = vmatprep.mubr.f32.mxu0 0.0
      %471 = vmatmul.mubr.f32.gmra.mrb[0].mxu0 %v351
      %v472 = vpop.f32.mrb[0].mxu0
      %v473 = vadd.f32 %v335, %v472
      %v474 = vpop.f32.mrb[0].mxu0
      %475 = vmatprep.mubr.f32.mxu0 0.0
      %476 = vmatmul.mubr.f32.gmra.mrb[0].mxu0 %v354
      %v477 = vpop.f32.mrb[0].mxu0
      %v478 = vadd.f32 %v335, %v477
      %v479 = vpop.f32.mrb[0].mxu0
      %480 = vmatprep.mubr.f32.mxu0 0.0
      %481 = vmatmul.mubr.f32.gmra.mrb[0].mxu0 %v357
      %v482 = vpop.f32.mrb[0].mxu0
      %v483 = vadd.f32 %v335, %v482
      %v484 = vpop.f32.mrb[0].mxu0
      %485 = vmatprep.mubr.f32.mxu0 0.0
      %486 = vmatmul.mubr.f32.gmra.mrb[0].mxu0 %v360
      %v487 = vpop.f32.mrb[0].mxu0
      %v488 = vadd.f32 %v335, %v487
      %v489 = vpop.f32.mrb[0].mxu0
      %490 = vmatprep.mubr.f32.mxu0 0.0
      %491 = vmatmul.mubr.f32.gmra.mrb[0].mxu0 %v363
      %v492 = vpop.f32.mrb[0].mxu0
      %v493 = vadd.f32 %v335, %v492
      %v494 = vpop.f32.mrb[0].mxu0
      %495 = vmatprep.mubr.f32.mxu0 0.0
      %496 = vmatmul.mubr.f32.gmra.mrb[0].mxu0 %v366
      %v497 = vpop.f32.mrb[0].mxu0
      %v498 = vadd.f32 %v335, %v497
      %v499 = vpop.f32.mrb[0].mxu0
      %500 = vmatprep.mubr.f32.mxu0 0.0
      %501 = vmatmul.mubr.f32.gmra.mrb[0].mxu0 %v369
      %v502 = vpop.f32.mrb[0].mxu0
      %v503 = vadd.f32 %v335, %v502
      %v504 = vpop.f32.mrb[0].mxu0
      %505 = vmatprep.mubr.f32.mxu0 0.0
      %506 = vmatmul.mubr.f32.gmra.mrb[0].mxu0 %v372
      %v507 = vpop.f32.mrb[0].mxu0
      %v508 = vadd.f32 %v335, %v507
      %v509 = vpop.f32.mrb[0].mxu0
      %510 = vmatprep.mubr.f32.mxu0 0.0
      %511 = vmatmul.mubr.f32.gmra.mrb[0].mxu0 %v375
      %v512 = vpop.f32.mrb[0].mxu0
      %v513 = vadd.f32 %v335, %v512
      %v514 = vpop.f32.mrb[0].mxu0
      %515 = vmatprep.mubr.f32.mxu0 0.0
      %516 = vmatmul.mubr.f32.gmra.mrb[0].mxu0 %v378
      %v517 = vpop.f32.mrb[0].mxu0
      %v518 = vadd.f32 %v335, %v517
      %v519 = vpop.f32.mrb[0].mxu0
      %520 = vmatprep.mubr.f32.mxu0 0.0
      %521 = vmatmul.mubr.f32.gmra.mrb[0].mxu0 %v381
      %v522 = vpop.f32.mrb[0].mxu0
      %v523 = vadd.f32 %v335, %v522
      %v524 = vpop.f32.mrb[0].mxu0
      %525 = vmatprep.mubr.f32.mxu0 0.0
      %526 = vmatmul.mubr.f32.gmra.mrb[0].mxu0 %v384
      %v527 = vpop.f32.mrb[0].mxu0
      %v528 = vadd.f32 %v335, %v527
      %v529 = vpop.f32.mrb[0].mxu0
      %530 = vdwg.mxu0
      %531 = vst.msk [vmem:[%s305] sm:$0xff] %vm337, %v453
      %532 = vst.msk [vmem:[%s305 + $0x8] sm:$0xff] %vm337, %v458
      %533 = vst.msk [vmem:[%s305 + $0x10] sm:$0xff] %vm337, %v463
      %534 = vst.msk [vmem:[%s305 + $0x18] sm:$0xff] %vm337, %v468
      %535 = vst.msk [vmem:[%s305 + $0x20] sm:$0xff] %vm337, %v473
      %536 = vst.msk [vmem:[%s305 + $0x28] sm:$0xff] %vm337, %v478
      %537 = vst.msk [vmem:[%s305 + $0x30] sm:$0xff] %vm337, %v483
      %538 = vst.msk [vmem:[%s305 + $0x38] sm:$0xff] %vm337, %v488
      %539 = vst.msk [vmem:[%s305 + $0x40] sm:$0xff] %vm337, %v493
      %540 = vst.msk [vmem:[%s305 + $0x48] sm:$0xff] %vm337, %v498
      %541 = vst.msk [vmem:[%s305 + $0x50] sm:$0xff] %vm337, %v503
      %542 = vst.msk [vmem:[%s305 + $0x58] sm:$0xff] %vm337, %v508
      %543 = vst.msk [vmem:[%s305 + $0x60] sm:$0xff] %vm337, %v513
      %544 = vst.msk [vmem:[%s305 + $0x68] sm:$0xff] %vm337, %v518
      %545 = vst.msk [vmem:[%s305 + $0x70] sm:$0xff] %vm337, %v523
      %546 = vst.msk [vmem:[%s305 + $0x78] sm:$0xff] %vm337, %v528
      %v547 = vmax.f32 %v453, 0.0
      %v548 = vmax.f32 %v458, 0.0
      %v549 = vmax.f32 %v463, 0.0
      %v550 = vmax.f32 %v468, 0.0
      %v551 = vmax.f32 %v473, 0.0
      %v552 = vmax.f32 %v478, 0.0
      %v553 = vmax.f32 %v483, 0.0
      %v554 = vmax.f32 %v488, 0.0
      %v555 = vmax.f32 %v493, 0.0
      %v556 = vmax.f32 %v498, 0.0
      %v557 = vmax.f32 %v503, 0.0
      %v558 = vmax.f32 %v508, 0.0
      %v559 = vmax.f32 %v513, 0.0
      %v560 = vmax.f32 %v518, 0.0
      %v561 = vmax.f32 %v523, 0.0
      %v562 = vmax.f32 %v528, 0.0
      %v563 = vmin.f32 %v547, 6.0
      %v564 = vmin.f32 %v548, 6.0
      %v565 = vmin.f32 %v549, 6.0
      %v566 = vmin.f32 %v550, 6.0
      %v567 = vmin.f32 %v551, 6.0
      %v568 = vmin.f32 %v552, 6.0
      %v569 = vmin.f32 %v553, 6.0
      %v570 = vmin.f32 %v554, 6.0
      %v571 = vmin.f32 %v555, 6.0
      %v572 = vmin.f32 %v556, 6.0
      %v573 = vmin.f32 %v557, 6.0
      %v574 = vmin.f32 %v558, 6.0
      %v575 = vmin.f32 %v559, 6.0
      %v576 = vmin.f32 %v560, 6.0
      %v577 = vmin.f32 %v561, 6.0
      %v578 = vmin.f32 %v562, 6.0
      %v587 = vrot.slane %v563, 1
      %v588 = vrot.slane %v565, 1
      %v589 = vrot.slane %v567, 1
      %v590 = vrot.slane %v569, 1
      %v591 = vrot.slane %v571, 1
      %v592 = vrot.slane %v573, 1
      %v593 = vrot.slane %v575, 1
      %v594 = vrot.slane %v577, 1
      %vm611 = vcmask 1040384
      %v612 = vrot.slane %v563, 7
      %v613 = vrot.slane %v564, 7
      %v614 = vsel %vm611, %v612, %v613
      %v615 = vrot.slane %v565, 7
      %v616 = vrot.slane %v566, 7
      %v617 = vsel %vm611, %v615, %v616
      %v618 = vrot.slane %v567, 7
      %v619 = vrot.slane %v568, 7
      %v620 = vsel %vm611, %v618, %v619
      %v621 = vrot.slane %v569, 7
      %v622 = vrot.slane %v570, 7
      %v623 = vsel %vm611, %v621, %v622
      %v624 = vrot.slane %v571, 7
      %v625 = vrot.slane %v572, 7
      %v626 = vsel %vm611, %v624, %v625
      %v627 = vrot.slane %v573, 7
      %v628 = vrot.slane %v574, 7
      %v629 = vsel %vm611, %v627, %v628
      %v630 = vrot.slane %v575, 7
      %v631 = vrot.slane %v576, 7
      %v632 = vsel %vm611, %v630, %v631
      %v633 = vrot.slane %v577, 7
      %v634 = vrot.slane %v578, 7
      %v635 = vsel %vm611, %v633, %v634
      %v652 = vrot.slane %v564, 5
      %v653 = vrot.slane %v566, 5
      %v654 = vrot.slane %v568, 5
      %v655 = vrot.slane %v570, 5
      %v656 = vrot.slane %v572, 5
      %v657 = vrot.slane %v574, 5
      %v658 = vrot.slane %v576, 5
      %v659 = vrot.slane %v578, 5
      %v668 = vsel %vm611, %v587, %v612
      %v669 = vsel %vm611, %v588, %v615
      %v670 = vsel %vm611, %v589, %v618
      %v671 = vsel %vm611, %v590, %v621
      %v672 = vsel %vm611, %v591, %v624
      %v673 = vsel %vm611, %v592, %v627
      %v674 = vsel %vm611, %v593, %v630
      %v675 = vsel %vm611, %v594, %v633
      %v676 = vsel %vm611, %v613, %v652
      %v677 = vsel %vm611, %v616, %v653
      %v678 = vsel %vm611, %v619, %v654
      %v679 = vsel %vm611, %v622, %v655
      %v680 = vsel %vm611, %v625, %v656
      %v681 = vsel %vm611, %v628, %v657
      %v682 = vsel %vm611, %v631, %v658
      %v683 = vsel %vm611, %v634, %v659
      %700 = vrot.lane.b32.xlu0 %v668, 64
      %v701 = vpop.permute.xlu0 %700
      %702 = vrot.lane.b32.xlu0 %v614, 64
      %v703 = vpop.permute.xlu0 %702
      %704 = vrot.lane.b32.xlu0 %v676, 64
      %v705 = vpop.permute.xlu0 %704
      %706 = vrot.lane.b32.xlu0 %v669, 64
      %v707 = vpop.permute.xlu0 %706
      %708 = vrot.lane.b32.xlu0 %v617, 64
      %v709 = vpop.permute.xlu0 %708
      %710 = vrot.lane.b32.xlu0 %v677, 64
      %v711 = vpop.permute.xlu0 %710
      %712 = vrot.lane.b32.xlu0 %v670, 64
      %v713 = vpop.permute.xlu0 %712
      %714 = vrot.lane.b32.xlu0 %v620, 64
      %v715 = vpop.permute.xlu0 %714
      %716 = vrot.lane.b32.xlu0 %v678, 64
      %v717 = vpop.permute.xlu0 %716
      %718 = vrot.lane.b32.xlu0 %v671, 64
      %v719 = vpop.permute.xlu0 %718
      %720 = vrot.lane.b32.xlu0 %v623, 64
      %v721 = vpop.permute.xlu0 %720
      %722 = vrot.lane.b32.xlu0 %v679, 64
      %v723 = vpop.permute.xlu0 %722
      %724 = vrot.lane.b32.xlu0 %v672, 64
      %v725 = vpop.permute.xlu0 %724
      %726 = vrot.lane.b32.xlu0 %v626, 64
      %v727 = vpop.permute.xlu0 %726
      %728 = vrot.lane.b32.xlu0 %v680, 64
      %v729 = vpop.permute.xlu0 %728
      %730 = vrot.lane.b32.xlu0 %v673, 64
      %v731 = vpop.permute.xlu0 %730
      %732 = vrot.lane.b32.xlu0 %v629, 64
      %v733 = vpop.permute.xlu0 %732
      %734 = vrot.lane.b32.xlu0 %v681, 64
      %v735 = vpop.permute.xlu0 %734
      %736 = vrot.lane.b32.xlu0 %v674, 64
      %v737 = vpop.permute.xlu0 %736
      %738 = vrot.lane.b32.xlu0 %v632, 64
      %v739 = vpop.permute.xlu0 %738
      %740 = vrot.lane.b32.xlu0 %v682, 64
      %v741 = vpop.permute.xlu0 %740
      %742 = vrot.lane.b32.xlu0 %v675, 64
      %v743 = vpop.permute.xlu0 %742
      %744 = vrot.lane.b32.xlu0 %v635, 64
      %v745 = vpop.permute.xlu0 %744
      %746 = vrot.lane.b32.xlu0 %v683, 64
      %v747 = vpop.permute.xlu0 %746
      %s772 = scalar_lea.vmem [#allocation2], 24
      %773 = vst.msk [vmem:[%s772] sm:$0xff] %vm337, %v701
      %774 = vst.msk [vmem:[%s772 + $0x8] sm:$0xff] %vm337, %v703
      %vm775 = vcmask 517120
      %776 = vst.msk [vmem:[%s772 + $0x10] sm:$0x3] %vm775, %v705
      %777 = vst.msk [vmem:[%s772 + $0x18] sm:$0xff] %vm337, %v707
      %778 = vst.msk [vmem:[%s772 + $0x20] sm:$0xff] %vm337, %v709
      %779 = vst.msk [vmem:[%s772 + $0x28] sm:$0x3] %vm775, %v711
      %780 = vst.msk [vmem:[%s772 + $0x30] sm:$0xff] %vm337, %v713
      %781 = vst.msk [vmem:[%s772 + $0x38] sm:$0xff] %vm337, %v715
      %782 = vst.msk [vmem:[%s772 + $0x40] sm:$0x3] %vm775, %v717
      %783 = vst.msk [vmem:[%s772 + $0x48] sm:$0xff] %vm337, %v719
      %784 = vst.msk [vmem:[%s772 + $0x50] sm:$0xff] %vm337, %v721
      %785 = vst.msk [vmem:[%s772 + $0x58] sm:$0x3] %vm775, %v723
      %786 = vst.msk [vmem:[%s772 + $0x60] sm:$0xff] %vm337, %v725
      %787 = vst.msk [vmem:[%s772 + $0x68] sm:$0xff] %vm337, %v727
      %788 = vst.msk [vmem:[%s772 + $0x70] sm:$0x3] %vm775, %v729
      %789 = vst.msk [vmem:[%s772 + $0x78] sm:$0xff] %vm337, %v731
      %790 = vst.msk [vmem:[%s772 + $0x80] sm:$0xff] %vm337, %v733
      %791 = vst.msk [vmem:[%s772 + $0x88] sm:$0x3] %vm775, %v735
      %792 = vst.msk [vmem:[%s772 + $0x90] sm:$0xff] %vm337, %v737
      %793 = vst.msk [vmem:[%s772 + $0x98] sm:$0xff] %vm337, %v739
      %794 = vst.msk [vmem:[%s772 + $0xa0] sm:$0x3] %vm775, %v741
      %795 = vst.msk [vmem:[%s772 + $0xa8] sm:$0xff] %vm337, %v743
      %796 = vst.msk [vmem:[%s772 + $0xb0] sm:$0xff] %vm337, %v745
      %797 = vst.msk [vmem:[%s772 + $0xb8] sm:$0x3] %vm775, %v747
      %v798 = vld [vmem:[%s300 + $0x80] sm:$0xff]
      %v799 = vld [vmem:[%s300 + $0x88] sm:$0xff]
      %v800 = vld [vmem:[%s300 + $0x90] sm:$0xff]
      %v801 = vld [vmem:[%s300 + $0x98] sm:$0xff]
      %v802 = vld [vmem:[%s300 + $0xa0] sm:$0xff]
      %v803 = vld [vmem:[%s300 + $0xa8] sm:$0xff]
      %v804 = vld [vmem:[%s300 + $0xb0] sm:$0xff]
      %v805 = vld [vmem:[%s300 + $0xb8] sm:$0xff]
      %v806 = vld [vmem:[%s300 + $0xc0] sm:$0xff]
      %v807 = vld [vmem:[%s300 + $0xc8] sm:$0xff]
      %v808 = vld [vmem:[%s300 + $0xd0] sm:$0xff]
      %v809 = vld [vmem:[%s300 + $0xd8] sm:$0xff]
      %v810 = vld [vmem:[%s300 + $0xe0] sm:$0xff]
      %v811 = vld [vmem:[%s300 + $0xe8] sm:$0xff]
      %v812 = vld [vmem:[%s300 + $0xf0] sm:$0xff]
      %v813 = vld [vmem:[%s300 + $0xf8] sm:$0xff]
      %v815 = vsel %vm337, %v798, 0
      %v818 = vsel %vm337, %v799, 0
      %v821 = vsel %vm337, %v800, 0
      %v824 = vsel %vm337, %v801, 0
      %v827 = vsel %vm337, %v802, 0
      %v830 = vsel %vm337, %v803, 0
      %v833 = vsel %vm337, %v804, 0
      %v836 = vsel %vm337, %v805, 0
      %v839 = vsel %vm337, %v806, 0
      %v842 = vsel %vm337, %v807, 0
      %v845 = vsel %vm337, %v808, 0
      %v848 = vsel %vm337, %v809, 0
      %v851 = vsel %vm337, %v810, 0
      %v854 = vsel %vm337, %v811, 0
      %v857 = vsel %vm337, %v812, 0
      %v860 = vsel %vm337, %v813, 0
      %862 = vmatprep.subr.mxu0 0.0
      %863 = vmatpush1.msra.mxu0 %v306
      %864 = vmatprep.subr.mxu0 0.0
      %865 = vmatpush1.msra.mxu0 %v307
      %866 = vmatprep.subr.mxu0 0.0
      %867 = vmatpush1.msra.mxu0 %v308
      %868 = vmatprep.subr.mxu0 0.0
      %869 = vmatpush1.msra.mxu0 %v309
      %870 = vmatprep.subr.mxu0 0.0
      %871 = vmatpush1.msra.mxu0 %v310
      %872 = vmatprep.subr.mxu0 0.0
      %873 = vmatpush1.msra.mxu0 %v311
      %874 = vmatprep.subr.mxu0 0.0
      %875 = vmatpush1.msra.mxu0 %v312
      %876 = vmatprep.subr.mxu0 0.0
      %877 = vmatpush1.msra.mxu0 %v313
      %878 = vmatprep.subr.mxu0 0.0
      %879 = vmatpush1.msra.mxu0 0.0
      %880 = vmatprep.subr.mxu0 0.0
      %881 = vmatpush1.msra.mxu0 0.0
      %882 = vmatprep.subr.mxu0 0.0
      %883 = vmatpush1.msra.mxu0 0.0
      %884 = vmatprep.subr.mxu0 0.0
      %885 = vmatpush1.msra.mxu0 0.0
      %886 = vmatprep.subr.mxu0 0.0
      %887 = vmatpush1.msra.mxu0 0.0
      %888 = vmatprep.subr.mxu0 0.0
      %889 = vmatpush1.msra.mxu0 0.0
      %890 = vmatprep.subr.mxu0 0.0
      %891 = vmatpush1.msra.mxu0 0.0
      %892 = vmatprep.subr.mxu0 0.0
      %893 = vmatpush1.msra.mxu0 0.0
      %894 = vmatprep.subr.mxu0 0.0
      %895 = vmatpush1.msra.mxu0 0.0
      %896 = vmatprep.subr.mxu0 0.0
      %897 = vmatpush1.msra.mxu0 0.0
      %898 = vmatprep.subr.mxu0 0.0
      %899 = vmatpush1.msra.mxu0 0.0
      %900 = vmatprep.subr.mxu0 0.0
      %901 = vmatpush1.msra.mxu0 0.0
      %902 = vmatprep.subr.mxu0 0.0
      %903 = vmatpush1.msra.mxu0 0.0
      %904 = vmatprep.subr.mxu0 0.0
      %905 = vmatpush1.msra.mxu0 0.0
      %906 = vmatprep.subr.mxu0 0.0
      %907 = vmatpush1.msra.mxu0 0.0
      %908 = vmatprep.subr.mxu0 0.0
      %909 = vmatpush1.msra.mxu0 0.0
      %910 = vmatprep.subr.mxu0 0.0
      %911 = vmatpush1.msra.mxu0 0.0
      %912 = vmatprep.subr.mxu0 0.0
      %913 = vmatpush1.msra.mxu0 0.0
      %914 = vmatprep.subr.mxu0 0.0
      %915 = vmatpush1.msra.mxu0 0.0
      %916 = vmatprep.subr.mxu0 0.0
      %917 = vmatpush1.msra.mxu0 0.0
      %918 = vmatprep.subr.mxu0 0.0
      %919 = vmatpush1.msra.mxu0 0.0
      %920 = vmatprep.subr.mxu0 0.0
      %921 = vmatpush1.msra.mxu0 0.0
      %922 = vmatprep.subr.mxu0 0.0
      %923 = vmatpush1.msra.mxu0 0.0
      %924 = vmatprep.subr.mxu0 0.0
      %925 = vmatpush1.msra.mxu0 0.0
      %926 = vmatprep.mubr.f32.mxu0 0.0
      %927 = vmatmul.mubr.f32.gmra.mrb[0].mxu0 %v815
      %v928 = vpop.f32.mrb[0].mxu0
      %v929 = vadd.f32 %v335, %v928
      %v930 = vpop.f32.mrb[0].mxu0
      %931 = vmatprep.mubr.f32.mxu0 0.0
      %932 = vmatmul.mubr.f32.gmra.mrb[0].mxu0 %v818
      %v933 = vpop.f32.mrb[0].mxu0
      %v934 = vadd.f32 %v335, %v933
      %v935 = vpop.f32.mrb[0].mxu0
      %936 = vmatprep.mubr.f32.mxu0 0.0
      %937 = vmatmul.mubr.f32.gmra.mrb[0].mxu0 %v821
      %v938 = vpop.f32.mrb[0].mxu0
      %v939 = vadd.f32 %v335, %v938
      %v940 = vpop.f32.mrb[0].mxu0
      %941 = vmatprep.mubr.f32.mxu0 0.0
      %942 = vmatmul.mubr.f32.gmra.mrb[0].mxu0 %v824
      %v943 = vpop.f32.mrb[0].mxu0
      %v944 = vadd.f32 %v335, %v943
      %v945 = vpop.f32.mrb[0].mxu0
      %946 = vmatprep.mubr.f32.mxu0 0.0
      %947 = vmatmul.mubr.f32.gmra.mrb[0].mxu0 %v827
      %v948 = vpop.f32.mrb[0].mxu0
      %v949 = vadd.f32 %v335, %v948
      %v950 = vpop.f32.mrb[0].mxu0
      %951 = vmatprep.mubr.f32.mxu0 0.0
      %952 = vmatmul.mubr.f32.gmra.mrb[0].mxu0 %v830
      %v953 = vpop.f32.mrb[0].mxu0
      %v954 = vadd.f32 %v335, %v953
      %v955 = vpop.f32.mrb[0].mxu0
      %956 = vmatprep.mubr.f32.mxu0 0.0
      %957 = vmatmul.mubr.f32.gmra.mrb[0].mxu0 %v833
      %v958 = vpop.f32.mrb[0].mxu0
      %v959 = vadd.f32 %v335, %v958
      %v960 = vpop.f32.mrb[0].mxu0
      %961 = vmatprep.mubr.f32.mxu0 0.0
      %962 = vmatmul.mubr.f32.gmra.mrb[0].mxu0 %v836
      %v963 = vpop.f32.mrb[0].mxu0
      %v964 = vadd.f32 %v335, %v963
      %v965 = vpop.f32.mrb[0].mxu0
      %966 = vmatprep.mubr.f32.mxu0 0.0
      %967 = vmatmul.mubr.f32.gmra.mrb[0].mxu0 %v839
      %v968 = vpop.f32.mrb[0].mxu0
      %v969 = vadd.f32 %v335, %v968
      %v970 = vpop.f32.mrb[0].mxu0
      %971 = vmatprep.mubr.f32.mxu0 0.0
      %972 = vmatmul.mubr.f32.gmra.mrb[0].mxu0 %v842
      %v973 = vpop.f32.mrb[0].mxu0
      %v974 = vadd.f32 %v335, %v973
      %v975 = vpop.f32.mrb[0].mxu0
      %976 = vmatprep.mubr.f32.mxu0 0.0
      %977 = vmatmul.mubr.f32.gmra.mrb[0].mxu0 %v845
      %v978 = vpop.f32.mrb[0].mxu0
      %v979 = vadd.f32 %v335, %v978
      %v980 = vpop.f32.mrb[0].mxu0
      %981 = vmatprep.mubr.f32.mxu0 0.0
      %982 = vmatmul.mubr.f32.gmra.mrb[0].mxu0 %v848
      %v983 = vpop.f32.mrb[0].mxu0
      %v984 = vadd.f32 %v335, %v983
      %v985 = vpop.f32.mrb[0].mxu0
      %986 = vmatprep.mubr.f32.mxu0 0.0
      %987 = vmatmul.mubr.f32.gmra.mrb[0].mxu0 %v851
      %v988 = vpop.f32.mrb[0].mxu0
      %v989 = vadd.f32 %v335, %v988
      %v990 = vpop.f32.mrb[0].mxu0
      %991 = vmatprep.mubr.f32.mxu0 0.0
      %992 = vmatmul.mubr.f32.gmra.mrb[0].mxu0 %v854
      %v993 = vpop.f32.mrb[0].mxu0
      %v994 = vadd.f32 %v335, %v993
      %v995 = vpop.f32.mrb[0].mxu0
      %996 = vmatprep.mubr.f32.mxu0 0.0
      %997 = vmatmul.mubr.f32.gmra.mrb[0].mxu0 %v857
      %v998 = vpop.f32.mrb[0].mxu0
      %v999 = vadd.f32 %v335, %v998
      %v1000 = vpop.f32.mrb[0].mxu0
      %1001 = vmatprep.mubr.f32.mxu0 0.0
      %1002 = vmatmul.mubr.f32.gmra.mrb[0].mxu0 %v860
      %v1003 = vpop.f32.mrb[0].mxu0
      %v1004 = vadd.f32 %v335, %v1003
      %v1005 = vpop.f32.mrb[0].mxu0
      %1006 = vdwg.mxu0
      %1007 = vst.msk [vmem:[%s305 + $0x80] sm:$0xff] %vm337, %v929
      %1008 = vst.msk [vmem:[%s305 + $0x88] sm:$0xff] %vm337, %v934
      %1009 = vst.msk [vmem:[%s305 + $0x90] sm:$0xff] %vm337, %v939
      %1010 = vst.msk [vmem:[%s305 + $0x98] sm:$0xff] %vm337, %v944
      %1011 = vst.msk [vmem:[%s305 + $0xa0] sm:$0xff] %vm337, %v949
      %1012 = vst.msk [vmem:[%s305 + $0xa8] sm:$0xff] %vm337, %v954
      %1013 = vst.msk [vmem:[%s305 + $0xb0] sm:$0xff] %vm337, %v959
      %1014 = vst.msk [vmem:[%s305 + $0xb8] sm:$0xff] %vm337, %v964
      %1015 = vst.msk [vmem:[%s305 + $0xc0] sm:$0xff] %vm337, %v969
      %1016 = vst.msk [vmem:[%s305 + $0xc8] sm:$0xff] %vm337, %v974
      %1017 = vst.msk [vmem:[%s305 + $0xd0] sm:$0xff] %vm337, %v979
      %1018 = vst.msk [vmem:[%s305 + $0xd8] sm:$0xff] %vm337, %v984
      %1019 = vst.msk [vmem:[%s305 + $0xe0] sm:$0xff] %vm337, %v989
      %1020 = vst.msk [vmem:[%s305 + $0xe8] sm:$0xff] %vm337, %v994
      %1021 = vst.msk [vmem:[%s305 + $0xf0] sm:$0xff] %vm337, %v999
      %1022 = vst.msk [vmem:[%s305 + $0xf8] sm:$0xff] %vm337, %v1004
      %v1023 = vmax.f32 %v929, 0.0
      %v1024 = vmax.f32 %v934, 0.0
      %v1025 = vmax.f32 %v939, 0.0
      %v1026 = vmax.f32 %v944, 0.0
      %v1027 = vmax.f32 %v949, 0.0
      %v1028 = vmax.f32 %v954, 0.0
      %v1029 = vmax.f32 %v959, 0.0
      %v1030 = vmax.f32 %v964, 0.0
      %v1031 = vmax.f32 %v969, 0.0
      %v1032 = vmax.f32 %v974, 0.0
      %v1033 = vmax.f32 %v979, 0.0
      %v1034 = vmax.f32 %v984, 0.0
      %v1035 = vmax.f32 %v989, 0.0
      %v1036 = vmax.f32 %v994, 0.0
      %v1037 = vmax.f32 %v999, 0.0
      %v1038 = vmax.f32 %v1004, 0.0
      %v1039 = vmin.f32 %v1023, 6.0
      %v1040 = vmin.f32 %v1024, 6.0
      %v1041 = vmin.f32 %v1025, 6.0
      %v1042 = vmin.f32 %v1026, 6.0
      %v1043 = vmin.f32 %v1027, 6.0
      %v1044 = vmin.f32 %v1028, 6.0
      %v1045 = vmin.f32 %v1029, 6.0
      %v1046 = vmin.f32 %v1030, 6.0
      %v1047 = vmin.f32 %v1031, 6.0
      %v1048 = vmin.f32 %v1032, 6.0
      %v1049 = vmin.f32 %v1033, 6.0
      %v1050 = vmin.f32 %v1034, 6.0
      %v1051 = vmin.f32 %v1035, 6.0
      %v1052 = vmin.f32 %v1036, 6.0
      %v1053 = vmin.f32 %v1037, 6.0
      %v1054 = vmin.f32 %v1038, 6.0
      %v1063 = vrot.slane %v1039, 1
      %v1064 = vrot.slane %v1041, 1
      %v1065 = vrot.slane %v1043, 1
      %v1066 = vrot.slane %v1045, 1
      %v1067 = vrot.slane %v1047, 1
      %v1068 = vrot.slane %v1049, 1
      %v1069 = vrot.slane %v1051, 1
      %v1070 = vrot.slane %v1053, 1
      %v1087 = vrot.slane %v1039, 7
      %v1088 = vrot.slane %v1040, 7
      %v1089 = vsel %vm611, %v1087, %v1088
      %v1090 = vrot.slane %v1041, 7
      %v1091 = vrot.slane %v1042, 7
      %v1092 = vsel %vm611, %v1090, %v1091
      %v1093 = vrot.slane %v1043, 7
      %v1094 = vrot.slane %v1044, 7
      %v1095 = vsel %vm611, %v1093, %v1094
      %v1096 = vrot.slane %v1045, 7
      %v1097 = vrot.slane %v1046, 7
      %v1098 = vsel %vm611, %v1096, %v1097
      %v1099 = vrot.slane %v1047, 7
      %v1100 = vrot.slane %v1048, 7
      %v1101 = vsel %vm611, %v1099, %v1100
      %v1102 = vrot.slane %v1049, 7
      %v1103 = vrot.slane %v1050, 7
      %v1104 = vsel %vm611, %v1102, %v1103
      %v1105 = vrot.slane %v1051, 7
      %v1106 = vrot.slane %v1052, 7
      %v1107 = vsel %vm611, %v1105, %v1106
      %v1108 = vrot.slane %v1053, 7
      %v1109 = vrot.slane %v1054, 7
      %v1110 = vsel %vm611, %v1108, %v1109
      %v1127 = vrot.slane %v1040, 5
      %v1128 = vrot.slane %v1042, 5
      %v1129 = vrot.slane %v1044, 5
      %v1130 = vrot.slane %v1046, 5
      %v1131 = vrot.slane %v1048, 5
      %v1132 = vrot.slane %v1050, 5
      %v1133 = vrot.slane %v1052, 5
      %v1134 = vrot.slane %v1054, 5
      %v1143 = vsel %vm611, %v1063, %v1087
      %v1144 = vsel %vm611, %v1064, %v1090
      %v1145 = vsel %vm611, %v1065, %v1093
      %v1146 = vsel %vm611, %v1066, %v1096
      %v1147 = vsel %vm611, %v1067, %v1099
      %v1148 = vsel %vm611, %v1068, %v1102
      %v1149 = vsel %vm611, %v1069, %v1105
      %v1150 = vsel %vm611, %v1070, %v1108
      %v1151 = vsel %vm611, %v1088, %v1127
      %v1152 = vsel %vm611, %v1091, %v1128
      %v1153 = vsel %vm611, %v1094, %v1129
      %v1154 = vsel %vm611, %v1097, %v1130
      %v1155 = vsel %vm611, %v1100, %v1131
      %v1156 = vsel %vm611, %v1103, %v1132
      %v1157 = vsel %vm611, %v1106, %v1133
      %v1158 = vsel %vm611, %v1109, %v1134
      %1175 = vrot.lane.b32.xlu0 %v1143, 64
      %v1176 = vpop.permute.xlu0 %1175
      %1177 = vrot.lane.b32.xlu0 %v1089, 64
      %v1178 = vpop.permute.xlu0 %1177
      %1179 = vrot.lane.b32.xlu0 %v1151, 64
      %v1180 = vpop.permute.xlu0 %1179
      %1181 = vrot.lane.b32.xlu0 %v1144, 64
      %v1182 = vpop.permute.xlu0 %1181
      %1183 = vrot.lane.b32.xlu0 %v1092, 64
      %v1184 = vpop.permute.xlu0 %1183
      %1185 = vrot.lane.b32.xlu0 %v1152, 64
      %v1186 = vpop.permute.xlu0 %1185
      %1187 = vrot.lane.b32.xlu0 %v1145, 64
      %v1188 = vpop.permute.xlu0 %1187
      %1189 = vrot.lane.b32.xlu0 %v1095, 64
      %v1190 = vpop.permute.xlu0 %1189
      %1191 = vrot.lane.b32.xlu0 %v1153, 64
      %v1192 = vpop.permute.xlu0 %1191
      %1193 = vrot.lane.b32.xlu0 %v1146, 64
      %v1194 = vpop.permute.xlu0 %1193
      %1195 = vrot.lane.b32.xlu0 %v1098, 64
      %v1196 = vpop.permute.xlu0 %1195
      %1197 = vrot.lane.b32.xlu0 %v1154, 64
      %v1198 = vpop.permute.xlu0 %1197
      %1199 = vrot.lane.b32.xlu0 %v1147, 64
      %v1200 = vpop.permute.xlu0 %1199
      %1201 = vrot.lane.b32.xlu0 %v1101, 64
      %v1202 = vpop.permute.xlu0 %1201
      %1203 = vrot.lane.b32.xlu0 %v1155, 64
      %v1204 = vpop.permute.xlu0 %1203
      %1205 = vrot.lane.b32.xlu0 %v1148, 64
      %v1206 = vpop.permute.xlu0 %1205
      %1207 = vrot.lane.b32.xlu0 %v1104, 64
      %v1208 = vpop.permute.xlu0 %1207
      %1209 = vrot.lane.b32.xlu0 %v1156, 64
      %v1210 = vpop.permute.xlu0 %1209
      %1211 = vrot.lane.b32.xlu0 %v1149, 64
      %v1212 = vpop.permute.xlu0 %1211
      %1213 = vrot.lane.b32.xlu0 %v1107, 64
      %v1214 = vpop.permute.xlu0 %1213
      %1215 = vrot.lane.b32.xlu0 %v1157, 64
      %v1216 = vpop.permute.xlu0 %1215
      %1217 = vrot.lane.b32.xlu0 %v1150, 64
      %v1218 = vpop.permute.xlu0 %1217
      %1219 = vrot.lane.b32.xlu0 %v1110, 64
      %v1220 = vpop.permute.xlu0 %1219
      %1221 = vrot.lane.b32.xlu0 %v1158, 64
      %v1222 = vpop.permute.xlu0 %1221
      %s1247 = scalar_lea.vmem [#allocation2], 216
      %1248 = vst.msk [vmem:[%s1247] sm:$0xff] %vm337, %v1176
      %1249 = vst.msk [vmem:[%s1247 + $0x8] sm:$0xff] %vm337, %v1178
      %1250 = vst.msk [vmem:[%s1247 + $0x10] sm:$0x3] %vm775, %v1180
      %1251 = vst.msk [vmem:[%s1247 + $0x18] sm:$0xff] %vm337, %v1182
      %1252 = vst.msk [vmem:[%s1247 + $0x20] sm:$0xff] %vm337, %v1184
      %1253 = vst.msk [vmem:[%s1247 + $0x28] sm:$0x3] %vm775, %v1186
      %1254 = vst.msk [vmem:[%s1247 + $0x30] sm:$0xff] %vm337, %v1188
      %1255 = vst.msk [vmem:[%s1247 + $0x38] sm:$0xff] %vm337, %v1190
      %1256 = vst.msk [vmem:[%s1247 + $0x40] sm:$0x3] %vm775, %v1192
      %1257 = vst.msk [vmem:[%s1247 + $0x48] sm:$0xff] %vm337, %v1194
      %1258 = vst.msk [vmem:[%s1247 + $0x50] sm:$0xff] %vm337, %v1196
      %1259 = vst.msk [vmem:[%s1247 + $0x58] sm:$0x3] %vm775, %v1198
      %1260 = vst.msk [vmem:[%s1247 + $0x60] sm:$0xff] %vm337, %v1200
      %1261 = vst.msk [vmem:[%s1247 + $0x68] sm:$0xff] %vm337, %v1202
      %1262 = vst.msk [vmem:[%s1247 + $0x70] sm:$0x3] %vm775, %v1204
      %1263 = vst.msk [vmem:[%s1247 + $0x78] sm:$0xff] %vm337, %v1206
      %1264 = vst.msk [vmem:[%s1247 + $0x80] sm:$0xff] %vm337, %v1208
      %1265 = vst.msk [vmem:[%s1247 + $0x88] sm:$0x3] %vm775, %v1210
      %1266 = vst.msk [vmem:[%s1247 + $0x90] sm:$0xff] %vm337, %v1212
      %1267 = vst.msk [vmem:[%s1247 + $0x98] sm:$0xff] %vm337, %v1214
      %1268 = vst.msk [vmem:[%s1247 + $0xa0] sm:$0x3] %vm775, %v1216
      %1269 = vst.msk [vmem:[%s1247 + $0xa8] sm:$0xff] %vm337, %v1218
      %1270 = vst.msk [vmem:[%s1247 + $0xb0] sm:$0xff] %vm337, %v1220
      %1271 = vst.msk [vmem:[%s1247 + $0xb8] sm:$0x3] %vm775, %v1222
      %s1272 = scalar_lea.vmem [#allocation2], 48
      %v1273 = vld [vmem:[%s1272] sm:$0xff]
      %v1274 = vld [vmem:[%s1272 + $0x8] sm:$0xff]
      %v1275 = vld [vmem:[%s1272 + $0x10] sm:$0x3]
      %1276 = vst.msk [vmem:[#allocation2] sm:$0xff] %vm337, %v1273
      %1277 = vst.msk [vmem:[#allocation2 + $0x8] sm:$0xff] %vm337, %v1274
      %1278 = vst.msk [vmem:[#allocation2 + $0x10] sm:$0x3] %vm775, %v1275
      %s1279 = scalar_lea.vmem [#allocation2], 360
      %v1280 = vld [vmem:[%s1279] sm:$0xff]
      %v1281 = vld [vmem:[%s1279 + $0x8] sm:$0xff]
      %v1282 = vld [vmem:[%s1279 + $0x10] sm:$0x3]
      %s1283 = scalar_lea.vmem [#allocation2], 408
      %1284 = vst.msk [vmem:[%s1283] sm:$0xff] %vm337, %v1280
      %1285 = vst.msk [vmem:[%s1283 + $0x8] sm:$0xff] %vm337, %v1281
      %1286 = vst.msk [vmem:[%s1283 + $0x10] sm:$0x3] %vm775, %v1282
      %v1287 = vld [vmem:[%s3] sm:$0xff]
      %v1288 = vld [vmem:[%s3 + $0x8] sm:$0x1]
      %v1289 = vld [vmem:[%s4] sm:$0xff]
      %v1290 = vld [vmem:[%s4 + $0x8] sm:$0xff]
      %v1291 = vld [vmem:[%s4 + $0x10] sm:$0xff]
      %v1292 = vld [vmem:[%s4 + $0x18] sm:$0xff]
      %v1293 = vld [vmem:[%s4 + $0x20] sm:$0xff]
      %v1294 = vld [vmem:[%s4 + $0x28] sm:$0xff]
      %v1295 = vld [vmem:[%s4 + $0x30] sm:$0xff]
      %v1296 = vld [vmem:[%s4 + $0x38] sm:$0xff]
      %v1297 = vld [vmem:[#allocation2] sm:$0xff]
      %v1298 = vld [vmem:[#allocation2 + $0x8] sm:$0xff]
      %v1299 = vld [vmem:[#allocation2 + $0x10] sm:$0x3]
      %v1300 = vld [vmem:[#allocation2 + $0x18] sm:$0xff]
      %v1301 = vld [vmem:[#allocation2 + $0x20] sm:$0xff]
      %v1302 = vld [vmem:[#allocation2 + $0x28] sm:$0x3]
      %v1303 = vld [vmem:[#allocation2 + $0x30] sm:$0xff]
      %v1304 = vld [vmem:[#allocation2 + $0x38] sm:$0xff]
      %v1305 = vld [vmem:[#allocation2 + $0x40] sm:$0x3]
      %v1306 = vld [vmem:[#allocation2 + $0x48] sm:$0xff]
      %v1307 = vld [vmem:[#allocation2 + $0x50] sm:$0xff]
      %v1308 = vld [vmem:[#allocation2 + $0x58] sm:$0x3]
      %v1309 = vld [vmem:[#allocation2 + $0x60] sm:$0xff]
      %v1310 = vld [vmem:[#allocation2 + $0x68] sm:$0xff]
      %v1311 = vld [vmem:[#allocation2 + $0x70] sm:$0x3]
      %v1312 = vld [vmem:[#allocation2 + $0x78] sm:$0xff]
      %v1313 = vld [vmem:[#allocation2 + $0x80] sm:$0xff]
      %v1314 = vld [vmem:[#allocation2 + $0x88] sm:$0x3]
      %v1315 = vld [vmem:[#allocation2 + $0x90] sm:$0xff]
      %v1316 = vld [vmem:[#allocation2 + $0x98] sm:$0xff]
      %v1317 = vld [vmem:[#allocation2 + $0xa0] sm:$0x3]
      %v1318 = vld [vmem:[#allocation2 + $0xa8] sm:$0xff]
      %v1319 = vld [vmem:[#allocation2 + $0xb0] sm:$0xff]
      %v1320 = vld [vmem:[#allocation2 + $0xb8] sm:$0x3]
      %v1321 = vlaneseq
      %v1322 = vshrl.u32 %v1321, 7
      %v1323 = vsub.s32 0, %v1322
      %v1324 = vrot.slane %v1287, %v1323
      %v1325 = vmul.f32 %v1297, %v1324
      %v1326 = vmul.f32 %v1298, %v1324
      %v1327 = vmul.f32 %v1300, %v1324
      %v1328 = vmul.f32 %v1301, %v1324
      %v1329 = vmul.f32 %v1303, %v1324
      %v1330 = vmul.f32 %v1304, %v1324
      %v1331 = vmul.f32 %v1306, %v1324
      %v1332 = vmul.f32 %v1307, %v1324
      %v1333 = vmul.f32 %v1309, %v1324
      %v1334 = vmul.f32 %v1310, %v1324
      %v1335 = vmul.f32 %v1312, %v1324
      %v1336 = vmul.f32 %v1313, %v1324
      %v1337 = vmul.f32 %v1315, %v1324
      %v1338 = vmul.f32 %v1316, %v1324
      %v1339 = vmul.f32 %v1318, %v1324
      %v1340 = vmul.f32 %v1319, %v1324
      %v1341 = vlaneseq
      %v1342 = vshrl.u32 %v1341, 7
      %v1343 = vsub.s32 1, %v1342
      %v1344 = vrot.slane %v1287, %v1343
      %v1345 = vmul.f32 %v1297, %v1344
      %v1346 = vmul.f32 %v1298, %v1344
      %v1347 = vmul.f32 %v1299, %v1344
      %v1348 = vmul.f32 %v1300, %v1344
      %v1349 = vmul.f32 %v1301, %v1344
      %v1350 = vmul.f32 %v1302, %v1344
      %v1351 = vmul.f32 %v1303, %v1344
      %v1352 = vmul.f32 %v1304, %v1344
      %v1353 = vmul.f32 %v1305, %v1344
      %v1354 = vmul.f32 %v1306, %v1344
      %v1355 = vmul.f32 %v1307, %v1344
      %v1356 = vmul.f32 %v1308, %v1344
      %v1357 = vmul.f32 %v1309, %v1344
      %v1358 = vmul.f32 %v1310, %v1344
      %v1359 = vmul.f32 %v1311, %v1344
      %v1360 = vmul.f32 %v1312, %v1344
      %v1361 = vmul.f32 %v1313, %v1344
      %v1362 = vmul.f32 %v1314, %v1344
      %v1363 = vmul.f32 %v1315, %v1344
      %v1364 = vmul.f32 %v1316, %v1344
      %v1365 = vmul.f32 %v1317, %v1344
      %v1366 = vmul.f32 %v1318, %v1344
      %v1367 = vmul.f32 %v1319, %v1344
      %v1368 = vmul.f32 %v1320, %v1344
      %vm1393 = vcmask 1046528
      %v1394 = vrot.slane %v1345, 1
      %v1395 = vrot.slane %v1346, 1
      %v1396 = vsel %vm1393, %v1394, %v1395
      %v1397 = vrot.slane %v1347, 1
      %v1398 = vsel %vm1393, %v1395, %v1397
      %v1399 = vrot.slane %v1348, 1
      %v1400 = vrot.slane %v1349, 1
      %v1401 = vsel %vm1393, %v1399, %v1400
      %v1402 = vrot.slane %v1350, 1
      %v1403 = vsel %vm1393, %v1400, %v1402
      %v1404 = vrot.slane %v1351, 1
      %v1405 = vrot.slane %v1352, 1
      %v1406 = vsel %vm1393, %v1404, %v1405
      %v1407 = vrot.slane %v1353, 1
      %v1408 = vsel %vm1393, %v1405, %v1407
      %v1409 = vrot.slane %v1354, 1
      %v1410 = vrot.slane %v1355, 1
      %v1411 = vsel %vm1393, %v1409, %v1410
      %v1412 = vrot.slane %v1356, 1
      %v1413 = vsel %vm1393, %v1410, %v1412
      %v1414 = vrot.slane %v1357, 1
      %v1415 = vrot.slane %v1358, 1
      %v1416 = vsel %vm1393, %v1414, %v1415
      %v1417 = vrot.slane %v1359, 1
      %v1418 = vsel %vm1393, %v1415, %v1417
      %v1419 = vrot.slane %v1360, 1
      %v1420 = vrot.slane %v1361, 1
      %v1421 = vsel %vm1393, %v1419, %v1420
      %v1422 = vrot.slane %v1362, 1
      %v1423 = vsel %vm1393, %v1420, %v1422
      %v1424 = vrot.slane %v1363, 1
      %v1425 = vrot.slane %v1364, 1
      %v1426 = vsel %vm1393, %v1424, %v1425
      %v1427 = vrot.slane %v1365, 1
      %v1428 = vsel %vm1393, %v1425, %v1427
      %v1429 = vrot.slane %v1366, 1
      %v1430 = vrot.slane %v1367, 1
      %v1431 = vsel %vm1393, %v1429, %v1430
      %v1432 = vrot.slane %v1368, 1
      %v1433 = vsel %vm1393, %v1430, %v1432
      %v1450 = vadd.f32 %v1325, %v1396
      %v1451 = vadd.f32 %v1326, %v1398
      %v1452 = vadd.f32 %v1327, %v1401
      %v1453 = vadd.f32 %v1328, %v1403
      %v1454 = vadd.f32 %v1329, %v1406
      %v1455 = vadd.f32 %v1330, %v1408
      %v1456 = vadd.f32 %v1331, %v1411
      %v1457 = vadd.f32 %v1332, %v1413
      %v1458 = vadd.f32 %v1333, %v1416
      %v1459 = vadd.f32 %v1334, %v1418
      %v1460 = vadd.f32 %v1335, %v1421
      %v1461 = vadd.f32 %v1336, %v1423
      %v1462 = vadd.f32 %v1337, %v1426
      %v1463 = vadd.f32 %v1338, %v1428
      %v1464 = vadd.f32 %v1339, %v1431
      %v1465 = vadd.f32 %v1340, %v1433
      %v1466 = vlaneseq
      %v1467 = vshrl.u32 %v1466, 7
      %v1468 = vsub.s32 2, %v1467
      %v1469 = vrot.slane %v1287, %v1468
      %v1470 = vmul.f32 %v1297, %v1469
      %v1471 = vmul.f32 %v1298, %v1469
      %v1472 = vmul.f32 %v1299, %v1469
      %v1473 = vmul.f32 %v1300, %v1469
      %v1474 = vmul.f32 %v1301, %v1469
      %v1475 = vmul.f32 %v1302, %v1469
      %v1476 = vmul.f32 %v1303, %v1469
      %v1477 = vmul.f32 %v1304, %v1469
      %v1478 = vmul.f32 %v1305, %v1469
      %v1479 = vmul.f32 %v1306, %v1469
      %v1480 = vmul.f32 %v1307, %v1469
      %v1481 = vmul.f32 %v1308, %v1469
      %v1482 = vmul.f32 %v1309, %v1469
      %v1483 = vmul.f32 %v1310, %v1469
      %v1484 = vmul.f32 %v1311, %v1469
      %v1485 = vmul.f32 %v1312, %v1469
      %v1486 = vmul.f32 %v1313, %v1469
      %v1487 = vmul.f32 %v1314, %v1469
      %v1488 = vmul.f32 %v1315, %v1469
      %v1489 = vmul.f32 %v1316, %v1469
      %v1490 = vmul.f32 %v1317, %v1469
      %v1491 = vmul.f32 %v1318, %v1469
      %v1492 = vmul.f32 %v1319, %v1469
      %v1493 = vmul.f32 %v1320, %v1469
      %vm1518 = vcmask 1045504
      %v1519 = vrot.slane %v1470, 2
      %v1520 = vrot.slane %v1471, 2
      %v1521 = vsel %vm1518, %v1519, %v1520
      %v1522 = vrot.slane %v1472, 2
      %v1523 = vsel %vm1518, %v1520, %v1522
      %v1524 = vrot.slane %v1473, 2
      %v1525 = vrot.slane %v1474, 2
      %v1526 = vsel %vm1518, %v1524, %v1525
      %v1527 = vrot.slane %v1475, 2
      %v1528 = vsel %vm1518, %v1525, %v1527
      %v1529 = vrot.slane %v1476, 2
      %v1530 = vrot.slane %v1477, 2
      %v1531 = vsel %vm1518, %v1529, %v1530
      %v1532 = vrot.slane %v1478, 2
      %v1533 = vsel %vm1518, %v1530, %v1532
      %v1534 = vrot.slane %v1479, 2
      %v1535 = vrot.slane %v1480, 2
      %v1536 = vsel %vm1518, %v1534, %v1535
      %v1537 = vrot.slane %v1481, 2
      %v1538 = vsel %vm1518, %v1535, %v1537
      %v1539 = vrot.slane %v1482, 2
      %v1540 = vrot.slane %v1483, 2
      %v1541 = vsel %vm1518, %v1539, %v1540
      %v1542 = vrot.slane %v1484, 2
      %v1543 = vsel %vm1518, %v1540, %v1542
      %v1544 = vrot.slane %v1485, 2
      %v1545 = vrot.slane %v1486, 2
      %v1546 = vsel %vm1518, %v1544, %v1545
      %v1547 = vrot.slane %v1487, 2
      %v1548 = vsel %vm1518, %v1545, %v1547
      %v1549 = vrot.slane %v1488, 2
      %v1550 = vrot.slane %v1489, 2
      %v1551 = vsel %vm1518, %v1549, %v1550
      %v1552 = vrot.slane %v1490, 2
      %v1553 = vsel %vm1518, %v1550, %v1552
      %v1554 = vrot.slane %v1491, 2
      %v1555 = vrot.slane %v1492, 2
      %v1556 = vsel %vm1518, %v1554, %v1555
      %v1557 = vrot.slane %v1493, 2
      %v1558 = vsel %vm1518, %v1555, %v1557
      %v1575 = vadd.f32 %v1450, %v1521
      %v1576 = vadd.f32 %v1451, %v1523
      %v1577 = vadd.f32 %v1452, %v1526
      %v1578 = vadd.f32 %v1453, %v1528
      %v1579 = vadd.f32 %v1454, %v1531
      %v1580 = vadd.f32 %v1455, %v1533
      %v1581 = vadd.f32 %v1456, %v1536
      %v1582 = vadd.f32 %v1457, %v1538
      %v1583 = vadd.f32 %v1458, %v1541
      %v1584 = vadd.f32 %v1459, %v1543
      %v1585 = vadd.f32 %v1460, %v1546
      %v1586 = vadd.f32 %v1461, %v1548
      %v1587 = vadd.f32 %v1462, %v1551
      %v1588 = vadd.f32 %v1463, %v1553
      %v1589 = vadd.f32 %v1464, %v1556
      %v1590 = vadd.f32 %v1465, %v1558
      %v1591 = vld [vmem:[%s772] sm:$0xff]
      %v1592 = vld [vmem:[%s772 + $0x8] sm:$0xff]
      %v1593 = vld [vmem:[%s772 + $0x10] sm:$0x3]
      %v1594 = vld [vmem:[%s772 + $0x18] sm:$0xff]
      %v1595 = vld [vmem:[%s772 + $0x20] sm:$0xff]
      %v1596 = vld [vmem:[%s772 + $0x28] sm:$0x3]
      %v1597 = vld [vmem:[%s772 + $0x30] sm:$0xff]
      %v1598 = vld [vmem:[%s772 + $0x38] sm:$0xff]
      %v1599 = vld [vmem:[%s772 + $0x40] sm:$0x3]
      %v1600 = vld [vmem:[%s772 + $0x48] sm:$0xff]
      %v1601 = vld [vmem:[%s772 + $0x50] sm:$0xff]
      %v1602 = vld [vmem:[%s772 + $0x58] sm:$0x3]
      %v1603 = vld [vmem:[%s772 + $0x60] sm:$0xff]
      %v1604 = vld [vmem:[%s772 + $0x68] sm:$0xff]
      %v1605 = vld [vmem:[%s772 + $0x70] sm:$0x3]
      %v1606 = vld [vmem:[%s772 + $0x78] sm:$0xff]
      %v1607 = vld [vmem:[%s772 + $0x80] sm:$0xff]
      %v1608 = vld [vmem:[%s772 + $0x88] sm:$0x3]
      %v1609 = vld [vmem:[%s772 + $0x90] sm:$0xff]
      %v1610 = vld [vmem:[%s772 + $0x98] sm:$0xff]
      %v1611 = vld [vmem:[%s772 + $0xa0] sm:$0x3]
      %v1612 = vld [vmem:[%s772 + $0xa8] sm:$0xff]
      %v1613 = vld [vmem:[%s772 + $0xb0] sm:$0xff]
      %v1614 = vld [vmem:[%s772 + $0xb8] sm:$0x3]
      %v1615 = vlaneseq
      %v1616 = vshrl.u32 %v1615, 7
      %v1617 = vsub.s32 3, %v1616
      %v1618 = vrot.slane %v1287, %v1617
      %v1619 = vmul.f32 %v1591, %v1618
      %v1620 = vmul.f32 %v1592, %v1618
      %v1621 = vmul.f32 %v1594, %v1618
      %v1622 = vmul.f32 %v1595, %v1618
      %v1623 = vmul.f32 %v1597, %v1618
      %v1624 = vmul.f32 %v1598, %v1618
      %v1625 = vmul.f32 %v1600, %v1618
      %v1626 = vmul.f32 %v1601, %v1618
      %v1627 = vmul.f32 %v1603, %v1618
      %v1628 = vmul.f32 %v1604, %v1618
      %v1629 = vmul.f32 %v1606, %v1618
      %v1630 = vmul.f32 %v1607, %v1618
      %v1631 = vmul.f32 %v1609, %v1618
      %v1632 = vmul.f32 %v1610, %v1618
      %v1633 = vmul.f32 %v1612, %v1618
      %v1634 = vmul.f32 %v1613, %v1618
      %v1635 = vadd.f32 %v1575, %v1619
      %v1636 = vadd.f32 %v1576, %v1620
      %v1637 = vadd.f32 %v1577, %v1621
      %v1638 = vadd.f32 %v1578, %v1622
      %v1639 = vadd.f32 %v1579, %v1623
      %v1640 = vadd.f32 %v1580, %v1624
      %v1641 = vadd.f32 %v1581, %v1625
      %v1642 = vadd.f32 %v1582, %v1626
      %v1643 = vadd.f32 %v1583, %v1627
      %v1644 = vadd.f32 %v1584, %v1628
      %v1645 = vadd.f32 %v1585, %v1629
      %v1646 = vadd.f32 %v1586, %v1630
      %v1647 = vadd.f32 %v1587, %v1631
      %v1648 = vadd.f32 %v1588, %v1632
      %v1649 = vadd.f32 %v1589, %v1633
      %v1650 = vadd.f32 %v1590, %v1634
      %v1651 = vlaneseq
      %v1652 = vshrl.u32 %v1651, 7
      %v1653 = vsub.s32 4, %v1652
      %v1654 = vrot.slane %v1287, %v1653
      %v1655 = vmul.f32 %v1591, %v1654
      %v1656 = vmul.f32 %v1592, %v1654
      %v1657 = vmul.f32 %v1593, %v1654
      %v1658 = vmul.f32 %v1594, %v1654
      %v1659 = vmul.f32 %v1595, %v1654
      %v1660 = vmul.f32 %v1596, %v1654
      %v1661 = vmul.f32 %v1597, %v1654
      %v1662 = vmul.f32 %v1598, %v1654
      %v1663 = vmul.f32 %v1599, %v1654
      %v1664 = vmul.f32 %v1600, %v1654
      %v1665 = vmul.f32 %v1601, %v1654
      %v1666 = vmul.f32 %v1602, %v1654
      %v1667 = vmul.f32 %v1603, %v1654
      %v1668 = vmul.f32 %v1604, %v1654
      %v1669 = vmul.f32 %v1605, %v1654
      %v1670 = vmul.f32 %v1606, %v1654
      %v1671 = vmul.f32 %v1607, %v1654
      %v1672 = vmul.f32 %v1608, %v1654
      %v1673 = vmul.f32 %v1609, %v1654
      %v1674 = vmul.f32 %v1610, %v1654
      %v1675 = vmul.f32 %v1611, %v1654
      %v1676 = vmul.f32 %v1612, %v1654
      %v1677 = vmul.f32 %v1613, %v1654
      %v1678 = vmul.f32 %v1614, %v1654
      %v1703 = vrot.slane %v1655, 1
      %v1704 = vrot.slane %v1656, 1
      %v1705 = vsel %vm1393, %v1703, %v1704
      %v1706 = vrot.slane %v1657, 1
      %v1707 = vsel %vm1393, %v1704, %v1706
      %v1708 = vrot.slane %v1658, 1
      %v1709 = vrot.slane %v1659, 1
      %v1710 = vsel %vm1393, %v1708, %v1709
      %v1711 = vrot.slane %v1660, 1
      %v1712 = vsel %vm1393, %v1709, %v1711
      %v1713 = vrot.slane %v1661, 1
      %v1714 = vrot.slane %v1662, 1
      %v1715 = vsel %vm1393, %v1713, %v1714
      %v1716 = vrot.slane %v1663, 1
      %v1717 = vsel %vm1393, %v1714, %v1716
      %v1718 = vrot.slane %v1664, 1
      %v1719 = vrot.slane %v1665, 1
      %v1720 = vsel %vm1393, %v1718, %v1719
      %v1721 = vrot.slane %v1666, 1
      %v1722 = vsel %vm1393, %v1719, %v1721
      %v1723 = vrot.slane %v1667, 1
      %v1724 = vrot.slane %v1668, 1
      %v1725 = vsel %vm1393, %v1723, %v1724
      %v1726 = vrot.slane %v1669, 1
      %v1727 = vsel %vm1393, %v1724, %v1726
      %v1728 = vrot.slane %v1670, 1
      %v1729 = vrot.slane %v1671, 1
      %v1730 = vsel %vm1393, %v1728, %v1729
      %v1731 = vrot.slane %v1672, 1
      %v1732 = vsel %vm1393, %v1729, %v1731
      %v1733 = vrot.slane %v1673, 1
      %v1734 = vrot.slane %v1674, 1
      %v1735 = vsel %vm1393, %v1733, %v1734
      %v1736 = vrot.slane %v1675, 1
      %v1737 = vsel %vm1393, %v1734, %v1736
      %v1738 = vrot.slane %v1676, 1
      %v1739 = vrot.slane %v1677, 1
      %v1740 = vsel %vm1393, %v1738, %v1739
      %v1741 = vrot.slane %v1678, 1
      %v1742 = vsel %vm1393, %v1739, %v1741
      %v1759 = vadd.f32 %v1635, %v1705
      %v1760 = vadd.f32 %v1636, %v1707
      %v1761 = vadd.f32 %v1637, %v1710
      %v1762 = vadd.f32 %v1638, %v1712
      %v1763 = vadd.f32 %v1639, %v1715
      %v1764 = vadd.f32 %v1640, %v1717
      %v1765 = vadd.f32 %v1641, %v1720
      %v1766 = vadd.f32 %v1642, %v1722
      %v1767 = vadd.f32 %v1643, %v1725
      %v1768 = vadd.f32 %v1644, %v1727
      %v1769 = vadd.f32 %v1645, %v1730
      %v1770 = vadd.f32 %v1646, %v1732
      %v1771 = vadd.f32 %v1647, %v1735
      %v1772 = vadd.f32 %v1648, %v1737
      %v1773 = vadd.f32 %v1649, %v1740
      %v1774 = vadd.f32 %v1650, %v1742
      %v1775 = vlaneseq
      %v1776 = vshrl.u32 %v1775, 7
      %v1777 = vsub.s32 5, %v1776
      %v1778 = vrot.slane %v1287, %v1777
      %v1779 = vmul.f32 %v1591, %v1778
      %v1780 = vmul.f32 %v1592, %v1778
      %v1781 = vmul.f32 %v1593, %v1778
      %v1782 = vmul.f32 %v1594, %v1778
      %v1783 = vmul.f32 %v1595, %v1778
      %v1784 = vmul.f32 %v1596, %v1778
      %v1785 = vmul.f32 %v1597, %v1778
      %v1786 = vmul.f32 %v1598, %v1778
      %v1787 = vmul.f32 %v1599, %v1778
      %v1788 = vmul.f32 %v1600, %v1778
      %v1789 = vmul.f32 %v1601, %v1778
      %v1790 = vmul.f32 %v1602, %v1778
      %v1791 = vmul.f32 %v1603, %v1778
      %v1792 = vmul.f32 %v1604, %v1778
      %v1793 = vmul.f32 %v1605, %v1778
      %v1794 = vmul.f32 %v1606, %v1778
      %v1795 = vmul.f32 %v1607, %v1778
      %v1796 = vmul.f32 %v1608, %v1778
      %v1797 = vmul.f32 %v1609, %v1778
      %v1798 = vmul.f32 %v1610, %v1778
      %v1799 = vmul.f32 %v1611, %v1778
      %v1800 = vmul.f32 %v1612, %v1778
      %v1801 = vmul.f32 %v1613, %v1778
      %v1802 = vmul.f32 %v1614, %v1778
      %v1827 = vrot.slane %v1779, 2
      %v1828 = vrot.slane %v1780, 2
      %v1829 = vsel %vm1518, %v1827, %v1828
      %v1830 = vrot.slane %v1781, 2
      %v1831 = vsel %vm1518, %v1828, %v1830
      %v1832 = vrot.slane %v1782, 2
      %v1833 = vrot.slane %v1783, 2
      %v1834 = vsel %vm1518, %v1832, %v1833
      %v1835 = vrot.slane %v1784, 2
      %v1836 = vsel %vm1518, %v1833, %v1835
      %v1837 = vrot.slane %v1785, 2
      %v1838 = vrot.slane %v1786, 2
      %v1839 = vsel %vm1518, %v1837, %v1838
      %v1840 = vrot.slane %v1787, 2
      %v1841 = vsel %vm1518, %v1838, %v1840
      %v1842 = vrot.slane %v1788, 2
      %v1843 = vrot.slane %v1789, 2
      %v1844 = vsel %vm1518, %v1842, %v1843
      %v1845 = vrot.slane %v1790, 2
      %v1846 = vsel %vm1518, %v1843, %v1845
      %v1847 = vrot.slane %v1791, 2
      %v1848 = vrot.slane %v1792, 2
      %v1849 = vsel %vm1518, %v1847, %v1848
      %v1850 = vrot.slane %v1793, 2
      %v1851 = vsel %vm1518, %v1848, %v1850
      %v1852 = vrot.slane %v1794, 2
      %v1853 = vrot.slane %v1795, 2
      %v1854 = vsel %vm1518, %v1852, %v1853
      %v1855 = vrot.slane %v1796, 2
      %v1856 = vsel %vm1518, %v1853, %v1855
      %v1857 = vrot.slane %v1797, 2
      %v1858 = vrot.slane %v1798, 2
      %v1859 = vsel %vm1518, %v1857, %v1858
      %v1860 = vrot.slane %v1799, 2
      %v1861 = vsel %vm1518, %v1858, %v1860
      %v1862 = vrot.slane %v1800, 2
      %v1863 = vrot.slane %v1801, 2
      %v1864 = vsel %vm1518, %v1862, %v1863
      %v1865 = vrot.slane %v1802, 2
      %v1866 = vsel %vm1518, %v1863, %v1865
      %v1883 = vadd.f32 %v1759, %v1829
      %v1884 = vadd.f32 %v1760, %v1831
      %v1885 = vadd.f32 %v1761, %v1834
      %v1886 = vadd.f32 %v1762, %v1836
      %v1887 = vadd.f32 %v1763, %v1839
      %v1888 = vadd.f32 %v1764, %v1841
      %v1889 = vadd.f32 %v1765, %v1844
      %v1890 = vadd.f32 %v1766, %v1846
      %v1891 = vadd.f32 %v1767, %v1849
      %v1892 = vadd.f32 %v1768, %v1851
      %v1893 = vadd.f32 %v1769, %v1854
      %v1894 = vadd.f32 %v1770, %v1856
      %v1895 = vadd.f32 %v1771, %v1859
      %v1896 = vadd.f32 %v1772, %v1861
      %v1897 = vadd.f32 %v1773, %v1864
      %v1898 = vadd.f32 %v1774, %v1866
      %v1899 = vld [vmem:[%s1272] sm:$0xff]
      %v1900 = vld [vmem:[%s1272 + $0x8] sm:$0xff]
      %v1901 = vld [vmem:[%s1272 + $0x10] sm:$0x3]
      %v1902 = vld [vmem:[%s1272 + $0x18] sm:$0xff]
      %v1903 = vld [vmem:[%s1272 + $0x20] sm:$0xff]
      %v1904 = vld [vmem:[%s1272 + $0x28] sm:$0x3]
      %v1905 = vld [vmem:[%s1272 + $0x30] sm:$0xff]
      %v1906 = vld [vmem:[%s1272 + $0x38] sm:$0xff]
      %v1907 = vld [vmem:[%s1272 + $0x40] sm:$0x3]
      %v1908 = vld [vmem:[%s1272 + $0x48] sm:$0xff]
      %v1909 = vld [vmem:[%s1272 + $0x50] sm:$0xff]
      %v1910 = vld [vmem:[%s1272 + $0x58] sm:$0x3]
      %v1911 = vld [vmem:[%s1272 + $0x60] sm:$0xff]
      %v1912 = vld [vmem:[%s1272 + $0x68] sm:$0xff]
      %v1913 = vld [vmem:[%s1272 + $0x70] sm:$0x3]
      %v1914 = vld [vmem:[%s1272 + $0x78] sm:$0xff]
      %v1915 = vld [vmem:[%s1272 + $0x80] sm:$0xff]
      %v1916 = vld [vmem:[%s1272 + $0x88] sm:$0x3]
      %v1917 = vld [vmem:[%s1272 + $0x90] sm:$0xff]
      %v1918 = vld [vmem:[%s1272 + $0x98] sm:$0xff]
      %v1919 = vld [vmem:[%s1272 + $0xa0] sm:$0x3]
      %v1920 = vld [vmem:[%s1272 + $0xa8] sm:$0xff]
      %v1921 = vld [vmem:[%s1272 + $0xb0] sm:$0xff]
      %v1922 = vld [vmem:[%s1272 + $0xb8] sm:$0x3]
      %v1923 = vlaneseq
      %v1924 = vshrl.u32 %v1923, 7
      %v1925 = vsub.s32 6, %v1924
      %v1926 = vrot.slane %v1287, %v1925
      %v1927 = vmul.f32 %v1899, %v1926
      %v1928 = vmul.f32 %v1900, %v1926
      %v1929 = vmul.f32 %v1902, %v1926
      %v1930 = vmul.f32 %v1903, %v1926
      %v1931 = vmul.f32 %v1905, %v1926
      %v1932 = vmul.f32 %v1906, %v1926
      %v1933 = vmul.f32 %v1908, %v1926
      %v1934 = vmul.f32 %v1909, %v1926
      %v1935 = vmul.f32 %v1911, %v1926
      %v1936 = vmul.f32 %v1912, %v1926
      %v1937 = vmul.f32 %v1914, %v1926
      %v1938 = vmul.f32 %v1915, %v1926
      %v1939 = vmul.f32 %v1917, %v1926
      %v1940 = vmul.f32 %v1918, %v1926
      %v1941 = vmul.f32 %v1920, %v1926
      %v1942 = vmul.f32 %v1921, %v1926
      %v1943 = vadd.f32 %v1883, %v1927
      %v1944 = vadd.f32 %v1884, %v1928
      %v1945 = vadd.f32 %v1885, %v1929
      %v1946 = vadd.f32 %v1886, %v1930
      %v1947 = vadd.f32 %v1887, %v1931
      %v1948 = vadd.f32 %v1888, %v1932
      %v1949 = vadd.f32 %v1889, %v1933
      %v1950 = vadd.f32 %v1890, %v1934
      %v1951 = vadd.f32 %v1891, %v1935
      %v1952 = vadd.f32 %v1892, %v1936
      %v1953 = vadd.f32 %v1893, %v1937
      %v1954 = vadd.f32 %v1894, %v1938
      %v1955 = vadd.f32 %v1895, %v1939
      %v1956 = vadd.f32 %v1896, %v1940
      %v1957 = vadd.f32 %v1897, %v1941
      %v1958 = vadd.f32 %v1898, %v1942
      %v1959 = vlaneseq
      %v1960 = vshrl.u32 %v1959, 7
      %v1961 = vsub.s32 7, %v1960
      %v1962 = vrot.slane %v1287, %v1961
      %v1963 = vmul.f32 %v1899, %v1962
      %v1964 = vmul.f32 %v1900, %v1962
      %v1965 = vmul.f32 %v1901, %v1962
      %v1966 = vmul.f32 %v1902, %v1962
      %v1967 = vmul.f32 %v1903, %v1962
      %v1968 = vmul.f32 %v1904, %v1962
      %v1969 = vmul.f32 %v1905, %v1962
      %v1970 = vmul.f32 %v1906, %v1962
      %v1971 = vmul.f32 %v1907, %v1962
      %v1972 = vmul.f32 %v1908, %v1962
      %v1973 = vmul.f32 %v1909, %v1962
      %v1974 = vmul.f32 %v1910, %v1962
      %v1975 = vmul.f32 %v1911, %v1962
      %v1976 = vmul.f32 %v1912, %v1962
      %v1977 = vmul.f32 %v1913, %v1962
      %v1978 = vmul.f32 %v1914, %v1962
      %v1979 = vmul.f32 %v1915, %v1962
      %v1980 = vmul.f32 %v1916, %v1962
      %v1981 = vmul.f32 %v1917, %v1962
      %v1982 = vmul.f32 %v1918, %v1962
      %v1983 = vmul.f32 %v1919, %v1962
      %v1984 = vmul.f32 %v1920, %v1962
      %v1985 = vmul.f32 %v1921, %v1962
      %v1986 = vmul.f32 %v1922, %v1962
      %v2011 = vrot.slane %v1963, 1
      %v2012 = vrot.slane %v1964, 1
      %v2013 = vsel %vm1393, %v2011, %v2012
      %v2014 = vrot.slane %v1965, 1
      %v2015 = vsel %vm1393, %v2012, %v2014
      %v2016 = vrot.slane %v1966, 1
      %v2017 = vrot.slane %v1967, 1
      %v2018 = vsel %vm1393, %v2016, %v2017
      %v2019 = vrot.slane %v1968, 1
      %v2020 = vsel %vm1393, %v2017, %v2019
      %v2021 = vrot.slane %v1969, 1
      %v2022 = vrot.slane %v1970, 1
      %v2023 = vsel %vm1393, %v2021, %v2022
      %v2024 = vrot.slane %v1971, 1
      %v2025 = vsel %vm1393, %v2022, %v2024
      %v2026 = vrot.slane %v1972, 1
      %v2027 = vrot.slane %v1973, 1
      %v2028 = vsel %vm1393, %v2026, %v2027
      %v2029 = vrot.slane %v1974, 1
      %v2030 = vsel %vm1393, %v2027, %v2029
      %v2031 = vrot.slane %v1975, 1
      %v2032 = vrot.slane %v1976, 1
      %v2033 = vsel %vm1393, %v2031, %v2032
      %v2034 = vrot.slane %v1977, 1
      %v2035 = vsel %vm1393, %v2032, %v2034
      %v2036 = vrot.slane %v1978, 1
      %v2037 = vrot.slane %v1979, 1
      %v2038 = vsel %vm1393, %v2036, %v2037
      %v2039 = vrot.slane %v1980, 1
      %v2040 = vsel %vm1393, %v2037, %v2039
      %v2041 = vrot.slane %v1981, 1
      %v2042 = vrot.slane %v1982, 1
      %v2043 = vsel %vm1393, %v2041, %v2042
      %v2044 = vrot.slane %v1983, 1
      %v2045 = vsel %vm1393, %v2042, %v2044
      %v2046 = vrot.slane %v1984, 1
      %v2047 = vrot.slane %v1985, 1
      %v2048 = vsel %vm1393, %v2046, %v2047
      %v2049 = vrot.slane %v1986, 1
      %v2050 = vsel %vm1393, %v2047, %v2049
      %v2067 = vadd.f32 %v1943, %v2013
      %v2068 = vadd.f32 %v1944, %v2015
      %v2069 = vadd.f32 %v1945, %v2018
      %v2070 = vadd.f32 %v1946, %v2020
      %v2071 = vadd.f32 %v1947, %v2023
      %v2072 = vadd.f32 %v1948, %v2025
      %v2073 = vadd.f32 %v1949, %v2028
      %v2074 = vadd.f32 %v1950, %v2030
      %v2075 = vadd.f32 %v1951, %v2033
      %v2076 = vadd.f32 %v1952, %v2035
      %v2077 = vadd.f32 %v1953, %v2038
      %v2078 = vadd.f32 %v1954, %v2040
      %v2079 = vadd.f32 %v1955, %v2043
      %v2080 = vadd.f32 %v1956, %v2045
      %v2081 = vadd.f32 %v1957, %v2048
      %v2082 = vadd.f32 %v1958, %v2050
      %v2083 = vlaneseq
      %v2084 = vshrl.u32 %v2083, 7
      %v2085 = vsub.s32 0, %v2084
      %v2086 = vrot.slane %v1288, %v2085
      %v2087 = vmul.f32 %v1899, %v2086
      %v2088 = vmul.f32 %v1900, %v2086
      %v2089 = vmul.f32 %v1901, %v2086
      %v2090 = vmul.f32 %v1902, %v2086
      %v2091 = vmul.f32 %v1903, %v2086
      %v2092 = vmul.f32 %v1904, %v2086
      %v2093 = vmul.f32 %v1905, %v2086
      %v2094 = vmul.f32 %v1906, %v2086
      %v2095 = vmul.f32 %v1907, %v2086
      %v2096 = vmul.f32 %v1908, %v2086
      %v2097 = vmul.f32 %v1909, %v2086
      %v2098 = vmul.f32 %v1910, %v2086
      %v2099 = vmul.f32 %v1911, %v2086
      %v2100 = vmul.f32 %v1912, %v2086
      %v2101 = vmul.f32 %v1913, %v2086
      %v2102 = vmul.f32 %v1914, %v2086
      %v2103 = vmul.f32 %v1915, %v2086
      %v2104 = vmul.f32 %v1916, %v2086
      %v2105 = vmul.f32 %v1917, %v2086
      %v2106 = vmul.f32 %v1918, %v2086
      %v2107 = vmul.f32 %v1919, %v2086
      %v2108 = vmul.f32 %v1920, %v2086
      %v2109 = vmul.f32 %v1921, %v2086
      %v2110 = vmul.f32 %v1922, %v2086
      %v2135 = vrot.slane %v2087, 2
      %v2136 = vrot.slane %v2088, 2
      %v2137 = vsel %vm1518, %v2135, %v2136
      %v2138 = vrot.slane %v2089, 2
      %v2139 = vsel %vm1518, %v2136, %v2138
      %v2140 = vrot.slane %v2090, 2
      %v2141 = vrot.slane %v2091, 2
      %v2142 = vsel %vm1518, %v2140, %v2141
      %v2143 = vrot.slane %v2092, 2
      %v2144 = vsel %vm1518, %v2141, %v2143
      %v2145 = vrot.slane %v2093, 2
      %v2146 = vrot.slane %v2094, 2
      %v2147 = vsel %vm1518, %v2145, %v2146
      %v2148 = vrot.slane %v2095, 2
      %v2149 = vsel %vm1518, %v2146, %v2148
      %v2150 = vrot.slane %v2096, 2
      %v2151 = vrot.slane %v2097, 2
      %v2152 = vsel %vm1518, %v2150, %v2151
      %v2153 = vrot.slane %v2098, 2
      %v2154 = vsel %vm1518, %v2151, %v2153
      %v2155 = vrot.slane %v2099, 2
      %v2156 = vrot.slane %v2100, 2
      %v2157 = vsel %vm1518, %v2155, %v2156
      %v2158 = vrot.slane %v2101, 2
      %v2159 = vsel %vm1518, %v2156, %v2158
      %v2160 = vrot.slane %v2102, 2
      %v2161 = vrot.slane %v2103, 2
      %v2162 = vsel %vm1518, %v2160, %v2161
      %v2163 = vrot.slane %v2104, 2
      %v2164 = vsel %vm1518, %v2161, %v2163
      %v2165 = vrot.slane %v2105, 2
      %v2166 = vrot.slane %v2106, 2
      %v2167 = vsel %vm1518, %v2165, %v2166
      %v2168 = vrot.slane %v2107, 2
      %v2169 = vsel %vm1518, %v2166, %v2168
      %v2170 = vrot.slane %v2108, 2
      %v2171 = vrot.slane %v2109, 2
      %v2172 = vsel %vm1518, %v2170, %v2171
      %v2173 = vrot.slane %v2110, 2
      %v2174 = vsel %vm1518, %v2171, %v2173
      %v2191 = vadd.f32 %v2067, %v2137
      %v2192 = vadd.f32 %v2068, %v2139
      %v2193 = vadd.f32 %v2069, %v2142
      %v2194 = vadd.f32 %v2070, %v2144
      %v2195 = vadd.f32 %v2071, %v2147
      %v2196 = vadd.f32 %v2072, %v2149
      %v2197 = vadd.f32 %v2073, %v2152
      %v2198 = vadd.f32 %v2074, %v2154
      %v2199 = vadd.f32 %v2075, %v2157
      %v2200 = vadd.f32 %v2076, %v2159
      %v2201 = vadd.f32 %v2077, %v2162
      %v2202 = vadd.f32 %v2078, %v2164
      %v2203 = vadd.f32 %v2079, %v2167
      %v2204 = vadd.f32 %v2080, %v2169
      %v2205 = vadd.f32 %v2081, %v2172
      %v2206 = vadd.f32 %v2082, %v2174
      %v2207 = vmax.f32 %v2191, 0.0
      %v2208 = vmax.f32 %v2192, 0.0
      %v2209 = vmax.f32 %v2193, 0.0
      %v2210 = vmax.f32 %v2194, 0.0
      %v2211 = vmax.f32 %v2195, 0.0
      %v2212 = vmax.f32 %v2196, 0.0
      %v2213 = vmax.f32 %v2197, 0.0
      %v2214 = vmax.f32 %v2198, 0.0
      %v2215 = vmax.f32 %v2199, 0.0
      %v2216 = vmax.f32 %v2200, 0.0
      %v2217 = vmax.f32 %v2201, 0.0
      %v2218 = vmax.f32 %v2202, 0.0
      %v2219 = vmax.f32 %v2203, 0.0
      %v2220 = vmax.f32 %v2204, 0.0
      %v2221 = vmax.f32 %v2205, 0.0
      %v2222 = vmax.f32 %v2206, 0.0
      %v2223 = vmin.f32 %v2207, 6.0
      %v2224 = vmin.f32 %v2208, 6.0
      %v2225 = vmin.f32 %v2209, 6.0
      %v2226 = vmin.f32 %v2210, 6.0
      %v2227 = vmin.f32 %v2211, 6.0
      %v2228 = vmin.f32 %v2212, 6.0
      %v2229 = vmin.f32 %v2213, 6.0
      %v2230 = vmin.f32 %v2214, 6.0
      %v2231 = vmin.f32 %v2215, 6.0
      %v2232 = vmin.f32 %v2216, 6.0
      %v2233 = vmin.f32 %v2217, 6.0
      %v2234 = vmin.f32 %v2218, 6.0
      %v2235 = vmin.f32 %v2219, 6.0
      %v2236 = vmin.f32 %v2220, 6.0
      %v2237 = vmin.f32 %v2221, 6.0
      %v2238 = vmin.f32 %v2222, 6.0
      %v2240 = vsel %vm337, %v2223, 0
      %v2243 = vsel %vm337, %v2224, 0
      %v2246 = vsel %vm337, %v2225, 0
      %v2249 = vsel %vm337, %v2226, 0
      %v2252 = vsel %vm337, %v2227, 0
      %v2255 = vsel %vm337, %v2228, 0
      %v2258 = vsel %vm337, %v2229, 0
      %v2261 = vsel %vm337, %v2230, 0
      %v2264 = vsel %vm337, %v2231, 0
      %v2267 = vsel %vm337, %v2232, 0
      %v2270 = vsel %vm337, %v2233, 0
      %v2273 = vsel %vm337, %v2234, 0
      %v2276 = vsel %vm337, %v2235, 0
      %v2279 = vsel %vm337, %v2236, 0
      %v2282 = vsel %vm337, %v2237, 0
      %v2285 = vsel %vm337, %v2238, 0
      %2287 = vmatprep.subr.mxu0 0.0
      %2288 = vmatpush1.msra.mxu0 %v1289
      %2289 = vmatprep.subr.mxu0 0.0
      %2290 = vmatpush1.msra.mxu0 %v1290
      %2291 = vmatprep.subr.mxu0 0.0
      %2292 = vmatpush1.msra.mxu0 %v1291
      %2293 = vmatprep.subr.mxu0 0.0
      %2294 = vmatpush1.msra.mxu0 %v1292
      %2295 = vmatprep.subr.mxu0 0.0
      %2296 = vmatpush1.msra.mxu0 %v1293
      %2297 = vmatprep.subr.mxu0 0.0
      %2298 = vmatpush1.msra.mxu0 %v1294
      %2299 = vmatprep.subr.mxu0 0.0
      %2300 = vmatpush1.msra.mxu0 %v1295
      %2301 = vmatprep.subr.mxu0 0.0
      %2302 = vmatpush1.msra.mxu0 %v1296
      %2303 = vmatprep.subr.mxu0 0.0
      %2304 = vmatpush1.msra.mxu0 0.0
      %2305 = vmatprep.subr.mxu0 0.0
      %2306 = vmatpush1.msra.mxu0 0.0
      %2307 = vmatprep.subr.mxu0 0.0
      %2308 = vmatpush1.msra.mxu0 0.0
      %2309 = vmatprep.subr.mxu0 0.0
      %2310 = vmatpush1.msra.mxu0 0.0
      %2311 = vmatprep.subr.mxu0 0.0
      %2312 = vmatpush1.msra.mxu0 0.0
      %2313 = vmatprep.subr.mxu0 0.0
      %2314 = vmatpush1.msra.mxu0 0.0
      %2315 = vmatprep.subr.mxu0 0.0
      %2316 = vmatpush1.msra.mxu0 0.0
      %2317 = vmatprep.subr.mxu0 0.0
      %2318 = vmatpush1.msra.mxu0 0.0
      %2319 = vmatprep.subr.mxu0 0.0
      %2320 = vmatpush1.msra.mxu0 0.0
      %2321 = vmatprep.subr.mxu0 0.0
      %2322 = vmatpush1.msra.mxu0 0.0
      %2323 = vmatprep.subr.mxu0 0.0
      %2324 = vmatpush1.msra.mxu0 0.0
      %2325 = vmatprep.subr.mxu0 0.0
      %2326 = vmatpush1.msra.mxu0 0.0
      %2327 = vmatprep.subr.mxu0 0.0
      %2328 = vmatpush1.msra.mxu0 0.0
      %2329 = vmatprep.subr.mxu0 0.0
      %2330 = vmatpush1.msra.mxu0 0.0
      %2331 = vmatprep.subr.mxu0 0.0
      %2332 = vmatpush1.msra.mxu0 0.0
      %2333 = vmatprep.subr.mxu0 0.0
      %2334 = vmatpush1.msra.mxu0 0.0
      %2335 = vmatprep.subr.mxu0 0.0
      %2336 = vmatpush1.msra.mxu0 0.0
      %2337 = vmatprep.subr.mxu0 0.0
      %2338 = vmatpush1.msra.mxu0 0.0
      %2339 = vmatprep.subr.mxu0 0.0
      %2340 = vmatpush1.msra.mxu0 0.0
      %2341 = vmatprep.subr.mxu0 0.0
      %2342 = vmatpush1.msra.mxu0 0.0
      %2343 = vmatprep.subr.mxu0 0.0
      %2344 = vmatpush1.msra.mxu0 0.0
      %2345 = vmatprep.subr.mxu0 0.0
      %2346 = vmatpush1.msra.mxu0 0.0
      %2347 = vmatprep.subr.mxu0 0.0
      %2348 = vmatpush1.msra.mxu0 0.0
      %2349 = vmatprep.subr.mxu0 0.0
      %2350 = vmatpush1.msra.mxu0 0.0
      %2351 = vmatprep.mubr.f32.mxu0 0.0
      %2352 = vmatmul.mubr.f32.gmra.mrb[0].mxu0 %v2240
      %v2353 = vpop.f32.mrb[0].mxu0
      %v2354 = vadd.f32 0.0, %v2353
      %v2355 = vpop.f32.mrb[0].mxu0
      %2356 = vmatprep.mubr.f32.mxu0 0.0
      %2357 = vmatmul.mubr.f32.gmra.mrb[0].mxu0 %v2243
      %v2358 = vpop.f32.mrb[0].mxu0
      %v2359 = vadd.f32 0.0, %v2358
      %v2360 = vpop.f32.mrb[0].mxu0
      %2361 = vmatprep.mubr.f32.mxu0 0.0
      %2362 = vmatmul.mubr.f32.gmra.mrb[0].mxu0 %v2246
      %v2363 = vpop.f32.mrb[0].mxu0
      %v2364 = vadd.f32 0.0, %v2363
      %v2365 = vpop.f32.mrb[0].mxu0
      %2366 = vmatprep.mubr.f32.mxu0 0.0
      %2367 = vmatmul.mubr.f32.gmra.mrb[0].mxu0 %v2249
      %v2368 = vpop.f32.mrb[0].mxu0
      %v2369 = vadd.f32 0.0, %v2368
      %v2370 = vpop.f32.mrb[0].mxu0
      %2371 = vmatprep.mubr.f32.mxu0 0.0
      %2372 = vmatmul.mubr.f32.gmra.mrb[0].mxu0 %v2252
      %v2373 = vpop.f32.mrb[0].mxu0
      %v2374 = vadd.f32 0.0, %v2373
      %v2375 = vpop.f32.mrb[0].mxu0
      %2376 = vmatprep.mubr.f32.mxu0 0.0
      %2377 = vmatmul.mubr.f32.gmra.mrb[0].mxu0 %v2255
      %v2378 = vpop.f32.mrb[0].mxu0
      %v2379 = vadd.f32 0.0, %v2378
      %v2380 = vpop.f32.mrb[0].mxu0
      %2381 = vmatprep.mubr.f32.mxu0 0.0
      %2382 = vmatmul.mubr.f32.gmra.mrb[0].mxu0 %v2258
      %v2383 = vpop.f32.mrb[0].mxu0
      %v2384 = vadd.f32 0.0, %v2383
      %v2385 = vpop.f32.mrb[0].mxu0
      %2386 = vmatprep.mubr.f32.mxu0 0.0
      %2387 = vmatmul.mubr.f32.gmra.mrb[0].mxu0 %v2261
      %v2388 = vpop.f32.mrb[0].mxu0
      %v2389 = vadd.f32 0.0, %v2388
      %v2390 = vpop.f32.mrb[0].mxu0
      %2391 = vmatprep.mubr.f32.mxu0 0.0
      %2392 = vmatmul.mubr.f32.gmra.mrb[0].mxu0 %v2264
      %v2393 = vpop.f32.mrb[0].mxu0
      %v2394 = vadd.f32 0.0, %v2393
      %v2395 = vpop.f32.mrb[0].mxu0
      %2396 = vmatprep.mubr.f32.mxu0 0.0
      %2397 = vmatmul.mubr.f32.gmra.mrb[0].mxu0 %v2267
      %v2398 = vpop.f32.mrb[0].mxu0
      %v2399 = vadd.f32 0.0, %v2398
      %v2400 = vpop.f32.mrb[0].mxu0
      %2401 = vmatprep.mubr.f32.mxu0 0.0
      %2402 = vmatmul.mubr.f32.gmra.mrb[0].mxu0 %v2270
      %v2403 = vpop.f32.mrb[0].mxu0
      %v2404 = vadd.f32 0.0, %v2403
      %v2405 = vpop.f32.mrb[0].mxu0
      %2406 = vmatprep.mubr.f32.mxu0 0.0
      %2407 = vmatmul.mubr.f32.gmra.mrb[0].mxu0 %v2273
      %v2408 = vpop.f32.mrb[0].mxu0
      %v2409 = vadd.f32 0.0, %v2408
      %v2410 = vpop.f32.mrb[0].mxu0
      %2411 = vmatprep.mubr.f32.mxu0 0.0
      %2412 = vmatmul.mubr.f32.gmra.mrb[0].mxu0 %v2276
      %v2413 = vpop.f32.mrb[0].mxu0
      %v2414 = vadd.f32 0.0, %v2413
      %v2415 = vpop.f32.mrb[0].mxu0
      %2416 = vmatprep.mubr.f32.mxu0 0.0
      %2417 = vmatmul.mubr.f32.gmra.mrb[0].mxu0 %v2279
      %v2418 = vpop.f32.mrb[0].mxu0
      %v2419 = vadd.f32 0.0, %v2418
      %v2420 = vpop.f32.mrb[0].mxu0
      %2421 = vmatprep.mubr.f32.mxu0 0.0
      %2422 = vmatmul.mubr.f32.gmra.mrb[0].mxu0 %v2282
      %v2423 = vpop.f32.mrb[0].mxu0
      %v2424 = vadd.f32 0.0, %v2423
      %v2425 = vpop.f32.mrb[0].mxu0
      %2426 = vmatprep.mubr.f32.mxu0 0.0
      %2427 = vmatmul.mubr.f32.gmra.mrb[0].mxu0 %v2285
      %v2428 = vpop.f32.mrb[0].mxu0
      %v2429 = vadd.f32 0.0, %v2428
      %v2430 = vpop.f32.mrb[0].mxu0
      %2431 = vdwg.mxu0
      %v2432 = vld [vmem:[%s305] sm:$0xff]
      %v2433 = vld [vmem:[%s305 + $0x8] sm:$0xff]
      %v2434 = vld [vmem:[%s305 + $0x10] sm:$0xff]
      %v2435 = vld [vmem:[%s305 + $0x18] sm:$0xff]
      %v2436 = vld [vmem:[%s305 + $0x20] sm:$0xff]
      %v2437 = vld [vmem:[%s305 + $0x28] sm:$0xff]
      %v2438 = vld [vmem:[%s305 + $0x30] sm:$0xff]
      %v2439 = vld [vmem:[%s305 + $0x38] sm:$0xff]
      %v2440 = vld [vmem:[%s305 + $0x40] sm:$0xff]
      %v2441 = vld [vmem:[%s305 + $0x48] sm:$0xff]
      %v2442 = vld [vmem:[%s305 + $0x50] sm:$0xff]
      %v2443 = vld [vmem:[%s305 + $0x58] sm:$0xff]
      %v2444 = vld [vmem:[%s305 + $0x60] sm:$0xff]
      %v2445 = vld [vmem:[%s305 + $0x68] sm:$0xff]
      %v2446 = vld [vmem:[%s305 + $0x70] sm:$0xff]
      %v2447 = vld [vmem:[%s305 + $0x78] sm:$0xff]
      %v2448 = vadd.f32 %v2432, %v2354
      %v2449 = vadd.f32 %v2433, %v2359
      %v2450 = vadd.f32 %v2434, %v2364
      %v2451 = vadd.f32 %v2435, %v2369
      %v2452 = vadd.f32 %v2436, %v2374
      %v2453 = vadd.f32 %v2437, %v2379
      %v2454 = vadd.f32 %v2438, %v2384
      %v2455 = vadd.f32 %v2439, %v2389
      %v2456 = vadd.f32 %v2440, %v2394
      %v2457 = vadd.f32 %v2441, %v2399
      %v2458 = vadd.f32 %v2442, %v2404
      %v2459 = vadd.f32 %v2443, %v2409
      %v2460 = vadd.f32 %v2444, %v2414
      %v2461 = vadd.f32 %v2445, %v2419
      %v2462 = vadd.f32 %v2446, %v2424
      %v2463 = vadd.f32 %v2447, %v2429
      %2464 = vst.msk [vmem:[%s305] sm:$0xff] %vm337, %v2448
      %2465 = vst.msk [vmem:[%s305 + $0x8] sm:$0xff] %vm337, %v2449
      %2466 = vst.msk [vmem:[%s305 + $0x10] sm:$0xff] %vm337, %v2450
      %2467 = vst.msk [vmem:[%s305 + $0x18] sm:$0xff] %vm337, %v2451
      %2468 = vst.msk [vmem:[%s305 + $0x20] sm:$0xff] %vm337, %v2452
      %2469 = vst.msk [vmem:[%s305 + $0x28] sm:$0xff] %vm337, %v2453
      %2470 = vst.msk [vmem:[%s305 + $0x30] sm:$0xff] %vm337, %v2454
      %2471 = vst.msk [vmem:[%s305 + $0x38] sm:$0xff] %vm337, %v2455
      %2472 = vst.msk [vmem:[%s305 + $0x40] sm:$0xff] %vm337, %v2456
      %2473 = vst.msk [vmem:[%s305 + $0x48] sm:$0xff] %vm337, %v2457
      %2474 = vst.msk [vmem:[%s305 + $0x50] sm:$0xff] %vm337, %v2458
      %2475 = vst.msk [vmem:[%s305 + $0x58] sm:$0xff] %vm337, %v2459
      %2476 = vst.msk [vmem:[%s305 + $0x60] sm:$0xff] %vm337, %v2460
      %2477 = vst.msk [vmem:[%s305 + $0x68] sm:$0xff] %vm337, %v2461
      %2478 = vst.msk [vmem:[%s305 + $0x70] sm:$0xff] %vm337, %v2462
      %2479 = vst.msk [vmem:[%s305 + $0x78] sm:$0xff] %vm337, %v2463
      %s2480 = scalar_lea.vmem [#allocation2], 192
      %v2481 = vld [vmem:[%s2480] sm:$0xff]
      %v2482 = vld [vmem:[%s2480 + $0x8] sm:$0xff]
      %v2483 = vld [vmem:[%s2480 + $0x10] sm:$0x3]
      %v2484 = vld [vmem:[%s2480 + $0x18] sm:$0xff]
      %v2485 = vld [vmem:[%s2480 + $0x20] sm:$0xff]
      %v2486 = vld [vmem:[%s2480 + $0x28] sm:$0x3]
      %v2487 = vld [vmem:[%s2480 + $0x30] sm:$0xff]
      %v2488 = vld [vmem:[%s2480 + $0x38] sm:$0xff]
      %v2489 = vld [vmem:[%s2480 + $0x40] sm:$0x3]
      %v2490 = vld [vmem:[%s2480 + $0x48] sm:$0xff]
      %v2491 = vld [vmem:[%s2480 + $0x50] sm:$0xff]
      %v2492 = vld [vmem:[%s2480 + $0x58] sm:$0x3]
      %v2493 = vld [vmem:[%s2480 + $0x60] sm:$0xff]
      %v2494 = vld [vmem:[%s2480 + $0x68] sm:$0xff]
      %v2495 = vld [vmem:[%s2480 + $0x70] sm:$0x3]
      %v2496 = vld [vmem:[%s2480 + $0x78] sm:$0xff]
      %v2497 = vld [vmem:[%s2480 + $0x80] sm:$0xff]
      %v2498 = vld [vmem:[%s2480 + $0x88] sm:$0x3]
      %v2499 = vld [vmem:[%s2480 + $0x90] sm:$0xff]
      %v2500 = vld [vmem:[%s2480 + $0x98] sm:$0xff]
      %v2501 = vld [vmem:[%s2480 + $0xa0] sm:$0x3]
      %v2502 = vld [vmem:[%s2480 + $0xa8] sm:$0xff]
      %v2503 = vld [vmem:[%s2480 + $0xb0] sm:$0xff]
      %v2504 = vld [vmem:[%s2480 + $0xb8] sm:$0x3]
      %v2505 = vmul.f32 %v2481, %v1324
      %v2506 = vmul.f32 %v2482, %v1324
      %v2507 = vmul.f32 %v2484, %v1324
      %v2508 = vmul.f32 %v2485, %v1324
      %v2509 = vmul.f32 %v2487, %v1324
      %v2510 = vmul.f32 %v2488, %v1324
      %v2511 = vmul.f32 %v2490, %v1324
      %v2512 = vmul.f32 %v2491, %v1324
      %v2513 = vmul.f32 %v2493, %v1324
      %v2514 = vmul.f32 %v2494, %v1324
      %v2515 = vmul.f32 %v2496, %v1324
      %v2516 = vmul.f32 %v2497, %v1324
      %v2517 = vmul.f32 %v2499, %v1324
      %v2518 = vmul.f32 %v2500, %v1324
      %v2519 = vmul.f32 %v2502, %v1324
      %v2520 = vmul.f32 %v2503, %v1324
      %v2521 = vmul.f32 %v2481, %v1344
      %v2522 = vmul.f32 %v2482, %v1344
      %v2523 = vmul.f32 %v2483, %v1344
      %v2524 = vmul.f32 %v2484, %v1344
      %v2525 = vmul.f32 %v2485, %v1344
      %v2526 = vmul.f32 %v2486, %v1344
      %v2527 = vmul.f32 %v2487, %v1344
      %v2528 = vmul.f32 %v2488, %v1344
      %v2529 = vmul.f32 %v2489, %v1344
      %v2530 = vmul.f32 %v2490, %v1344
      %v2531 = vmul.f32 %v2491, %v1344
      %v2532 = vmul.f32 %v2492, %v1344
      %v2533 = vmul.f32 %v2493, %v1344
      %v2534 = vmul.f32 %v2494, %v1344
      %v2535 = vmul.f32 %v2495, %v1344
      %v2536 = vmul.f32 %v2496, %v1344
      %v2537 = vmul.f32 %v2497, %v1344
      %v2538 = vmul.f32 %v2498, %v1344
      %v2539 = vmul.f32 %v2499, %v1344
      %v2540 = vmul.f32 %v2500, %v1344
      %v2541 = vmul.f32 %v2501, %v1344
      %v2542 = vmul.f32 %v2502, %v1344
      %v2543 = vmul.f32 %v2503, %v1344
      %v2544 = vmul.f32 %v2504, %v1344
      %v2569 = vrot.slane %v2521, 1
      %v2570 = vrot.slane %v2522, 1
      %v2571 = vsel %vm1393, %v2569, %v2570
      %v2572 = vrot.slane %v2523, 1
      %v2573 = vsel %vm1393, %v2570, %v2572
      %v2574 = vrot.slane %v2524, 1
      %v2575 = vrot.slane %v2525, 1
      %v2576 = vsel %vm1393, %v2574, %v2575
      %v2577 = vrot.slane %v2526, 1
      %v2578 = vsel %vm1393, %v2575, %v2577
      %v2579 = vrot.slane %v2527, 1
      %v2580 = vrot.slane %v2528, 1
      %v2581 = vsel %vm1393, %v2579, %v2580
      %v2582 = vrot.slane %v2529, 1
      %v2583 = vsel %vm1393, %v2580, %v2582
      %v2584 = vrot.slane %v2530, 1
      %v2585 = vrot.slane %v2531, 1
      %v2586 = vsel %vm1393, %v2584, %v2585
      %v2587 = vrot.slane %v2532, 1
      %v2588 = vsel %vm1393, %v2585, %v2587
      %v2589 = vrot.slane %v2533, 1
      %v2590 = vrot.slane %v2534, 1
      %v2591 = vsel %vm1393, %v2589, %v2590
      %v2592 = vrot.slane %v2535, 1
      %v2593 = vsel %vm1393, %v2590, %v2592
      %v2594 = vrot.slane %v2536, 1
      %v2595 = vrot.slane %v2537, 1
      %v2596 = vsel %vm1393, %v2594, %v2595
      %v2597 = vrot.slane %v2538, 1
      %v2598 = vsel %vm1393, %v2595, %v2597
      %v2599 = vrot.slane %v2539, 1
      %v2600 = vrot.slane %v2540, 1
      %v2601 = vsel %vm1393, %v2599, %v2600
      %v2602 = vrot.slane %v2541, 1
      %v2603 = vsel %vm1393, %v2600, %v2602
      %v2604 = vrot.slane %v2542, 1
      %v2605 = vrot.slane %v2543, 1
      %v2606 = vsel %vm1393, %v2604, %v2605
      %v2607 = vrot.slane %v2544, 1
      %v2608 = vsel %vm1393, %v2605, %v2607
      %v2625 = vadd.f32 %v2505, %v2571
      %v2626 = vadd.f32 %v2506, %v2573
      %v2627 = vadd.f32 %v2507, %v2576
      %v2628 = vadd.f32 %v2508, %v2578
      %v2629 = vadd.f32 %v2509, %v2581
      %v2630 = vadd.f32 %v2510, %v2583
      %v2631 = vadd.f32 %v2511, %v2586
      %v2632 = vadd.f32 %v2512, %v2588
      %v2633 = vadd.f32 %v2513, %v2591
      %v2634 = vadd.f32 %v2514, %v2593
      %v2635 = vadd.f32 %v2515, %v2596
      %v2636 = vadd.f32 %v2516, %v2598
      %v2637 = vadd.f32 %v2517, %v2601
      %v2638 = vadd.f32 %v2518, %v2603
      %v2639 = vadd.f32 %v2519, %v2606
      %v2640 = vadd.f32 %v2520, %v2608
      %v2641 = vmul.f32 %v2481, %v1469
      %v2642 = vmul.f32 %v2482, %v1469
      %v2643 = vmul.f32 %v2483, %v1469
      %v2644 = vmul.f32 %v2484, %v1469
      %v2645 = vmul.f32 %v2485, %v1469
      %v2646 = vmul.f32 %v2486, %v1469
      %v2647 = vmul.f32 %v2487, %v1469
      %v2648 = vmul.f32 %v2488, %v1469
      %v2649 = vmul.f32 %v2489, %v1469
      %v2650 = vmul.f32 %v2490, %v1469
      %v2651 = vmul.f32 %v2491, %v1469
      %v2652 = vmul.f32 %v2492, %v1469
      %v2653 = vmul.f32 %v2493, %v1469
      %v2654 = vmul.f32 %v2494, %v1469
      %v2655 = vmul.f32 %v2495, %v1469
      %v2656 = vmul.f32 %v2496, %v1469
      %v2657 = vmul.f32 %v2497, %v1469
      %v2658 = vmul.f32 %v2498, %v1469
      %v2659 = vmul.f32 %v2499, %v1469
      %v2660 = vmul.f32 %v2500, %v1469
      %v2661 = vmul.f32 %v2501, %v1469
      %v2662 = vmul.f32 %v2502, %v1469
      %v2663 = vmul.f32 %v2503, %v1469
      %v2664 = vmul.f32 %v2504, %v1469
      %v2689 = vrot.slane %v2641, 2
      %v2690 = vrot.slane %v2642, 2
      %v2691 = vsel %vm1518, %v2689, %v2690
      %v2692 = vrot.slane %v2643, 2
      %v2693 = vsel %vm1518, %v2690, %v2692
      %v2694 = vrot.slane %v2644, 2
      %v2695 = vrot.slane %v2645, 2
      %v2696 = vsel %vm1518, %v2694, %v2695
      %v2697 = vrot.slane %v2646, 2
      %v2698 = vsel %vm1518, %v2695, %v2697
      %v2699 = vrot.slane %v2647, 2
      %v2700 = vrot.slane %v2648, 2
      %v2701 = vsel %vm1518, %v2699, %v2700
      %v2702 = vrot.slane %v2649, 2
      %v2703 = vsel %vm1518, %v2700, %v2702
      %v2704 = vrot.slane %v2650, 2
      %v2705 = vrot.slane %v2651, 2
      %v2706 = vsel %vm1518, %v2704, %v2705
      %v2707 = vrot.slane %v2652, 2
      %v2708 = vsel %vm1518, %v2705, %v2707
      %v2709 = vrot.slane %v2653, 2
      %v2710 = vrot.slane %v2654, 2
      %v2711 = vsel %vm1518, %v2709, %v2710
      %v2712 = vrot.slane %v2655, 2
      %v2713 = vsel %vm1518, %v2710, %v2712
      %v2714 = vrot.slane %v2656, 2
      %v2715 = vrot.slane %v2657, 2
      %v2716 = vsel %vm1518, %v2714, %v2715
      %v2717 = vrot.slane %v2658, 2
      %v2718 = vsel %vm1518, %v2715, %v2717
      %v2719 = vrot.slane %v2659, 2
      %v2720 = vrot.slane %v2660, 2
      %v2721 = vsel %vm1518, %v2719, %v2720
      %v2722 = vrot.slane %v2661, 2
      %v2723 = vsel %vm1518, %v2720, %v2722
      %v2724 = vrot.slane %v2662, 2
      %v2725 = vrot.slane %v2663, 2
      %v2726 = vsel %vm1518, %v2724, %v2725
      %v2727 = vrot.slane %v2664, 2
      %v2728 = vsel %vm1518, %v2725, %v2727
      %v2745 = vadd.f32 %v2625, %v2691
      %v2746 = vadd.f32 %v2626, %v2693
      %v2747 = vadd.f32 %v2627, %v2696
      %v2748 = vadd.f32 %v2628, %v2698
      %v2749 = vadd.f32 %v2629, %v2701
      %v2750 = vadd.f32 %v2630, %v2703
      %v2751 = vadd.f32 %v2631, %v2706
      %v2752 = vadd.f32 %v2632, %v2708
      %v2753 = vadd.f32 %v2633, %v2711
      %v2754 = vadd.f32 %v2634, %v2713
      %v2755 = vadd.f32 %v2635, %v2716
      %v2756 = vadd.f32 %v2636, %v2718
      %v2757 = vadd.f32 %v2637, %v2721
      %v2758 = vadd.f32 %v2638, %v2723
      %v2759 = vadd.f32 %v2639, %v2726
      %v2760 = vadd.f32 %v2640, %v2728
      %v2761 = vld [vmem:[%s1247] sm:$0xff]
      %v2762 = vld [vmem:[%s1247 + $0x8] sm:$0xff]
      %v2763 = vld [vmem:[%s1247 + $0x10] sm:$0x3]
      %v2764 = vld [vmem:[%s1247 + $0x18] sm:$0xff]
      %v2765 = vld [vmem:[%s1247 + $0x20] sm:$0xff]
      %v2766 = vld [vmem:[%s1247 + $0x28] sm:$0x3]
      %v2767 = vld [vmem:[%s1247 + $0x30] sm:$0xff]
      %v2768 = vld [vmem:[%s1247 + $0x38] sm:$0xff]
      %v2769 = vld [vmem:[%s1247 + $0x40] sm:$0x3]
      %v2770 = vld [vmem:[%s1247 + $0x48] sm:$0xff]
      %v2771 = vld [vmem:[%s1247 + $0x50] sm:$0xff]
      %v2772 = vld [vmem:[%s1247 + $0x58] sm:$0x3]
      %v2773 = vld [vmem:[%s1247 + $0x60] sm:$0xff]
      %v2774 = vld [vmem:[%s1247 + $0x68] sm:$0xff]
      %v2775 = vld [vmem:[%s1247 + $0x70] sm:$0x3]
      %v2776 = vld [vmem:[%s1247 + $0x78] sm:$0xff]
      %v2777 = vld [vmem:[%s1247 + $0x80] sm:$0xff]
      %v2778 = vld [vmem:[%s1247 + $0x88] sm:$0x3]
      %v2779 = vld [vmem:[%s1247 + $0x90] sm:$0xff]
      %v2780 = vld [vmem:[%s1247 + $0x98] sm:$0xff]
      %v2781 = vld [vmem:[%s1247 + $0xa0] sm:$0x3]
      %v2782 = vld [vmem:[%s1247 + $0xa8] sm:$0xff]
      %v2783 = vld [vmem:[%s1247 + $0xb0] sm:$0xff]
      %v2784 = vld [vmem:[%s1247 + $0xb8] sm:$0x3]
      %v2785 = vmul.f32 %v2761, %v1618
      %v2786 = vmul.f32 %v2762, %v1618
      %v2787 = vmul.f32 %v2764, %v1618
      %v2788 = vmul.f32 %v2765, %v1618
      %v2789 = vmul.f32 %v2767, %v1618
      %v2790 = vmul.f32 %v2768, %v1618
      %v2791 = vmul.f32 %v2770, %v1618
      %v2792 = vmul.f32 %v2771, %v1618
      %v2793 = vmul.f32 %v2773, %v1618
      %v2794 = vmul.f32 %v2774, %v1618
      %v2795 = vmul.f32 %v2776, %v1618
      %v2796 = vmul.f32 %v2777, %v1618
      %v2797 = vmul.f32 %v2779, %v1618
      %v2798 = vmul.f32 %v2780, %v1618
      %v2799 = vmul.f32 %v2782, %v1618
      %v2800 = vmul.f32 %v2783, %v1618
      %v2801 = vadd.f32 %v2745, %v2785
      %v2802 = vadd.f32 %v2746, %v2786
      %v2803 = vadd.f32 %v2747, %v2787
      %v2804 = vadd.f32 %v2748, %v2788
      %v2805 = vadd.f32 %v2749, %v2789
      %v2806 = vadd.f32 %v2750, %v2790
      %v2807 = vadd.f32 %v2751, %v2791
      %v2808 = vadd.f32 %v2752, %v2792
      %v2809 = vadd.f32 %v2753, %v2793
      %v2810 = vadd.f32 %v2754, %v2794
      %v2811 = vadd.f32 %v2755, %v2795
      %v2812 = vadd.f32 %v2756, %v2796
      %v2813 = vadd.f32 %v2757, %v2797
      %v2814 = vadd.f32 %v2758, %v2798
      %v2815 = vadd.f32 %v2759, %v2799
      %v2816 = vadd.f32 %v2760, %v2800
      %v2817 = vmul.f32 %v2761, %v1654
      %v2818 = vmul.f32 %v2762, %v1654
      %v2819 = vmul.f32 %v2763, %v1654
      %v2820 = vmul.f32 %v2764, %v1654
      %v2821 = vmul.f32 %v2765, %v1654
      %v2822 = vmul.f32 %v2766, %v1654
      %v2823 = vmul.f32 %v2767, %v1654
      %v2824 = vmul.f32 %v2768, %v1654
      %v2825 = vmul.f32 %v2769, %v1654
      %v2826 = vmul.f32 %v2770, %v1654
      %v2827 = vmul.f32 %v2771, %v1654
      %v2828 = vmul.f32 %v2772, %v1654
      %v2829 = vmul.f32 %v2773, %v1654
      %v2830 = vmul.f32 %v2774, %v1654
      %v2831 = vmul.f32 %v2775, %v1654
      %v2832 = vmul.f32 %v2776, %v1654
      %v2833 = vmul.f32 %v2777, %v1654
      %v2834 = vmul.f32 %v2778, %v1654
      %v2835 = vmul.f32 %v2779, %v1654
      %v2836 = vmul.f32 %v2780, %v1654
      %v2837 = vmul.f32 %v2781, %v1654
      %v2838 = vmul.f32 %v2782, %v1654
      %v2839 = vmul.f32 %v2783, %v1654
      %v2840 = vmul.f32 %v2784, %v1654
      %v2865 = vrot.slane %v2817, 1
      %v2866 = vrot.slane %v2818, 1
      %v2867 = vsel %vm1393, %v2865, %v2866
      %v2868 = vrot.slane %v2819, 1
      %v2869 = vsel %vm1393, %v2866, %v2868
      %v2870 = vrot.slane %v2820, 1
      %v2871 = vrot.slane %v2821, 1
      %v2872 = vsel %vm1393, %v2870, %v2871
      %v2873 = vrot.slane %v2822, 1
      %v2874 = vsel %vm1393, %v2871, %v2873
      %v2875 = vrot.slane %v2823, 1
      %v2876 = vrot.slane %v2824, 1
      %v2877 = vsel %vm1393, %v2875, %v2876
      %v2878 = vrot.slane %v2825, 1
      %v2879 = vsel %vm1393, %v2876, %v2878
      %v2880 = vrot.slane %v2826, 1
      %v2881 = vrot.slane %v2827, 1
      %v2882 = vsel %vm1393, %v2880, %v2881
      %v2883 = vrot.slane %v2828, 1
      %v2884 = vsel %vm1393, %v2881, %v2883
      %v2885 = vrot.slane %v2829, 1
      %v2886 = vrot.slane %v2830, 1
      %v2887 = vsel %vm1393, %v2885, %v2886
      %v2888 = vrot.slane %v2831, 1
      %v2889 = vsel %vm1393, %v2886, %v2888
      %v2890 = vrot.slane %v2832, 1
      %v2891 = vrot.slane %v2833, 1
      %v2892 = vsel %vm1393, %v2890, %v2891
      %v2893 = vrot.slane %v2834, 1
      %v2894 = vsel %vm1393, %v2891, %v2893
      %v2895 = vrot.slane %v2835, 1
      %v2896 = vrot.slane %v2836, 1
      %v2897 = vsel %vm1393, %v2895, %v2896
      %v2898 = vrot.slane %v2837, 1
      %v2899 = vsel %vm1393, %v2896, %v2898
      %v2900 = vrot.slane %v2838, 1
      %v2901 = vrot.slane %v2839, 1
      %v2902 = vsel %vm1393, %v2900, %v2901
      %v2903 = vrot.slane %v2840, 1
      %v2904 = vsel %vm1393, %v2901, %v2903
      %v2921 = vadd.f32 %v2801, %v2867
      %v2922 = vadd.f32 %v2802, %v2869
      %v2923 = vadd.f32 %v2803, %v2872
      %v2924 = vadd.f32 %v2804, %v2874
      %v2925 = vadd.f32 %v2805, %v2877
      %v2926 = vadd.f32 %v2806, %v2879
      %v2927 = vadd.f32 %v2807, %v2882
      %v2928 = vadd.f32 %v2808, %v2884
      %v2929 = vadd.f32 %v2809, %v2887
      %v2930 = vadd.f32 %v2810, %v2889
      %v2931 = vadd.f32 %v2811, %v2892
      %v2932 = vadd.f32 %v2812, %v2894
      %v2933 = vadd.f32 %v2813, %v2897
      %v2934 = vadd.f32 %v2814, %v2899
      %v2935 = vadd.f32 %v2815, %v2902
      %v2936 = vadd.f32 %v2816, %v2904
      %v2937 = vmul.f32 %v2761, %v1778
      %v2938 = vmul.f32 %v2762, %v1778
      %v2939 = vmul.f32 %v2763, %v1778
      %v2940 = vmul.f32 %v2764, %v1778
      %v2941 = vmul.f32 %v2765, %v1778
      %v2942 = vmul.f32 %v2766, %v1778
      %v2943 = vmul.f32 %v2767, %v1778
      %v2944 = vmul.f32 %v2768, %v1778
      %v2945 = vmul.f32 %v2769, %v1778
      %v2946 = vmul.f32 %v2770, %v1778
      %v2947 = vmul.f32 %v2771, %v1778
      %v2948 = vmul.f32 %v2772, %v1778
      %v2949 = vmul.f32 %v2773, %v1778
      %v2950 = vmul.f32 %v2774, %v1778
      %v2951 = vmul.f32 %v2775, %v1778
      %v2952 = vmul.f32 %v2776, %v1778
      %v2953 = vmul.f32 %v2777, %v1778
      %v2954 = vmul.f32 %v2778, %v1778
      %v2955 = vmul.f32 %v2779, %v1778
      %v2956 = vmul.f32 %v2780, %v1778
      %v2957 = vmul.f32 %v2781, %v1778
      %v2958 = vmul.f32 %v2782, %v1778
      %v2959 = vmul.f32 %v2783, %v1778
      %v2960 = vmul.f32 %v2784, %v1778
      %v2985 = vrot.slane %v2937, 2
      %v2986 = vrot.slane %v2938, 2
      %v2987 = vsel %vm1518, %v2985, %v2986
      %v2988 = vrot.slane %v2939, 2
      %v2989 = vsel %vm1518, %v2986, %v2988
      %v2990 = vrot.slane %v2940, 2
      %v2991 = vrot.slane %v2941, 2
      %v2992 = vsel %vm1518, %v2990, %v2991
      %v2993 = vrot.slane %v2942, 2
      %v2994 = vsel %vm1518, %v2991, %v2993
      %v2995 = vrot.slane %v2943, 2
      %v2996 = vrot.slane %v2944, 2
      %v2997 = vsel %vm1518, %v2995, %v2996
      %v2998 = vrot.slane %v2945, 2
      %v2999 = vsel %vm1518, %v2996, %v2998
      %v3000 = vrot.slane %v2946, 2
      %v3001 = vrot.slane %v2947, 2
      %v3002 = vsel %vm1518, %v3000, %v3001
      %v3003 = vrot.slane %v2948, 2
      %v3004 = vsel %vm1518, %v3001, %v3003
      %v3005 = vrot.slane %v2949, 2
      %v3006 = vrot.slane %v2950, 2
      %v3007 = vsel %vm1518, %v3005, %v3006
      %v3008 = vrot.slane %v2951, 2
      %v3009 = vsel %vm1518, %v3006, %v3008
      %v3010 = vrot.slane %v2952, 2
      %v3011 = vrot.slane %v2953, 2
      %v3012 = vsel %vm1518, %v3010, %v3011
      %v3013 = vrot.slane %v2954, 2
      %v3014 = vsel %vm1518, %v3011, %v3013
      %v3015 = vrot.slane %v2955, 2
      %v3016 = vrot.slane %v2956, 2
      %v3017 = vsel %vm1518, %v3015, %v3016
      %v3018 = vrot.slane %v2957, 2
      %v3019 = vsel %vm1518, %v3016, %v3018
      %v3020 = vrot.slane %v2958, 2
      %v3021 = vrot.slane %v2959, 2
      %v3022 = vsel %vm1518, %v3020, %v3021
      %v3023 = vrot.slane %v2960, 2
      %v3024 = vsel %vm1518, %v3021, %v3023
      %v3041 = vadd.f32 %v2921, %v2987
      %v3042 = vadd.f32 %v2922, %v2989
      %v3043 = vadd.f32 %v2923, %v2992
      %v3044 = vadd.f32 %v2924, %v2994
      %v3045 = vadd.f32 %v2925, %v2997
      %v3046 = vadd.f32 %v2926, %v2999
      %v3047 = vadd.f32 %v2927, %v3002
      %v3048 = vadd.f32 %v2928, %v3004
      %v3049 = vadd.f32 %v2929, %v3007
      %v3050 = vadd.f32 %v2930, %v3009
      %v3051 = vadd.f32 %v2931, %v3012
      %v3052 = vadd.f32 %v2932, %v3014
      %v3053 = vadd.f32 %v2933, %v3017
      %v3054 = vadd.f32 %v2934, %v3019
      %v3055 = vadd.f32 %v2935, %v3022
      %v3056 = vadd.f32 %v2936, %v3024
      %s3057 = scalar_lea.vmem [#allocation2], 240
      %v3058 = vld [vmem:[%s3057] sm:$0xff]
      %v3059 = vld [vmem:[%s3057 + $0x8] sm:$0xff]
      %v3060 = vld [vmem:[%s3057 + $0x10] sm:$0x3]
      %v3061 = vld [vmem:[%s3057 + $0x18] sm:$0xff]
      %v3062 = vld [vmem:[%s3057 + $0x20] sm:$0xff]
      %v3063 = vld [vmem:[%s3057 + $0x28] sm:$0x3]
      %v3064 = vld [vmem:[%s3057 + $0x30] sm:$0xff]
      %v3065 = vld [vmem:[%s3057 + $0x38] sm:$0xff]
      %v3066 = vld [vmem:[%s3057 + $0x40] sm:$0x3]
      %v3067 = vld [vmem:[%s3057 + $0x48] sm:$0xff]
      %v3068 = vld [vmem:[%s3057 + $0x50] sm:$0xff]
      %v3069 = vld [vmem:[%s3057 + $0x58] sm:$0x3]
      %v3070 = vld [vmem:[%s3057 + $0x60] sm:$0xff]
      %v3071 = vld [vmem:[%s3057 + $0x68] sm:$0xff]
      %v3072 = vld [vmem:[%s3057 + $0x70] sm:$0x3]
      %v3073 = vld [vmem:[%s3057 + $0x78] sm:$0xff]
      %v3074 = vld [vmem:[%s3057 + $0x80] sm:$0xff]
      %v3075 = vld [vmem:[%s3057 + $0x88] sm:$0x3]
      %v3076 = vld [vmem:[%s3057 + $0x90] sm:$0xff]
      %v3077 = vld [vmem:[%s3057 + $0x98] sm:$0xff]
      %v3078 = vld [vmem:[%s3057 + $0xa0] sm:$0x3]
      %v3079 = vld [vmem:[%s3057 + $0xa8] sm:$0xff]
      %v3080 = vld [vmem:[%s3057 + $0xb0] sm:$0xff]
      %v3081 = vld [vmem:[%s3057 + $0xb8] sm:$0x3]
      %v3082 = vmul.f32 %v3058, %v1926
      %v3083 = vmul.f32 %v3059, %v1926
      %v3084 = vmul.f32 %v3061, %v1926
      %v3085 = vmul.f32 %v3062, %v1926
      %v3086 = vmul.f32 %v3064, %v1926
      %v3087 = vmul.f32 %v3065, %v1926
      %v3088 = vmul.f32 %v3067, %v1926
      %v3089 = vmul.f32 %v3068, %v1926
      %v3090 = vmul.f32 %v3070, %v1926
      %v3091 = vmul.f32 %v3071, %v1926
      %v3092 = vmul.f32 %v3073, %v1926
      %v3093 = vmul.f32 %v3074, %v1926
      %v3094 = vmul.f32 %v3076, %v1926
      %v3095 = vmul.f32 %v3077, %v1926
      %v3096 = vmul.f32 %v3079, %v1926
      %v3097 = vmul.f32 %v3080, %v1926
      %v3098 = vadd.f32 %v3041, %v3082
      %v3099 = vadd.f32 %v3042, %v3083
      %v3100 = vadd.f32 %v3043, %v3084
      %v3101 = vadd.f32 %v3044, %v3085
      %v3102 = vadd.f32 %v3045, %v3086
      %v3103 = vadd.f32 %v3046, %v3087
      %v3104 = vadd.f32 %v3047, %v3088
      %v3105 = vadd.f32 %v3048, %v3089
      %v3106 = vadd.f32 %v3049, %v3090
      %v3107 = vadd.f32 %v3050, %v3091
      %v3108 = vadd.f32 %v3051, %v3092
      %v3109 = vadd.f32 %v3052, %v3093
      %v3110 = vadd.f32 %v3053, %v3094
      %v3111 = vadd.f32 %v3054, %v3095
      %v3112 = vadd.f32 %v3055, %v3096
      %v3113 = vadd.f32 %v3056, %v3097
      %v3114 = vmul.f32 %v3058, %v1962
      %v3115 = vmul.f32 %v3059, %v1962
      %v3116 = vmul.f32 %v3060, %v1962
      %v3117 = vmul.f32 %v3061, %v1962
      %v3118 = vmul.f32 %v3062, %v1962
      %v3119 = vmul.f32 %v3063, %v1962
      %v3120 = vmul.f32 %v3064, %v1962
      %v3121 = vmul.f32 %v3065, %v1962
      %v3122 = vmul.f32 %v3066, %v1962
      %v3123 = vmul.f32 %v3067, %v1962
      %v3124 = vmul.f32 %v3068, %v1962
      %v3125 = vmul.f32 %v3069, %v1962
      %v3126 = vmul.f32 %v3070, %v1962
      %v3127 = vmul.f32 %v3071, %v1962
      %v3128 = vmul.f32 %v3072, %v1962
      %v3129 = vmul.f32 %v3073, %v1962
      %v3130 = vmul.f32 %v3074, %v1962
      %v3131 = vmul.f32 %v3075, %v1962
      %v3132 = vmul.f32 %v3076, %v1962
      %v3133 = vmul.f32 %v3077, %v1962
      %v3134 = vmul.f32 %v3078, %v1962
      %v3135 = vmul.f32 %v3079, %v1962
      %v3136 = vmul.f32 %v3080, %v1962
      %v3137 = vmul.f32 %v3081, %v1962
      %v3162 = vrot.slane %v3114, 1
      %v3163 = vrot.slane %v3115, 1
      %v3164 = vsel %vm1393, %v3162, %v3163
      %v3165 = vrot.slane %v3116, 1
      %v3166 = vsel %vm1393, %v3163, %v3165
      %v3167 = vrot.slane %v3117, 1
      %v3168 = vrot.slane %v3118, 1
      %v3169 = vsel %vm1393, %v3167, %v3168
      %v3170 = vrot.slane %v3119, 1
      %v3171 = vsel %vm1393, %v3168, %v3170
      %v3172 = vrot.slane %v3120, 1
      %v3173 = vrot.slane %v3121, 1
      %v3174 = vsel %vm1393, %v3172, %v3173
      %v3175 = vrot.slane %v3122, 1
      %v3176 = vsel %vm1393, %v3173, %v3175
      %v3177 = vrot.slane %v3123, 1
      %v3178 = vrot.slane %v3124, 1
      %v3179 = vsel %vm1393, %v3177, %v3178
      %v3180 = vrot.slane %v3125, 1
      %v3181 = vsel %vm1393, %v3178, %v3180
      %v3182 = vrot.slane %v3126, 1
      %v3183 = vrot.slane %v3127, 1
      %v3184 = vsel %vm1393, %v3182, %v3183
      %v3185 = vrot.slane %v3128, 1
      %v3186 = vsel %vm1393, %v3183, %v3185
      %v3187 = vrot.slane %v3129, 1
      %v3188 = vrot.slane %v3130, 1
      %v3189 = vsel %vm1393, %v3187, %v3188
      %v3190 = vrot.slane %v3131, 1
      %v3191 = vsel %vm1393, %v3188, %v3190
      %v3192 = vrot.slane %v3132, 1
      %v3193 = vrot.slane %v3133, 1
      %v3194 = vsel %vm1393, %v3192, %v3193
      %v3195 = vrot.slane %v3134, 1
      %v3196 = vsel %vm1393, %v3193, %v3195
      %v3197 = vrot.slane %v3135, 1
      %v3198 = vrot.slane %v3136, 1
      %v3199 = vsel %vm1393, %v3197, %v3198
      %v3200 = vrot.slane %v3137, 1
      %v3201 = vsel %vm1393, %v3198, %v3200
      %v3218 = vadd.f32 %v3098, %v3164
      %v3219 = vadd.f32 %v3099, %v3166
      %v3220 = vadd.f32 %v3100, %v3169
      %v3221 = vadd.f32 %v3101, %v3171
      %v3222 = vadd.f32 %v3102, %v3174
      %v3223 = vadd.f32 %v3103, %v3176
      %v3224 = vadd.f32 %v3104, %v3179
      %v3225 = vadd.f32 %v3105, %v3181
      %v3226 = vadd.f32 %v3106, %v3184
      %v3227 = vadd.f32 %v3107, %v3186
      %v3228 = vadd.f32 %v3108, %v3189
      %v3229 = vadd.f32 %v3109, %v3191
      %v3230 = vadd.f32 %v3110, %v3194
      %v3231 = vadd.f32 %v3111, %v3196
      %v3232 = vadd.f32 %v3112, %v3199
      %v3233 = vadd.f32 %v3113, %v3201
      %v3234 = vmul.f32 %v3058, %v2086
      %v3235 = vmul.f32 %v3059, %v2086
      %v3236 = vmul.f32 %v3060, %v2086
      %v3237 = vmul.f32 %v3061, %v2086
      %v3238 = vmul.f32 %v3062, %v2086
      %v3239 = vmul.f32 %v3063, %v2086
      %v3240 = vmul.f32 %v3064, %v2086
      %v3241 = vmul.f32 %v3065, %v2086
      %v3242 = vmul.f32 %v3066, %v2086
      %v3243 = vmul.f32 %v3067, %v2086
      %v3244 = vmul.f32 %v3068, %v2086
      %v3245 = vmul.f32 %v3069, %v2086
      %v3246 = vmul.f32 %v3070, %v2086
      %v3247 = vmul.f32 %v3071, %v2086
      %v3248 = vmul.f32 %v3072, %v2086
      %v3249 = vmul.f32 %v3073, %v2086
      %v3250 = vmul.f32 %v3074, %v2086
      %v3251 = vmul.f32 %v3075, %v2086
      %v3252 = vmul.f32 %v3076, %v2086
      %v3253 = vmul.f32 %v3077, %v2086
      %v3254 = vmul.f32 %v3078, %v2086
      %v3255 = vmul.f32 %v3079, %v2086
      %v3256 = vmul.f32 %v3080, %v2086
      %v3257 = vmul.f32 %v3081, %v2086
      %v3282 = vrot.slane %v3234, 2
      %v3283 = vrot.slane %v3235, 2
      %v3284 = vsel %vm1518, %v3282, %v3283
      %v3285 = vrot.slane %v3236, 2
      %v3286 = vsel %vm1518, %v3283, %v3285
      %v3287 = vrot.slane %v3237, 2
      %v3288 = vrot.slane %v3238, 2
      %v3289 = vsel %vm1518, %v3287, %v3288
      %v3290 = vrot.slane %v3239, 2
      %v3291 = vsel %vm1518, %v3288, %v3290
      %v3292 = vrot.slane %v3240, 2
      %v3293 = vrot.slane %v3241, 2
      %v3294 = vsel %vm1518, %v3292, %v3293
      %v3295 = vrot.slane %v3242, 2
      %v3296 = vsel %vm1518, %v3293, %v3295
      %v3297 = vrot.slane %v3243, 2
      %v3298 = vrot.slane %v3244, 2
      %v3299 = vsel %vm1518, %v3297, %v3298
      %v3300 = vrot.slane %v3245, 2
      %v3301 = vsel %vm1518, %v3298, %v3300
      %v3302 = vrot.slane %v3246, 2
      %v3303 = vrot.slane %v3247, 2
      %v3304 = vsel %vm1518, %v3302, %v3303
      %v3305 = vrot.slane %v3248, 2
      %v3306 = vsel %vm1518, %v3303, %v3305
      %v3307 = vrot.slane %v3249, 2
      %v3308 = vrot.slane %v3250, 2
      %v3309 = vsel %vm1518, %v3307, %v3308
      %v3310 = vrot.slane %v3251, 2
      %v3311 = vsel %vm1518, %v3308, %v3310
      %v3312 = vrot.slane %v3252, 2
      %v3313 = vrot.slane %v3253, 2
      %v3314 = vsel %vm1518, %v3312, %v3313
      %v3315 = vrot.slane %v3254, 2
      %v3316 = vsel %vm1518, %v3313, %v3315
      %v3317 = vrot.slane %v3255, 2
      %v3318 = vrot.slane %v3256, 2
      %v3319 = vsel %vm1518, %v3317, %v3318
      %v3320 = vrot.slane %v3257, 2
      %v3321 = vsel %vm1518, %v3318, %v3320
      %v3338 = vadd.f32 %v3218, %v3284
      %v3339 = vadd.f32 %v3219, %v3286
      %v3340 = vadd.f32 %v3220, %v3289
      %v3341 = vadd.f32 %v3221, %v3291
      %v3342 = vadd.f32 %v3222, %v3294
      %v3343 = vadd.f32 %v3223, %v3296
      %v3344 = vadd.f32 %v3224, %v3299
      %v3345 = vadd.f32 %v3225, %v3301
      %v3346 = vadd.f32 %v3226, %v3304
      %v3347 = vadd.f32 %v3227, %v3306
      %v3348 = vadd.f32 %v3228, %v3309
      %v3349 = vadd.f32 %v3229, %v3311
      %v3350 = vadd.f32 %v3230, %v3314
      %v3351 = vadd.f32 %v3231, %v3316
      %v3352 = vadd.f32 %v3232, %v3319
      %v3353 = vadd.f32 %v3233, %v3321
      %v3354 = vmax.f32 %v3338, 0.0
      %v3355 = vmax.f32 %v3339, 0.0
      %v3356 = vmax.f32 %v3340, 0.0
      %v3357 = vmax.f32 %v3341, 0.0
      %v3358 = vmax.f32 %v3342, 0.0
      %v3359 = vmax.f32 %v3343, 0.0
      %v3360 = vmax.f32 %v3344, 0.0
      %v3361 = vmax.f32 %v3345, 0.0
      %v3362 = vmax.f32 %v3346, 0.0
      %v3363 = vmax.f32 %v3347, 0.0
      %v3364 = vmax.f32 %v3348, 0.0
      %v3365 = vmax.f32 %v3349, 0.0
      %v3366 = vmax.f32 %v3350, 0.0
      %v3367 = vmax.f32 %v3351, 0.0
      %v3368 = vmax.f32 %v3352, 0.0
      %v3369 = vmax.f32 %v3353, 0.0
      %v3370 = vmin.f32 %v3354, 6.0
      %v3371 = vmin.f32 %v3355, 6.0
      %v3372 = vmin.f32 %v3356, 6.0
      %v3373 = vmin.f32 %v3357, 6.0
      %v3374 = vmin.f32 %v3358, 6.0
      %v3375 = vmin.f32 %v3359, 6.0
      %v3376 = vmin.f32 %v3360, 6.0
      %v3377 = vmin.f32 %v3361, 6.0
      %v3378 = vmin.f32 %v3362, 6.0
      %v3379 = vmin.f32 %v3363, 6.0
      %v3380 = vmin.f32 %v3364, 6.0
      %v3381 = vmin.f32 %v3365, 6.0
      %v3382 = vmin.f32 %v3366, 6.0
      %v3383 = vmin.f32 %v3367, 6.0
      %v3384 = vmin.f32 %v3368, 6.0
      %v3385 = vmin.f32 %v3369, 6.0
      %v3387 = vsel %vm337, %v3370, 0
      %v3390 = vsel %vm337, %v3371, 0
      %v3393 = vsel %vm337, %v3372, 0
      %v3396 = vsel %vm337, %v3373, 0
      %v3399 = vsel %vm337, %v3374, 0
      %v3402 = vsel %vm337, %v3375, 0
      %v3405 = vsel %vm337, %v3376, 0
      %v3408 = vsel %vm337, %v3377, 0
      %v3411 = vsel %vm337, %v3378, 0
      %v3414 = vsel %vm337, %v3379, 0
      %v3417 = vsel %vm337, %v3380, 0
      %v3420 = vsel %vm337, %v3381, 0
      %v3423 = vsel %vm337, %v3382, 0
      %v3426 = vsel %vm337, %v3383, 0
      %v3429 = vsel %vm337, %v3384, 0
      %v3432 = vsel %vm337, %v3385, 0
      %3434 = vmatprep.subr.mxu0 0.0
      %3435 = vmatpush1.msra.mxu0 %v1289
      %3436 = vmatprep.subr.mxu0 0.0
      %3437 = vmatpush1.msra.mxu0 %v1290
      %3438 = vmatprep.subr.mxu0 0.0
      %3439 = vmatpush1.msra.mxu0 %v1291
      %3440 = vmatprep.subr.mxu0 0.0
      %3441 = vmatpush1.msra.mxu0 %v1292
      %3442 = vmatprep.subr.mxu0 0.0
      %3443 = vmatpush1.msra.mxu0 %v1293
      %3444 = vmatprep.subr.mxu0 0.0
      %3445 = vmatpush1.msra.mxu0 %v1294
      %3446 = vmatprep.subr.mxu0 0.0
      %3447 = vmatpush1.msra.mxu0 %v1295
      %3448 = vmatprep.subr.mxu0 0.0
      %3449 = vmatpush1.msra.mxu0 %v1296
      %3450 = vmatprep.subr.mxu0 0.0
      %3451 = vmatpush1.msra.mxu0 0.0
      %3452 = vmatprep.subr.mxu0 0.0
      %3453 = vmatpush1.msra.mxu0 0.0
      %3454 = vmatprep.subr.mxu0 0.0
      %3455 = vmatpush1.msra.mxu0 0.0
      %3456 = vmatprep.subr.mxu0 0.0
      %3457 = vmatpush1.msra.mxu0 0.0
      %3458 = vmatprep.subr.mxu0 0.0
      %3459 = vmatpush1.msra.mxu0 0.0
      %3460 = vmatprep.subr.mxu0 0.0
      %3461 = vmatpush1.msra.mxu0 0.0
      %3462 = vmatprep.subr.mxu0 0.0
      %3463 = vmatpush1.msra.mxu0 0.0
      %3464 = vmatprep.subr.mxu0 0.0
      %3465 = vmatpush1.msra.mxu0 0.0
      %3466 = vmatprep.subr.mxu0 0.0
      %3467 = vmatpush1.msra.mxu0 0.0
      %3468 = vmatprep.subr.mxu0 0.0
      %3469 = vmatpush1.msra.mxu0 0.0
      %3470 = vmatprep.subr.mxu0 0.0
      %3471 = vmatpush1.msra.mxu0 0.0
      %3472 = vmatprep.subr.mxu0 0.0
      %3473 = vmatpush1.msra.mxu0 0.0
      %3474 = vmatprep.subr.mxu0 0.0
      %3475 = vmatpush1.msra.mxu0 0.0
      %3476 = vmatprep.subr.mxu0 0.0
      %3477 = vmatpush1.msra.mxu0 0.0
      %3478 = vmatprep.subr.mxu0 0.0
      %3479 = vmatpush1.msra.mxu0 0.0
      %3480 = vmatprep.subr.mxu0 0.0
      %3481 = vmatpush1.msra.mxu0 0.0
      %3482 = vmatprep.subr.mxu0 0.0
      %3483 = vmatpush1.msra.mxu0 0.0
      %3484 = vmatprep.subr.mxu0 0.0
      %3485 = vmatpush1.msra.mxu0 0.0
      %3486 = vmatprep.subr.mxu0 0.0
      %3487 = vmatpush1.msra.mxu0 0.0
      %3488 = vmatprep.subr.mxu0 0.0
      %3489 = vmatpush1.msra.mxu0 0.0
      %3490 = vmatprep.subr.mxu0 0.0
      %3491 = vmatpush1.msra.mxu0 0.0
      %3492 = vmatprep.subr.mxu0 0.0
      %3493 = vmatpush1.msra.mxu0 0.0
      %3494 = vmatprep.subr.mxu0 0.0
      %3495 = vmatpush1.msra.mxu0 0.0
      %3496 = vmatprep.subr.mxu0 0.0
      %3497 = vmatpush1.msra.mxu0 0.0
      %3498 = vmatprep.mubr.f32.mxu0 0.0
      %3499 = vmatmul.mubr.f32.gmra.mrb[0].mxu0 %v3387
      %v3500 = vpop.f32.mrb[0].mxu0
      %v3501 = vadd.f32 0.0, %v3500
      %v3502 = vpop.f32.mrb[0].mxu0
      %3503 = vmatprep.mubr.f32.mxu0 0.0
      %3504 = vmatmul.mubr.f32.gmra.mrb[0].mxu0 %v3390
      %v3505 = vpop.f32.mrb[0].mxu0
      %v3506 = vadd.f32 0.0, %v3505
      %v3507 = vpop.f32.mrb[0].mxu0
      %3508 = vmatprep.mubr.f32.mxu0 0.0
      %3509 = vmatmul.mubr.f32.gmra.mrb[0].mxu0 %v3393
      %v3510 = vpop.f32.mrb[0].mxu0
      %v3511 = vadd.f32 0.0, %v3510
      %v3512 = vpop.f32.mrb[0].mxu0
      %3513 = vmatprep.mubr.f32.mxu0 0.0
      %3514 = vmatmul.mubr.f32.gmra.mrb[0].mxu0 %v3396
      %v3515 = vpop.f32.mrb[0].mxu0
      %v3516 = vadd.f32 0.0, %v3515
      %v3517 = vpop.f32.mrb[0].mxu0
      %3518 = vmatprep.mubr.f32.mxu0 0.0
      %3519 = vmatmul.mubr.f32.gmra.mrb[0].mxu0 %v3399
      %v3520 = vpop.f32.mrb[0].mxu0
      %v3521 = vadd.f32 0.0, %v3520
      %v3522 = vpop.f32.mrb[0].mxu0
      %3523 = vmatprep.mubr.f32.mxu0 0.0
      %3524 = vmatmul.mubr.f32.gmra.mrb[0].mxu0 %v3402
      %v3525 = vpop.f32.mrb[0].mxu0
      %v3526 = vadd.f32 0.0, %v3525
      %v3527 = vpop.f32.mrb[0].mxu0
      %3528 = vmatprep.mubr.f32.mxu0 0.0
      %3529 = vmatmul.mubr.f32.gmra.mrb[0].mxu0 %v3405
      %v3530 = vpop.f32.mrb[0].mxu0
      %v3531 = vadd.f32 0.0, %v3530
      %v3532 = vpop.f32.mrb[0].mxu0
      %3533 = vmatprep.mubr.f32.mxu0 0.0
      %3534 = vmatmul.mubr.f32.gmra.mrb[0].mxu0 %v3408
      %v3535 = vpop.f32.mrb[0].mxu0
      %v3536 = vadd.f32 0.0, %v3535
      %v3537 = vpop.f32.mrb[0].mxu0
      %3538 = vmatprep.mubr.f32.mxu0 0.0
      %3539 = vmatmul.mubr.f32.gmra.mrb[0].mxu0 %v3411
      %v3540 = vpop.f32.mrb[0].mxu0
      %v3541 = vadd.f32 0.0, %v3540
      %v3542 = vpop.f32.mrb[0].mxu0
      %3543 = vmatprep.mubr.f32.mxu0 0.0
      %3544 = vmatmul.mubr.f32.gmra.mrb[0].mxu0 %v3414
      %v3545 = vpop.f32.mrb[0].mxu0
      %v3546 = vadd.f32 0.0, %v3545
      %v3547 = vpop.f32.mrb[0].mxu0
      %3548 = vmatprep.mubr.f32.mxu0 0.0
      %3549 = vmatmul.mubr.f32.gmra.mrb[0].mxu0 %v3417
      %v3550 = vpop.f32.mrb[0].mxu0
      %v3551 = vadd.f32 0.0, %v3550
      %v3552 = vpop.f32.mrb[0].mxu0
      %3553 = vmatprep.mubr.f32.mxu0 0.0
      %3554 = vmatmul.mubr.f32.gmra.mrb[0].mxu0 %v3420
      %v3555 = vpop.f32.mrb[0].mxu0
      %v3556 = vadd.f32 0.0, %v3555
      %v3557 = vpop.f32.mrb[0].mxu0
      %3558 = vmatprep.mubr.f32.mxu0 0.0
      %3559 = vmatmul.mubr.f32.gmra.mrb[0].mxu0 %v3423
      %v3560 = vpop.f32.mrb[0].mxu0
      %v3561 = vadd.f32 0.0, %v3560
      %v3562 = vpop.f32.mrb[0].mxu0
      %3563 = vmatprep.mubr.f32.mxu0 0.0
      %3564 = vmatmul.mubr.f32.gmra.mrb[0].mxu0 %v3426
      %v3565 = vpop.f32.mrb[0].mxu0
      %v3566 = vadd.f32 0.0, %v3565
      %v3567 = vpop.f32.mrb[0].mxu0
      %3568 = vmatprep.mubr.f32.mxu0 0.0
      %3569 = vmatmul.mubr.f32.gmra.mrb[0].mxu0 %v3429
      %v3570 = vpop.f32.mrb[0].mxu0
      %v3571 = vadd.f32 0.0, %v3570
      %v3572 = vpop.f32.mrb[0].mxu0
      %3573 = vmatprep.mubr.f32.mxu0 0.0
      %3574 = vmatmul.mubr.f32.gmra.mrb[0].mxu0 %v3432
      %v3575 = vpop.f32.mrb[0].mxu0
      %v3576 = vadd.f32 0.0, %v3575
      %v3577 = vpop.f32.mrb[0].mxu0
      %3578 = vdwg.mxu0
      %v3579 = vld [vmem:[%s305 + $0x80] sm:$0xff]
      %v3580 = vld [vmem:[%s305 + $0x88] sm:$0xff]
      %v3581 = vld [vmem:[%s305 + $0x90] sm:$0xff]
      %v3582 = vld [vmem:[%s305 + $0x98] sm:$0xff]
      %v3583 = vld [vmem:[%s305 + $0xa0] sm:$0xff]
      %v3584 = vld [vmem:[%s305 + $0xa8] sm:$0xff]
      %v3585 = vld [vmem:[%s305 + $0xb0] sm:$0xff]
      %v3586 = vld [vmem:[%s305 + $0xb8] sm:$0xff]
      %v3587 = vld [vmem:[%s305 + $0xc0] sm:$0xff]
      %v3588 = vld [vmem:[%s305 + $0xc8] sm:$0xff]
      %v3589 = vld [vmem:[%s305 + $0xd0] sm:$0xff]
      %v3590 = vld [vmem:[%s305 + $0xd8] sm:$0xff]
      %v3591 = vld [vmem:[%s305 + $0xe0] sm:$0xff]
      %v3592 = vld [vmem:[%s305 + $0xe8] sm:$0xff]
      %v3593 = vld [vmem:[%s305 + $0xf0] sm:$0xff]
      %v3594 = vld [vmem:[%s305 + $0xf8] sm:$0xff]
      %v3595 = vadd.f32 %v3579, %v3501
      %v3596 = vadd.f32 %v3580, %v3506
      %v3597 = vadd.f32 %v3581, %v3511
      %v3598 = vadd.f32 %v3582, %v3516
      %v3599 = vadd.f32 %v3583, %v3521
      %v3600 = vadd.f32 %v3584, %v3526
      %v3601 = vadd.f32 %v3585, %v3531
      %v3602 = vadd.f32 %v3586, %v3536
      %v3603 = vadd.f32 %v3587, %v3541
      %v3604 = vadd.f32 %v3588, %v3546
      %v3605 = vadd.f32 %v3589, %v3551
      %v3606 = vadd.f32 %v3590, %v3556
      %v3607 = vadd.f32 %v3591, %v3561
      %v3608 = vadd.f32 %v3592, %v3566
      %v3609 = vadd.f32 %v3593, %v3571
      %v3610 = vadd.f32 %v3594, %v3576
      %3611 = vst.msk [vmem:[%s305 + $0x80] sm:$0xff] %vm337, %v3595
      %3612 = vst.msk [vmem:[%s305 + $0x88] sm:$0xff] %vm337, %v3596
      %3613 = vst.msk [vmem:[%s305 + $0x90] sm:$0xff] %vm337, %v3597
      %3614 = vst.msk [vmem:[%s305 + $0x98] sm:$0xff] %vm337, %v3598
      %3615 = vst.msk [vmem:[%s305 + $0xa0] sm:$0xff] %vm337, %v3599
      %3616 = vst.msk [vmem:[%s305 + $0xa8] sm:$0xff] %vm337, %v3600
      %3617 = vst.msk [vmem:[%s305 + $0xb0] sm:$0xff] %vm337, %v3601
      %3618 = vst.msk [vmem:[%s305 + $0xb8] sm:$0xff] %vm337, %v3602
      %3619 = vst.msk [vmem:[%s305 + $0xc0] sm:$0xff] %vm337, %v3603
      %3620 = vst.msk [vmem:[%s305 + $0xc8] sm:$0xff] %vm337, %v3604
      %3621 = vst.msk [vmem:[%s305 + $0xd0] sm:$0xff] %vm337, %v3605
      %3622 = vst.msk [vmem:[%s305 + $0xd8] sm:$0xff] %vm337, %v3606
      %3623 = vst.msk [vmem:[%s305 + $0xe0] sm:$0xff] %vm337, %v3607
      %3624 = vst.msk [vmem:[%s305 + $0xe8] sm:$0xff] %vm337, %v3608
      %3625 = vst.msk [vmem:[%s305 + $0xf0] sm:$0xff] %vm337, %v3609
      %3626 = vst.msk [vmem:[%s305 + $0xf8] sm:$0xff] %vm337, %v3610
      %v3627 = vld [vmem:[%s5] sm:$0xff]
      %v3628 = vld [vmem:[%s5 + $0x8] sm:$0xff]
      %v3629 = vld [vmem:[%s5 + $0x10] sm:$0xff]
      %v3630 = vld [vmem:[%s5 + $0x18] sm:$0xff]
      %v3631 = vld [vmem:[%s5 + $0x20] sm:$0xff]
      %v3632 = vld [vmem:[%s5 + $0x28] sm:$0xff]
      %v3633 = vld [vmem:[%s5 + $0x30] sm:$0xff]
      %v3634 = vld [vmem:[%s5 + $0x38] sm:$0xff]
      %v3635 = vld [vmem:[%s305] sm:$0xff]
      %v3636 = vld [vmem:[%s305 + $0x8] sm:$0xff]
      %v3637 = vld [vmem:[%s305 + $0x10] sm:$0xff]
      %v3638 = vld [vmem:[%s305 + $0x18] sm:$0xff]
      %v3639 = vld [vmem:[%s305 + $0x20] sm:$0xff]
      %v3640 = vld [vmem:[%s305 + $0x28] sm:$0xff]
      %v3641 = vld [vmem:[%s305 + $0x30] sm:$0xff]
      %v3642 = vld [vmem:[%s305 + $0x38] sm:$0xff]
      %v3643 = vld [vmem:[%s305 + $0x40] sm:$0xff]
      %v3644 = vld [vmem:[%s305 + $0x48] sm:$0xff]
      %v3645 = vld [vmem:[%s305 + $0x50] sm:$0xff]
      %v3646 = vld [vmem:[%s305 + $0x58] sm:$0xff]
      %v3647 = vld [vmem:[%s305 + $0x60] sm:$0xff]
      %v3648 = vld [vmem:[%s305 + $0x68] sm:$0xff]
      %v3649 = vld [vmem:[%s305 + $0x70] sm:$0xff]
      %v3650 = vld [vmem:[%s305 + $0x78] sm:$0xff]
      %v3652 = vsel %vm337, %v3635, 0
      %v3655 = vsel %vm337, %v3636, 0
      %v3658 = vsel %vm337, %v3637, 0
      %v3661 = vsel %vm337, %v3638, 0
      %v3664 = vsel %vm337, %v3639, 0
      %v3667 = vsel %vm337, %v3640, 0
      %v3670 = vsel %vm337, %v3641, 0
      %v3673 = vsel %vm337, %v3642, 0
      %v3676 = vsel %vm337, %v3643, 0
      %v3679 = vsel %vm337, %v3644, 0
      %v3682 = vsel %vm337, %v3645, 0
      %v3685 = vsel %vm337, %v3646, 0
      %v3688 = vsel %vm337, %v3647, 0
      %v3691 = vsel %vm337, %v3648, 0
      %v3694 = vsel %vm337, %v3649, 0
      %v3697 = vsel %vm337, %v3650, 0
      %3699 = vmatprep.subr.mxu0 0.0
      %3700 = vmatpush1.msra.mxu0 %v3627
      %3701 = vmatprep.subr.mxu0 0.0
      %3702 = vmatpush1.msra.mxu0 %v3628
      %3703 = vmatprep.subr.mxu0 0.0
      %3704 = vmatpush1.msra.mxu0 %v3629
      %3705 = vmatprep.subr.mxu0 0.0
      %3706 = vmatpush1.msra.mxu0 %v3630
      %3707 = vmatprep.subr.mxu0 0.0
      %3708 = vmatpush1.msra.mxu0 %v3631
      %3709 = vmatprep.subr.mxu0 0.0
      %3710 = vmatpush1.msra.mxu0 %v3632
      %3711 = vmatprep.subr.mxu0 0.0
      %3712 = vmatpush1.msra.mxu0 %v3633
      %3713 = vmatprep.subr.mxu0 0.0
      %3714 = vmatpush1.msra.mxu0 %v3634
      %3715 = vmatprep.subr.mxu0 0.0
      %3716 = vmatpush1.msra.mxu0 0.0
      %3717 = vmatprep.subr.mxu0 0.0
      %3718 = vmatpush1.msra.mxu0 0.0
      %3719 = vmatprep.subr.mxu0 0.0
      %3720 = vmatpush1.msra.mxu0 0.0
      %3721 = vmatprep.subr.mxu0 0.0
      %3722 = vmatpush1.msra.mxu0 0.0
      %3723 = vmatprep.subr.mxu0 0.0
      %3724 = vmatpush1.msra.mxu0 0.0
      %3725 = vmatprep.subr.mxu0 0.0
      %3726 = vmatpush1.msra.mxu0 0.0
      %3727 = vmatprep.subr.mxu0 0.0
      %3728 = vmatpush1.msra.mxu0 0.0
      %3729 = vmatprep.subr.mxu0 0.0
      %3730 = vmatpush1.msra.mxu0 0.0
      %3731 = vmatprep.subr.mxu0 0.0
      %3732 = vmatpush1.msra.mxu0 0.0
      %3733 = vmatprep.subr.mxu0 0.0
      %3734 = vmatpush1.msra.mxu0 0.0
      %3735 = vmatprep.subr.mxu0 0.0
      %3736 = vmatpush1.msra.mxu0 0.0
      %3737 = vmatprep.subr.mxu0 0.0
      %3738 = vmatpush1.msra.mxu0 0.0
      %3739 = vmatprep.subr.mxu0 0.0
      %3740 = vmatpush1.msra.mxu0 0.0
      %3741 = vmatprep.subr.mxu0 0.0
      %3742 = vmatpush1.msra.mxu0 0.0
      %3743 = vmatprep.subr.mxu0 0.0
      %3744 = vmatpush1.msra.mxu0 0.0
      %3745 = vmatprep.subr.mxu0 0.0
      %3746 = vmatpush1.msra.mxu0 0.0
      %3747 = vmatprep.subr.mxu0 0.0
      %3748 = vmatpush1.msra.mxu0 0.0
      %3749 = vmatprep.subr.mxu0 0.0
      %3750 = vmatpush1.msra.mxu0 0.0
      %3751 = vmatprep.subr.mxu0 0.0
      %3752 = vmatpush1.msra.mxu0 0.0
      %3753 = vmatprep.subr.mxu0 0.0
      %3754 = vmatpush1.msra.mxu0 0.0
      %3755 = vmatprep.subr.mxu0 0.0
      %3756 = vmatpush1.msra.mxu0 0.0
      %3757 = vmatprep.subr.mxu0 0.0
      %3758 = vmatpush1.msra.mxu0 0.0
      %3759 = vmatprep.subr.mxu0 0.0
      %3760 = vmatpush1.msra.mxu0 0.0
      %3761 = vmatprep.subr.mxu0 0.0
      %3762 = vmatpush1.msra.mxu0 0.0
      %3763 = vmatprep.mubr.f32.mxu0 0.0
      %3764 = vmatmul.mubr.f32.gmra.mrb[0].mxu0 %v3652
      %v3765 = vpop.f32.mrb[0].mxu0
      %v3766 = vadd.f32 0.0, %v3765
      %v3767 = vpop.f32.mrb[0].mxu0
      %3768 = vmatprep.mubr.f32.mxu0 0.0
      %3769 = vmatmul.mubr.f32.gmra.mrb[0].mxu0 %v3655
      %v3770 = vpop.f32.mrb[0].mxu0
      %v3771 = vadd.f32 0.0, %v3770
      %v3772 = vpop.f32.mrb[0].mxu0
      %3773 = vmatprep.mubr.f32.mxu0 0.0
      %3774 = vmatmul.mubr.f32.gmra.mrb[0].mxu0 %v3658
      %v3775 = vpop.f32.mrb[0].mxu0
      %v3776 = vadd.f32 0.0, %v3775
      %v3777 = vpop.f32.mrb[0].mxu0
      %3778 = vmatprep.mubr.f32.mxu0 0.0
      %3779 = vmatmul.mubr.f32.gmra.mrb[0].mxu0 %v3661
      %v3780 = vpop.f32.mrb[0].mxu0
      %v3781 = vadd.f32 0.0, %v3780
      %v3782 = vpop.f32.mrb[0].mxu0
      %3783 = vmatprep.mubr.f32.mxu0 0.0
      %3784 = vmatmul.mubr.f32.gmra.mrb[0].mxu0 %v3664
      %v3785 = vpop.f32.mrb[0].mxu0
      %v3786 = vadd.f32 0.0, %v3785
      %v3787 = vpop.f32.mrb[0].mxu0
      %3788 = vmatprep.mubr.f32.mxu0 0.0
      %3789 = vmatmul.mubr.f32.gmra.mrb[0].mxu0 %v3667
      %v3790 = vpop.f32.mrb[0].mxu0
      %v3791 = vadd.f32 0.0, %v3790
      %v3792 = vpop.f32.mrb[0].mxu0
      %3793 = vmatprep.mubr.f32.mxu0 0.0
      %3794 = vmatmul.mubr.f32.gmra.mrb[0].mxu0 %v3670
      %v3795 = vpop.f32.mrb[0].mxu0
      %v3796 = vadd.f32 0.0, %v3795
      %v3797 = vpop.f32.mrb[0].mxu0
      %3798 = vmatprep.mubr.f32.mxu0 0.0
      %3799 = vmatmul.mubr.f32.gmra.mrb[0].mxu0 %v3673
      %v3800 = vpop.f32.mrb[0].mxu0
      %v3801 = vadd.f32 0.0, %v3800
      %v3802 = vpop.f32.mrb[0].mxu0
      %3803 = vmatprep.mubr.f32.mxu0 0.0
      %3804 = vmatmul.mubr.f32.gmra.mrb[0].mxu0 %v3676
      %v3805 = vpop.f32.mrb[0].mxu0
      %v3806 = vadd.f32 0.0, %v3805
      %v3807 = vpop.f32.mrb[0].mxu0
      %3808 = vmatprep.mubr.f32.mxu0 0.0
      %3809 = vmatmul.mubr.f32.gmra.mrb[0].mxu0 %v3679
      %v3810 = vpop.f32.mrb[0].mxu0
      %v3811 = vadd.f32 0.0, %v3810
      %v3812 = vpop.f32.mrb[0].mxu0
      %3813 = vmatprep.mubr.f32.mxu0 0.0
      %3814 = vmatmul.mubr.f32.gmra.mrb[0].mxu0 %v3682
      %v3815 = vpop.f32.mrb[0].mxu0
      %v3816 = vadd.f32 0.0, %v3815
      %v3817 = vpop.f32.mrb[0].mxu0
      %3818 = vmatprep.mubr.f32.mxu0 0.0
      %3819 = vmatmul.mubr.f32.gmra.mrb[0].mxu0 %v3685
      %v3820 = vpop.f32.mrb[0].mxu0
      %v3821 = vadd.f32 0.0, %v3820
      %v3822 = vpop.f32.mrb[0].mxu0
      %3823 = vmatprep.mubr.f32.mxu0 0.0
      %3824 = vmatmul.mubr.f32.gmra.mrb[0].mxu0 %v3688
      %v3825 = vpop.f32.mrb[0].mxu0
      %v3826 = vadd.f32 0.0, %v3825
      %v3827 = vpop.f32.mrb[0].mxu0
      %3828 = vmatprep.mubr.f32.mxu0 0.0
      %3829 = vmatmul.mubr.f32.gmra.mrb[0].mxu0 %v3691
      %v3830 = vpop.f32.mrb[0].mxu0
      %v3831 = vadd.f32 0.0, %v3830
      %v3832 = vpop.f32.mrb[0].mxu0
      %3833 = vmatprep.mubr.f32.mxu0 0.0
      %3834 = vmatmul.mubr.f32.gmra.mrb[0].mxu0 %v3694
      %v3835 = vpop.f32.mrb[0].mxu0
      %v3836 = vadd.f32 0.0, %v3835
      %v3837 = vpop.f32.mrb[0].mxu0
      %3838 = vmatprep.mubr.f32.mxu0 0.0
      %3839 = vmatmul.mubr.f32.gmra.mrb[0].mxu0 %v3697
      %v3840 = vpop.f32.mrb[0].mxu0
      %v3841 = vadd.f32 0.0, %v3840
      %v3842 = vpop.f32.mrb[0].mxu0
      %3843 = vdwg.mxu0
      %v3844 = vmax.f32 %v3766, 0.0
      %v3845 = vmax.f32 %v3771, 0.0
      %v3846 = vmax.f32 %v3776, 0.0
      %v3847 = vmax.f32 %v3781, 0.0
      %v3848 = vmax.f32 %v3786, 0.0
      %v3849 = vmax.f32 %v3791, 0.0
      %v3850 = vmax.f32 %v3796, 0.0
      %v3851 = vmax.f32 %v3801, 0.0
      %v3852 = vmax.f32 %v3806, 0.0
      %v3853 = vmax.f32 %v3811, 0.0
      %v3854 = vmax.f32 %v3816, 0.0
      %v3855 = vmax.f32 %v3821, 0.0
      %v3856 = vmax.f32 %v3826, 0.0
      %v3857 = vmax.f32 %v3831, 0.0
      %v3858 = vmax.f32 %v3836, 0.0
      %v3859 = vmax.f32 %v3841, 0.0
      %v3860 = vmin.f32 %v3844, 6.0
      %v3861 = vmin.f32 %v3845, 6.0
      %v3862 = vmin.f32 %v3846, 6.0
      %v3863 = vmin.f32 %v3847, 6.0
      %v3864 = vmin.f32 %v3848, 6.0
      %v3865 = vmin.f32 %v3849, 6.0
      %v3866 = vmin.f32 %v3850, 6.0
      %v3867 = vmin.f32 %v3851, 6.0
      %v3868 = vmin.f32 %v3852, 6.0
      %v3869 = vmin.f32 %v3853, 6.0
      %v3870 = vmin.f32 %v3854, 6.0
      %v3871 = vmin.f32 %v3855, 6.0
      %v3872 = vmin.f32 %v3856, 6.0
      %v3873 = vmin.f32 %v3857, 6.0
      %v3874 = vmin.f32 %v3858, 6.0
      %v3875 = vmin.f32 %v3859, 6.0
      %v3884 = vrot.slane %v3860, 1
      %v3885 = vrot.slane %v3862, 1
      %v3886 = vrot.slane %v3864, 1
      %v3887 = vrot.slane %v3866, 1
      %v3888 = vrot.slane %v3868, 1
      %v3889 = vrot.slane %v3870, 1
      %v3890 = vrot.slane %v3872, 1
      %v3891 = vrot.slane %v3874, 1
      %v3908 = vrot.slane %v3860, 7
      %v3909 = vrot.slane %v3861, 7
      %v3910 = vsel %vm611, %v3908, %v3909
      %v3911 = vrot.slane %v3862, 7
      %v3912 = vrot.slane %v3863, 7
      %v3913 = vsel %vm611, %v3911, %v3912
      %v3914 = vrot.slane %v3864, 7
      %v3915 = vrot.slane %v3865, 7
      %v3916 = vsel %vm611, %v3914, %v3915
      %v3917 = vrot.slane %v3866, 7
      %v3918 = vrot.slane %v3867, 7
      %v3919 = vsel %vm611, %v3917, %v3918
      %v3920 = vrot.slane %v3868, 7
      %v3921 = vrot.slane %v3869, 7
      %v3922 = vsel %vm611, %v3920, %v3921
      %v3923 = vrot.slane %v3870, 7
      %v3924 = vrot.slane %v3871, 7
      %v3925 = vsel %vm611, %v3923, %v3924
      %v3926 = vrot.slane %v3872, 7
      %v3927 = vrot.slane %v3873, 7
      %v3928 = vsel %vm611, %v3926, %v3927
      %v3929 = vrot.slane %v3874, 7
      %v3930 = vrot.slane %v3875, 7
      %v3931 = vsel %vm611, %v3929, %v3930
      %v3956 = vrot.slane %v3861, 5
      %v3957 = vrot.slane %v3863, 5
      %v3958 = vrot.slane %v3865, 5
      %v3959 = vrot.slane %v3867, 5
      %v3960 = vrot.slane %v3869, 5
      %v3961 = vrot.slane %v3871, 5
      %v3962 = vrot.slane %v3873, 5
      %v3963 = vrot.slane %v3875, 5
      %v3972 = vsel %vm611, %v3884, %v3908
      %v3973 = vsel %vm611, %v3885, %v3911
      %v3974 = vsel %vm611, %v3886, %v3914
      %v3975 = vsel %vm611, %v3887, %v3917
      %v3976 = vsel %vm611, %v3888, %v3920
      %v3977 = vsel %vm611, %v3889, %v3923
      %v3978 = vsel %vm611, %v3890, %v3926
      %v3979 = vsel %vm611, %v3891, %v3929
      %v3980 = vsel %vm611, %v3909, %v3956
      %v3981 = vsel %vm611, %v3912, %v3957
      %v3982 = vsel %vm611, %v3915, %v3958
      %v3983 = vsel %vm611, %v3918, %v3959
      %v3984 = vsel %vm611, %v3921, %v3960
      %v3985 = vsel %vm611, %v3924, %v3961
      %v3986 = vsel %vm611, %v3927, %v3962
      %v3987 = vsel %vm611, %v3930, %v3963
      %s3988 = scalar_lea.vmem [#allocation3], 24
      %3989 = vst [vmem:[%s3988] sm:$0xff] %v3972
      %3990 = vst [vmem:[%s3988 + $0x8] sm:$0xff] %v3910
      %3991 = vst [vmem:[%s3988 + $0x10] sm:$0x3] %v3980
      %3992 = vst [vmem:[%s3988 + $0x18] sm:$0xff] %v3973
      %3993 = vst [vmem:[%s3988 + $0x20] sm:$0xff] %v3913
      %3994 = vst [vmem:[%s3988 + $0x28] sm:$0x3] %v3981
      %3995 = vst [vmem:[%s3988 + $0x30] sm:$0xff] %v3974
      %3996 = vst [vmem:[%s3988 + $0x38] sm:$0xff] %v3916
      %3997 = vst [vmem:[%s3988 + $0x40] sm:$0x3] %v3982
      %3998 = vst [vmem:[%s3988 + $0x48] sm:$0xff] %v3975
      %3999 = vst [vmem:[%s3988 + $0x50] sm:$0xff] %v3919
      %4000 = vst [vmem:[%s3988 + $0x58] sm:$0x3] %v3983
      %4001 = vst [vmem:[%s3988 + $0x60] sm:$0xff] %v3976
      %4002 = vst [vmem:[%s3988 + $0x68] sm:$0xff] %v3922
      %4003 = vst [vmem:[%s3988 + $0x70] sm:$0x3] %v3984
      %4004 = vst [vmem:[%s3988 + $0x78] sm:$0xff] %v3977
      %4005 = vst [vmem:[%s3988 + $0x80] sm:$0xff] %v3925
      %4006 = vst [vmem:[%s3988 + $0x88] sm:$0x3] %v3985
      %4007 = vst [vmem:[%s3988 + $0x90] sm:$0xff] %v3978
      %4008 = vst [vmem:[%s3988 + $0x98] sm:$0xff] %v3928
      %4009 = vst [vmem:[%s3988 + $0xa0] sm:$0x3] %v3986
      %4010 = vst [vmem:[%s3988 + $0xa8] sm:$0xff] %v3979
      %4011 = vst [vmem:[%s3988 + $0xb0] sm:$0xff] %v3931
      %4012 = vst [vmem:[%s3988 + $0xb8] sm:$0x3] %v3987
      %v4013 = vld [vmem:[%s305 + $0x80] sm:$0xff]
      %v4014 = vld [vmem:[%s305 + $0x88] sm:$0xff]
      %v4015 = vld [vmem:[%s305 + $0x90] sm:$0xff]
      %v4016 = vld [vmem:[%s305 + $0x98] sm:$0xff]
      %v4017 = vld [vmem:[%s305 + $0xa0] sm:$0xff]
      %v4018 = vld [vmem:[%s305 + $0xa8] sm:$0xff]
      %v4019 = vld [vmem:[%s305 + $0xb0] sm:$0xff]
      %v4020 = vld [vmem:[%s305 + $0xb8] sm:$0xff]
      %v4021 = vld [vmem:[%s305 + $0xc0] sm:$0xff]
      %v4022 = vld [vmem:[%s305 + $0xc8] sm:$0xff]
      %v4023 = vld [vmem:[%s305 + $0xd0] sm:$0xff]
      %v4024 = vld [vmem:[%s305 + $0xd8] sm:$0xff]
      %v4025 = vld [vmem:[%s305 + $0xe0] sm:$0xff]
      %v4026 = vld [vmem:[%s305 + $0xe8] sm:$0xff]
      %v4027 = vld [vmem:[%s305 + $0xf0] sm:$0xff]
      %v4028 = vld [vmem:[%s305 + $0xf8] sm:$0xff]
      %v4030 = vsel %vm337, %v4013, 0
      %v4033 = vsel %vm337, %v4014, 0
      %v4036 = vsel %vm337, %v4015, 0
      %v4039 = vsel %vm337, %v4016, 0
      %v4042 = vsel %vm337, %v4017, 0
      %v4045 = vsel %vm337, %v4018, 0
      %v4048 = vsel %vm337, %v4019, 0
      %v4051 = vsel %vm337, %v4020, 0
      %v4054 = vsel %vm337, %v4021, 0
      %v4057 = vsel %vm337, %v4022, 0
      %v4060 = vsel %vm337, %v4023, 0
      %v4063 = vsel %vm337, %v4024, 0
      %v4066 = vsel %vm337, %v4025, 0
      %v4069 = vsel %vm337, %v4026, 0
      %v4072 = vsel %vm337, %v4027, 0
      %v4075 = vsel %vm337, %v4028, 0
      %4077 = vmatprep.subr.mxu0 0.0
      %4078 = vmatpush1.msra.mxu0 %v3627
      %4079 = vmatprep.subr.mxu0 0.0
      %4080 = vmatpush1.msra.mxu0 %v3628
      %4081 = vmatprep.subr.mxu0 0.0
      %4082 = vmatpush1.msra.mxu0 %v3629
      %4083 = vmatprep.subr.mxu0 0.0
      %4084 = vmatpush1.msra.mxu0 %v3630
      %4085 = vmatprep.subr.mxu0 0.0
      %4086 = vmatpush1.msra.mxu0 %v3631
      %4087 = vmatprep.subr.mxu0 0.0
      %4088 = vmatpush1.msra.mxu0 %v3632
      %4089 = vmatprep.subr.mxu0 0.0
      %4090 = vmatpush1.msra.mxu0 %v3633
      %4091 = vmatprep.subr.mxu0 0.0
      %4092 = vmatpush1.msra.mxu0 %v3634
      %4093 = vmatprep.subr.mxu0 0.0
      %4094 = vmatpush1.msra.mxu0 0.0
      %4095 = vmatprep.subr.mxu0 0.0
      %4096 = vmatpush1.msra.mxu0 0.0
      %4097 = vmatprep.subr.mxu0 0.0
      %4098 = vmatpush1.msra.mxu0 0.0
      %4099 = vmatprep.subr.mxu0 0.0
      %4100 = vmatpush1.msra.mxu0 0.0
      %4101 = vmatprep.subr.mxu0 0.0
      %4102 = vmatpush1.msra.mxu0 0.0
      %4103 = vmatprep.subr.mxu0 0.0
      %4104 = vmatpush1.msra.mxu0 0.0
      %4105 = vmatprep.subr.mxu0 0.0
      %4106 = vmatpush1.msra.mxu0 0.0
      %4107 = vmatprep.subr.mxu0 0.0
      %4108 = vmatpush1.msra.mxu0 0.0
      %4109 = vmatprep.subr.mxu0 0.0
      %4110 = vmatpush1.msra.mxu0 0.0
      %4111 = vmatprep.subr.mxu0 0.0
      %4112 = vmatpush1.msra.mxu0 0.0
      %4113 = vmatprep.subr.mxu0 0.0
      %4114 = vmatpush1.msra.mxu0 0.0
      %4115 = vmatprep.subr.mxu0 0.0
      %4116 = vmatpush1.msra.mxu0 0.0
      %4117 = vmatprep.subr.mxu0 0.0
      %4118 = vmatpush1.msra.mxu0 0.0
      %4119 = vmatprep.subr.mxu0 0.0
      %4120 = vmatpush1.msra.mxu0 0.0
      %4121 = vmatprep.subr.mxu0 0.0
      %4122 = vmatpush1.msra.mxu0 0.0
      %4123 = vmatprep.subr.mxu0 0.0
      %4124 = vmatpush1.msra.mxu0 0.0
      %4125 = vmatprep.subr.mxu0 0.0
      %4126 = vmatpush1.msra.mxu0 0.0
      %4127 = vmatprep.subr.mxu0 0.0
      %4128 = vmatpush1.msra.mxu0 0.0
      %4129 = vmatprep.subr.mxu0 0.0
      %4130 = vmatpush1.msra.mxu0 0.0
      %4131 = vmatprep.subr.mxu0 0.0
      %4132 = vmatpush1.msra.mxu0 0.0
      %4133 = vmatprep.subr.mxu0 0.0
      %4134 = vmatpush1.msra.mxu0 0.0
      %4135 = vmatprep.subr.mxu0 0.0
      %4136 = vmatpush1.msra.mxu0 0.0
      %4137 = vmatprep.subr.mxu0 0.0
      %4138 = vmatpush1.msra.mxu0 0.0
      %4139 = vmatprep.subr.mxu0 0.0
      %4140 = vmatpush1.msra.mxu0 0.0
      %4141 = vmatprep.mubr.f32.mxu0 0.0
      %4142 = vmatmul.mubr.f32.gmra.mrb[0].mxu0 %v4030
      %v4143 = vpop.f32.mrb[0].mxu0
      %v4144 = vadd.f32 0.0, %v4143
      %v4145 = vpop.f32.mrb[0].mxu0
      %4146 = vmatprep.mubr.f32.mxu0 0.0
      %4147 = vmatmul.mubr.f32.gmra.mrb[0].mxu0 %v4033
      %v4148 = vpop.f32.mrb[0].mxu0
      %v4149 = vadd.f32 0.0, %v4148
      %v4150 = vpop.f32.mrb[0].mxu0
      %4151 = vmatprep.mubr.f32.mxu0 0.0
      %4152 = vmatmul.mubr.f32.gmra.mrb[0].mxu0 %v4036
      %v4153 = vpop.f32.mrb[0].mxu0
      %v4154 = vadd.f32 0.0, %v4153
      %v4155 = vpop.f32.mrb[0].mxu0
      %4156 = vmatprep.mubr.f32.mxu0 0.0
      %4157 = vmatmul.mubr.f32.gmra.mrb[0].mxu0 %v4039
      %v4158 = vpop.f32.mrb[0].mxu0
      %v4159 = vadd.f32 0.0, %v4158
      %v4160 = vpop.f32.mrb[0].mxu0
      %4161 = vmatprep.mubr.f32.mxu0 0.0
      %4162 = vmatmul.mubr.f32.gmra.mrb[0].mxu0 %v4042
      %v4163 = vpop.f32.mrb[0].mxu0
      %v4164 = vadd.f32 0.0, %v4163
      %v4165 = vpop.f32.mrb[0].mxu0
      %4166 = vmatprep.mubr.f32.mxu0 0.0
      %4167 = vmatmul.mubr.f32.gmra.mrb[0].mxu0 %v4045
      %v4168 = vpop.f32.mrb[0].mxu0
      %v4169 = vadd.f32 0.0, %v4168
      %v4170 = vpop.f32.mrb[0].mxu0
      %4171 = vmatprep.mubr.f32.mxu0 0.0
      %4172 = vmatmul.mubr.f32.gmra.mrb[0].mxu0 %v4048
      %v4173 = vpop.f32.mrb[0].mxu0
      %v4174 = vadd.f32 0.0, %v4173
      %v4175 = vpop.f32.mrb[0].mxu0
      %4176 = vmatprep.mubr.f32.mxu0 0.0
      %4177 = vmatmul.mubr.f32.gmra.mrb[0].mxu0 %v4051
      %v4178 = vpop.f32.mrb[0].mxu0
      %v4179 = vadd.f32 0.0, %v4178
      %v4180 = vpop.f32.mrb[0].mxu0
      %4181 = vmatprep.mubr.f32.mxu0 0.0
      %4182 = vmatmul.mubr.f32.gmra.mrb[0].mxu0 %v4054
      %v4183 = vpop.f32.mrb[0].mxu0
      %v4184 = vadd.f32 0.0, %v4183
      %v4185 = vpop.f32.mrb[0].mxu0
      %4186 = vmatprep.mubr.f32.mxu0 0.0
      %4187 = vmatmul.mubr.f32.gmra.mrb[0].mxu0 %v4057
      %v4188 = vpop.f32.mrb[0].mxu0
      %v4189 = vadd.f32 0.0, %v4188
      %v4190 = vpop.f32.mrb[0].mxu0
      %4191 = vmatprep.mubr.f32.mxu0 0.0
      %4192 = vmatmul.mubr.f32.gmra.mrb[0].mxu0 %v4060
      %v4193 = vpop.f32.mrb[0].mxu0
      %v4194 = vadd.f32 0.0, %v4193
      %v4195 = vpop.f32.mrb[0].mxu0
      %4196 = vmatprep.mubr.f32.mxu0 0.0
      %4197 = vmatmul.mubr.f32.gmra.mrb[0].mxu0 %v4063
      %v4198 = vpop.f32.mrb[0].mxu0
      %v4199 = vadd.f32 0.0, %v4198
      %v4200 = vpop.f32.mrb[0].mxu0
      %4201 = vmatprep.mubr.f32.mxu0 0.0
      %4202 = vmatmul.mubr.f32.gmra.mrb[0].mxu0 %v4066
      %v4203 = vpop.f32.mrb[0].mxu0
      %v4204 = vadd.f32 0.0, %v4203
      %v4205 = vpop.f32.mrb[0].mxu0
      %4206 = vmatprep.mubr.f32.mxu0 0.0
      %4207 = vmatmul.mubr.f32.gmra.mrb[0].mxu0 %v4069
      %v4208 = vpop.f32.mrb[0].mxu0
      %v4209 = vadd.f32 0.0, %v4208
      %v4210 = vpop.f32.mrb[0].mxu0
      %4211 = vmatprep.mubr.f32.mxu0 0.0
      %4212 = vmatmul.mubr.f32.gmra.mrb[0].mxu0 %v4072
      %v4213 = vpop.f32.mrb[0].mxu0
      %v4214 = vadd.f32 0.0, %v4213
      %v4215 = vpop.f32.mrb[0].mxu0
      %4216 = vmatprep.mubr.f32.mxu0 0.0
      %4217 = vmatmul.mubr.f32.gmra.mrb[0].mxu0 %v4075
      %v4218 = vpop.f32.mrb[0].mxu0
      %v4219 = vadd.f32 0.0, %v4218
      %v4220 = vpop.f32.mrb[0].mxu0
      %4221 = vdwg.mxu0
      %v4222 = vmax.f32 %v4144, 0.0
      %v4223 = vmax.f32 %v4149, 0.0
      %v4224 = vmax.f32 %v4154, 0.0
      %v4225 = vmax.f32 %v4159, 0.0
      %v4226 = vmax.f32 %v4164, 0.0
      %v4227 = vmax.f32 %v4169, 0.0
      %v4228 = vmax.f32 %v4174, 0.0
      %v4229 = vmax.f32 %v4179, 0.0
      %v4230 = vmax.f32 %v4184, 0.0
      %v4231 = vmax.f32 %v4189, 0.0
      %v4232 = vmax.f32 %v4194, 0.0
      %v4233 = vmax.f32 %v4199, 0.0
      %v4234 = vmax.f32 %v4204, 0.0
      %v4235 = vmax.f32 %v4209, 0.0
      %v4236 = vmax.f32 %v4214, 0.0
      %v4237 = vmax.f32 %v4219, 0.0
      %v4238 = vmin.f32 %v4222, 6.0
      %v4239 = vmin.f32 %v4223, 6.0
      %v4240 = vmin.f32 %v4224, 6.0
      %v4241 = vmin.f32 %v4225, 6.0
      %v4242 = vmin.f32 %v4226, 6.0
      %v4243 = vmin.f32 %v4227, 6.0
      %v4244 = vmin.f32 %v4228, 6.0
      %v4245 = vmin.f32 %v4229, 6.0
      %v4246 = vmin.f32 %v4230, 6.0
      %v4247 = vmin.f32 %v4231, 6.0
      %v4248 = vmin.f32 %v4232, 6.0
      %v4249 = vmin.f32 %v4233, 6.0
      %v4250 = vmin.f32 %v4234, 6.0
      %v4251 = vmin.f32 %v4235, 6.0
      %v4252 = vmin.f32 %v4236, 6.0
      %v4253 = vmin.f32 %v4237, 6.0
      %v4262 = vrot.slane %v4238, 1
      %v4263 = vrot.slane %v4240, 1
      %v4264 = vrot.slane %v4242, 1
      %v4265 = vrot.slane %v4244, 1
      %v4266 = vrot.slane %v4246, 1
      %v4267 = vrot.slane %v4248, 1
      %v4268 = vrot.slane %v4250, 1
      %v4269 = vrot.slane %v4252, 1
      %v4286 = vrot.slane %v4238, 7
      %v4287 = vrot.slane %v4239, 7
      %v4288 = vsel %vm611, %v4286, %v4287
      %v4289 = vrot.slane %v4240, 7
      %v4290 = vrot.slane %v4241, 7
      %v4291 = vsel %vm611, %v4289, %v4290
      %v4292 = vrot.slane %v4242, 7
      %v4293 = vrot.slane %v4243, 7
      %v4294 = vsel %vm611, %v4292, %v4293
      %v4295 = vrot.slane %v4244, 7
      %v4296 = vrot.slane %v4245, 7
      %v4297 = vsel %vm611, %v4295, %v4296
      %v4298 = vrot.slane %v4246, 7
      %v4299 = vrot.slane %v4247, 7
      %v4300 = vsel %vm611, %v4298, %v4299
      %v4301 = vrot.slane %v4248, 7
      %v4302 = vrot.slane %v4249, 7
      %v4303 = vsel %vm611, %v4301, %v4302
      %v4304 = vrot.slane %v4250, 7
      %v4305 = vrot.slane %v4251, 7
      %v4306 = vsel %vm611, %v4304, %v4305
      %v4307 = vrot.slane %v4252, 7
      %v4308 = vrot.slane %v4253, 7
      %v4309 = vsel %vm611, %v4307, %v4308
      %v4334 = vrot.slane %v4239, 5
      %v4335 = vrot.slane %v4241, 5
      %v4336 = vrot.slane %v4243, 5
      %v4337 = vrot.slane %v4245, 5
      %v4338 = vrot.slane %v4247, 5
      %v4339 = vrot.slane %v4249, 5
      %v4340 = vrot.slane %v4251, 5
      %v4341 = vrot.slane %v4253, 5
      %v4350 = vsel %vm611, %v4262, %v4286
      %v4351 = vsel %vm611, %v4263, %v4289
      %v4352 = vsel %vm611, %v4264, %v4292
      %v4353 = vsel %vm611, %v4265, %v4295
      %v4354 = vsel %vm611, %v4266, %v4298
      %v4355 = vsel %vm611, %v4267, %v4301
      %v4356 = vsel %vm611, %v4268, %v4304
      %v4357 = vsel %vm611, %v4269, %v4307
      %v4358 = vsel %vm611, %v4287, %v4334
      %v4359 = vsel %vm611, %v4290, %v4335
      %v4360 = vsel %vm611, %v4293, %v4336
      %v4361 = vsel %vm611, %v4296, %v4337
      %v4362 = vsel %vm611, %v4299, %v4338
      %v4363 = vsel %vm611, %v4302, %v4339
      %v4364 = vsel %vm611, %v4305, %v4340
      %v4365 = vsel %vm611, %v4308, %v4341
      %s4366 = scalar_lea.vmem [#allocation3], 216
      %4367 = vst [vmem:[%s4366] sm:$0xff] %v4350
      %4368 = vst [vmem:[%s4366 + $0x8] sm:$0xff] %v4288
      %4369 = vst [vmem:[%s4366 + $0x10] sm:$0x3] %v4358
      %4370 = vst [vmem:[%s4366 + $0x18] sm:$0xff] %v4351
      %4371 = vst [vmem:[%s4366 + $0x20] sm:$0xff] %v4291
      %4372 = vst [vmem:[%s4366 + $0x28] sm:$0x3] %v4359
      %4373 = vst [vmem:[%s4366 + $0x30] sm:$0xff] %v4352
      %4374 = vst [vmem:[%s4366 + $0x38] sm:$0xff] %v4294
      %4375 = vst [vmem:[%s4366 + $0x40] sm:$0x3] %v4360
      %4376 = vst [vmem:[%s4366 + $0x48] sm:$0xff] %v4353
      %4377 = vst [vmem:[%s4366 + $0x50] sm:$0xff] %v4297
      %4378 = vst [vmem:[%s4366 + $0x58] sm:$0x3] %v4361
      %4379 = vst [vmem:[%s4366 + $0x60] sm:$0xff] %v4354
      %4380 = vst [vmem:[%s4366 + $0x68] sm:$0xff] %v4300
      %4381 = vst [vmem:[%s4366 + $0x70] sm:$0x3] %v4362
      %4382 = vst [vmem:[%s4366 + $0x78] sm:$0xff] %v4355
      %4383 = vst [vmem:[%s4366 + $0x80] sm:$0xff] %v4303
      %4384 = vst [vmem:[%s4366 + $0x88] sm:$0x3] %v4363
      %4385 = vst [vmem:[%s4366 + $0x90] sm:$0xff] %v4356
      %4386 = vst [vmem:[%s4366 + $0x98] sm:$0xff] %v4306
      %4387 = vst [vmem:[%s4366 + $0xa0] sm:$0x3] %v4364
      %4388 = vst [vmem:[%s4366 + $0xa8] sm:$0xff] %v4357
      %4389 = vst [vmem:[%s4366 + $0xb0] sm:$0xff] %v4309
      %4390 = vst [vmem:[%s4366 + $0xb8] sm:$0x3] %v4365
      %s4391 = scalar_lea.vmem [#allocation3], 48
      %v4392 = vld [vmem:[%s4391] sm:$0xff]
      %v4393 = vld [vmem:[%s4391 + $0x8] sm:$0xff]
      %v4394 = vld [vmem:[%s4391 + $0x10] sm:$0x3]
      %4395 = vst [vmem:[#allocation3] sm:$0xff] %v4392
      %4396 = vst [vmem:[#allocation3 + $0x8] sm:$0xff] %v4393
      %4397 = vst [vmem:[#allocation3 + $0x10] sm:$0x3] %v4394
      %s4398 = scalar_lea.vmem [#allocation3], 360
      %v4399 = vld [vmem:[%s4398] sm:$0xff]
      %v4400 = vld [vmem:[%s4398 + $0x8] sm:$0xff]
      %v4401 = vld [vmem:[%s4398 + $0x10] sm:$0x3]
      %s4402 = scalar_lea.vmem [#allocation3], 408
      %4403 = vst [vmem:[%s4402] sm:$0xff] %v4399
      %4404 = vst [vmem:[%s4402 + $0x8] sm:$0xff] %v4400
      %4405 = vst [vmem:[%s4402 + $0x10] sm:$0x3] %v4401
      %v4406 = vld [vmem:[%s6] sm:$0xff]
      %v4407 = vld [vmem:[%s6 + $0x8] sm:$0x1]
      %v4408 = vld [vmem:[%s7] sm:$0xff]
      %v4409 = vld [vmem:[%s7 + $0x8] sm:$0xff]
      %v4410 = vld [vmem:[%s7 + $0x10] sm:$0xff]
      %v4411 = vld [vmem:[%s7 + $0x18] sm:$0xff]
      %v4412 = vld [vmem:[%s7 + $0x20] sm:$0xff]
      %v4413 = vld [vmem:[%s7 + $0x28] sm:$0xff]
      %v4414 = vld [vmem:[%s7 + $0x30] sm:$0xff]
      %v4415 = vld [vmem:[%s7 + $0x38] sm:$0xff]
      %v4416 = vld [vmem:[%s7 + $0x40] sm:$0xff]
      %v4417 = vld [vmem:[%s7 + $0x48] sm:$0xff]
      %v4418 = vld [vmem:[%s7 + $0x50] sm:$0xff]
      %v4419 = vld [vmem:[%s7 + $0x58] sm:$0xff]
      %v4420 = vld [vmem:[%s7 + $0x60] sm:$0xff]
      %v4421 = vld [vmem:[%s7 + $0x68] sm:$0xff]
      %v4422 = vld [vmem:[%s7 + $0x70] sm:$0xff]
      %v4423 = vld [vmem:[%s7 + $0x78] sm:$0xff]
      %v4424 = vld [vmem:[#allocation3] sm:$0xff]
      %v4425 = vld [vmem:[#allocation3 + $0x8] sm:$0xff]
      %v4426 = vld [vmem:[#allocation3 + $0x10] sm:$0x3]
      %v4427 = vld [vmem:[#allocation3 + $0x18] sm:$0xff]
      %v4428 = vld [vmem:[#allocation3 + $0x20] sm:$0xff]
      %v4429 = vld [vmem:[#allocation3 + $0x28] sm:$0x3]
      %v4430 = vld [vmem:[#allocation3 + $0x30] sm:$0xff]
      %v4431 = vld [vmem:[#allocation3 + $0x38] sm:$0xff]
      %v4432 = vld [vmem:[#allocation3 + $0x40] sm:$0x3]
      %v4433 = vld [vmem:[#allocation3 + $0x48] sm:$0xff]
      %v4434 = vld [vmem:[#allocation3 + $0x50] sm:$0xff]
      %v4435 = vld [vmem:[#allocation3 + $0x58] sm:$0x3]
      %v4436 = vld [vmem:[#allocation3 + $0x60] sm:$0xff]
      %v4437 = vld [vmem:[#allocation3 + $0x68] sm:$0xff]
      %v4438 = vld [vmem:[#allocation3 + $0x70] sm:$0x3]
      %v4439 = vld [vmem:[#allocation3 + $0x78] sm:$0xff]
      %v4440 = vld [vmem:[#allocation3 + $0x80] sm:$0xff]
      %v4441 = vld [vmem:[#allocation3 + $0x88] sm:$0x3]
      %v4442 = vld [vmem:[#allocation3 + $0x90] sm:$0xff]
      %v4443 = vld [vmem:[#allocation3 + $0x98] sm:$0xff]
      %v4444 = vld [vmem:[#allocation3 + $0xa0] sm:$0x3]
      %v4445 = vld [vmem:[#allocation3 + $0xa8] sm:$0xff]
      %v4446 = vld [vmem:[#allocation3 + $0xb0] sm:$0xff]
      %v4447 = vld [vmem:[#allocation3 + $0xb8] sm:$0x3]
      %v4448 = vlaneseq
      %v4449 = vshrl.u32 %v4448, 7
      %v4450 = vsub.s32 0, %v4449
      %v4451 = vrot.slane %v4406, %v4450
      %v4452 = vmul.f32 %v4424, %v4451
      %v4453 = vmul.f32 %v4425, %v4451
      %v4454 = vmul.f32 %v4427, %v4451
      %v4455 = vmul.f32 %v4428, %v4451
      %v4456 = vmul.f32 %v4430, %v4451
      %v4457 = vmul.f32 %v4431, %v4451
      %v4458 = vmul.f32 %v4433, %v4451
      %v4459 = vmul.f32 %v4434, %v4451
      %v4460 = vmul.f32 %v4436, %v4451
      %v4461 = vmul.f32 %v4437, %v4451
      %v4462 = vmul.f32 %v4439, %v4451
      %v4463 = vmul.f32 %v4440, %v4451
      %v4464 = vmul.f32 %v4442, %v4451
      %v4465 = vmul.f32 %v4443, %v4451
      %v4466 = vmul.f32 %v4445, %v4451
      %v4467 = vmul.f32 %v4446, %v4451
      %v4468 = vlaneseq
      %v4469 = vshrl.u32 %v4468, 7
      %v4470 = vsub.s32 1, %v4469
      %v4471 = vrot.slane %v4406, %v4470
      %v4472 = vmul.f32 %v4424, %v4471
      %v4473 = vmul.f32 %v4425, %v4471
      %v4474 = vmul.f32 %v4426, %v4471
      %v4475 = vmul.f32 %v4427, %v4471
      %v4476 = vmul.f32 %v4428, %v4471
      %v4477 = vmul.f32 %v4429, %v4471
      %v4478 = vmul.f32 %v4430, %v4471
      %v4479 = vmul.f32 %v4431, %v4471
      %v4480 = vmul.f32 %v4432, %v4471
      %v4481 = vmul.f32 %v4433, %v4471
      %v4482 = vmul.f32 %v4434, %v4471
      %v4483 = vmul.f32 %v4435, %v4471
      %v4484 = vmul.f32 %v4436, %v4471
      %v4485 = vmul.f32 %v4437, %v4471
      %v4486 = vmul.f32 %v4438, %v4471
      %v4487 = vmul.f32 %v4439, %v4471
      %v4488 = vmul.f32 %v4440, %v4471
      %v4489 = vmul.f32 %v4441, %v4471
      %v4490 = vmul.f32 %v4442, %v4471
      %v4491 = vmul.f32 %v4443, %v4471
      %v4492 = vmul.f32 %v4444, %v4471
      %v4493 = vmul.f32 %v4445, %v4471
      %v4494 = vmul.f32 %v4446, %v4471
      %v4495 = vmul.f32 %v4447, %v4471
      %v4520 = vrot.slane %v4472, 1
      %v4521 = vrot.slane %v4473, 1
      %v4522 = vsel %vm1393, %v4520, %v4521
      %v4523 = vrot.slane %v4474, 1
      %v4524 = vsel %vm1393, %v4521, %v4523
      %v4525 = vrot.slane %v4475, 1
      %v4526 = vrot.slane %v4476, 1
      %v4527 = vsel %vm1393, %v4525, %v4526
      %v4528 = vrot.slane %v4477, 1
      %v4529 = vsel %vm1393, %v4526, %v4528
      %v4530 = vrot.slane %v4478, 1
      %v4531 = vrot.slane %v4479, 1
      %v4532 = vsel %vm1393, %v4530, %v4531
      %v4533 = vrot.slane %v4480, 1
      %v4534 = vsel %vm1393, %v4531, %v4533
      %v4535 = vrot.slane %v4481, 1
      %v4536 = vrot.slane %v4482, 1
      %v4537 = vsel %vm1393, %v4535, %v4536
      %v4538 = vrot.slane %v4483, 1
      %v4539 = vsel %vm1393, %v4536, %v4538
      %v4540 = vrot.slane %v4484, 1
      %v4541 = vrot.slane %v4485, 1
      %v4542 = vsel %vm1393, %v4540, %v4541
      %v4543 = vrot.slane %v4486, 1
      %v4544 = vsel %vm1393, %v4541, %v4543
      %v4545 = vrot.slane %v4487, 1
      %v4546 = vrot.slane %v4488, 1
      %v4547 = vsel %vm1393, %v4545, %v4546
      %v4548 = vrot.slane %v4489, 1
      %v4549 = vsel %vm1393, %v4546, %v4548
      %v4550 = vrot.slane %v4490, 1
      %v4551 = vrot.slane %v4491, 1
      %v4552 = vsel %vm1393, %v4550, %v4551
      %v4553 = vrot.slane %v4492, 1
      %v4554 = vsel %vm1393, %v4551, %v4553
      %v4555 = vrot.slane %v4493, 1
      %v4556 = vrot.slane %v4494, 1
      %v4557 = vsel %vm1393, %v4555, %v4556
      %v4558 = vrot.slane %v4495, 1
      %v4559 = vsel %vm1393, %v4556, %v4558
      %v4576 = vadd.f32 %v4452, %v4522
      %v4577 = vadd.f32 %v4453, %v4524
      %v4578 = vadd.f32 %v4454, %v4527
      %v4579 = vadd.f32 %v4455, %v4529
      %v4580 = vadd.f32 %v4456, %v4532
      %v4581 = vadd.f32 %v4457, %v4534
      %v4582 = vadd.f32 %v4458, %v4537
      %v4583 = vadd.f32 %v4459, %v4539
      %v4584 = vadd.f32 %v4460, %v4542
      %v4585 = vadd.f32 %v4461, %v4544
      %v4586 = vadd.f32 %v4462, %v4547
      %v4587 = vadd.f32 %v4463, %v4549
      %v4588 = vadd.f32 %v4464, %v4552
      %v4589 = vadd.f32 %v4465, %v4554
      %v4590 = vadd.f32 %v4466, %v4557
      %v4591 = vadd.f32 %v4467, %v4559
      %v4592 = vlaneseq
      %v4593 = vshrl.u32 %v4592, 7
      %v4594 = vsub.s32 2, %v4593
      %v4595 = vrot.slane %v4406, %v4594
      %v4596 = vmul.f32 %v4424, %v4595
      %v4597 = vmul.f32 %v4425, %v4595
      %v4598 = vmul.f32 %v4426, %v4595
      %v4599 = vmul.f32 %v4427, %v4595
      %v4600 = vmul.f32 %v4428, %v4595
      %v4601 = vmul.f32 %v4429, %v4595
      %v4602 = vmul.f32 %v4430, %v4595
      %v4603 = vmul.f32 %v4431, %v4595
      %v4604 = vmul.f32 %v4432, %v4595
      %v4605 = vmul.f32 %v4433, %v4595
      %v4606 = vmul.f32 %v4434, %v4595
      %v4607 = vmul.f32 %v4435, %v4595
      %v4608 = vmul.f32 %v4436, %v4595
      %v4609 = vmul.f32 %v4437, %v4595
      %v4610 = vmul.f32 %v4438, %v4595
      %v4611 = vmul.f32 %v4439, %v4595
      %v4612 = vmul.f32 %v4440, %v4595
      %v4613 = vmul.f32 %v4441, %v4595
      %v4614 = vmul.f32 %v4442, %v4595
      %v4615 = vmul.f32 %v4443, %v4595
      %v4616 = vmul.f32 %v4444, %v4595
      %v4617 = vmul.f32 %v4445, %v4595
      %v4618 = vmul.f32 %v4446, %v4595
      %v4619 = vmul.f32 %v4447, %v4595
      %v4644 = vrot.slane %v4596, 2
      %v4645 = vrot.slane %v4597, 2
      %v4646 = vsel %vm1518, %v4644, %v4645
      %v4647 = vrot.slane %v4598, 2
      %v4648 = vsel %vm1518, %v4645, %v4647
      %v4649 = vrot.slane %v4599, 2
      %v4650 = vrot.slane %v4600, 2
      %v4651 = vsel %vm1518, %v4649, %v4650
      %v4652 = vrot.slane %v4601, 2
      %v4653 = vsel %vm1518, %v4650, %v4652
      %v4654 = vrot.slane %v4602, 2
      %v4655 = vrot.slane %v4603, 2
      %v4656 = vsel %vm1518, %v4654, %v4655
      %v4657 = vrot.slane %v4604, 2
      %v4658 = vsel %vm1518, %v4655, %v4657
      %v4659 = vrot.slane %v4605, 2
      %v4660 = vrot.slane %v4606, 2
      %v4661 = vsel %vm1518, %v4659, %v4660
      %v4662 = vrot.slane %v4607, 2
      %v4663 = vsel %vm1518, %v4660, %v4662
      %v4664 = vrot.slane %v4608, 2
      %v4665 = vrot.slane %v4609, 2
      %v4666 = vsel %vm1518, %v4664, %v4665
      %v4667 = vrot.slane %v4610, 2
      %v4668 = vsel %vm1518, %v4665, %v4667
      %v4669 = vrot.slane %v4611, 2
      %v4670 = vrot.slane %v4612, 2
      %v4671 = vsel %vm1518, %v4669, %v4670
      %v4672 = vrot.slane %v4613, 2
      %v4673 = vsel %vm1518, %v4670, %v4672
      %v4674 = vrot.slane %v4614, 2
      %v4675 = vrot.slane %v4615, 2
      %v4676 = vsel %vm1518, %v4674, %v4675
      %v4677 = vrot.slane %v4616, 2
      %v4678 = vsel %vm1518, %v4675, %v4677
      %v4679 = vrot.slane %v4617, 2
      %v4680 = vrot.slane %v4618, 2
      %v4681 = vsel %vm1518, %v4679, %v4680
      %v4682 = vrot.slane %v4619, 2
      %v4683 = vsel %vm1518, %v4680, %v4682
      %v4700 = vadd.f32 %v4576, %v4646
      %v4701 = vadd.f32 %v4577, %v4648
      %v4702 = vadd.f32 %v4578, %v4651
      %v4703 = vadd.f32 %v4579, %v4653
      %v4704 = vadd.f32 %v4580, %v4656
      %v4705 = vadd.f32 %v4581, %v4658
      %v4706 = vadd.f32 %v4582, %v4661
      %v4707 = vadd.f32 %v4583, %v4663
      %v4708 = vadd.f32 %v4584, %v4666
      %v4709 = vadd.f32 %v4585, %v4668
      %v4710 = vadd.f32 %v4586, %v4671
      %v4711 = vadd.f32 %v4587, %v4673
      %v4712 = vadd.f32 %v4588, %v4676
      %v4713 = vadd.f32 %v4589, %v4678
      %v4714 = vadd.f32 %v4590, %v4681
      %v4715 = vadd.f32 %v4591, %v4683
      %v4716 = vld [vmem:[%s3988] sm:$0xff]
      %v4717 = vld [vmem:[%s3988 + $0x8] sm:$0xff]
      %v4718 = vld [vmem:[%s3988 + $0x10] sm:$0x3]
      %v4719 = vld [vmem:[%s3988 + $0x18] sm:$0xff]
      %v4720 = vld [vmem:[%s3988 + $0x20] sm:$0xff]
      %v4721 = vld [vmem:[%s3988 + $0x28] sm:$0x3]
      %v4722 = vld [vmem:[%s3988 + $0x30] sm:$0xff]
      %v4723 = vld [vmem:[%s3988 + $0x38] sm:$0xff]
      %v4724 = vld [vmem:[%s3988 + $0x40] sm:$0x3]
      %v4725 = vld [vmem:[%s3988 + $0x48] sm:$0xff]
      %v4726 = vld [vmem:[%s3988 + $0x50] sm:$0xff]
      %v4727 = vld [vmem:[%s3988 + $0x58] sm:$0x3]
      %v4728 = vld [vmem:[%s3988 + $0x60] sm:$0xff]
      %v4729 = vld [vmem:[%s3988 + $0x68] sm:$0xff]
      %v4730 = vld [vmem:[%s3988 + $0x70] sm:$0x3]
      %v4731 = vld [vmem:[%s3988 + $0x78] sm:$0xff]
      %v4732 = vld [vmem:[%s3988 + $0x80] sm:$0xff]
      %v4733 = vld [vmem:[%s3988 + $0x88] sm:$0x3]
      %v4734 = vld [vmem:[%s3988 + $0x90] sm:$0xff]
      %v4735 = vld [vmem:[%s3988 + $0x98] sm:$0xff]
      %v4736 = vld [vmem:[%s3988 + $0xa0] sm:$0x3]
      %v4737 = vld [vmem:[%s3988 + $0xa8] sm:$0xff]
      %v4738 = vld [vmem:[%s3988 + $0xb0] sm:$0xff]
      %v4739 = vld [vmem:[%s3988 + $0xb8] sm:$0x3]
      %v4740 = vlaneseq
      %v4741 = vshrl.u32 %v4740, 7
      %v4742 = vsub.s32 3, %v4741
      %v4743 = vrot.slane %v4406, %v4742
      %v4744 = vmul.f32 %v4716, %v4743
      %v4745 = vmul.f32 %v4717, %v4743
      %v4746 = vmul.f32 %v4719, %v4743
      %v4747 = vmul.f32 %v4720, %v4743
      %v4748 = vmul.f32 %v4722, %v4743
      %v4749 = vmul.f32 %v4723, %v4743
      %v4750 = vmul.f32 %v4725, %v4743
      %v4751 = vmul.f32 %v4726, %v4743
      %v4752 = vmul.f32 %v4728, %v4743
      %v4753 = vmul.f32 %v4729, %v4743
      %v4754 = vmul.f32 %v4731, %v4743
      %v4755 = vmul.f32 %v4732, %v4743
      %v4756 = vmul.f32 %v4734, %v4743
      %v4757 = vmul.f32 %v4735, %v4743
      %v4758 = vmul.f32 %v4737, %v4743
      %v4759 = vmul.f32 %v4738, %v4743
      %v4760 = vadd.f32 %v4700, %v4744
      %v4761 = vadd.f32 %v4701, %v4745
      %v4762 = vadd.f32 %v4702, %v4746
      %v4763 = vadd.f32 %v4703, %v4747
      %v4764 = vadd.f32 %v4704, %v4748
      %v4765 = vadd.f32 %v4705, %v4749
      %v4766 = vadd.f32 %v4706, %v4750
      %v4767 = vadd.f32 %v4707, %v4751
      %v4768 = vadd.f32 %v4708, %v4752
      %v4769 = vadd.f32 %v4709, %v4753
      %v4770 = vadd.f32 %v4710, %v4754
      %v4771 = vadd.f32 %v4711, %v4755
      %v4772 = vadd.f32 %v4712, %v4756
      %v4773 = vadd.f32 %v4713, %v4757
      %v4774 = vadd.f32 %v4714, %v4758
      %v4775 = vadd.f32 %v4715, %v4759
      %v4776 = vlaneseq
      %v4777 = vshrl.u32 %v4776, 7
      %v4778 = vsub.s32 4, %v4777
      %v4779 = vrot.slane %v4406, %v4778
      %v4780 = vmul.f32 %v4716, %v4779
      %v4781 = vmul.f32 %v4717, %v4779
      %v4782 = vmul.f32 %v4718, %v4779
      %v4783 = vmul.f32 %v4719, %v4779
      %v4784 = vmul.f32 %v4720, %v4779
      %v4785 = vmul.f32 %v4721, %v4779
      %v4786 = vmul.f32 %v4722, %v4779
      %v4787 = vmul.f32 %v4723, %v4779
      %v4788 = vmul.f32 %v4724, %v4779
      %v4789 = vmul.f32 %v4725, %v4779
      %v4790 = vmul.f32 %v4726, %v4779
      %v4791 = vmul.f32 %v4727, %v4779
      %v4792 = vmul.f32 %v4728, %v4779
      %v4793 = vmul.f32 %v4729, %v4779
      %v4794 = vmul.f32 %v4730, %v4779
      %v4795 = vmul.f32 %v4731, %v4779
      %v4796 = vmul.f32 %v4732, %v4779
      %v4797 = vmul.f32 %v4733, %v4779
      %v4798 = vmul.f32 %v4734, %v4779
      %v4799 = vmul.f32 %v4735, %v4779
      %v4800 = vmul.f32 %v4736, %v4779
      %v4801 = vmul.f32 %v4737, %v4779
      %v4802 = vmul.f32 %v4738, %v4779
      %v4803 = vmul.f32 %v4739, %v4779
      %v4828 = vrot.slane %v4780, 1
      %v4829 = vrot.slane %v4781, 1
      %v4830 = vsel %vm1393, %v4828, %v4829
      %v4831 = vrot.slane %v4782, 1
      %v4832 = vsel %vm1393, %v4829, %v4831
      %v4833 = vrot.slane %v4783, 1
      %v4834 = vrot.slane %v4784, 1
      %v4835 = vsel %vm1393, %v4833, %v4834
      %v4836 = vrot.slane %v4785, 1
      %v4837 = vsel %vm1393, %v4834, %v4836
      %v4838 = vrot.slane %v4786, 1
      %v4839 = vrot.slane %v4787, 1
      %v4840 = vsel %vm1393, %v4838, %v4839
      %v4841 = vrot.slane %v4788, 1
      %v4842 = vsel %vm1393, %v4839, %v4841
      %v4843 = vrot.slane %v4789, 1
      %v4844 = vrot.slane %v4790, 1
      %v4845 = vsel %vm1393, %v4843, %v4844
      %v4846 = vrot.slane %v4791, 1
      %v4847 = vsel %vm1393, %v4844, %v4846
      %v4848 = vrot.slane %v4792, 1
      %v4849 = vrot.slane %v4793, 1
      %v4850 = vsel %vm1393, %v4848, %v4849
      %v4851 = vrot.slane %v4794, 1
      %v4852 = vsel %vm1393, %v4849, %v4851
      %v4853 = vrot.slane %v4795, 1
      %v4854 = vrot.slane %v4796, 1
      %v4855 = vsel %vm1393, %v4853, %v4854
      %v4856 = vrot.slane %v4797, 1
      %v4857 = vsel %vm1393, %v4854, %v4856
      %v4858 = vrot.slane %v4798, 1
      %v4859 = vrot.slane %v4799, 1
      %v4860 = vsel %vm1393, %v4858, %v4859
      %v4861 = vrot.slane %v4800, 1
      %v4862 = vsel %vm1393, %v4859, %v4861
      %v4863 = vrot.slane %v4801, 1
      %v4864 = vrot.slane %v4802, 1
      %v4865 = vsel %vm1393, %v4863, %v4864
      %v4866 = vrot.slane %v4803, 1
      %v4867 = vsel %vm1393, %v4864, %v4866
      %v4884 = vadd.f32 %v4760, %v4830
      %v4885 = vadd.f32 %v4761, %v4832
      %v4886 = vadd.f32 %v4762, %v4835
      %v4887 = vadd.f32 %v4763, %v4837
      %v4888 = vadd.f32 %v4764, %v4840
      %v4889 = vadd.f32 %v4765, %v4842
      %v4890 = vadd.f32 %v4766, %v4845
      %v4891 = vadd.f32 %v4767, %v4847
      %v4892 = vadd.f32 %v4768, %v4850
      %v4893 = vadd.f32 %v4769, %v4852
      %v4894 = vadd.f32 %v4770, %v4855
      %v4895 = vadd.f32 %v4771, %v4857
      %v4896 = vadd.f32 %v4772, %v4860
      %v4897 = vadd.f32 %v4773, %v4862
      %v4898 = vadd.f32 %v4774, %v4865
      %v4899 = vadd.f32 %v4775, %v4867
      %v4900 = vlaneseq
      %v4901 = vshrl.u32 %v4900, 7
      %v4902 = vsub.s32 5, %v4901
      %v4903 = vrot.slane %v4406, %v4902
      %v4904 = vmul.f32 %v4716, %v4903
      %v4905 = vmul.f32 %v4717, %v4903
      %v4906 = vmul.f32 %v4718, %v4903
      %v4907 = vmul.f32 %v4719, %v4903
      %v4908 = vmul.f32 %v4720, %v4903
      %v4909 = vmul.f32 %v4721, %v4903
      %v4910 = vmul.f32 %v4722, %v4903
      %v4911 = vmul.f32 %v4723, %v4903
      %v4912 = vmul.f32 %v4724, %v4903
      %v4913 = vmul.f32 %v4725, %v4903
      %v4914 = vmul.f32 %v4726, %v4903
      %v4915 = vmul.f32 %v4727, %v4903
      %v4916 = vmul.f32 %v4728, %v4903
      %v4917 = vmul.f32 %v4729, %v4903
      %v4918 = vmul.f32 %v4730, %v4903
      %v4919 = vmul.f32 %v4731, %v4903
      %v4920 = vmul.f32 %v4732, %v4903
      %v4921 = vmul.f32 %v4733, %v4903
      %v4922 = vmul.f32 %v4734, %v4903
      %v4923 = vmul.f32 %v4735, %v4903
      %v4924 = vmul.f32 %v4736, %v4903
      %v4925 = vmul.f32 %v4737, %v4903
      %v4926 = vmul.f32 %v4738, %v4903
      %v4927 = vmul.f32 %v4739, %v4903
      %v4952 = vrot.slane %v4904, 2
      %v4953 = vrot.slane %v4905, 2
      %v4954 = vsel %vm1518, %v4952, %v4953
      %v4955 = vrot.slane %v4906, 2
      %v4956 = vsel %vm1518, %v4953, %v4955
      %v4957 = vrot.slane %v4907, 2
      %v4958 = vrot.slane %v4908, 2
      %v4959 = vsel %vm1518, %v4957, %v4958
      %v4960 = vrot.slane %v4909, 2
      %v4961 = vsel %vm1518, %v4958, %v4960
      %v4962 = vrot.slane %v4910, 2
      %v4963 = vrot.slane %v4911, 2
      %v4964 = vsel %vm1518, %v4962, %v4963
      %v4965 = vrot.slane %v4912, 2
      %v4966 = vsel %vm1518, %v4963, %v4965
      %v4967 = vrot.slane %v4913, 2
      %v4968 = vrot.slane %v4914, 2
      %v4969 = vsel %vm1518, %v4967, %v4968
      %v4970 = vrot.slane %v4915, 2
      %v4971 = vsel %vm1518, %v4968, %v4970
      %v4972 = vrot.slane %v4916, 2
      %v4973 = vrot.slane %v4917, 2
      %v4974 = vsel %vm1518, %v4972, %v4973
      %v4975 = vrot.slane %v4918, 2
      %v4976 = vsel %vm1518, %v4973, %v4975
      %v4977 = vrot.slane %v4919, 2
      %v4978 = vrot.slane %v4920, 2
      %v4979 = vsel %vm1518, %v4977, %v4978
      %v4980 = vrot.slane %v4921, 2
      %v4981 = vsel %vm1518, %v4978, %v4980
      %v4982 = vrot.slane %v4922, 2
      %v4983 = vrot.slane %v4923, 2
      %v4984 = vsel %vm1518, %v4982, %v4983
      %v4985 = vrot.slane %v4924, 2
      %v4986 = vsel %vm1518, %v4983, %v4985
      %v4987 = vrot.slane %v4925, 2
      %v4988 = vrot.slane %v4926, 2
      %v4989 = vsel %vm1518, %v4987, %v4988
      %v4990 = vrot.slane %v4927, 2
      %v4991 = vsel %vm1518, %v4988, %v4990
      %v5008 = vadd.f32 %v4884, %v4954
      %v5009 = vadd.f32 %v4885, %v4956
      %v5010 = vadd.f32 %v4886, %v4959
      %v5011 = vadd.f32 %v4887, %v4961
      %v5012 = vadd.f32 %v4888, %v4964
      %v5013 = vadd.f32 %v4889, %v4966
      %v5014 = vadd.f32 %v4890, %v4969
      %v5015 = vadd.f32 %v4891, %v4971
      %v5016 = vadd.f32 %v4892, %v4974
      %v5017 = vadd.f32 %v4893, %v4976
      %v5018 = vadd.f32 %v4894, %v4979
      %v5019 = vadd.f32 %v4895, %v4981
      %v5020 = vadd.f32 %v4896, %v4984
      %v5021 = vadd.f32 %v4897, %v4986
      %v5022 = vadd.f32 %v4898, %v4989
      %v5023 = vadd.f32 %v4899, %v4991
      %v5024 = vld [vmem:[%s4391] sm:$0xff]
      %v5025 = vld [vmem:[%s4391 + $0x8] sm:$0xff]
      %v5026 = vld [vmem:[%s4391 + $0x10] sm:$0x3]
      %v5027 = vld [vmem:[%s4391 + $0x18] sm:$0xff]
      %v5028 = vld [vmem:[%s4391 + $0x20] sm:$0xff]
      %v5029 = vld [vmem:[%s4391 + $0x28] sm:$0x3]
      %v5030 = vld [vmem:[%s4391 + $0x30] sm:$0xff]
      %v5031 = vld [vmem:[%s4391 + $0x38] sm:$0xff]
      %v5032 = vld [vmem:[%s4391 + $0x40] sm:$0x3]
      %v5033 = vld [vmem:[%s4391 + $0x48] sm:$0xff]
      %v5034 = vld [vmem:[%s4391 + $0x50] sm:$0xff]
      %v5035 = vld [vmem:[%s4391 + $0x58] sm:$0x3]
      %v5036 = vld [vmem:[%s4391 + $0x60] sm:$0xff]
      %v5037 = vld [vmem:[%s4391 + $0x68] sm:$0xff]
      %v5038 = vld [vmem:[%s4391 + $0x70] sm:$0x3]
      %v5039 = vld [vmem:[%s4391 + $0x78] sm:$0xff]
      %v5040 = vld [vmem:[%s4391 + $0x80] sm:$0xff]
      %v5041 = vld [vmem:[%s4391 + $0x88] sm:$0x3]
      %v5042 = vld [vmem:[%s4391 + $0x90] sm:$0xff]
      %v5043 = vld [vmem:[%s4391 + $0x98] sm:$0xff]
      %v5044 = vld [vmem:[%s4391 + $0xa0] sm:$0x3]
      %v5045 = vld [vmem:[%s4391 + $0xa8] sm:$0xff]
      %v5046 = vld [vmem:[%s4391 + $0xb0] sm:$0xff]
      %v5047 = vld [vmem:[%s4391 + $0xb8] sm:$0x3]
      %v5048 = vlaneseq
      %v5049 = vshrl.u32 %v5048, 7
      %v5050 = vsub.s32 6, %v5049
      %v5051 = vrot.slane %v4406, %v5050
      %v5052 = vmul.f32 %v5024, %v5051
      %v5053 = vmul.f32 %v5025, %v5051
      %v5054 = vmul.f32 %v5027, %v5051
      %v5055 = vmul.f32 %v5028, %v5051
      %v5056 = vmul.f32 %v5030, %v5051
      %v5057 = vmul.f32 %v5031, %v5051
      %v5058 = vmul.f32 %v5033, %v5051
      %v5059 = vmul.f32 %v5034, %v5051
      %v5060 = vmul.f32 %v5036, %v5051
      %v5061 = vmul.f32 %v5037, %v5051
      %v5062 = vmul.f32 %v5039, %v5051
      %v5063 = vmul.f32 %v5040, %v5051
      %v5064 = vmul.f32 %v5042, %v5051
      %v5065 = vmul.f32 %v5043, %v5051
      %v5066 = vmul.f32 %v5045, %v5051
      %v5067 = vmul.f32 %v5046, %v5051
      %v5068 = vadd.f32 %v5008, %v5052
      %v5069 = vadd.f32 %v5009, %v5053
      %v5070 = vadd.f32 %v5010, %v5054
      %v5071 = vadd.f32 %v5011, %v5055
      %v5072 = vadd.f32 %v5012, %v5056
      %v5073 = vadd.f32 %v5013, %v5057
      %v5074 = vadd.f32 %v5014, %v5058
      %v5075 = vadd.f32 %v5015, %v5059
      %v5076 = vadd.f32 %v5016, %v5060
      %v5077 = vadd.f32 %v5017, %v5061
      %v5078 = vadd.f32 %v5018, %v5062
      %v5079 = vadd.f32 %v5019, %v5063
      %v5080 = vadd.f32 %v5020, %v5064
      %v5081 = vadd.f32 %v5021, %v5065
      %v5082 = vadd.f32 %v5022, %v5066
      %v5083 = vadd.f32 %v5023, %v5067
      %v5084 = vlaneseq
      %v5085 = vshrl.u32 %v5084, 7
      %v5086 = vsub.s32 7, %v5085
      %v5087 = vrot.slane %v4406, %v5086
      %v5088 = vmul.f32 %v5024, %v5087
      %v5089 = vmul.f32 %v5025, %v5087
      %v5090 = vmul.f32 %v5026, %v5087
      %v5091 = vmul.f32 %v5027, %v5087
      %v5092 = vmul.f32 %v5028, %v5087
      %v5093 = vmul.f32 %v5029, %v5087
      %v5094 = vmul.f32 %v5030, %v5087
      %v5095 = vmul.f32 %v5031, %v5087
      %v5096 = vmul.f32 %v5032, %v5087
      %v5097 = vmul.f32 %v5033, %v5087
      %v5098 = vmul.f32 %v5034, %v5087
      %v5099 = vmul.f32 %v5035, %v5087
      %v5100 = vmul.f32 %v5036, %v5087
      %v5101 = vmul.f32 %v5037, %v5087
      %v5102 = vmul.f32 %v5038, %v5087
      %v5103 = vmul.f32 %v5039, %v5087
      %v5104 = vmul.f32 %v5040, %v5087
      %v5105 = vmul.f32 %v5041, %v5087
      %v5106 = vmul.f32 %v5042, %v5087
      %v5107 = vmul.f32 %v5043, %v5087
      %v5108 = vmul.f32 %v5044, %v5087
      %v5109 = vmul.f32 %v5045, %v5087
      %v5110 = vmul.f32 %v5046, %v5087
      %v5111 = vmul.f32 %v5047, %v5087
      %v5136 = vrot.slane %v5088, 1
      %v5137 = vrot.slane %v5089, 1
      %v5138 = vsel %vm1393, %v5136, %v5137
      %v5139 = vrot.slane %v5090, 1
      %v5140 = vsel %vm1393, %v5137, %v5139
      %v5141 = vrot.slane %v5091, 1
      %v5142 = vrot.slane %v5092, 1
      %v5143 = vsel %vm1393, %v5141, %v5142
      %v5144 = vrot.slane %v5093, 1
      %v5145 = vsel %vm1393, %v5142, %v5144
      %v5146 = vrot.slane %v5094, 1
      %v5147 = vrot.slane %v5095, 1
      %v5148 = vsel %vm1393, %v5146, %v5147
      %v5149 = vrot.slane %v5096, 1
      %v5150 = vsel %vm1393, %v5147, %v5149
      %v5151 = vrot.slane %v5097, 1
      %v5152 = vrot.slane %v5098, 1
      %v5153 = vsel %vm1393, %v5151, %v5152
      %v5154 = vrot.slane %v5099, 1
      %v5155 = vsel %vm1393, %v5152, %v5154
      %v5156 = vrot.slane %v5100, 1
      %v5157 = vrot.slane %v5101, 1
      %v5158 = vsel %vm1393, %v5156, %v5157
      %v5159 = vrot.slane %v5102, 1
      %v5160 = vsel %vm1393, %v5157, %v5159
      %v5161 = vrot.slane %v5103, 1
      %v5162 = vrot.slane %v5104, 1
      %v5163 = vsel %vm1393, %v5161, %v5162
      %v5164 = vrot.slane %v5105, 1
      %v5165 = vsel %vm1393, %v5162, %v5164
      %v5166 = vrot.slane %v5106, 1
      %v5167 = vrot.slane %v5107, 1
      %v5168 = vsel %vm1393, %v5166, %v5167
      %v5169 = vrot.slane %v5108, 1
      %v5170 = vsel %vm1393, %v5167, %v5169
      %v5171 = vrot.slane %v5109, 1
      %v5172 = vrot.slane %v5110, 1
      %v5173 = vsel %vm1393, %v5171, %v5172
      %v5174 = vrot.slane %v5111, 1
      %v5175 = vsel %vm1393, %v5172, %v5174
      %v5192 = vadd.f32 %v5068, %v5138
      %v5193 = vadd.f32 %v5069, %v5140
      %v5194 = vadd.f32 %v5070, %v5143
      %v5195 = vadd.f32 %v5071, %v5145
      %v5196 = vadd.f32 %v5072, %v5148
      %v5197 = vadd.f32 %v5073, %v5150
      %v5198 = vadd.f32 %v5074, %v5153
      %v5199 = vadd.f32 %v5075, %v5155
      %v5200 = vadd.f32 %v5076, %v5158
      %v5201 = vadd.f32 %v5077, %v5160
      %v5202 = vadd.f32 %v5078, %v5163
      %v5203 = vadd.f32 %v5079, %v5165
      %v5204 = vadd.f32 %v5080, %v5168
      %v5205 = vadd.f32 %v5081, %v5170
      %v5206 = vadd.f32 %v5082, %v5173
      %v5207 = vadd.f32 %v5083, %v5175
      %v5208 = vlaneseq
      %v5209 = vshrl.u32 %v5208, 7
      %v5210 = vsub.s32 0, %v5209
      %v5211 = vrot.slane %v4407, %v5210
      %v5212 = vmul.f32 %v5024, %v5211
      %v5213 = vmul.f32 %v5025, %v5211
      %v5214 = vmul.f32 %v5026, %v5211
      %v5215 = vmul.f32 %v5027, %v5211
      %v5216 = vmul.f32 %v5028, %v5211
      %v5217 = vmul.f32 %v5029, %v5211
      %v5218 = vmul.f32 %v5030, %v5211
      %v5219 = vmul.f32 %v5031, %v5211
      %v5220 = vmul.f32 %v5032, %v5211
      %v5221 = vmul.f32 %v5033, %v5211
      %v5222 = vmul.f32 %v5034, %v5211
      %v5223 = vmul.f32 %v5035, %v5211
      %v5224 = vmul.f32 %v5036, %v5211
      %v5225 = vmul.f32 %v5037, %v5211
      %v5226 = vmul.f32 %v5038, %v5211
      %v5227 = vmul.f32 %v5039, %v5211
      %v5228 = vmul.f32 %v5040, %v5211
      %v5229 = vmul.f32 %v5041, %v5211
      %v5230 = vmul.f32 %v5042, %v5211
      %v5231 = vmul.f32 %v5043, %v5211
      %v5232 = vmul.f32 %v5044, %v5211
      %v5233 = vmul.f32 %v5045, %v5211
      %v5234 = vmul.f32 %v5046, %v5211
      %v5235 = vmul.f32 %v5047, %v5211
      %v5260 = vrot.slane %v5212, 2
      %v5261 = vrot.slane %v5213, 2
      %v5262 = vsel %vm1518, %v5260, %v5261
      %v5263 = vrot.slane %v5214, 2
      %v5264 = vsel %vm1518, %v5261, %v5263
      %v5265 = vrot.slane %v5215, 2
      %v5266 = vrot.slane %v5216, 2
      %v5267 = vsel %vm1518, %v5265, %v5266
      %v5268 = vrot.slane %v5217, 2
      %v5269 = vsel %vm1518, %v5266, %v5268
      %v5270 = vrot.slane %v5218, 2
      %v5271 = vrot.slane %v5219, 2
      %v5272 = vsel %vm1518, %v5270, %v5271
      %v5273 = vrot.slane %v5220, 2
      %v5274 = vsel %vm1518, %v5271, %v5273
      %v5275 = vrot.slane %v5221, 2
      %v5276 = vrot.slane %v5222, 2
      %v5277 = vsel %vm1518, %v5275, %v5276
      %v5278 = vrot.slane %v5223, 2
      %v5279 = vsel %vm1518, %v5276, %v5278
      %v5280 = vrot.slane %v5224, 2
      %v5281 = vrot.slane %v5225, 2
      %v5282 = vsel %vm1518, %v5280, %v5281
      %v5283 = vrot.slane %v5226, 2
      %v5284 = vsel %vm1518, %v5281, %v5283
      %v5285 = vrot.slane %v5227, 2
      %v5286 = vrot.slane %v5228, 2
      %v5287 = vsel %vm1518, %v5285, %v5286
      %v5288 = vrot.slane %v5229, 2
      %v5289 = vsel %vm1518, %v5286, %v5288
      %v5290 = vrot.slane %v5230, 2
      %v5291 = vrot.slane %v5231, 2
      %v5292 = vsel %vm1518, %v5290, %v5291
      %v5293 = vrot.slane %v5232, 2
      %v5294 = vsel %vm1518, %v5291, %v5293
      %v5295 = vrot.slane %v5233, 2
      %v5296 = vrot.slane %v5234, 2
      %v5297 = vsel %vm1518, %v5295, %v5296
      %v5298 = vrot.slane %v5235, 2
      %v5299 = vsel %vm1518, %v5296, %v5298
      %v5316 = vadd.f32 %v5192, %v5262
      %v5317 = vadd.f32 %v5193, %v5264
      %v5318 = vadd.f32 %v5194, %v5267
      %v5319 = vadd.f32 %v5195, %v5269
      %v5320 = vadd.f32 %v5196, %v5272
      %v5321 = vadd.f32 %v5197, %v5274
      %v5322 = vadd.f32 %v5198, %v5277
      %v5323 = vadd.f32 %v5199, %v5279
      %v5324 = vadd.f32 %v5200, %v5282
      %v5325 = vadd.f32 %v5201, %v5284
      %v5326 = vadd.f32 %v5202, %v5287
      %v5327 = vadd.f32 %v5203, %v5289
      %v5328 = vadd.f32 %v5204, %v5292
      %v5329 = vadd.f32 %v5205, %v5294
      %v5330 = vadd.f32 %v5206, %v5297
      %v5331 = vadd.f32 %v5207, %v5299
      %v5332 = vmax.f32 %v5316, 0.0
      %v5333 = vmax.f32 %v5317, 0.0
      %v5334 = vmax.f32 %v5318, 0.0
      %v5335 = vmax.f32 %v5319, 0.0
      %v5336 = vmax.f32 %v5320, 0.0
      %v5337 = vmax.f32 %v5321, 0.0
      %v5338 = vmax.f32 %v5322, 0.0
      %v5339 = vmax.f32 %v5323, 0.0
      %v5340 = vmax.f32 %v5324, 0.0
      %v5341 = vmax.f32 %v5325, 0.0
      %v5342 = vmax.f32 %v5326, 0.0
      %v5343 = vmax.f32 %v5327, 0.0
      %v5344 = vmax.f32 %v5328, 0.0
      %v5345 = vmax.f32 %v5329, 0.0
      %v5346 = vmax.f32 %v5330, 0.0
      %v5347 = vmax.f32 %v5331, 0.0
      %v5348 = vmin.f32 %v5332, 6.0
      %v5349 = vmin.f32 %v5333, 6.0
      %v5350 = vmin.f32 %v5334, 6.0
      %v5351 = vmin.f32 %v5335, 6.0
      %v5352 = vmin.f32 %v5336, 6.0
      %v5353 = vmin.f32 %v5337, 6.0
      %v5354 = vmin.f32 %v5338, 6.0
      %v5355 = vmin.f32 %v5339, 6.0
      %v5356 = vmin.f32 %v5340, 6.0
      %v5357 = vmin.f32 %v5341, 6.0
      %v5358 = vmin.f32 %v5342, 6.0
      %v5359 = vmin.f32 %v5343, 6.0
      %v5360 = vmin.f32 %v5344, 6.0
      %v5361 = vmin.f32 %v5345, 6.0
      %v5362 = vmin.f32 %v5346, 6.0
      %v5363 = vmin.f32 %v5347, 6.0
      %5364 = vmatprep.subr.mxu0 0.0
      %5365 = vmatpush1.msra.mxu0 %v4408
      %5366 = vmatprep.subr.mxu0 0.0
      %5367 = vmatpush1.msra.mxu0 %v4409
      %5368 = vmatprep.subr.mxu0 0.0
      %5369 = vmatpush1.msra.mxu0 %v4410
      %5370 = vmatprep.subr.mxu0 0.0
      %5371 = vmatpush1.msra.mxu0 %v4411
      %5372 = vmatprep.subr.mxu0 0.0
      %5373 = vmatpush1.msra.mxu0 %v4412
      %5374 = vmatprep.subr.mxu0 0.0
      %5375 = vmatpush1.msra.mxu0 %v4413
      %5376 = vmatprep.subr.mxu0 0.0
      %5377 = vmatpush1.msra.mxu0 %v4414
      %5378 = vmatprep.subr.mxu0 0.0
      %5379 = vmatpush1.msra.mxu0 %v4415
      %5380 = vmatprep.subr.mxu0 0.0
      %5381 = vmatpush1.msra.mxu0 %v4416
      %5382 = vmatprep.subr.mxu0 0.0
      %5383 = vmatpush1.msra.mxu0 %v4417
      %5384 = vmatprep.subr.mxu0 0.0
      %5385 = vmatpush1.msra.mxu0 %v4418
      %5386 = vmatprep.subr.mxu0 0.0
      %5387 = vmatpush1.msra.mxu0 %v4419
      %5388 = vmatprep.subr.mxu0 0.0
      %5389 = vmatpush1.msra.mxu0 %v4420
      %5390 = vmatprep.subr.mxu0 0.0
      %5391 = vmatpush1.msra.mxu0 %v4421
      %5392 = vmatprep.subr.mxu0 0.0
      %5393 = vmatpush1.msra.mxu0 %v4422
      %5394 = vmatprep.subr.mxu0 0.0
      %5395 = vmatpush1.msra.mxu0 %v4423
      %5396 = vmatprep.subr.mxu0 0.0
      %5397 = vmatpush1.msra.mxu0 0.0
      %5398 = vmatprep.subr.mxu0 0.0
      %5399 = vmatpush1.msra.mxu0 0.0
      %5400 = vmatprep.subr.mxu0 0.0
      %5401 = vmatpush1.msra.mxu0 0.0
      %5402 = vmatprep.subr.mxu0 0.0
      %5403 = vmatpush1.msra.mxu0 0.0
      %5404 = vmatprep.subr.mxu0 0.0
      %5405 = vmatpush1.msra.mxu0 0.0
      %5406 = vmatprep.subr.mxu0 0.0
      %5407 = vmatpush1.msra.mxu0 0.0
      %5408 = vmatprep.subr.mxu0 0.0
      %5409 = vmatpush1.msra.mxu0 0.0
      %5410 = vmatprep.subr.mxu0 0.0
      %5411 = vmatpush1.msra.mxu0 0.0
      %5412 = vmatprep.subr.mxu0 0.0
      %5413 = vmatpush1.msra.mxu0 0.0
      %5414 = vmatprep.subr.mxu0 0.0
      %5415 = vmatpush1.msra.mxu0 0.0
      %5416 = vmatprep.subr.mxu0 0.0
      %5417 = vmatpush1.msra.mxu0 0.0
      %5418 = vmatprep.subr.mxu0 0.0
      %5419 = vmatpush1.msra.mxu0 0.0
      %5420 = vmatprep.subr.mxu0 0.0
      %5421 = vmatpush1.msra.mxu0 0.0
      %5422 = vmatprep.subr.mxu0 0.0
      %5423 = vmatpush1.msra.mxu0 0.0
      %5424 = vmatprep.subr.mxu0 0.0
      %5425 = vmatpush1.msra.mxu0 0.0
      %5426 = vmatprep.subr.mxu0 0.0
      %5427 = vmatpush1.msra.mxu0 0.0
      %5428 = vmatprep.mubr.f32.mxu0 0.0
      %5429 = vmatmul.mubr.f32.gmra.mrb[0].mxu0 %v5348
      %v5430 = vpop.f32.mrb[0].mxu0
      %v5431 = vadd.f32 0.0, %v5430
      %v5432 = vpop.f32.mrb[0].mxu0
      %5433 = vmatprep.mubr.f32.mxu0 0.0
      %5434 = vmatmul.mubr.f32.gmra.mrb[0].mxu0 %v5349
      %v5435 = vpop.f32.mrb[0].mxu0
      %v5436 = vadd.f32 0.0, %v5435
      %v5437 = vpop.f32.mrb[0].mxu0
      %5438 = vmatprep.mubr.f32.mxu0 0.0
      %5439 = vmatmul.mubr.f32.gmra.mrb[0].mxu0 %v5350
      %v5440 = vpop.f32.mrb[0].mxu0
      %v5441 = vadd.f32 0.0, %v5440
      %v5442 = vpop.f32.mrb[0].mxu0
      %5443 = vmatprep.mubr.f32.mxu0 0.0
      %5444 = vmatmul.mubr.f32.gmra.mrb[0].mxu0 %v5351
      %v5445 = vpop.f32.mrb[0].mxu0
      %v5446 = vadd.f32 0.0, %v5445
      %v5447 = vpop.f32.mrb[0].mxu0
      %5448 = vmatprep.mubr.f32.mxu0 0.0
      %5449 = vmatmul.mubr.f32.gmra.mrb[0].mxu0 %v5352
      %v5450 = vpop.f32.mrb[0].mxu0
      %v5451 = vadd.f32 0.0, %v5450
      %v5452 = vpop.f32.mrb[0].mxu0
      %5453 = vmatprep.mubr.f32.mxu0 0.0
      %5454 = vmatmul.mubr.f32.gmra.mrb[0].mxu0 %v5353
      %v5455 = vpop.f32.mrb[0].mxu0
      %v5456 = vadd.f32 0.0, %v5455
      %v5457 = vpop.f32.mrb[0].mxu0
      %5458 = vmatprep.mubr.f32.mxu0 0.0
      %5459 = vmatmul.mubr.f32.gmra.mrb[0].mxu0 %v5354
      %v5460 = vpop.f32.mrb[0].mxu0
      %v5461 = vadd.f32 0.0, %v5460
      %v5462 = vpop.f32.mrb[0].mxu0
      %5463 = vmatprep.mubr.f32.mxu0 0.0
      %5464 = vmatmul.mubr.f32.gmra.mrb[0].mxu0 %v5355
      %v5465 = vpop.f32.mrb[0].mxu0
      %v5466 = vadd.f32 0.0, %v5465
      %v5467 = vpop.f32.mrb[0].mxu0
      %5468 = vmatprep.mubr.f32.mxu0 0.0
      %5469 = vmatmul.mubr.f32.gmra.mrb[0].mxu0 %v5356
      %v5470 = vpop.f32.mrb[0].mxu0
      %v5471 = vadd.f32 0.0, %v5470
      %v5472 = vpop.f32.mrb[0].mxu0
      %5473 = vmatprep.mubr.f32.mxu0 0.0
      %5474 = vmatmul.mubr.f32.gmra.mrb[0].mxu0 %v5357
      %v5475 = vpop.f32.mrb[0].mxu0
      %v5476 = vadd.f32 0.0, %v5475
      %v5477 = vpop.f32.mrb[0].mxu0
      %5478 = vmatprep.mubr.f32.mxu0 0.0
      %5479 = vmatmul.mubr.f32.gmra.mrb[0].mxu0 %v5358
      %v5480 = vpop.f32.mrb[0].mxu0
      %v5481 = vadd.f32 0.0, %v5480
      %v5482 = vpop.f32.mrb[0].mxu0
      %5483 = vmatprep.mubr.f32.mxu0 0.0
      %5484 = vmatmul.mubr.f32.gmra.mrb[0].mxu0 %v5359
      %v5485 = vpop.f32.mrb[0].mxu0
      %v5486 = vadd.f32 0.0, %v5485
      %v5487 = vpop.f32.mrb[0].mxu0
      %5488 = vmatprep.mubr.f32.mxu0 0.0
      %5489 = vmatmul.mubr.f32.gmra.mrb[0].mxu0 %v5360
      %v5490 = vpop.f32.mrb[0].mxu0
      %v5491 = vadd.f32 0.0, %v5490
      %v5492 = vpop.f32.mrb[0].mxu0
      %5493 = vmatprep.mubr.f32.mxu0 0.0
      %5494 = vmatmul.mubr.f32.gmra.mrb[0].mxu0 %v5361
      %v5495 = vpop.f32.mrb[0].mxu0
      %v5496 = vadd.f32 0.0, %v5495
      %v5497 = vpop.f32.mrb[0].mxu0
      %5498 = vmatprep.mubr.f32.mxu0 0.0
      %5499 = vmatmul.mubr.f32.gmra.mrb[0].mxu0 %v5362
      %v5500 = vpop.f32.mrb[0].mxu0
      %v5501 = vadd.f32 0.0, %v5500
      %v5502 = vpop.f32.mrb[0].mxu0
      %5503 = vmatprep.mubr.f32.mxu0 0.0
      %5504 = vmatmul.mubr.f32.gmra.mrb[0].mxu0 %v5363
      %v5505 = vpop.f32.mrb[0].mxu0
      %v5506 = vadd.f32 0.0, %v5505
      %v5507 = vpop.f32.mrb[0].mxu0
      %5508 = vdwg.mxu0
      %v5509 = vld [vmem:[%s305] sm:$0xff]
      %v5510 = vld [vmem:[%s305 + $0x8] sm:$0xff]
      %v5511 = vld [vmem:[%s305 + $0x10] sm:$0xff]
      %v5512 = vld [vmem:[%s305 + $0x18] sm:$0xff]
      %v5513 = vld [vmem:[%s305 + $0x20] sm:$0xff]
      %v5514 = vld [vmem:[%s305 + $0x28] sm:$0xff]
      %v5515 = vld [vmem:[%s305 + $0x30] sm:$0xff]
      %v5516 = vld [vmem:[%s305 + $0x38] sm:$0xff]
      %v5517 = vld [vmem:[%s305 + $0x40] sm:$0xff]
      %v5518 = vld [vmem:[%s305 + $0x48] sm:$0xff]
      %v5519 = vld [vmem:[%s305 + $0x50] sm:$0xff]
      %v5520 = vld [vmem:[%s305 + $0x58] sm:$0xff]
      %v5521 = vld [vmem:[%s305 + $0x60] sm:$0xff]
      %v5522 = vld [vmem:[%s305 + $0x68] sm:$0xff]
      %v5523 = vld [vmem:[%s305 + $0x70] sm:$0xff]
      %v5524 = vld [vmem:[%s305 + $0x78] sm:$0xff]
      %v5525 = vmul.f32 %v5431, 1.442695
      %v5526 = vpow.pop %v5525
      %v5527 = vmul.f32 %v5436, 1.442695
      %v5528 = vpow.pop %v5527
      %v5529 = vmul.f32 %v5441, 1.442695
      %v5530 = vpow.pop %v5529
      %v5531 = vmul.f32 %v5446, 1.442695
      %v5532 = vpow.pop %v5531
      %v5533 = vmul.f32 %v5451, 1.442695
      %v5534 = vpow.pop %v5533
      %v5535 = vmul.f32 %v5456, 1.442695
      %v5536 = vpow.pop %v5535
      %v5537 = vmul.f32 %v5461, 1.442695
      %v5538 = vpow.pop %v5537
      %v5539 = vmul.f32 %v5466, 1.442695
      %v5540 = vpow.pop %v5539
      %v5541 = vmul.f32 %v5471, 1.442695
      %v5542 = vpow.pop %v5541
      %v5543 = vmul.f32 %v5476, 1.442695
      %v5544 = vpow.pop %v5543
      %v5545 = vmul.f32 %v5481, 1.442695
      %v5546 = vpow.pop %v5545
      %v5547 = vmul.f32 %v5486, 1.442695
      %v5548 = vpow.pop %v5547
      %v5549 = vmul.f32 %v5491, 1.442695
      %v5550 = vpow.pop %v5549
      %v5551 = vmul.f32 %v5496, 1.442695
      %v5552 = vpow.pop %v5551
      %v5553 = vmul.f32 %v5501, 1.442695
      %v5554 = vpow.pop %v5553
      %v5555 = vmul.f32 %v5506, 1.442695
      %v5556 = vpow.pop %v5555
      %v5557 = vmul.f32 %v5509, %v5526
      %v5558 = vmul.f32 %v5510, %v5528
      %v5559 = vmul.f32 %v5511, %v5530
      %v5560 = vmul.f32 %v5512, %v5532
      %v5561 = vmul.f32 %v5513, %v5534
      %v5562 = vmul.f32 %v5514, %v5536
      %v5563 = vmul.f32 %v5515, %v5538
      %v5564 = vmul.f32 %v5516, %v5540
      %v5565 = vmul.f32 %v5517, %v5542
      %v5566 = vmul.f32 %v5518, %v5544
      %v5567 = vmul.f32 %v5519, %v5546
      %v5568 = vmul.f32 %v5520, %v5548
      %v5569 = vmul.f32 %v5521, %v5550
      %v5570 = vmul.f32 %v5522, %v5552
      %v5571 = vmul.f32 %v5523, %v5554
      %v5572 = vmul.f32 %v5524, %v5556
      %5589 = vrot.lane.b32.xlu0 %v5431, 96
      %v5590 = vpop.permute.xlu0 %5589
      %5591 = vrot.lane.b32.xlu0 %v5436, 96
      %v5592 = vpop.permute.xlu0 %5591
      %5593 = vrot.lane.b32.xlu0 %v5441, 96
      %v5594 = vpop.permute.xlu0 %5593
      %5595 = vrot.lane.b32.xlu0 %v5446, 96
      %v5596 = vpop.permute.xlu0 %5595
      %5597 = vrot.lane.b32.xlu0 %v5451, 96
      %v5598 = vpop.permute.xlu0 %5597
      %5599 = vrot.lane.b32.xlu0 %v5456, 96
      %v5600 = vpop.permute.xlu0 %5599
      %5601 = vrot.lane.b32.xlu0 %v5461, 96
      %v5602 = vpop.permute.xlu0 %5601
      %5603 = vrot.lane.b32.xlu0 %v5466, 96
      %v5604 = vpop.permute.xlu0 %5603
      %5605 = vrot.lane.b32.xlu0 %v5471, 96
      %v5606 = vpop.permute.xlu0 %5605
      %5607 = vrot.lane.b32.xlu0 %v5476, 96
      %v5608 = vpop.permute.xlu0 %5607
      %5609 = vrot.lane.b32.xlu0 %v5481, 96
      %v5610 = vpop.permute.xlu0 %5609
      %5611 = vrot.lane.b32.xlu0 %v5486, 96
      %v5612 = vpop.permute.xlu0 %5611
      %5613 = vrot.lane.b32.xlu0 %v5491, 96
      %v5614 = vpop.permute.xlu0 %5613
      %5615 = vrot.lane.b32.xlu0 %v5496, 96
      %v5616 = vpop.permute.xlu0 %5615
      %5617 = vrot.lane.b32.xlu0 %v5501, 96
      %v5618 = vpop.permute.xlu0 %5617
      %5619 = vrot.lane.b32.xlu0 %v5506, 96
      %v5620 = vpop.permute.xlu0 %5619
      %v5637 = vadd.f32 %v5557, %v5590
      %v5638 = vadd.f32 %v5558, %v5592
      %v5639 = vadd.f32 %v5559, %v5594
      %v5640 = vadd.f32 %v5560, %v5596
      %v5641 = vadd.f32 %v5561, %v5598
      %v5642 = vadd.f32 %v5562, %v5600
      %v5643 = vadd.f32 %v5563, %v5602
      %v5644 = vadd.f32 %v5564, %v5604
      %v5645 = vadd.f32 %v5565, %v5606
      %v5646 = vadd.f32 %v5566, %v5608
      %v5647 = vadd.f32 %v5567, %v5610
      %v5648 = vadd.f32 %v5568, %v5612
      %v5649 = vadd.f32 %v5569, %v5614
      %v5650 = vadd.f32 %v5570, %v5616
      %v5651 = vadd.f32 %v5571, %v5618
      %v5652 = vadd.f32 %v5572, %v5620
      %vm5653 = vcmask 261120
      %5654 = vst.msk [vmem:[%s305] sm:$0xff] %vm5653, %v5637
      %5655 = vst.msk [vmem:[%s305 + $0x8] sm:$0xff] %vm5653, %v5638
      %5656 = vst.msk [vmem:[%s305 + $0x10] sm:$0xff] %vm5653, %v5639
      %5657 = vst.msk [vmem:[%s305 + $0x18] sm:$0xff] %vm5653, %v5640
      %5658 = vst.msk [vmem:[%s305 + $0x20] sm:$0xff] %vm5653, %v5641
      %5659 = vst.msk [vmem:[%s305 + $0x28] sm:$0xff] %vm5653, %v5642
      %5660 = vst.msk [vmem:[%s305 + $0x30] sm:$0xff] %vm5653, %v5643
      %5661 = vst.msk [vmem:[%s305 + $0x38] sm:$0xff] %vm5653, %v5644
      %5662 = vst.msk [vmem:[%s305 + $0x40] sm:$0xff] %vm5653, %v5645
      %5663 = vst.msk [vmem:[%s305 + $0x48] sm:$0xff] %vm5653, %v5646
      %5664 = vst.msk [vmem:[%s305 + $0x50] sm:$0xff] %vm5653, %v5647
      %5665 = vst.msk [vmem:[%s305 + $0x58] sm:$0xff] %vm5653, %v5648
      %5666 = vst.msk [vmem:[%s305 + $0x60] sm:$0xff] %vm5653, %v5649
      %5667 = vst.msk [vmem:[%s305 + $0x68] sm:$0xff] %vm5653, %v5650
      %5668 = vst.msk [vmem:[%s305 + $0x70] sm:$0xff] %vm5653, %v5651
      %5669 = vst.msk [vmem:[%s305 + $0x78] sm:$0xff] %vm5653, %v5652
      %s5670 = scalar_lea.vmem [#allocation3], 192
      %v5671 = vld [vmem:[%s5670] sm:$0xff]
      %v5672 = vld [vmem:[%s5670 + $0x8] sm:$0xff]
      %v5673 = vld [vmem:[%s5670 + $0x10] sm:$0x3]
      %v5674 = vld [vmem:[%s5670 + $0x18] sm:$0xff]
      %v5675 = vld [vmem:[%s5670 + $0x20] sm:$0xff]
      %v5676 = vld [vmem:[%s5670 + $0x28] sm:$0x3]
      %v5677 = vld [vmem:[%s5670 + $0x30] sm:$0xff]
      %v5678 = vld [vmem:[%s5670 + $0x38] sm:$0xff]
      %v5679 = vld [vmem:[%s5670 + $0x40] sm:$0x3]
      %v5680 = vld [vmem:[%s5670 + $0x48] sm:$0xff]
      %v5681 = vld [vmem:[%s5670 + $0x50] sm:$0xff]
      %v5682 = vld [vmem:[%s5670 + $0x58] sm:$0x3]
      %v5683 = vld [vmem:[%s5670 + $0x60] sm:$0xff]
      %v5684 = vld [vmem:[%s5670 + $0x68] sm:$0xff]
      %v5685 = vld [vmem:[%s5670 + $0x70] sm:$0x3]
      %v5686 = vld [vmem:[%s5670 + $0x78] sm:$0xff]
      %v5687 = vld [vmem:[%s5670 + $0x80] sm:$0xff]
      %v5688 = vld [vmem:[%s5670 + $0x88] sm:$0x3]
      %v5689 = vld [vmem:[%s5670 + $0x90] sm:$0xff]
      %v5690 = vld [vmem:[%s5670 + $0x98] sm:$0xff]
      %v5691 = vld [vmem:[%s5670 + $0xa0] sm:$0x3]
      %v5692 = vld [vmem:[%s5670 + $0xa8] sm:$0xff]
      %v5693 = vld [vmem:[%s5670 + $0xb0] sm:$0xff]
      %v5694 = vld [vmem:[%s5670 + $0xb8] sm:$0x3]
      %v5695 = vmul.f32 %v5671, %v4451
      %v5696 = vmul.f32 %v5672, %v4451
      %v5697 = vmul.f32 %v5674, %v4451
      %v5698 = vmul.f32 %v5675, %v4451
      %v5699 = vmul.f32 %v5677, %v4451
      %v5700 = vmul.f32 %v5678, %v4451
      %v5701 = vmul.f32 %v5680, %v4451
      %v5702 = vmul.f32 %v5681, %v4451
      %v5703 = vmul.f32 %v5683, %v4451
      %v5704 = vmul.f32 %v5684, %v4451
      %v5705 = vmul.f32 %v5686, %v4451
      %v5706 = vmul.f32 %v5687, %v4451
      %v5707 = vmul.f32 %v5689, %v4451
      %v5708 = vmul.f32 %v5690, %v4451
      %v5709 = vmul.f32 %v5692, %v4451
      %v5710 = vmul.f32 %v5693, %v4451
      %v5711 = vmul.f32 %v5671, %v4471
      %v5712 = vmul.f32 %v5672, %v4471
      %v5713 = vmul.f32 %v5673, %v4471
      %v5714 = vmul.f32 %v5674, %v4471
      %v5715 = vmul.f32 %v5675, %v4471
      %v5716 = vmul.f32 %v5676, %v4471
      %v5717 = vmul.f32 %v5677, %v4471
      %v5718 = vmul.f32 %v5678, %v4471
      %v5719 = vmul.f32 %v5679, %v4471
      %v5720 = vmul.f32 %v5680, %v4471
      %v5721 = vmul.f32 %v5681, %v4471
      %v5722 = vmul.f32 %v5682, %v4471
      %v5723 = vmul.f32 %v5683, %v4471
      %v5724 = vmul.f32 %v5684, %v4471
      %v5725 = vmul.f32 %v5685, %v4471
      %v5726 = vmul.f32 %v5686, %v4471
      %v5727 = vmul.f32 %v5687, %v4471
      %v5728 = vmul.f32 %v5688, %v4471
      %v5729 = vmul.f32 %v5689, %v4471
      %v5730 = vmul.f32 %v5690, %v4471
      %v5731 = vmul.f32 %v5691, %v4471
      %v5732 = vmul.f32 %v5692, %v4471
      %v5733 = vmul.f32 %v5693, %v4471
      %v5734 = vmul.f32 %v5694, %v4471
      %v5759 = vrot.slane %v5711, 1
      %v5760 = vrot.slane %v5712, 1
      %v5761 = vsel %vm1393, %v5759, %v5760
      %v5762 = vrot.slane %v5713, 1
      %v5763 = vsel %vm1393, %v5760, %v5762
      %v5764 = vrot.slane %v5714, 1
      %v5765 = vrot.slane %v5715, 1
      %v5766 = vsel %vm1393, %v5764, %v5765
      %v5767 = vrot.slane %v5716, 1
      %v5768 = vsel %vm1393, %v5765, %v5767
      %v5769 = vrot.slane %v5717, 1
      %v5770 = vrot.slane %v5718, 1
      %v5771 = vsel %vm1393, %v5769, %v5770
      %v5772 = vrot.slane %v5719, 1
      %v5773 = vsel %vm1393, %v5770, %v5772
      %v5774 = vrot.slane %v5720, 1
      %v5775 = vrot.slane %v5721, 1
      %v5776 = vsel %vm1393, %v5774, %v5775
      %v5777 = vrot.slane %v5722, 1
      %v5778 = vsel %vm1393, %v5775, %v5777
      %v5779 = vrot.slane %v5723, 1
      %v5780 = vrot.slane %v5724, 1
      %v5781 = vsel %vm1393, %v5779, %v5780
      %v5782 = vrot.slane %v5725, 1
      %v5783 = vsel %vm1393, %v5780, %v5782
      %v5784 = vrot.slane %v5726, 1
      %v5785 = vrot.slane %v5727, 1
      %v5786 = vsel %vm1393, %v5784, %v5785
      %v5787 = vrot.slane %v5728, 1
      %v5788 = vsel %vm1393, %v5785, %v5787
      %v5789 = vrot.slane %v5729, 1
      %v5790 = vrot.slane %v5730, 1
      %v5791 = vsel %vm1393, %v5789, %v5790
      %v5792 = vrot.slane %v5731, 1
      %v5793 = vsel %vm1393, %v5790, %v5792
      %v5794 = vrot.slane %v5732, 1
      %v5795 = vrot.slane %v5733, 1
      %v5796 = vsel %vm1393, %v5794, %v5795
      %v5797 = vrot.slane %v5734, 1
      %v5798 = vsel %vm1393, %v5795, %v5797
      %v5815 = vadd.f32 %v5695, %v5761
      %v5816 = vadd.f32 %v5696, %v5763
      %v5817 = vadd.f32 %v5697, %v5766
      %v5818 = vadd.f32 %v5698, %v5768
      %v5819 = vadd.f32 %v5699, %v5771
      %v5820 = vadd.f32 %v5700, %v5773
      %v5821 = vadd.f32 %v5701, %v5776
      %v5822 = vadd.f32 %v5702, %v5778
      %v5823 = vadd.f32 %v5703, %v5781
      %v5824 = vadd.f32 %v5704, %v5783
      %v5825 = vadd.f32 %v5705, %v5786
      %v5826 = vadd.f32 %v5706, %v5788
      %v5827 = vadd.f32 %v5707, %v5791
      %v5828 = vadd.f32 %v5708, %v5793
      %v5829 = vadd.f32 %v5709, %v5796
      %v5830 = vadd.f32 %v5710, %v5798
      %v5831 = vmul.f32 %v5671, %v4595
      %v5832 = vmul.f32 %v5672, %v4595
      %v5833 = vmul.f32 %v5673, %v4595
      %v5834 = vmul.f32 %v5674, %v4595
      %v5835 = vmul.f32 %v5675, %v4595
      %v5836 = vmul.f32 %v5676, %v4595
      %v5837 = vmul.f32 %v5677, %v4595
      %v5838 = vmul.f32 %v5678, %v4595
      %v5839 = vmul.f32 %v5679, %v4595
      %v5840 = vmul.f32 %v5680, %v4595
      %v5841 = vmul.f32 %v5681, %v4595
      %v5842 = vmul.f32 %v5682, %v4595
      %v5843 = vmul.f32 %v5683, %v4595
      %v5844 = vmul.f32 %v5684, %v4595
      %v5845 = vmul.f32 %v5685, %v4595
      %v5846 = vmul.f32 %v5686, %v4595
      %v5847 = vmul.f32 %v5687, %v4595
      %v5848 = vmul.f32 %v5688, %v4595
      %v5849 = vmul.f32 %v5689, %v4595
      %v5850 = vmul.f32 %v5690, %v4595
      %v5851 = vmul.f32 %v5691, %v4595
      %v5852 = vmul.f32 %v5692, %v4595
      %v5853 = vmul.f32 %v5693, %v4595
      %v5854 = vmul.f32 %v5694, %v4595
      %v5879 = vrot.slane %v5831, 2
      %v5880 = vrot.slane %v5832, 2
      %v5881 = vsel %vm1518, %v5879, %v5880
      %v5882 = vrot.slane %v5833, 2
      %v5883 = vsel %vm1518, %v5880, %v5882
      %v5884 = vrot.slane %v5834, 2
      %v5885 = vrot.slane %v5835, 2
      %v5886 = vsel %vm1518, %v5884, %v5885
      %v5887 = vrot.slane %v5836, 2
      %v5888 = vsel %vm1518, %v5885, %v5887
      %v5889 = vrot.slane %v5837, 2
      %v5890 = vrot.slane %v5838, 2
      %v5891 = vsel %vm1518, %v5889, %v5890
      %v5892 = vrot.slane %v5839, 2
      %v5893 = vsel %vm1518, %v5890, %v5892
      %v5894 = vrot.slane %v5840, 2
      %v5895 = vrot.slane %v5841, 2
      %v5896 = vsel %vm1518, %v5894, %v5895
      %v5897 = vrot.slane %v5842, 2
      %v5898 = vsel %vm1518, %v5895, %v5897
      %v5899 = vrot.slane %v5843, 2
      %v5900 = vrot.slane %v5844, 2
      %v5901 = vsel %vm1518, %v5899, %v5900
      %v5902 = vrot.slane %v5845, 2
      %v5903 = vsel %vm1518, %v5900, %v5902
      %v5904 = vrot.slane %v5846, 2
      %v5905 = vrot.slane %v5847, 2
      %v5906 = vsel %vm1518, %v5904, %v5905
      %v5907 = vrot.slane %v5848, 2
      %v5908 = vsel %vm1518, %v5905, %v5907
      %v5909 = vrot.slane %v5849, 2
      %v5910 = vrot.slane %v5850, 2
      %v5911 = vsel %vm1518, %v5909, %v5910
      %v5912 = vrot.slane %v5851, 2
      %v5913 = vsel %vm1518, %v5910, %v5912
      %v5914 = vrot.slane %v5852, 2
      %v5915 = vrot.slane %v5853, 2
      %v5916 = vsel %vm1518, %v5914, %v5915
      %v5917 = vrot.slane %v5854, 2
      %v5918 = vsel %vm1518, %v5915, %v5917
      %v5935 = vadd.f32 %v5815, %v5881
      %v5936 = vadd.f32 %v5816, %v5883
      %v5937 = vadd.f32 %v5817, %v5886
      %v5938 = vadd.f32 %v5818, %v5888
      %v5939 = vadd.f32 %v5819, %v5891
      %v5940 = vadd.f32 %v5820, %v5893
      %v5941 = vadd.f32 %v5821, %v5896
      %v5942 = vadd.f32 %v5822, %v5898
      %v5943 = vadd.f32 %v5823, %v5901
      %v5944 = vadd.f32 %v5824, %v5903
      %v5945 = vadd.f32 %v5825, %v5906
      %v5946 = vadd.f32 %v5826, %v5908
      %v5947 = vadd.f32 %v5827, %v5911
      %v5948 = vadd.f32 %v5828, %v5913
      %v5949 = vadd.f32 %v5829, %v5916
      %v5950 = vadd.f32 %v5830, %v5918
      %v5951 = vld [vmem:[%s4366] sm:$0xff]
      %v5952 = vld [vmem:[%s4366 + $0x8] sm:$0xff]
      %v5953 = vld [vmem:[%s4366 + $0x10] sm:$0x3]
      %v5954 = vld [vmem:[%s4366 + $0x18] sm:$0xff]
      %v5955 = vld [vmem:[%s4366 + $0x20] sm:$0xff]
      %v5956 = vld [vmem:[%s4366 + $0x28] sm:$0x3]
      %v5957 = vld [vmem:[%s4366 + $0x30] sm:$0xff]
      %v5958 = vld [vmem:[%s4366 + $0x38] sm:$0xff]
      %v5959 = vld [vmem:[%s4366 + $0x40] sm:$0x3]
      %v5960 = vld [vmem:[%s4366 + $0x48] sm:$0xff]
      %v5961 = vld [vmem:[%s4366 + $0x50] sm:$0xff]
      %v5962 = vld [vmem:[%s4366 + $0x58] sm:$0x3]
      %v5963 = vld [vmem:[%s4366 + $0x60] sm:$0xff]
      %v5964 = vld [vmem:[%s4366 + $0x68] sm:$0xff]
      %v5965 = vld [vmem:[%s4366 + $0x70] sm:$0x3]
      %v5966 = vld [vmem:[%s4366 + $0x78] sm:$0xff]
      %v5967 = vld [vmem:[%s4366 + $0x80] sm:$0xff]
      %v5968 = vld [vmem:[%s4366 + $0x88] sm:$0x3]
      %v5969 = vld [vmem:[%s4366 + $0x90] sm:$0xff]
      %v5970 = vld [vmem:[%s4366 + $0x98] sm:$0xff]
      %v5971 = vld [vmem:[%s4366 + $0xa0] sm:$0x3]
      %v5972 = vld [vmem:[%s4366 + $0xa8] sm:$0xff]
      %v5973 = vld [vmem:[%s4366 + $0xb0] sm:$0xff]
      %v5974 = vld [vmem:[%s4366 + $0xb8] sm:$0x3]
      %v5975 = vmul.f32 %v5951, %v4743
      %v5976 = vmul.f32 %v5952, %v4743
      %v5977 = vmul.f32 %v5954, %v4743
      %v5978 = vmul.f32 %v5955, %v4743
      %v5979 = vmul.f32 %v5957, %v4743
      %v5980 = vmul.f32 %v5958, %v4743
      %v5981 = vmul.f32 %v5960, %v4743
      %v5982 = vmul.f32 %v5961, %v4743
      %v5983 = vmul.f32 %v5963, %v4743
      %v5984 = vmul.f32 %v5964, %v4743
      %v5985 = vmul.f32 %v5966, %v4743
      %v5986 = vmul.f32 %v5967, %v4743
      %v5987 = vmul.f32 %v5969, %v4743
      %v5988 = vmul.f32 %v5970, %v4743
      %v5989 = vmul.f32 %v5972, %v4743
      %v5990 = vmul.f32 %v5973, %v4743
      %v5991 = vadd.f32 %v5935, %v5975
      %v5992 = vadd.f32 %v5936, %v5976
      %v5993 = vadd.f32 %v5937, %v5977
      %v5994 = vadd.f32 %v5938, %v5978
      %v5995 = vadd.f32 %v5939, %v5979
      %v5996 = vadd.f32 %v5940, %v5980
      %v5997 = vadd.f32 %v5941, %v5981
      %v5998 = vadd.f32 %v5942, %v5982
      %v5999 = vadd.f32 %v5943, %v5983
      %v6000 = vadd.f32 %v5944, %v5984
      %v6001 = vadd.f32 %v5945, %v5985
      %v6002 = vadd.f32 %v5946, %v5986
      %v6003 = vadd.f32 %v5947, %v5987
      %v6004 = vadd.f32 %v5948, %v5988
      %v6005 = vadd.f32 %v5949, %v5989
      %v6006 = vadd.f32 %v5950, %v5990
      %v6007 = vmul.f32 %v5951, %v4779
      %v6008 = vmul.f32 %v5952, %v4779
      %v6009 = vmul.f32 %v5953, %v4779
      %v6010 = vmul.f32 %v5954, %v4779
      %v6011 = vmul.f32 %v5955, %v4779
      %v6012 = vmul.f32 %v5956, %v4779
      %v6013 = vmul.f32 %v5957, %v4779
      %v6014 = vmul.f32 %v5958, %v4779
      %v6015 = vmul.f32 %v5959, %v4779
      %v6016 = vmul.f32 %v5960, %v4779
      %v6017 = vmul.f32 %v5961, %v4779
      %v6018 = vmul.f32 %v5962, %v4779
      %v6019 = vmul.f32 %v5963, %v4779
      %v6020 = vmul.f32 %v5964, %v4779
      %v6021 = vmul.f32 %v5965, %v4779
      %v6022 = vmul.f32 %v5966, %v4779
      %v6023 = vmul.f32 %v5967, %v4779
      %v6024 = vmul.f32 %v5968, %v4779
      %v6025 = vmul.f32 %v5969, %v4779
      %v6026 = vmul.f32 %v5970, %v4779
      %v6027 = vmul.f32 %v5971, %v4779
      %v6028 = vmul.f32 %v5972, %v4779
      %v6029 = vmul.f32 %v5973, %v4779
      %v6030 = vmul.f32 %v5974, %v4779
      %v6055 = vrot.slane %v6007, 1
      %v6056 = vrot.slane %v6008, 1
      %v6057 = vsel %vm1393, %v6055, %v6056
      %v6058 = vrot.slane %v6009, 1
      %v6059 = vsel %vm1393, %v6056, %v6058
      %v6060 = vrot.slane %v6010, 1
      %v6061 = vrot.slane %v6011, 1
      %v6062 = vsel %vm1393, %v6060, %v6061
      %v6063 = vrot.slane %v6012, 1
      %v6064 = vsel %vm1393, %v6061, %v6063
      %v6065 = vrot.slane %v6013, 1
      %v6066 = vrot.slane %v6014, 1
      %v6067 = vsel %vm1393, %v6065, %v6066
      %v6068 = vrot.slane %v6015, 1
      %v6069 = vsel %vm1393, %v6066, %v6068
      %v6070 = vrot.slane %v6016, 1
      %v6071 = vrot.slane %v6017, 1
      %v6072 = vsel %vm1393, %v6070, %v6071
      %v6073 = vrot.slane %v6018, 1
      %v6074 = vsel %vm1393, %v6071, %v6073
      %v6075 = vrot.slane %v6019, 1
      %v6076 = vrot.slane %v6020, 1
      %v6077 = vsel %vm1393, %v6075, %v6076
      %v6078 = vrot.slane %v6021, 1
      %v6079 = vsel %vm1393, %v6076, %v6078
      %v6080 = vrot.slane %v6022, 1
      %v6081 = vrot.slane %v6023, 1
      %v6082 = vsel %vm1393, %v6080, %v6081
      %v6083 = vrot.slane %v6024, 1
      %v6084 = vsel %vm1393, %v6081, %v6083
      %v6085 = vrot.slane %v6025, 1
      %v6086 = vrot.slane %v6026, 1
      %v6087 = vsel %vm1393, %v6085, %v6086
      %v6088 = vrot.slane %v6027, 1
      %v6089 = vsel %vm1393, %v6086, %v6088
      %v6090 = vrot.slane %v6028, 1
      %v6091 = vrot.slane %v6029, 1
      %v6092 = vsel %vm1393, %v6090, %v6091
      %v6093 = vrot.slane %v6030, 1
      %v6094 = vsel %vm1393, %v6091, %v6093
      %v6111 = vadd.f32 %v5991, %v6057
      %v6112 = vadd.f32 %v5992, %v6059
      %v6113 = vadd.f32 %v5993, %v6062
      %v6114 = vadd.f32 %v5994, %v6064
      %v6115 = vadd.f32 %v5995, %v6067
      %v6116 = vadd.f32 %v5996, %v6069
      %v6117 = vadd.f32 %v5997, %v6072
      %v6118 = vadd.f32 %v5998, %v6074
      %v6119 = vadd.f32 %v5999, %v6077
      %v6120 = vadd.f32 %v6000, %v6079
      %v6121 = vadd.f32 %v6001, %v6082
      %v6122 = vadd.f32 %v6002, %v6084
      %v6123 = vadd.f32 %v6003, %v6087
      %v6124 = vadd.f32 %v6004, %v6089
      %v6125 = vadd.f32 %v6005, %v6092
      %v6126 = vadd.f32 %v6006, %v6094
      %v6127 = vmul.f32 %v5951, %v4903
      %v6128 = vmul.f32 %v5952, %v4903
      %v6129 = vmul.f32 %v5953, %v4903
      %v6130 = vmul.f32 %v5954, %v4903
      %v6131 = vmul.f32 %v5955, %v4903
      %v6132 = vmul.f32 %v5956, %v4903
      %v6133 = vmul.f32 %v5957, %v4903
      %v6134 = vmul.f32 %v5958, %v4903
      %v6135 = vmul.f32 %v5959, %v4903
      %v6136 = vmul.f32 %v5960, %v4903
      %v6137 = vmul.f32 %v5961, %v4903
      %v6138 = vmul.f32 %v5962, %v4903
      %v6139 = vmul.f32 %v5963, %v4903
      %v6140 = vmul.f32 %v5964, %v4903
      %v6141 = vmul.f32 %v5965, %v4903
      %v6142 = vmul.f32 %v5966, %v4903
      %v6143 = vmul.f32 %v5967, %v4903
      %v6144 = vmul.f32 %v5968, %v4903
      %v6145 = vmul.f32 %v5969, %v4903
      %v6146 = vmul.f32 %v5970, %v4903
      %v6147 = vmul.f32 %v5971, %v4903
      %v6148 = vmul.f32 %v5972, %v4903
      %v6149 = vmul.f32 %v5973, %v4903
      %v6150 = vmul.f32 %v5974, %v4903
      %v6175 = vrot.slane %v6127, 2
      %v6176 = vrot.slane %v6128, 2
      %v6177 = vsel %vm1518, %v6175, %v6176
      %v6178 = vrot.slane %v6129, 2
      %v6179 = vsel %vm1518, %v6176, %v6178
      %v6180 = vrot.slane %v6130, 2
      %v6181 = vrot.slane %v6131, 2
      %v6182 = vsel %vm1518, %v6180, %v6181
      %v6183 = vrot.slane %v6132, 2
      %v6184 = vsel %vm1518, %v6181, %v6183
      %v6185 = vrot.slane %v6133, 2
      %v6186 = vrot.slane %v6134, 2
      %v6187 = vsel %vm1518, %v6185, %v6186
      %v6188 = vrot.slane %v6135, 2
      %v6189 = vsel %vm1518, %v6186, %v6188
      %v6190 = vrot.slane %v6136, 2
      %v6191 = vrot.slane %v6137, 2
      %v6192 = vsel %vm1518, %v6190, %v6191
      %v6193 = vrot.slane %v6138, 2
      %v6194 = vsel %vm1518, %v6191, %v6193
      %v6195 = vrot.slane %v6139, 2
      %v6196 = vrot.slane %v6140, 2
      %v6197 = vsel %vm1518, %v6195, %v6196
      %v6198 = vrot.slane %v6141, 2
      %v6199 = vsel %vm1518, %v6196, %v6198
      %v6200 = vrot.slane %v6142, 2
      %v6201 = vrot.slane %v6143, 2
      %v6202 = vsel %vm1518, %v6200, %v6201
      %v6203 = vrot.slane %v6144, 2
      %v6204 = vsel %vm1518, %v6201, %v6203
      %v6205 = vrot.slane %v6145, 2
      %v6206 = vrot.slane %v6146, 2
      %v6207 = vsel %vm1518, %v6205, %v6206
      %v6208 = vrot.slane %v6147, 2
      %v6209 = vsel %vm1518, %v6206, %v6208
      %v6210 = vrot.slane %v6148, 2
      %v6211 = vrot.slane %v6149, 2
      %v6212 = vsel %vm1518, %v6210, %v6211
      %v6213 = vrot.slane %v6150, 2
      %v6214 = vsel %vm1518, %v6211, %v6213
      %v6231 = vadd.f32 %v6111, %v6177
      %v6232 = vadd.f32 %v6112, %v6179
      %v6233 = vadd.f32 %v6113, %v6182
      %v6234 = vadd.f32 %v6114, %v6184
      %v6235 = vadd.f32 %v6115, %v6187
      %v6236 = vadd.f32 %v6116, %v6189
      %v6237 = vadd.f32 %v6117, %v6192
      %v6238 = vadd.f32 %v6118, %v6194
      %v6239 = vadd.f32 %v6119, %v6197
      %v6240 = vadd.f32 %v6120, %v6199
      %v6241 = vadd.f32 %v6121, %v6202
      %v6242 = vadd.f32 %v6122, %v6204
      %v6243 = vadd.f32 %v6123, %v6207
      %v6244 = vadd.f32 %v6124, %v6209
      %v6245 = vadd.f32 %v6125, %v6212
      %v6246 = vadd.f32 %v6126, %v6214
      %s6247 = scalar_lea.vmem [#allocation3], 240
      %v6248 = vld [vmem:[%s6247] sm:$0xff]
      %v6249 = vld [vmem:[%s6247 + $0x8] sm:$0xff]
      %v6250 = vld [vmem:[%s6247 + $0x10] sm:$0x3]
      %v6251 = vld [vmem:[%s6247 + $0x18] sm:$0xff]
      %v6252 = vld [vmem:[%s6247 + $0x20] sm:$0xff]
      %v6253 = vld [vmem:[%s6247 + $0x28] sm:$0x3]
      %v6254 = vld [vmem:[%s6247 + $0x30] sm:$0xff]
      %v6255 = vld [vmem:[%s6247 + $0x38] sm:$0xff]
      %v6256 = vld [vmem:[%s6247 + $0x40] sm:$0x3]
      %v6257 = vld [vmem:[%s6247 + $0x48] sm:$0xff]
      %v6258 = vld [vmem:[%s6247 + $0x50] sm:$0xff]
      %v6259 = vld [vmem:[%s6247 + $0x58] sm:$0x3]
      %v6260 = vld [vmem:[%s6247 + $0x60] sm:$0xff]
      %v6261 = vld [vmem:[%s6247 + $0x68] sm:$0xff]
      %v6262 = vld [vmem:[%s6247 + $0x70] sm:$0x3]
      %v6263 = vld [vmem:[%s6247 + $0x78] sm:$0xff]
      %v6264 = vld [vmem:[%s6247 + $0x80] sm:$0xff]
      %v6265 = vld [vmem:[%s6247 + $0x88] sm:$0x3]
      %v6266 = vld [vmem:[%s6247 + $0x90] sm:$0xff]
      %v6267 = vld [vmem:[%s6247 + $0x98] sm:$0xff]
      %v6268 = vld [vmem:[%s6247 + $0xa0] sm:$0x3]
      %v6269 = vld [vmem:[%s6247 + $0xa8] sm:$0xff]
      %v6270 = vld [vmem:[%s6247 + $0xb0] sm:$0xff]
      %v6271 = vld [vmem:[%s6247 + $0xb8] sm:$0x3]
      %v6272 = vmul.f32 %v6248, %v5051
      %v6273 = vmul.f32 %v6249, %v5051
      %v6274 = vmul.f32 %v6251, %v5051
      %v6275 = vmul.f32 %v6252, %v5051
      %v6276 = vmul.f32 %v6254, %v5051
      %v6277 = vmul.f32 %v6255, %v5051
      %v6278 = vmul.f32 %v6257, %v5051
      %v6279 = vmul.f32 %v6258, %v5051
      %v6280 = vmul.f32 %v6260, %v5051
      %v6281 = vmul.f32 %v6261, %v5051
      %v6282 = vmul.f32 %v6263, %v5051
      %v6283 = vmul.f32 %v6264, %v5051
      %v6284 = vmul.f32 %v6266, %v5051
      %v6285 = vmul.f32 %v6267, %v5051
      %v6286 = vmul.f32 %v6269, %v5051
      %v6287 = vmul.f32 %v6270, %v5051
      %v6288 = vadd.f32 %v6231, %v6272
      %v6289 = vadd.f32 %v6232, %v6273
      %v6290 = vadd.f32 %v6233, %v6274
      %v6291 = vadd.f32 %v6234, %v6275
      %v6292 = vadd.f32 %v6235, %v6276
      %v6293 = vadd.f32 %v6236, %v6277
      %v6294 = vadd.f32 %v6237, %v6278
      %v6295 = vadd.f32 %v6238, %v6279
      %v6296 = vadd.f32 %v6239, %v6280
      %v6297 = vadd.f32 %v6240, %v6281
      %v6298 = vadd.f32 %v6241, %v6282
      %v6299 = vadd.f32 %v6242, %v6283
      %v6300 = vadd.f32 %v6243, %v6284
      %v6301 = vadd.f32 %v6244, %v6285
      %v6302 = vadd.f32 %v6245, %v6286
      %v6303 = vadd.f32 %v6246, %v6287
      %v6304 = vmul.f32 %v6248, %v5087
      %v6305 = vmul.f32 %v6249, %v5087
      %v6306 = vmul.f32 %v6250, %v5087
      %v6307 = vmul.f32 %v6251, %v5087
      %v6308 = vmul.f32 %v6252, %v5087
      %v6309 = vmul.f32 %v6253, %v5087
      %v6310 = vmul.f32 %v6254, %v5087
      %v6311 = vmul.f32 %v6255, %v5087
      %v6312 = vmul.f32 %v6256, %v5087
      %v6313 = vmul.f32 %v6257, %v5087
      %v6314 = vmul.f32 %v6258, %v5087
      %v6315 = vmul.f32 %v6259, %v5087
      %v6316 = vmul.f32 %v6260, %v5087
      %v6317 = vmul.f32 %v6261, %v5087
      %v6318 = vmul.f32 %v6262, %v5087
      %v6319 = vmul.f32 %v6263, %v5087
      %v6320 = vmul.f32 %v6264, %v5087
      %v6321 = vmul.f32 %v6265, %v5087
      %v6322 = vmul.f32 %v6266, %v5087
      %v6323 = vmul.f32 %v6267, %v5087
      %v6324 = vmul.f32 %v6268, %v5087
      %v6325 = vmul.f32 %v6269, %v5087
      %v6326 = vmul.f32 %v6270, %v5087
      %v6327 = vmul.f32 %v6271, %v5087
      %v6352 = vrot.slane %v6304, 1
      %v6353 = vrot.slane %v6305, 1
      %v6354 = vsel %vm1393, %v6352, %v6353
      %v6355 = vrot.slane %v6306, 1
      %v6356 = vsel %vm1393, %v6353, %v6355
      %v6357 = vrot.slane %v6307, 1
      %v6358 = vrot.slane %v6308, 1
      %v6359 = vsel %vm1393, %v6357, %v6358
      %v6360 = vrot.slane %v6309, 1
      %v6361 = vsel %vm1393, %v6358, %v6360
      %v6362 = vrot.slane %v6310, 1
      %v6363 = vrot.slane %v6311, 1
      %v6364 = vsel %vm1393, %v6362, %v6363
      %v6365 = vrot.slane %v6312, 1
      %v6366 = vsel %vm1393, %v6363, %v6365
      %v6367 = vrot.slane %v6313, 1
      %v6368 = vrot.slane %v6314, 1
      %v6369 = vsel %vm1393, %v6367, %v6368
      %v6370 = vrot.slane %v6315, 1
      %v6371 = vsel %vm1393, %v6368, %v6370
      %v6372 = vrot.slane %v6316, 1
      %v6373 = vrot.slane %v6317, 1
      %v6374 = vsel %vm1393, %v6372, %v6373
      %v6375 = vrot.slane %v6318, 1
      %v6376 = vsel %vm1393, %v6373, %v6375
      %v6377 = vrot.slane %v6319, 1
      %v6378 = vrot.slane %v6320, 1
      %v6379 = vsel %vm1393, %v6377, %v6378
      %v6380 = vrot.slane %v6321, 1
      %v6381 = vsel %vm1393, %v6378, %v6380
      %v6382 = vrot.slane %v6322, 1
      %v6383 = vrot.slane %v6323, 1
      %v6384 = vsel %vm1393, %v6382, %v6383
      %v6385 = vrot.slane %v6324, 1
      %v6386 = vsel %vm1393, %v6383, %v6385
      %v6387 = vrot.slane %v6325, 1
      %v6388 = vrot.slane %v6326, 1
      %v6389 = vsel %vm1393, %v6387, %v6388
      %v6390 = vrot.slane %v6327, 1
      %v6391 = vsel %vm1393, %v6388, %v6390
      %v6408 = vadd.f32 %v6288, %v6354
      %v6409 = vadd.f32 %v6289, %v6356
      %v6410 = vadd.f32 %v6290, %v6359
      %v6411 = vadd.f32 %v6291, %v6361
      %v6412 = vadd.f32 %v6292, %v6364
      %v6413 = vadd.f32 %v6293, %v6366
      %v6414 = vadd.f32 %v6294, %v6369
      %v6415 = vadd.f32 %v6295, %v6371
      %v6416 = vadd.f32 %v6296, %v6374
      %v6417 = vadd.f32 %v6297, %v6376
      %v6418 = vadd.f32 %v6298, %v6379
      %v6419 = vadd.f32 %v6299, %v6381
      %v6420 = vadd.f32 %v6300, %v6384
      %v6421 = vadd.f32 %v6301, %v6386
      %v6422 = vadd.f32 %v6302, %v6389
      %v6423 = vadd.f32 %v6303, %v6391
      %v6424 = vmul.f32 %v6248, %v5211
      %v6425 = vmul.f32 %v6249, %v5211
      %v6426 = vmul.f32 %v6250, %v5211
      %v6427 = vmul.f32 %v6251, %v5211
      %v6428 = vmul.f32 %v6252, %v5211
      %v6429 = vmul.f32 %v6253, %v5211
      %v6430 = vmul.f32 %v6254, %v5211
      %v6431 = vmul.f32 %v6255, %v5211
      %v6432 = vmul.f32 %v6256, %v5211
      %v6433 = vmul.f32 %v6257, %v5211
      %v6434 = vmul.f32 %v6258, %v5211
      %v6435 = vmul.f32 %v6259, %v5211
      %v6436 = vmul.f32 %v6260, %v5211
      %v6437 = vmul.f32 %v6261, %v5211
      %v6438 = vmul.f32 %v6262, %v5211
      %v6439 = vmul.f32 %v6263, %v5211
      %v6440 = vmul.f32 %v6264, %v5211
      %v6441 = vmul.f32 %v6265, %v5211
      %v6442 = vmul.f32 %v6266, %v5211
      %v6443 = vmul.f32 %v6267, %v5211
      %v6444 = vmul.f32 %v6268, %v5211
      %v6445 = vmul.f32 %v6269, %v5211
      %v6446 = vmul.f32 %v6270, %v5211
      %v6447 = vmul.f32 %v6271, %v5211
      %v6472 = vrot.slane %v6424, 2
      %v6473 = vrot.slane %v6425, 2
      %v6474 = vsel %vm1518, %v6472, %v6473
      %v6475 = vrot.slane %v6426, 2
      %v6476 = vsel %vm1518, %v6473, %v6475
      %v6477 = vrot.slane %v6427, 2
      %v6478 = vrot.slane %v6428, 2
      %v6479 = vsel %vm1518, %v6477, %v6478
      %v6480 = vrot.slane %v6429, 2
      %v6481 = vsel %vm1518, %v6478, %v6480
      %v6482 = vrot.slane %v6430, 2
      %v6483 = vrot.slane %v6431, 2
      %v6484 = vsel %vm1518, %v6482, %v6483
      %v6485 = vrot.slane %v6432, 2
      %v6486 = vsel %vm1518, %v6483, %v6485
      %v6487 = vrot.slane %v6433, 2
      %v6488 = vrot.slane %v6434, 2
      %v6489 = vsel %vm1518, %v6487, %v6488
      %v6490 = vrot.slane %v6435, 2
      %v6491 = vsel %vm1518, %v6488, %v6490
      %v6492 = vrot.slane %v6436, 2
      %v6493 = vrot.slane %v6437, 2
      %v6494 = vsel %vm1518, %v6492, %v6493
      %v6495 = vrot.slane %v6438, 2
      %v6496 = vsel %vm1518, %v6493, %v6495
      %v6497 = vrot.slane %v6439, 2
      %v6498 = vrot.slane %v6440, 2
      %v6499 = vsel %vm1518, %v6497, %v6498
      %v6500 = vrot.slane %v6441, 2
      %v6501 = vsel %vm1518, %v6498, %v6500
      %v6502 = vrot.slane %v6442, 2
      %v6503 = vrot.slane %v6443, 2
      %v6504 = vsel %vm1518, %v6502, %v6503
      %v6505 = vrot.slane %v6444, 2
      %v6506 = vsel %vm1518, %v6503, %v6505
      %v6507 = vrot.slane %v6445, 2
      %v6508 = vrot.slane %v6446, 2
      %v6509 = vsel %vm1518, %v6507, %v6508
      %v6510 = vrot.slane %v6447, 2
      %v6511 = vsel %vm1518, %v6508, %v6510
      %v6528 = vadd.f32 %v6408, %v6474
      %v6529 = vadd.f32 %v6409, %v6476
      %v6530 = vadd.f32 %v6410, %v6479
      %v6531 = vadd.f32 %v6411, %v6481
      %v6532 = vadd.f32 %v6412, %v6484
      %v6533 = vadd.f32 %v6413, %v6486
      %v6534 = vadd.f32 %v6414, %v6489
      %v6535 = vadd.f32 %v6415, %v6491
      %v6536 = vadd.f32 %v6416, %v6494
      %v6537 = vadd.f32 %v6417, %v6496
      %v6538 = vadd.f32 %v6418, %v6499
      %v6539 = vadd.f32 %v6419, %v6501
      %v6540 = vadd.f32 %v6420, %v6504
      %v6541 = vadd.f32 %v6421, %v6506
      %v6542 = vadd.f32 %v6422, %v6509
      %v6543 = vadd.f32 %v6423, %v6511
      %v6544 = vmax.f32 %v6528, 0.0
      %v6545 = vmax.f32 %v6529, 0.0
      %v6546 = vmax.f32 %v6530, 0.0
      %v6547 = vmax.f32 %v6531, 0.0
      %v6548 = vmax.f32 %v6532, 0.0
      %v6549 = vmax.f32 %v6533, 0.0
      %v6550 = vmax.f32 %v6534, 0.0
      %v6551 = vmax.f32 %v6535, 0.0
      %v6552 = vmax.f32 %v6536, 0.0
      %v6553 = vmax.f32 %v6537, 0.0
      %v6554 = vmax.f32 %v6538, 0.0
      %v6555 = vmax.f32 %v6539, 0.0
      %v6556 = vmax.f32 %v6540, 0.0
      %v6557 = vmax.f32 %v6541, 0.0
      %v6558 = vmax.f32 %v6542, 0.0
      %v6559 = vmax.f32 %v6543, 0.0
      %v6560 = vmin.f32 %v6544, 6.0
      %v6561 = vmin.f32 %v6545, 6.0
      %v6562 = vmin.f32 %v6546, 6.0
      %v6563 = vmin.f32 %v6547, 6.0
      %v6564 = vmin.f32 %v6548, 6.0
      %v6565 = vmin.f32 %v6549, 6.0
      %v6566 = vmin.f32 %v6550, 6.0
      %v6567 = vmin.f32 %v6551, 6.0
      %v6568 = vmin.f32 %v6552, 6.0
      %v6569 = vmin.f32 %v6553, 6.0
      %v6570 = vmin.f32 %v6554, 6.0
      %v6571 = vmin.f32 %v6555, 6.0
      %v6572 = vmin.f32 %v6556, 6.0
      %v6573 = vmin.f32 %v6557, 6.0
      %v6574 = vmin.f32 %v6558, 6.0
      %v6575 = vmin.f32 %v6559, 6.0
      %6576 = vmatprep.subr.mxu0 0.0
      %6577 = vmatpush1.msra.mxu0 %v4408
      %6578 = vmatprep.subr.mxu0 0.0
      %6579 = vmatpush1.msra.mxu0 %v4409
      %6580 = vmatprep.subr.mxu0 0.0
      %6581 = vmatpush1.msra.mxu0 %v4410
      %6582 = vmatprep.subr.mxu0 0.0
      %6583 = vmatpush1.msra.mxu0 %v4411
      %6584 = vmatprep.subr.mxu0 0.0
      %6585 = vmatpush1.msra.mxu0 %v4412
      %6586 = vmatprep.subr.mxu0 0.0
      %6587 = vmatpush1.msra.mxu0 %v4413
      %6588 = vmatprep.subr.mxu0 0.0
      %6589 = vmatpush1.msra.mxu0 %v4414
      %6590 = vmatprep.subr.mxu0 0.0
      %6591 = vmatpush1.msra.mxu0 %v4415
      %6592 = vmatprep.subr.mxu0 0.0
      %6593 = vmatpush1.msra.mxu0 %v4416
      %6594 = vmatprep.subr.mxu0 0.0
      %6595 = vmatpush1.msra.mxu0 %v4417
      %6596 = vmatprep.subr.mxu0 0.0
      %6597 = vmatpush1.msra.mxu0 %v4418
      %6598 = vmatprep.subr.mxu0 0.0
      %6599 = vmatpush1.msra.mxu0 %v4419
      %6600 = vmatprep.subr.mxu0 0.0
      %6601 = vmatpush1.msra.mxu0 %v4420
      %6602 = vmatprep.subr.mxu0 0.0
      %6603 = vmatpush1.msra.mxu0 %v4421
      %6604 = vmatprep.subr.mxu0 0.0
      %6605 = vmatpush1.msra.mxu0 %v4422
      %6606 = vmatprep.subr.mxu0 0.0
      %6607 = vmatpush1.msra.mxu0 %v4423
      %6608 = vmatprep.subr.mxu0 0.0
      %6609 = vmatpush1.msra.mxu0 0.0
      %6610 = vmatprep.subr.mxu0 0.0
      %6611 = vmatpush1.msra.mxu0 0.0
      %6612 = vmatprep.subr.mxu0 0.0
      %6613 = vmatpush1.msra.mxu0 0.0
      %6614 = vmatprep.subr.mxu0 0.0
      %6615 = vmatpush1.msra.mxu0 0.0
      %6616 = vmatprep.subr.mxu0 0.0
      %6617 = vmatpush1.msra.mxu0 0.0
      %6618 = vmatprep.subr.mxu0 0.0
      %6619 = vmatpush1.msra.mxu0 0.0
      %6620 = vmatprep.subr.mxu0 0.0
      %6621 = vmatpush1.msra.mxu0 0.0
      %6622 = vmatprep.subr.mxu0 0.0
      %6623 = vmatpush1.msra.mxu0 0.0
      %6624 = vmatprep.subr.mxu0 0.0
      %6625 = vmatpush1.msra.mxu0 0.0
      %6626 = vmatprep.subr.mxu0 0.0
      %6627 = vmatpush1.msra.mxu0 0.0
      %6628 = vmatprep.subr.mxu0 0.0
      %6629 = vmatpush1.msra.mxu0 0.0
      %6630 = vmatprep.subr.mxu0 0.0
      %6631 = vmatpush1.msra.mxu0 0.0
      %6632 = vmatprep.subr.mxu0 0.0
      %6633 = vmatpush1.msra.mxu0 0.0
      %6634 = vmatprep.subr.mxu0 0.0
      %6635 = vmatpush1.msra.mxu0 0.0
      %6636 = vmatprep.subr.mxu0 0.0
      %6637 = vmatpush1.msra.mxu0 0.0
      %6638 = vmatprep.subr.mxu0 0.0
      %6639 = vmatpush1.msra.mxu0 0.0
      %6640 = vmatprep.mubr.f32.mxu0 0.0
      %6641 = vmatmul.mubr.f32.gmra.mrb[0].mxu0 %v6560
      %v6642 = vpop.f32.mrb[0].mxu0
      %v6643 = vadd.f32 0.0, %v6642
      %v6644 = vpop.f32.mrb[0].mxu0
      %6645 = vmatprep.mubr.f32.mxu0 0.0
      %6646 = vmatmul.mubr.f32.gmra.mrb[0].mxu0 %v6561
      %v6647 = vpop.f32.mrb[0].mxu0
      %v6648 = vadd.f32 0.0, %v6647
      %v6649 = vpop.f32.mrb[0].mxu0
      %6650 = vmatprep.mubr.f32.mxu0 0.0
      %6651 = vmatmul.mubr.f32.gmra.mrb[0].mxu0 %v6562
      %v6652 = vpop.f32.mrb[0].mxu0
      %v6653 = vadd.f32 0.0, %v6652
      %v6654 = vpop.f32.mrb[0].mxu0
      %6655 = vmatprep.mubr.f32.mxu0 0.0
      %6656 = vmatmul.mubr.f32.gmra.mrb[0].mxu0 %v6563
      %v6657 = vpop.f32.mrb[0].mxu0
      %v6658 = vadd.f32 0.0, %v6657
      %v6659 = vpop.f32.mrb[0].mxu0
      %6660 = vmatprep.mubr.f32.mxu0 0.0
      %6661 = vmatmul.mubr.f32.gmra.mrb[0].mxu0 %v6564
      %v6662 = vpop.f32.mrb[0].mxu0
      %v6663 = vadd.f32 0.0, %v6662
      %v6664 = vpop.f32.mrb[0].mxu0
      %6665 = vmatprep.mubr.f32.mxu0 0.0
      %6666 = vmatmul.mubr.f32.gmra.mrb[0].mxu0 %v6565
      %v6667 = vpop.f32.mrb[0].mxu0
      %v6668 = vadd.f32 0.0, %v6667
      %v6669 = vpop.f32.mrb[0].mxu0
      %6670 = vmatprep.mubr.f32.mxu0 0.0
      %6671 = vmatmul.mubr.f32.gmra.mrb[0].mxu0 %v6566
      %v6672 = vpop.f32.mrb[0].mxu0
      %v6673 = vadd.f32 0.0, %v6672
      %v6674 = vpop.f32.mrb[0].mxu0
      %6675 = vmatprep.mubr.f32.mxu0 0.0
      %6676 = vmatmul.mubr.f32.gmra.mrb[0].mxu0 %v6567
      %v6677 = vpop.f32.mrb[0].mxu0
      %v6678 = vadd.f32 0.0, %v6677
      %v6679 = vpop.f32.mrb[0].mxu0
      %6680 = vmatprep.mubr.f32.mxu0 0.0
      %6681 = vmatmul.mubr.f32.gmra.mrb[0].mxu0 %v6568
      %v6682 = vpop.f32.mrb[0].mxu0
      %v6683 = vadd.f32 0.0, %v6682
      %v6684 = vpop.f32.mrb[0].mxu0
      %6685 = vmatprep.mubr.f32.mxu0 0.0
      %6686 = vmatmul.mubr.f32.gmra.mrb[0].mxu0 %v6569
      %v6687 = vpop.f32.mrb[0].mxu0
      %v6688 = vadd.f32 0.0, %v6687
      %v6689 = vpop.f32.mrb[0].mxu0
      %6690 = vmatprep.mubr.f32.mxu0 0.0
      %6691 = vmatmul.mubr.f32.gmra.mrb[0].mxu0 %v6570
      %v6692 = vpop.f32.mrb[0].mxu0
      %v6693 = vadd.f32 0.0, %v6692
      %v6694 = vpop.f32.mrb[0].mxu0
      %6695 = vmatprep.mubr.f32.mxu0 0.0
      %6696 = vmatmul.mubr.f32.gmra.mrb[0].mxu0 %v6571
      %v6697 = vpop.f32.mrb[0].mxu0
      %v6698 = vadd.f32 0.0, %v6697
      %v6699 = vpop.f32.mrb[0].mxu0
      %6700 = vmatprep.mubr.f32.mxu0 0.0
      %6701 = vmatmul.mubr.f32.gmra.mrb[0].mxu0 %v6572
      %v6702 = vpop.f32.mrb[0].mxu0
      %v6703 = vadd.f32 0.0, %v6702
      %v6704 = vpop.f32.mrb[0].mxu0
      %6705 = vmatprep.mubr.f32.mxu0 0.0
      %6706 = vmatmul.mubr.f32.gmra.mrb[0].mxu0 %v6573
      %v6707 = vpop.f32.mrb[0].mxu0
      %v6708 = vadd.f32 0.0, %v6707
      %v6709 = vpop.f32.mrb[0].mxu0
      %6710 = vmatprep.mubr.f32.mxu0 0.0
      %6711 = vmatmul.mubr.f32.gmra.mrb[0].mxu0 %v6574
      %v6712 = vpop.f32.mrb[0].mxu0
      %v6713 = vadd.f32 0.0, %v6712
      %v6714 = vpop.f32.mrb[0].mxu0
      %6715 = vmatprep.mubr.f32.mxu0 0.0
      %6716 = vmatmul.mubr.f32.gmra.mrb[0].mxu0 %v6575
      %v6717 = vpop.f32.mrb[0].mxu0
      %v6718 = vadd.f32 0.0, %v6717
      %v6719 = vpop.f32.mrb[0].mxu0
      %6720 = vdwg.mxu0
      %v6721 = vld [vmem:[%s305 + $0x80] sm:$0xff]
      %v6722 = vld [vmem:[%s305 + $0x88] sm:$0xff]
      %v6723 = vld [vmem:[%s305 + $0x90] sm:$0xff]
      %v6724 = vld [vmem:[%s305 + $0x98] sm:$0xff]
      %v6725 = vld [vmem:[%s305 + $0xa0] sm:$0xff]
      %v6726 = vld [vmem:[%s305 + $0xa8] sm:$0xff]
      %v6727 = vld [vmem:[%s305 + $0xb0] sm:$0xff]
      %v6728 = vld [vmem:[%s305 + $0xb8] sm:$0xff]
      %v6729 = vld [vmem:[%s305 + $0xc0] sm:$0xff]
      %v6730 = vld [vmem:[%s305 + $0xc8] sm:$0xff]
      %v6731 = vld [vmem:[%s305 + $0xd0] sm:$0xff]
      %v6732 = vld [vmem:[%s305 + $0xd8] sm:$0xff]
      %v6733 = vld [vmem:[%s305 + $0xe0] sm:$0xff]
      %v6734 = vld [vmem:[%s305 + $0xe8] sm:$0xff]
      %v6735 = vld [vmem:[%s305 + $0xf0] sm:$0xff]
      %v6736 = vld [vmem:[%s305 + $0xf8] sm:$0xff]
      %v6737 = vmul.f32 %v6643, 1.442695
      %v6738 = vpow.pop %v6737
      %v6739 = vmul.f32 %v6648, 1.442695
      %v6740 = vpow.pop %v6739
      %v6741 = vmul.f32 %v6653, 1.442695
      %v6742 = vpow.pop %v6741
      %v6743 = vmul.f32 %v6658, 1.442695
      %v6744 = vpow.pop %v6743
      %v6745 = vmul.f32 %v6663, 1.442695
      %v6746 = vpow.pop %v6745
      %v6747 = vmul.f32 %v6668, 1.442695
      %v6748 = vpow.pop %v6747
      %v6749 = vmul.f32 %v6673, 1.442695
      %v6750 = vpow.pop %v6749
      %v6751 = vmul.f32 %v6678, 1.442695
      %v6752 = vpow.pop %v6751
      %v6753 = vmul.f32 %v6683, 1.442695
      %v6754 = vpow.pop %v6753
      %v6755 = vmul.f32 %v6688, 1.442695
      %v6756 = vpow.pop %v6755
      %v6757 = vmul.f32 %v6693, 1.442695
      %v6758 = vpow.pop %v6757
      %v6759 = vmul.f32 %v6698, 1.442695
      %v6760 = vpow.pop %v6759
      %v6761 = vmul.f32 %v6703, 1.442695
      %v6762 = vpow.pop %v6761
      %v6763 = vmul.f32 %v6708, 1.442695
      %v6764 = vpow.pop %v6763
      %v6765 = vmul.f32 %v6713, 1.442695
      %v6766 = vpow.pop %v6765
      %v6767 = vmul.f32 %v6718, 1.442695
      %v6768 = vpow.pop %v6767
      %v6769 = vmul.f32 %v6721, %v6738
      %v6770 = vmul.f32 %v6722, %v6740
      %v6771 = vmul.f32 %v6723, %v6742
      %v6772 = vmul.f32 %v6724, %v6744
      %v6773 = vmul.f32 %v6725, %v6746
      %v6774 = vmul.f32 %v6726, %v6748
      %v6775 = vmul.f32 %v6727, %v6750
      %v6776 = vmul.f32 %v6728, %v6752
      %v6777 = vmul.f32 %v6729, %v6754
      %v6778 = vmul.f32 %v6730, %v6756
      %v6779 = vmul.f32 %v6731, %v6758
      %v6780 = vmul.f32 %v6732, %v6760
      %v6781 = vmul.f32 %v6733, %v6762
      %v6782 = vmul.f32 %v6734, %v6764
      %v6783 = vmul.f32 %v6735, %v6766
      %v6784 = vmul.f32 %v6736, %v6768
      %6801 = vrot.lane.b32.xlu0 %v6643, 96
      %v6802 = vpop.permute.xlu0 %6801
      %6803 = vrot.lane.b32.xlu0 %v6648, 96
      %v6804 = vpop.permute.xlu0 %6803
      %6805 = vrot.lane.b32.xlu0 %v6653, 96
      %v6806 = vpop.permute.xlu0 %6805
      %6807 = vrot.lane.b32.xlu0 %v6658, 96
      %v6808 = vpop.permute.xlu0 %6807
      %6809 = vrot.lane.b32.xlu0 %v6663, 96
      %v6810 = vpop.permute.xlu0 %6809
      %6811 = vrot.lane.b32.xlu0 %v6668, 96
      %v6812 = vpop.permute.xlu0 %6811
      %6813 = vrot.lane.b32.xlu0 %v6673, 96
      %v6814 = vpop.permute.xlu0 %6813
      %6815 = vrot.lane.b32.xlu0 %v6678, 96
      %v6816 = vpop.permute.xlu0 %6815
      %6817 = vrot.lane.b32.xlu0 %v6683, 96
      %v6818 = vpop.permute.xlu0 %6817
      %6819 = vrot.lane.b32.xlu0 %v6688, 96
      %v6820 = vpop.permute.xlu0 %6819
      %6821 = vrot.lane.b32.xlu0 %v6693, 96
      %v6822 = vpop.permute.xlu0 %6821
      %6823 = vrot.lane.b32.xlu0 %v6698, 96
      %v6824 = vpop.permute.xlu0 %6823
      %6825 = vrot.lane.b32.xlu0 %v6703, 96
      %v6826 = vpop.permute.xlu0 %6825
      %6827 = vrot.lane.b32.xlu0 %v6708, 96
      %v6828 = vpop.permute.xlu0 %6827
      %6829 = vrot.lane.b32.xlu0 %v6713, 96
      %v6830 = vpop.permute.xlu0 %6829
      %6831 = vrot.lane.b32.xlu0 %v6718, 96
      %v6832 = vpop.permute.xlu0 %6831
      %v6849 = vadd.f32 %v6769, %v6802
      %v6850 = vadd.f32 %v6770, %v6804
      %v6851 = vadd.f32 %v6771, %v6806
      %v6852 = vadd.f32 %v6772, %v6808
      %v6853 = vadd.f32 %v6773, %v6810
      %v6854 = vadd.f32 %v6774, %v6812
      %v6855 = vadd.f32 %v6775, %v6814
      %v6856 = vadd.f32 %v6776, %v6816
      %v6857 = vadd.f32 %v6777, %v6818
      %v6858 = vadd.f32 %v6778, %v6820
      %v6859 = vadd.f32 %v6779, %v6822
      %v6860 = vadd.f32 %v6780, %v6824
      %v6861 = vadd.f32 %v6781, %v6826
      %v6862 = vadd.f32 %v6782, %v6828
      %v6863 = vadd.f32 %v6783, %v6830
      %v6864 = vadd.f32 %v6784, %v6832
      %6865 = vst.msk [vmem:[%s305 + $0x80] sm:$0xff] %vm5653, %v6849
      %6866 = vst.msk [vmem:[%s305 + $0x88] sm:$0xff] %vm5653, %v6850
      %6867 = vst.msk [vmem:[%s305 + $0x90] sm:$0xff] %vm5653, %v6851
      %6868 = vst.msk [vmem:[%s305 + $0x98] sm:$0xff] %vm5653, %v6852
      %6869 = vst.msk [vmem:[%s305 + $0xa0] sm:$0xff] %vm5653, %v6853
      %6870 = vst.msk [vmem:[%s305 + $0xa8] sm:$0xff] %vm5653, %v6854
      %6871 = vst.msk [vmem:[%s305 + $0xb0] sm:$0xff] %vm5653, %v6855
      %6872 = vst.msk [vmem:[%s305 + $0xb8] sm:$0xff] %vm5653, %v6856
      %6873 = vst.msk [vmem:[%s305 + $0xc0] sm:$0xff] %vm5653, %v6857
      %6874 = vst.msk [vmem:[%s305 + $0xc8] sm:$0xff] %vm5653, %v6858
      %6875 = vst.msk [vmem:[%s305 + $0xd0] sm:$0xff] %vm5653, %v6859
      %6876 = vst.msk [vmem:[%s305 + $0xd8] sm:$0xff] %vm5653, %v6860
      %6877 = vst.msk [vmem:[%s305 + $0xe0] sm:$0xff] %vm5653, %v6861
      %6878 = vst.msk [vmem:[%s305 + $0xe8] sm:$0xff] %vm5653, %v6862
      %6879 = vst.msk [vmem:[%s305 + $0xf0] sm:$0xff] %vm5653, %v6863
      %6880 = vst.msk [vmem:[%s305 + $0xf8] sm:$0xff] %vm5653, %v6864
      %p6881 = scmp.lt.s32.totalorder %s19, 1
      %s6882 = scalar_select %p6881, %s19, 1
      %s6883 = smul.addr %s6882, 32
      %s6884 = smul.addr %s6883, 8
      %s6885 = scalar_lea.vmem %s8, %s6884
      // Predicated region
      $region53: #{detail_node_forward.1} parent=51 // pred_check
        %p6886 = pneg %p210
      $region54: #{detail_node_forward.1} parent=51 // pred_check_branch
        %6888 = sbr.rel (%p6886) target = $region56
      $region55: #{detail_node_forward.1} parent=51 // pred_region
        _
      $region56: #{detail_node_forward.1} parent=51 // pred_fallthru
        _
    $region52: #{detail_node_forward.1} parent=5 // pred_fallthru
      _
    %p6889 = scmp.le.s32.totalorder 2, %s14
    // Predicated region
    $region57: #{detail_node_forward.1} parent=5 // pred_check
      %p6890 = pneg %p6889
    $region58: #{detail_node_forward.1} parent=5 // pred_check_branch
      %6892 = sbr.rel (%p6890) target = $region60
    $region59: #{detail_node_forward.1} parent=5 // pred_region
      %s6893 = ssub.s32 %s14, 2
      // Predicated region
      $region61: #{detail_node_forward.1} parent=59 // pred_check
        %p6894 = pneg %p216
      $region62: #{detail_node_forward.1} parent=59 // pred_check_branch
        %6896 = sbr.rel (%p6894) target = $region64
      $region63: #{detail_node_forward.1} parent=59 // pred_region
        %p6897 = scmp.lt.s32.totalorder %s20, 1
        %s6898 = scalar_select %p6897, %s20, 1
        %s6899 = smul.addr %s6898, 32
        %s6900 = smul.addr %s6899, 8
        %s6901 = scalar_lea.vmem %s8, %s6900
      $region64: #{detail_node_forward.1} parent=59 // pred_fallthru
        _
    $region60: #{detail_node_forward.1} parent=5 // pred_fallthru
      _
  $region6: #{detail_node_forward.1} parent=0 // loop_footer
    %s18 = sadd.s32 1, %s14
  $region7: #{detail_node_forward.1} parent=0 // loop_footer_branch
    %13 = sbr.rel target = $region3
  $region8: #{detail_node_forward.1} parent=0 // loop_exit
    _

</llo_original>
